<compile_context>
chip_gen: v6e
topology: v6e:2x2x1
jax: 0.10.0
libtpu: 0.0.40
codegen_flags: <defaults>
</compile_context>

<pallas_src>
import functools

import jax
import jax.numpy as jnp
from jax import lax
from jax.experimental import pallas as pl
from jax.experimental.pallas import tpu as pltpu


def _round_up(x, m):
    return (x + m - 1) // m * m


# ---------------------------------------------------------------------------
# Pairwise-folded dilated conv over a window of the bf16 operand scratch.
# ---------------------------------------------------------------------------
def _dilated_conv(xl_ref, base, width, w_ref, b_ref, k, d, C):
    """sum_j dot(xl[base + j*d : +width], w[j]) + b, taps folded in pairs
    (depth 2*C = 256 -> fills v6e/v7x MXU; lone tap = depth C fills v5e)."""
    acc = None
    j = 0
    while j < k:
        if j + 1 < k:
            lhs = jnp.concatenate(
                [xl_ref[base + j * d: base + j * d + width, :],
                 xl_ref[base + (j + 1) * d: base + (j + 1) * d + width, :]],
                axis=-1)                                   # (width, 2C) bf16
            rhs = w_ref[j * C:(j + 2) * C, :]
            j += 2
        else:
            lhs = xl_ref[base + j * d: base + j * d + width, :]
            rhs = w_ref[j * C:(j + 1) * C, :]
            j += 1
        part = jnp.dot(lhs, rhs, preferred_element_type=jnp.float32)
        acc = part if acc is None else acc + part
    return acc + b_ref[...]                                # bias (1, C) f32


# ---------------------------------------------------------------------------
# Fused ResBlock kernel: chains all P sub-units of one block for one time tile
#   x_{p+1} = x_p + conv2_p(lrelu(conv1_p(lrelu(x_p))))      ("same" zero pad)
# and accumulates the block output into the MRF accumulator tile.
# ---------------------------------------------------------------------------
def _mrf_block_kernel(*refs, pairs, tile_t, t_real, halo, x_off, out_scale,
                      slope):
    P = len(pairs)
    acc_ref, x_ref = refs[0], refs[1]
    wb = refs[2:2 + 4 * P]
    o_ref = refs[2 + 4 * P]
    st_ref = refs[2 + 4 * P + 1]        # f32 residual-chain state (haloed)
    xl_ref = refs[2 + 4 * P + 2]        # bf16 lrelu'd MXU operand (haloed)
    C = o_ref.shape[-1]

    t0 = pl.multiple_of(pl.program_id(1) * tile_t, 8)   # tile start, global t
    W = tile_t + 2 * halo

    # Haloed x window for this tile; the slab carries x_off + halo extra
    # left-pad rows, so this dynamic slice is always in bounds.  State row u
    # corresponds to global time t0 - halo + u.
    st_ref[...] = x_ref[0, pl.ds(t0 + x_off, W), :]

    L = 0                               # start of the valid state region
    for p in range(P):
        k1, d1, k2, d2 = pairs[p]
        h1 = d1 * (k1 - 1) // 2
        h2 = d2 * (k2 - 1) // 2
        w1_ref, b1_ref, w2_ref, b2_ref = wb[4 * p: 4 * p + 4]

        # ---- lrelu(x_p) -> bf16 operand (OOB rows are 0, so lrelu keeps the
        #      "same"-padding zeros intact) --------------------------------
        xin = st_ref[L:L + W, :]
        xl_ref[L:L + W, :] = jnp.where(xin >= 0, xin,
                                       slope * xin).astype(jnp.bfloat16)

        # ---- conv1 (dilation d1) + bias + lrelu ---------------------------
        W_mid = W - 2 * h1
        mid = _dilated_conv(xl_ref, L, W_mid, w1_ref, b1_ref, k1, d1, C)
        mid = jnp.where(mid >= 0, mid, slope * mid)
        # conv2's "same" zero padding (and keep T-rounding pad rows inert):
        g = (t0 - halo + L + h1) + lax.broadcasted_iota(jnp.int32, (W_mid, 1), 0)
        mid = jnp.where((g >= 0) & (g < t_real), mid, 0.0)
        xl_ref[L + h1:L + h1 + W_mid, :] = mid.astype(jnp.bfloat16)

        # ---- conv2 (dilation d2) + bias + residual ------------------------
        W_out = W_mid - 2 * h2
        Lo = L + h1 + h2
        y = _dilated_conv(xl_ref, L + h1, W_out, w2_ref, b2_ref, k2, d2, C)
        y = st_ref[Lo:Lo + W_out, :] + y
        # keep the chained state exactly zero outside [0, t_real) so it acts
        # as the next sub-unit's "same" zero padding
        g = (t0 - halo + Lo) + lax.broadcasted_iota(jnp.int32, (W_out, 1), 0)
        y = jnp.where((g >= 0) & (g < t_real), y, 0.0)
        st_ref[Lo:Lo + W_out, :] = y

        L = Lo
        W = W_out

    # ---- fused MRF accumulation (+ final 1/n_blocks scale on last block) --
    out = acc_ref[0] + st_ref[halo:halo + tile_t, :]
    if out_scale != 1.0:
        out = out * out_scale
    o_ref[0] = out.astype(o_ref.dtype)


def fused_resblock(acc, x_slab, wb_list, pair_meta, *, halo, x_off, t_real,
                   tile_t, relu_slope, out_scale):
    """acc: (B, T_round, C_pad) f32 MRF accumulator (aliased in/out).
       x_slab: (B, T_round + 2*H_max, C_pad) f32, zero outside real data.
       wb_list: per pair [w1 (k1*C,C) bf16, b1 (1,C) f32, w2, b2]."""
    B, T_round, C = acc.shape
    T_slab = x_slab.shape[1]
    assert tile_t % 8 == 0 and T_round % tile_t == 0
    assert C % 128 == 0
    n_t = T_round // tile_t
    P = len(pair_meta)
    W0 = tile_t + 2 * halo

    kernel = functools.partial(
        _mrf_block_kernel, pairs=tuple(pair_meta), tile_t=tile_t,
        t_real=t_real, halo=halo, x_off=x_off, out_scale=out_scale,
        slope=relu_slope)

    in_specs = [
        pl.BlockSpec((1, tile_t, C), lambda b, t: (b, t, 0)),   # accumulator
        pl.BlockSpec((1, T_slab, C), lambda b, t: (b, 0, 0)),   # x slab
    ]
    for (k1, d1, k2, d2) in pair_meta:
        in_specs += [
            pl.BlockSpec((k1 * C, C), lambda b, t: (0, 0)),
            pl.BlockSpec((1, C), lambda b, t: (0, 0)),
            pl.BlockSpec((k2 * C, C), lambda b, t: (0, 0)),
            pl.BlockSpec((1, C), lambda b, t: (0, 0)),
        ]

    # Explicit VMEM budget: double-buffered slab + acc/out tiles + weights
    # + scratch + headroom (review item; avoids surprise scoped-limit OOMs).
    est = 2 * T_slab * C * 4
    est += 2 * 2 * tile_t * C * 4
    est += 2 * sum(int(a.size) * a.dtype.itemsize for a in wb_list)
    est += W0 * C * (4 + 2)
    est += 4 << 20
    vmem_limit = int(min(max(est, 32 << 20), 128 << 20))

    return pl.pallas_call(
        kernel,
        out_shape=jax.ShapeDtypeStruct((B, T_round, C), jnp.float32),
        grid=(B, n_t),
        in_specs=in_specs,
        out_specs=pl.BlockSpec((1, tile_t, C), lambda b, t: (b, t, 0)),
        scratch_shapes=[pltpu.VMEM((W0, C), jnp.float32),      # residual chain
                        pltpu.VMEM((W0, C), jnp.bfloat16)],    # lrelu operand
        input_output_aliases={0: 0},                           # acc in == out
        compiler_params=pltpu.CompilerParams(
            # tiles are fully independent (halo is recomputed per tile), so
            # both axes are parallel -> megacore/v7x can shard time tiles too.
            dimension_semantics=("parallel", "parallel"),
            vmem_limit_bytes=vmem_limit),
    )(acc, x_slab, *wb_list)


# ---------------------------------------------------------------------------
# MultiReceptiveField wrapper (layout, padding, per-block kernel launch)
# ---------------------------------------------------------------------------
def _prep_weights(w, b, c_pad):
    k, cin, cout = w.shape
    assert k % 2 == 1, "odd kernel sizes only ('same' padding)"
    wp = jnp.pad(w, ((0, 0), (0, c_pad - cin), (0, c_pad - cout)))
    wp = wp.astype(jnp.bfloat16).reshape(k * c_pad, c_pad)
    bp = jnp.pad(b, ((0, c_pad - b.shape[0]),)).astype(jnp.float32)
    return wp, bp.reshape(1, c_pad)


def multi_receptive_field(x_ncw, blocks_params, relu_slope, tile_t=None):
    """x_ncw: (B, C, T) like the PyTorch module. Returns (B, C, T)."""
    B, C, T = x_ncw.shape
    C_pad = _round_up(max(C, 128), 128)                  # lane-dense channels
    if tile_t is None:
        tile_t = 512                                     # 512-1024 v5e/v6e, 256-512 v7x
    tile_t = max(8, min(_round_up(tile_t, 8), _round_up(T, 8)))
    T_round = _round_up(T, tile_t)

    # Per-block total halo (sum over sub-units of both conv halos).
    halos = []
    for bp in blocks_params:
        h = 0
        for (w1, _, d1), (w2, _, d2) in bp:
            h += d1 * (w1.shape[0] - 1) // 2 + d2 * (w2.shape[0] - 1) // 2
        halos.append(h)
    H_max = max(halos) if halos else 0

    # One padded channels-last slab shared by every block (zeros outside the
    # real data provide the "same" conv padding; pad channels stay zero
    # because weight/bias padding is zero and lrelu(0)=0).
    x = jnp.transpose(x_ncw, (0, 2, 1))                  # -> (B, T, C)
    x_slab = jnp.pad(x, ((0, 0), (H_max, H_max + T_round - T),
                         (0, C_pad - C)))

    acc = jnp.zeros((B, T_round, C_pad), jnp.float32)
    n_blocks = len(blocks_params)
    for bi, bp in enumerate(blocks_params):
        wb_list, pair_meta = [], []
        for (w1, b1, d1), (w2, b2, d2) in bp:
            w1p, b1p = _prep_weights(w1, b1, C_pad)
            w2p, b2p = _prep_weights(w2, b2, C_pad)
            wb_list += [w1p, b1p, w2p, b2p]
            pair_meta.append((int(w1.shape[0]), int(d1),
                              int(w2.shape[0]), int(d2)))
        out_scale = 1.0 / n_blocks if bi == n_blocks - 1 else 1.0
        acc = fused_resblock(acc, x_slab, wb_list, pair_meta,
                             halo=halos[bi], x_off=H_max - halos[bi],
                             t_real=T, tile_t=tile_t,
                             relu_slope=relu_slope, out_scale=out_scale)

    out = acc[:, :T, :C]
    return jnp.transpose(out, (0, 2, 1))                 # -> (B, C, T)


# ---------------------------------------------------------------------------
# Pure-JAX reference (same math: bf16 MXU operands, f32 accumulation)
# ---------------------------------------------------------------------------
def _ref_leaky_conv1d(x, w, b, dilation, relu_slope):
    B, T, C = x.shape
    K = w.shape[0]
    pad = dilation * (K - 1) // 2
    xl = jnp.where(x >= 0, x, relu_slope * x).astype(jnp.bfloat16)
    xp = jnp.pad(xl, ((0, 0), (pad, pad), (0, 0)))
    wb = w.astype(jnp.bfloat16)
    out = jnp.broadcast_to(b[None, None, :], (B, T, C)).astype(jnp.float32)
    for j in range(K):
        off = j * dilation
        out = out + jnp.einsum('btc,cd->btd', xp[:, off:off + T, :], wb[j],
                               preferred_element_type=jnp.float32)
    return out


def _ref_mrf(x_ncw, blocks_params, relu_slope):
    x = jnp.transpose(x_ncw, (0, 2, 1))
    out = jnp.zeros_like(x)
    for bp in blocks_params:
        xb = x
        for (w1, b1, d1), (w2, b2, d2) in bp:
            xt = _ref_leaky_conv1d(xb, w1, b1, d1, relu_slope)
            xt = _ref_leaky_conv1d(xt, w2, b2, d2, relu_slope)
            xb = xb + xt
        out = out + xb
    out = out / float(len(blocks_params))
    return jnp.transpose(out, (0, 2, 1))


# ---------------------------------------------------------------------------
# Deterministic parameter init (synthetic, no checkpoint)
# ---------------------------------------------------------------------------
def init_params(key, kernel_size, dilation, channels):
    blocks = []
    for i, k in enumerate(kernel_size):
        block = []
        for d_pair in dilation[i]:
            pair = []
            for d in d_pair:
                key, wk, bk = jax.random.split(key, 3)
                w = jax.random.normal(wk, (k, channels, channels),
                                      jnp.float32) / ((channels * k) ** 0.5)
                b = 0.01 * jax.random.normal(bk, (channels,), jnp.float32)
                pair.append((w, b, int(d)))
            block.append(tuple(pair))
        blocks.append(block)
    return blocks


if __name__ == "__main__":
    key = jax.random.PRNGKey(0)

    # Small HiFi-GAN-like config (C < 128, T not a tile multiple, different
    # halos per block) to exercise channel padding, multi-tile time grid,
    # boundary masking, nonzero slab offset, and odd/even tap folding.
    B, C, T = 2, 32, 200
    kernel_size = [3, 7]
    dilation = [[[1, 1], [3, 1], [5, 1]],
                [[1, 1], [3, 1]]]
    relu_slope = 0.1

    key, xk = jax.random.split(key)
    x = jax.random.normal(xk, (B, C, T), jnp.float32)       # NCW, like PyTorch

    blocks_params = init_params(key, kernel_size, dilation, C)

    out = multi_receptive_field(x, blocks_params, relu_slope, tile_t=128)
    out = jax.block_until_ready(out)

    ref = jax.block_until_ready(_ref_mrf(x, blocks_params, relu_slope))

    assert out.shape == (B, C, T)
    err = jnp.max(jnp.abs(out - ref))
    assert jnp.allclose(out, ref, rtol=2e-2, atol=2e-2), f"max abs err {err}"

    print("KERNEL_OK")
</pallas_src>

<mosaic_0001>
module attributes {stable_mosaic.version = 11 : i64} {
  func.func @_mrf_block_kernel(%arg0: i32, %arg1: i32, %arg2: memref<1x128x128xf32, #tpu.memory_space<vmem>>, %arg3: memref<1x292x128xf32, #tpu.memory_space<vmem>>, %arg4: memref<384x128xbf16, #tpu.memory_space<vmem>>, %arg5: memref<1x128xf32, #tpu.memory_space<vmem>>, %arg6: memref<384x128xbf16, #tpu.memory_space<vmem>>, %arg7: memref<1x128xf32, #tpu.memory_space<vmem>>, %arg8: memref<384x128xbf16, #tpu.memory_space<vmem>>, %arg9: memref<1x128xf32, #tpu.memory_space<vmem>>, %arg10: memref<384x128xbf16, #tpu.memory_space<vmem>>, %arg11: memref<1x128xf32, #tpu.memory_space<vmem>>, %arg12: memref<384x128xbf16, #tpu.memory_space<vmem>>, %arg13: memref<1x128xf32, #tpu.memory_space<vmem>>, %arg14: memref<384x128xbf16, #tpu.memory_space<vmem>>, %arg15: memref<1x128xf32, #tpu.memory_space<vmem>>, %arg16: memref<1x128x128xf32, #tpu.memory_space<vmem>>, %arg17: memref<152x128xf32, #tpu.memory_space<vmem>>, %arg18: memref<152x128xbf16, #tpu.memory_space<vmem>>) attributes {dimension_semantics = [#tpu.dimension_semantics<parallel>, #tpu.dimension_semantics<parallel>], iteration_bounds = array<i64: 2, 2>, scalar_prefetch = 0 : i64, scratch_operands = 2 : i64, tpu.core_type = #tpu.core_type<tc>, window_params = [{transform_indices = @transform_0, window_bounds = array<i64: 1, 128, 128>}, {transform_indices = @transform_1, window_bounds = array<i64: 1, 292, 128>}, {pipeline_mode = #tpu.pipeline_mode<synchronous>, transform_indices = @transform_2, window_bounds = array<i64: 384, 128>}, {pipeline_mode = #tpu.pipeline_mode<synchronous>, transform_indices = @transform_3, window_bounds = array<i64: 1, 128>}, {pipeline_mode = #tpu.pipeline_mode<synchronous>, transform_indices = @transform_4, window_bounds = array<i64: 384, 128>}, {pipeline_mode = #tpu.pipeline_mode<synchronous>, transform_indices = @transform_5, window_bounds = array<i64: 1, 128>}, {pipeline_mode = #tpu.pipeline_mode<synchronous>, transform_indices = @transform_6, window_bounds = array<i64: 384, 128>}, {pipeline_mode = #tpu.pipeline_mode<synchronous>, transform_indices = @transform_7, window_bounds = array<i64: 1, 128>}, {pipeline_mode = #tpu.pipeline_mode<synchronous>, transform_indices = @transform_8, window_bounds = array<i64: 384, 128>}, {pipeline_mode = #tpu.pipeline_mode<synchronous>, transform_indices = @transform_9, window_bounds = array<i64: 1, 128>}, {pipeline_mode = #tpu.pipeline_mode<synchronous>, transform_indices = @transform_10, window_bounds = array<i64: 384, 128>}, {pipeline_mode = #tpu.pipeline_mode<synchronous>, transform_indices = @transform_11, window_bounds = array<i64: 1, 128>}, {pipeline_mode = #tpu.pipeline_mode<synchronous>, transform_indices = @transform_12, window_bounds = array<i64: 384, 128>}, {pipeline_mode = #tpu.pipeline_mode<synchronous>, transform_indices = @transform_13, window_bounds = array<i64: 1, 128>}, {transform_indices = @transform_14, window_bounds = array<i64: 1, 128, 128>}]} {
    %c128_i32 = arith.constant 128 : i32
    %0 = arith.muli %arg1, %c128_i32 : i32
    %1 = tpu.assume_multiple %0, 8 : i32
    %c6_i32 = arith.constant 6 : i32
    %2 = arith.addi %1, %c6_i32 : i32
    %c0 = arith.constant 0 : index
    %3 = arith.index_cast %2 : i32 to index
    %c0_0 = arith.constant 0 : index
    %4 = vector.load %arg3[%c0, %3, %c0_0] : memref<1x292x128xf32, #tpu.memory_space<vmem>>, vector<1x152x128xf32>
    %5 = vector.shape_cast %4 : vector<1x152x128xf32> to vector<152x128xf32>
    %c0_1 = arith.constant 0 : index
    %c0_2 = arith.constant 0 : index
    %6 = vector.load %arg17[%c0_1, %c0_2] : memref<152x128xf32, #tpu.memory_space<vmem>>, vector<152x128xf32>
    tpu.vector_store %arg17[%c0_1, %c0_2], %5 {strides = array<i32>} : memref<152x128xf32, #tpu.memory_space<vmem>>, vector<152x128xf32>,
    %c0_3 = arith.constant 0 : index
    %c0_4 = arith.constant 0 : index
    %7 = vector.load %arg17[%c0_3, %c0_4] : memref<152x128xf32, #tpu.memory_space<vmem>>, vector<152x128xf32>
    %cst = arith.constant 0.000000e+00 : f32
    %8 = vector.broadcast %cst : f32 to vector<152x128xf32>
    %9 = arith.cmpf oge, %7, %8 : vector<152x128xf32>
    %cst_5 = arith.constant 1.000000e-01 : f32
    %10 = vector.broadcast %cst_5 : f32 to vector<152x128xf32>
    %11 = arith.mulf %10, %7 : vector<152x128xf32>
    %12 = arith.select %9, %7, %11 : vector<152x128xi1>, vector<152x128xf32>
    %13 = arith.truncf %12 : vector<152x128xf32> to vector<152x128xbf16>
    %c0_6 = arith.constant 0 : index
    %c0_7 = arith.constant 0 : index
    %14 = vector.load %arg18[%c0_6, %c0_7] : memref<152x128xbf16, #tpu.memory_space<vmem>>, vector<152x128xbf16>
    tpu.vector_store %arg18[%c0_6, %c0_7], %13 {strides = array<i32>} : memref<152x128xbf16, #tpu.memory_space<vmem>>, vector<152x128xbf16>,
    %c0_8 = arith.constant 0 : index
    %c0_9 = arith.constant 0 : index
    %15 = vector.load %arg18[%c0_8, %c0_9] : memref<152x128xbf16, #tpu.memory_space<vmem>>, vector<150x128xbf16>
    %c1 = arith.constant 1 : index
    %c0_10 = arith.constant 0 : index
    %16 = vector.load %arg18[%c1, %c0_10] : memref<152x128xbf16, #tpu.memory_space<vmem>>, vector<150x128xbf16>
    %17 = tpu.concatenate %15, %16 in 1 : vector<150x128xbf16>, vector<150x128xbf16> -> vector<150x256xbf16>
    %c0_11 = arith.constant 0 : index
    %c0_12 = arith.constant 0 : index
    %18 = vector.load %arg4[%c0_11, %c0_12] : memref<384x128xbf16, #tpu.memory_space<vmem>>, vector<256x128xbf16>
    %cst_13 = arith.constant dense<0.000000e+00> : vector<150x128xf32>
    %19 = tpu.matmul %17, %18, %cst_13 {dimension_numbers = #tpu.dot_dimension_numbers<[1], [0], [0], [1], [0, 0, 1, 1], [], []>} : vector<150x256xbf16>, vector<256x128xbf16>, vector<150x128xf32> -> vector<150x128xf32>
    %c2 = arith.constant 2 : index
    %c0_14 = arith.constant 0 : index
    %20 = vector.load %arg18[%c2, %c0_14] : memref<152x128xbf16, #tpu.memory_space<vmem>>, vector<150x128xbf16>
    %c256 = arith.constant 256 : index
    %c0_15 = arith.constant 0 : index
    %21 = vector.load %arg4[%c256, %c0_15] : memref<384x128xbf16, #tpu.memory_space<vmem>>, vector<128x128xbf16>
    %cst_16 = arith.constant dense<0.000000e+00> : vector<150x128xf32>
    %22 = tpu.matmul %20, %21, %cst_16 {dimension_numbers = #tpu.dot_dimension_numbers<[1], [0], [0], [1], [0, 0, 1, 1], [], []>} : vector<150x128xbf16>, vector<128x128xbf16>, vector<150x128xf32> -> vector<150x128xf32>
    %23 = arith.addf %19, %22 : vector<150x128xf32>
    %c0_17 = arith.constant 0 : index
    %c0_18 = arith.constant 0 : index
    %24 = vector.load %arg5[%c0_17, %c0_18] : memref<1x128xf32, #tpu.memory_space<vmem>>, vector<1x128xf32>
    %25 = vector.broadcast %24 : vector<1x128xf32> to vector<150x128xf32>
    %26 = arith.addf %23, %25 : vector<150x128xf32>
    %cst_19 = arith.constant 0.000000e+00 : f32
    %27 = vector.broadcast %cst_19 : f32 to vector<150x128xf32>
    %28 = arith.cmpf oge, %26, %27 : vector<150x128xf32>
    %cst_20 = arith.constant 1.000000e-01 : f32
    %29 = vector.broadcast %cst_20 : f32 to vector<150x128xf32>
    %30 = arith.mulf %29, %26 : vector<150x128xf32>
    %31 = arith.select %28, %26, %30 : vector<150x128xi1>, vector<150x128xf32>
    %c12_i32 = arith.constant 12 : i32
    %32 = arith.subi %1, %c12_i32 : i32
    %c0_i32 = arith.constant 0 : i32
    %33 = arith.addi %32, %c0_i32 : i32
    %c1_i32 = arith.constant 1 : i32
    %34 = arith.addi %33, %c1_i32 : i32
    %35 = tpu.iota {dimensions = array<i32: 0>} : vector<150x1xi32>
    %36 = vector.broadcast %34 : i32 to vector<150x1xi32>
    %37 = arith.addi %36, %35 : vector<150x1xi32>
    %c0_i32_21 = arith.constant 0 : i32
    %38 = vector.broadcast %c0_i32_21 : i32 to vector<150x1xi32>
    %39 = arith.cmpi sge, %37, %38 : vector<150x1xi32>
    %c200_i32 = arith.constant 200 : i32
    %40 = vector.broadcast %c200_i32 : i32 to vector<150x1xi32>
    %41 = arith.cmpi slt, %37, %40 : vector<150x1xi32>
    %42 = arith.andi %39, %41 : vector<150x1xi1>
    %cst_22 = arith.constant 0.000000e+00 : f32
    %43 = vector.shape_cast %42 : vector<150x1xi1> to vector<150x1xi1>
    %44 = vector.broadcast %43 : vector<150x1xi1> to vector<150x128xi1>
    %45 = vector.broadcast %cst_22 : f32 to vector<150x128xf32>
    %46 = arith.select %44, %31, %45 : vector<150x128xi1>, vector<150x128xf32>
    %47 = arith.truncf %46 : vector<150x128xf32> to vector<150x128xbf16>
    %c1_23 = arith.constant 1 : index
    %c0_24 = arith.constant 0 : index
    %48 = vector.load %arg18[%c1_23, %c0_24] : memref<152x128xbf16, #tpu.memory_space<vmem>>, vector<150x128xbf16>
    tpu.vector_store %arg18[%c1_23, %c0_24], %47 {strides = array<i32>} : memref<152x128xbf16, #tpu.memory_space<vmem>>, vector<150x128xbf16>,
    %c1_25 = arith.constant 1 : index
    %c0_26 = arith.constant 0 : index
    %49 = vector.load %arg18[%c1_25, %c0_26] : memref<152x128xbf16, #tpu.memory_space<vmem>>, vector<148x128xbf16>
    %c2_27 = arith.constant 2 : index
    %c0_28 = arith.constant 0 : index
    %50 = vector.load %arg18[%c2_27, %c0_28] : memref<152x128xbf16, #tpu.memory_space<vmem>>, vector<148x128xbf16>
    %51 = tpu.concatenate %49, %50 in 1 : vector<148x128xbf16>, vector<148x128xbf16> -> vector<148x256xbf16>
    %c0_29 = arith.constant 0 : index
    %c0_30 = arith.constant 0 : index
    %52 = vector.load %arg6[%c0_29, %c0_30] : memref<384x128xbf16, #tpu.memory_space<vmem>>, vector<256x128xbf16>
    %cst_31 = arith.constant dense<0.000000e+00> : vector<148x128xf32>
    %53 = tpu.matmul %51, %52, %cst_31 {dimension_numbers = #tpu.dot_dimension_numbers<[1], [0], [0], [1], [0, 0, 1, 1], [], []>} : vector<148x256xbf16>, vector<256x128xbf16>, vector<148x128xf32> -> vector<148x128xf32>
    %c3 = arith.constant 3 : index
    %c0_32 = arith.constant 0 : index
    %54 = vector.load %arg18[%c3, %c0_32] : memref<152x128xbf16, #tpu.memory_space<vmem>>, vector<148x128xbf16>
    %c256_33 = arith.constant 256 : index
    %c0_34 = arith.constant 0 : index
    %55 = vector.load %arg6[%c256_33, %c0_34] : memref<384x128xbf16, #tpu.memory_space<vmem>>, vector<128x128xbf16>
    %cst_35 = arith.constant dense<0.000000e+00> : vector<148x128xf32>
    %56 = tpu.matmul %54, %55, %cst_35 {dimension_numbers = #tpu.dot_dimension_numbers<[1], [0], [0], [1], [0, 0, 1, 1], [], []>} : vector<148x128xbf16>, vector<128x128xbf16>, vector<148x128xf32> -> vector<148x128xf32>
    %57 = arith.addf %53, %56 : vector<148x128xf32>
    %c0_36 = arith.constant 0 : index
    %c0_37 = arith.constant 0 : index
    %58 = vector.load %arg7[%c0_36, %c0_37] : memref<1x128xf32, #tpu.memory_space<vmem>>, vector<1x128xf32>
    %59 = vector.broadcast %58 : vector<1x128xf32> to vector<148x128xf32>
    %60 = arith.addf %57, %59 : vector<148x128xf32>
    %c2_38 = arith.constant 2 : index
    %c0_39 = arith.constant 0 : index
    %61 = vector.load %arg17[%c2_38, %c0_39] : memref<152x128xf32, #tpu.memory_space<vmem>>, vector<148x128xf32>
    %62 = arith.addf %61, %60 : vector<148x128xf32>
    %c12_i32_40 = arith.constant 12 : i32
    %63 = arith.subi %1, %c12_i32_40 : i32
    %c2_i32 = arith.constant 2 : i32
    %64 = arith.addi %63, %c2_i32 : i32
    %65 = tpu.iota {dimensions = array<i32: 0>} : vector<148x1xi32>
    %66 = vector.broadcast %64 : i32 to vector<148x1xi32>
    %67 = arith.addi %66, %65 : vector<148x1xi32>
    %c0_i32_41 = arith.constant 0 : i32
    %68 = vector.broadcast %c0_i32_41 : i32 to vector<148x1xi32>
    %69 = arith.cmpi sge, %67, %68 : vector<148x1xi32>
    %c200_i32_42 = arith.constant 200 : i32
    %70 = vector.broadcast %c200_i32_42 : i32 to vector<148x1xi32>
    %71 = arith.cmpi slt, %67, %70 : vector<148x1xi32>
    %72 = arith.andi %69, %71 : vector<148x1xi1>
    %cst_43 = arith.constant 0.000000e+00 : f32
    %73 = vector.shape_cast %72 : vector<148x1xi1> to vector<148x1xi1>
    %74 = vector.broadcast %73 : vector<148x1xi1> to vector<148x128xi1>
    %75 = vector.broadcast %cst_43 : f32 to vector<148x128xf32>
    %76 = arith.select %74, %62, %75 : vector<148x128xi1>, vector<148x128xf32>
    %c2_44 = arith.constant 2 : index
    %c0_45 = arith.constant 0 : index
    %77 = vector.load %arg17[%c2_44, %c0_45] : memref<152x128xf32, #tpu.memory_space<vmem>>, vector<148x128xf32>
    tpu.vector_store %arg17[%c2_44, %c0_45], %76 {strides = array<i32>} : memref<152x128xf32, #tpu.memory_space<vmem>>, vector<148x128xf32>,
    %c2_46 = arith.constant 2 : index
    %c0_47 = arith.constant 0 : index
    %78 = vector.load %arg17[%c2_46, %c0_47] : memref<152x128xf32, #tpu.memory_space<vmem>>, vector<148x128xf32>
    %cst_48 = arith.constant 0.000000e+00 : f32
    %79 = vector.broadcast %cst_48 : f32 to vector<148x128xf32>
    %80 = arith.cmpf oge, %78, %79 : vector<148x128xf32>
    %cst_49 = arith.constant 1.000000e-01 : f32
    %81 = vector.broadcast %cst_49 : f32 to vector<148x128xf32>
    %82 = arith.mulf %81, %78 : vector<148x128xf32>
    %83 = arith.select %80, %78, %82 : vector<148x128xi1>, vector<148x128xf32>
    %84 = arith.truncf %83 : vector<148x128xf32> to vector<148x128xbf16>
    %c2_50 = arith.constant 2 : index
    %c0_51 = arith.constant 0 : index
    %85 = vector.load %arg18[%c2_50, %c0_51] : memref<152x128xbf16, #tpu.memory_space<vmem>>, vector<148x128xbf16>
    tpu.vector_store %arg18[%c2_50, %c0_51], %84 {strides = array<i32>} : memref<152x128xbf16, #tpu.memory_space<vmem>>, vector<148x128xbf16>,
    %c2_52 = arith.constant 2 : index
    %c0_53 = arith.constant 0 : index
    %86 = vector.load %arg18[%c2_52, %c0_53] : memref<152x128xbf16, #tpu.memory_space<vmem>>, vector<142x128xbf16>
    %c5 = arith.constant 5 : index
    %c0_54 = arith.constant 0 : index
    %87 = vector.load %arg18[%c5, %c0_54] : memref<152x128xbf16, #tpu.memory_space<vmem>>, vector<142x128xbf16>
    %88 = tpu.concatenate %86, %87 in 1 : vector<142x128xbf16>, vector<142x128xbf16> -> vector<142x256xbf16>
    %c0_55 = arith.constant 0 : index
    %c0_56 = arith.constant 0 : index
    %89 = vector.load %arg8[%c0_55, %c0_56] : memref<384x128xbf16, #tpu.memory_space<vmem>>, vector<256x128xbf16>
    %cst_57 = arith.constant dense<0.000000e+00> : vector<142x128xf32>
    %90 = tpu.matmul %88, %89, %cst_57 {dimension_numbers = #tpu.dot_dimension_numbers<[1], [0], [0], [1], [0, 0, 1, 1], [], []>} : vector<142x256xbf16>, vector<256x128xbf16>, vector<142x128xf32> -> vector<142x128xf32>
    %c8 = arith.constant 8 : index
    %c0_58 = arith.constant 0 : index
    %91 = vector.load %arg18[%c8, %c0_58] : memref<152x128xbf16, #tpu.memory_space<vmem>>, vector<142x128xbf16>
    %c256_59 = arith.constant 256 : index
    %c0_60 = arith.constant 0 : index
    %92 = vector.load %arg8[%c256_59, %c0_60] : memref<384x128xbf16, #tpu.memory_space<vmem>>, vector<128x128xbf16>
    %cst_61 = arith.constant dense<0.000000e+00> : vector<142x128xf32>
    %93 = tpu.matmul %91, %92, %cst_61 {dimension_numbers = #tpu.dot_dimension_numbers<[1], [0], [0], [1], [0, 0, 1, 1], [], []>} : vector<142x128xbf16>, vector<128x128xbf16>, vector<142x128xf32> -> vector<142x128xf32>
    %94 = arith.addf %90, %93 : vector<142x128xf32>
    %c0_62 = arith.constant 0 : index
    %c0_63 = arith.constant 0 : index
    %95 = vector.load %arg9[%c0_62, %c0_63] : memref<1x128xf32, #tpu.memory_space<vmem>>, vector<1x128xf32>
    %96 = vector.broadcast %95 : vector<1x128xf32> to vector<142x128xf32>
    %97 = arith.addf %94, %96 : vector<142x128xf32>
    %cst_64 = arith.constant 0.000000e+00 : f32
    %98 = vector.broadcast %cst_64 : f32 to vector<142x128xf32>
    %99 = arith.cmpf oge, %97, %98 : vector<142x128xf32>
    %cst_65 = arith.constant 1.000000e-01 : f32
    %100 = vector.broadcast %cst_65 : f32 to vector<142x128xf32>
    %101 = arith.mulf %100, %97 : vector<142x128xf32>
    %102 = arith.select %99, %97, %101 : vector<142x128xi1>, vector<142x128xf32>
    %c12_i32_66 = arith.constant 12 : i32
    %103 = arith.subi %1, %c12_i32_66 : i32
    %c2_i32_67 = arith.constant 2 : i32
    %104 = arith.addi %103, %c2_i32_67 : i32
    %c3_i32 = arith.constant 3 : i32
    %105 = arith.addi %104, %c3_i32 : i32
    %106 = tpu.iota {dimensions = array<i32: 0>} : vector<142x1xi32>
    %107 = vector.broadcast %105 : i32 to vector<142x1xi32>
    %108 = arith.addi %107, %106 : vector<142x1xi32>
    %c0_i32_68 = arith.constant 0 : i32
    %109 = vector.broadcast %c0_i32_68 : i32 to vector<142x1xi32>
    %110 = arith.cmpi sge, %108, %109 : vector<142x1xi32>
    %c200_i32_69 = arith.constant 200 : i32
    %111 = vector.broadcast %c200_i32_69 : i32 to vector<142x1xi32>
    %112 = arith.cmpi slt, %108, %111 : vector<142x1xi32>
    %113 = arith.andi %110, %112 : vector<142x1xi1>
    %cst_70 = arith.constant 0.000000e+00 : f32
    %114 = vector.shape_cast %113 : vector<142x1xi1> to vector<142x1xi1>
    %115 = vector.broadcast %114 : vector<142x1xi1> to vector<142x128xi1>
    %116 = vector.broadcast %cst_70 : f32 to vector<142x128xf32>
    %117 = arith.select %115, %102, %116 : vector<142x128xi1>, vector<142x128xf32>
    %118 = arith.truncf %117 : vector<142x128xf32> to vector<142x128xbf16>
    %c5_71 = arith.constant 5 : index
    %c0_72 = arith.constant 0 : index
    %119 = vector.load %arg18[%c5_71, %c0_72] : memref<152x128xbf16, #tpu.memory_space<vmem>>, vector<142x128xbf16>
    tpu.vector_store %arg18[%c5_71, %c0_72], %118 {strides = array<i32>} : memref<152x128xbf16, #tpu.memory_space<vmem>>, vector<142x128xbf16>,
    %c5_73 = arith.constant 5 : index
    %c0_74 = arith.constant 0 : index
    %120 = vector.load %arg18[%c5_73, %c0_74] : memref<152x128xbf16, #tpu.memory_space<vmem>>, vector<140x128xbf16>
    %c6 = arith.constant 6 : index
    %c0_75 = arith.constant 0 : index
    %121 = vector.load %arg18[%c6, %c0_75] : memref<152x128xbf16, #tpu.memory_space<vmem>>, vector<140x128xbf16>
    %122 = tpu.concatenate %120, %121 in 1 : vector<140x128xbf16>, vector<140x128xbf16> -> vector<140x256xbf16>
    %c0_76 = arith.constant 0 : index
    %c0_77 = arith.constant 0 : index
    %123 = vector.load %arg10[%c0_76, %c0_77] : memref<384x128xbf16, #tpu.memory_space<vmem>>, vector<256x128xbf16>
    %cst_78 = arith.constant dense<0.000000e+00> : vector<140x128xf32>
    %124 = tpu.matmul %122, %123, %cst_78 {dimension_numbers = #tpu.dot_dimension_numbers<[1], [0], [0], [1], [0, 0, 1, 1], [], []>} : vector<140x256xbf16>, vector<256x128xbf16>, vector<140x128xf32> -> vector<140x128xf32>
    %c7 = arith.constant 7 : index
    %c0_79 = arith.constant 0 : index
    %125 = vector.load %arg18[%c7, %c0_79] : memref<152x128xbf16, #tpu.memory_space<vmem>>, vector<140x128xbf16>
    %c256_80 = arith.constant 256 : index
    %c0_81 = arith.constant 0 : index
    %126 = vector.load %arg10[%c256_80, %c0_81] : memref<384x128xbf16, #tpu.memory_space<vmem>>, vector<128x128xbf16>
    %cst_82 = arith.constant dense<0.000000e+00> : vector<140x128xf32>
    %127 = tpu.matmul %125, %126, %cst_82 {dimension_numbers = #tpu.dot_dimension_numbers<[1], [0], [0], [1], [0, 0, 1, 1], [], []>} : vector<140x128xbf16>, vector<128x128xbf16>, vector<140x128xf32> -> vector<140x128xf32>
    %128 = arith.addf %124, %127 : vector<140x128xf32>
    %c0_83 = arith.constant 0 : index
    %c0_84 = arith.constant 0 : index
    %129 = vector.load %arg11[%c0_83, %c0_84] : memref<1x128xf32, #tpu.memory_space<vmem>>, vector<1x128xf32>
    %130 = vector.broadcast %129 : vector<1x128xf32> to vector<140x128xf32>
    %131 = arith.addf %128, %130 : vector<140x128xf32>
    %c6_85 = arith.constant 6 : index
    %c0_86 = arith.constant 0 : index
    %132 = vector.load %arg17[%c6_85, %c0_86] : memref<152x128xf32, #tpu.memory_space<vmem>>, vector<140x128xf32>
    %133 = arith.addf %132, %131 : vector<140x128xf32>
    %c12_i32_87 = arith.constant 12 : i32
    %134 = arith.subi %1, %c12_i32_87 : i32
    %c6_i32_88 = arith.constant 6 : i32
    %135 = arith.addi %134, %c6_i32_88 : i32
    %136 = tpu.iota {dimensions = array<i32: 0>} : vector<140x1xi32>
    %137 = vector.broadcast %135 : i32 to vector<140x1xi32>
    %138 = arith.addi %137, %136 : vector<140x1xi32>
    %c0_i32_89 = arith.constant 0 : i32
    %139 = vector.broadcast %c0_i32_89 : i32 to vector<140x1xi32>
    %140 = arith.cmpi sge, %138, %139 : vector<140x1xi32>
    %c200_i32_90 = arith.constant 200 : i32
    %141 = vector.broadcast %c200_i32_90 : i32 to vector<140x1xi32>
    %142 = arith.cmpi slt, %138, %141 : vector<140x1xi32>
    %143 = arith.andi %140, %142 : vector<140x1xi1>
    %cst_91 = arith.constant 0.000000e+00 : f32
    %144 = vector.shape_cast %143 : vector<140x1xi1> to vector<140x1xi1>
    %145 = vector.broadcast %144 : vector<140x1xi1> to vector<140x128xi1>
    %146 = vector.broadcast %cst_91 : f32 to vector<140x128xf32>
    %147 = arith.select %145, %133, %146 : vector<140x128xi1>, vector<140x128xf32>
    %c6_92 = arith.constant 6 : index
    %c0_93 = arith.constant 0 : index
    %148 = vector.load %arg17[%c6_92, %c0_93] : memref<152x128xf32, #tpu.memory_space<vmem>>, vector<140x128xf32>
    tpu.vector_store %arg17[%c6_92, %c0_93], %147 {strides = array<i32>} : memref<152x128xf32, #tpu.memory_space<vmem>>, vector<140x128xf32>,
    %c6_94 = arith.constant 6 : index
    %c0_95 = arith.constant 0 : index
    %149 = vector.load %arg17[%c6_94, %c0_95] : memref<152x128xf32, #tpu.memory_space<vmem>>, vector<140x128xf32>
    %cst_96 = arith.constant 0.000000e+00 : f32
    %150 = vector.broadcast %cst_96 : f32 to vector<140x128xf32>
    %151 = arith.cmpf oge, %149, %150 : vector<140x128xf32>
    %cst_97 = arith.constant 1.000000e-01 : f32
    %152 = vector.broadcast %cst_97 : f32 to vector<140x128xf32>
    %153 = arith.mulf %152, %149 : vector<140x128xf32>
    %154 = arith.select %151, %149, %153 : vector<140x128xi1>, vector<140x128xf32>
    %155 = arith.truncf %154 : vector<140x128xf32> to vector<140x128xbf16>
    %c6_98 = arith.constant 6 : index
    %c0_99 = arith.constant 0 : index
    %156 = vector.load %arg18[%c6_98, %c0_99] : memref<152x128xbf16, #tpu.memory_space<vmem>>, vector<140x128xbf16>
    tpu.vector_store %arg18[%c6_98, %c0_99], %155 {strides = array<i32>} : memref<152x128xbf16, #tpu.memory_space<vmem>>, vector<140x128xbf16>,
    %c6_100 = arith.constant 6 : index
    %c0_101 = arith.constant 0 : index
    %157 = vector.load %arg18[%c6_100, %c0_101] : memref<152x128xbf16, #tpu.memory_space<vmem>>, vector<130x128xbf16>
    %c11 = arith.constant 11 : index
    %c0_102 = arith.constant 0 : index
    %158 = vector.load %arg18[%c11, %c0_102] : memref<152x128xbf16, #tpu.memory_space<vmem>>, vector<130x128xbf16>
    %159 = tpu.concatenate %157, %158 in 1 : vector<130x128xbf16>, vector<130x128xbf16> -> vector<130x256xbf16>
    %c0_103 = arith.constant 0 : index
    %c0_104 = arith.constant 0 : index
    %160 = vector.load %arg12[%c0_103, %c0_104] : memref<384x128xbf16, #tpu.memory_space<vmem>>, vector<256x128xbf16>
    %cst_105 = arith.constant dense<0.000000e+00> : vector<130x128xf32>
    %161 = tpu.matmul %159, %160, %cst_105 {dimension_numbers = #tpu.dot_dimension_numbers<[1], [0], [0], [1], [0, 0, 1, 1], [], []>} : vector<130x256xbf16>, vector<256x128xbf16>, vector<130x128xf32> -> vector<130x128xf32>
    %c16 = arith.constant 16 : index
    %c0_106 = arith.constant 0 : index
    %162 = vector.load %arg18[%c16, %c0_106] : memref<152x128xbf16, #tpu.memory_space<vmem>>, vector<130x128xbf16>
    %c256_107 = arith.constant 256 : index
    %c0_108 = arith.constant 0 : index
    %163 = vector.load %arg12[%c256_107, %c0_108] : memref<384x128xbf16, #tpu.memory_space<vmem>>, vector<128x128xbf16>
    %cst_109 = arith.constant dense<0.000000e+00> : vector<130x128xf32>
    %164 = tpu.matmul %162, %163, %cst_109 {dimension_numbers = #tpu.dot_dimension_numbers<[1], [0], [0], [1], [0, 0, 1, 1], [], []>} : vector<130x128xbf16>, vector<128x128xbf16>, vector<130x128xf32> -> vector<130x128xf32>
    %165 = arith.addf %161, %164 : vector<130x128xf32>
    %c0_110 = arith.constant 0 : index
    %c0_111 = arith.constant 0 : index
    %166 = vector.load %arg13[%c0_110, %c0_111] : memref<1x128xf32, #tpu.memory_space<vmem>>, vector<1x128xf32>
    %167 = vector.broadcast %166 : vector<1x128xf32> to vector<130x128xf32>
    %168 = arith.addf %165, %167 : vector<130x128xf32>
    %cst_112 = arith.constant 0.000000e+00 : f32
    %169 = vector.broadcast %cst_112 : f32 to vector<130x128xf32>
    %170 = arith.cmpf oge, %168, %169 : vector<130x128xf32>
    %cst_113 = arith.constant 1.000000e-01 : f32
    %171 = vector.broadcast %cst_113 : f32 to vector<130x128xf32>
    %172 = arith.mulf %171, %168 : vector<130x128xf32>
    %173 = arith.select %170, %168, %172 : vector<130x128xi1>, vector<130x128xf32>
    %c12_i32_114 = arith.constant 12 : i32
    %174 = arith.subi %1, %c12_i32_114 : i32
    %c6_i32_115 = arith.constant 6 : i32
    %175 = arith.addi %174, %c6_i32_115 : i32
    %c5_i32 = arith.constant 5 : i32
    %176 = arith.addi %175, %c5_i32 : i32
    %177 = tpu.iota {dimensions = array<i32: 0>} : vector<130x1xi32>
    %178 = vector.broadcast %176 : i32 to vector<130x1xi32>
    %179 = arith.addi %178, %177 : vector<130x1xi32>
    %c0_i32_116 = arith.constant 0 : i32
    %180 = vector.broadcast %c0_i32_116 : i32 to vector<130x1xi32>
    %181 = arith.cmpi sge, %179, %180 : vector<130x1xi32>
    %c200_i32_117 = arith.constant 200 : i32
    %182 = vector.broadcast %c200_i32_117 : i32 to vector<130x1xi32>
    %183 = arith.cmpi slt, %179, %182 : vector<130x1xi32>
    %184 = arith.andi %181, %183 : vector<130x1xi1>
    %cst_118 = arith.constant 0.000000e+00 : f32
    %185 = vector.shape_cast %184 : vector<130x1xi1> to vector<130x1xi1>
    %186 = vector.broadcast %185 : vector<130x1xi1> to vector<130x128xi1>
    %187 = vector.broadcast %cst_118 : f32 to vector<130x128xf32>
    %188 = arith.select %186, %173, %187 : vector<130x128xi1>, vector<130x128xf32>
    %189 = arith.truncf %188 : vector<130x128xf32> to vector<130x128xbf16>
    %c11_119 = arith.constant 11 : index
    %c0_120 = arith.constant 0 : index
    %190 = vector.load %arg18[%c11_119, %c0_120] : memref<152x128xbf16, #tpu.memory_space<vmem>>, vector<130x128xbf16>
    tpu.vector_store %arg18[%c11_119, %c0_120], %189 {strides = array<i32>} : memref<152x128xbf16, #tpu.memory_space<vmem>>, vector<130x128xbf16>,
    %c11_121 = arith.constant 11 : index
    %c0_122 = arith.constant 0 : index
    %191 = vector.load %arg18[%c11_121, %c0_122] : memref<152x128xbf16, #tpu.memory_space<vmem>>, vector<128x128xbf16>
    %c12 = arith.constant 12 : index
    %c0_123 = arith.constant 0 : index
    %192 = vector.load %arg18[%c12, %c0_123] : memref<152x128xbf16, #tpu.memory_space<vmem>>, vector<128x128xbf16>
    %193 = tpu.concatenate %191, %192 in 1 : vector<128x128xbf16>, vector<128x128xbf16> -> vector<128x256xbf16>
    %c0_124 = arith.constant 0 : index
    %c0_125 = arith.constant 0 : index
    %194 = vector.load %arg14[%c0_124, %c0_125] : memref<384x128xbf16, #tpu.memory_space<vmem>>, vector<256x128xbf16>
    %cst_126 = arith.constant dense<0.000000e+00> : vector<128x128xf32>
    %195 = tpu.matmul %193, %194, %cst_126 {dimension_numbers = #tpu.dot_dimension_numbers<[1], [0], [0], [1], [0, 0, 1, 1], [], []>} : vector<128x256xbf16>, vector<256x128xbf16>, vector<128x128xf32> -> vector<128x128xf32>
    %c13 = arith.constant 13 : index
    %c0_127 = arith.constant 0 : index
    %196 = vector.load %arg18[%c13, %c0_127] : memref<152x128xbf16, #tpu.memory_space<vmem>>, vector<128x128xbf16>
    %c256_128 = arith.constant 256 : index
    %c0_129 = arith.constant 0 : index
    %197 = vector.load %arg14[%c256_128, %c0_129] : memref<384x128xbf16, #tpu.memory_space<vmem>>, vector<128x128xbf16>
    %cst_130 = arith.constant dense<0.000000e+00> : vector<128x128xf32>
    %198 = tpu.matmul %196, %197, %cst_130 {dimension_numbers = #tpu.dot_dimension_numbers<[1], [0], [0], [1], [0, 0, 1, 1], [], []>} : vector<128x128xbf16>, vector<128x128xbf16>, vector<128x128xf32> -> vector<128x128xf32>
    %199 = arith.addf %195, %198 : vector<128x128xf32>
    %c0_131 = arith.constant 0 : index
    %c0_132 = arith.constant 0 : index
    %200 = vector.load %arg15[%c0_131, %c0_132] : memref<1x128xf32, #tpu.memory_space<vmem>>, vector<1x128xf32>
    %201 = vector.broadcast %200 : vector<1x128xf32> to vector<128x128xf32>
    %202 = arith.addf %199, %201 : vector<128x128xf32>
    %c12_133 = arith.constant 12 : index
    %c0_134 = arith.constant 0 : index
    %203 = vector.load %arg17[%c12_133, %c0_134] : memref<152x128xf32, #tpu.memory_space<vmem>>, vector<128x128xf32>
    %204 = arith.addf %203, %202 : vector<128x128xf32>
    %c12_i32_135 = arith.constant 12 : i32
    %205 = arith.subi %1, %c12_i32_135 : i32
    %c12_i32_136 = arith.constant 12 : i32
    %206 = arith.addi %205, %c12_i32_136 : i32
    %207 = tpu.iota {dimensions = array<i32: 0>} : vector<128x1xi32>
    %208 = vector.broadcast %206 : i32 to vector<128x1xi32>
    %209 = arith.addi %208, %207 : vector<128x1xi32>
    %c0_i32_137 = arith.constant 0 : i32
    %210 = vector.broadcast %c0_i32_137 : i32 to vector<128x1xi32>
    %211 = arith.cmpi sge, %209, %210 : vector<128x1xi32>
    %c200_i32_138 = arith.constant 200 : i32
    %212 = vector.broadcast %c200_i32_138 : i32 to vector<128x1xi32>
    %213 = arith.cmpi slt, %209, %212 : vector<128x1xi32>
    %214 = arith.andi %211, %213 : vector<128x1xi1>
    %cst_139 = arith.constant 0.000000e+00 : f32
    %215 = vector.shape_cast %214 : vector<128x1xi1> to vector<128x1xi1>
    %216 = vector.broadcast %215 : vector<128x1xi1> to vector<128x128xi1>
    %217 = vector.broadcast %cst_139 : f32 to vector<128x128xf32>
    %218 = arith.select %216, %204, %217 : vector<128x128xi1>, vector<128x128xf32>
    %c12_140 = arith.constant 12 : index
    %c0_141 = arith.constant 0 : index
    %219 = vector.load %arg17[%c12_140, %c0_141] : memref<152x128xf32, #tpu.memory_space<vmem>>, vector<128x128xf32>
    tpu.vector_store %arg17[%c12_140, %c0_141], %218 {strides = array<i32>} : memref<152x128xf32, #tpu.memory_space<vmem>>, vector<128x128xf32>,
    %c0_142 = arith.constant 0 : index
    %c0_143 = arith.constant 0 : index
    %c0_144 = arith.constant 0 : index
    %220 = vector.load %arg2[%c0_142, %c0_143, %c0_144] : memref<1x128x128xf32, #tpu.memory_space<vmem>>, vector<1x128x128xf32>
    %221 = vector.shape_cast %220 : vector<1x128x128xf32> to vector<128x128xf32>
    %c12_145 = arith.constant 12 : index
    %c0_146 = arith.constant 0 : index
    %222 = vector.load %arg17[%c12_145, %c0_146] : memref<152x128xf32, #tpu.memory_space<vmem>>, vector<128x128xf32>
    %223 = arith.addf %221, %222 : vector<128x128xf32>
    %c0_147 = arith.constant 0 : index
    %c0_148 = arith.constant 0 : index
    %c0_149 = arith.constant 0 : index
    %224 = vector.load %arg16[%c0_147, %c0_148, %c0_149] : memref<1x128x128xf32, #tpu.memory_space<vmem>>, vector<1x128x128xf32>
    %225 = vector.shape_cast %224 : vector<1x128x128xf32> to vector<128x128xf32>
    %226 = vector.shape_cast %223 : vector<128x128xf32> to vector<1x128x128xf32>
    tpu.vector_store %arg16[%c0_147, %c0_148, %c0_149], %226 {strides = array<i32>} : memref<1x128x128xf32, #tpu.memory_space<vmem>>, vector<1x128x128xf32>,
    return
  }
  func.func @transform_0(%arg0: i32, %arg1: i32) -> (i32, i32, i32) {
    %c0_i32 = arith.constant 0 : i32
    %c0_i32_0 = arith.constant 0 : i32
    return %arg0, %arg1, %c0_i32 : i32, i32, i32
  }
  func.func @transform_1(%arg0: i32, %arg1: i32) -> (i32, i32, i32) {
    %c0_i32 = arith.constant 0 : i32
    %c0_i32_0 = arith.constant 0 : i32
    %c0_i32_1 = arith.constant 0 : i32
    return %arg0, %c0_i32, %c0_i32_0 : i32, i32, i32
  }
  func.func @transform_2(%arg0: i32, %arg1: i32) -> (i32, i32) {
    %c0_i32 = arith.constant 0 : i32
    %c0_i32_0 = arith.constant 0 : i32
    %c0_i32_1 = arith.constant 0 : i32
    return %c0_i32, %c0_i32_0 : i32, i32
  }
  func.func @transform_3(%arg0: i32, %arg1: i32) -> (i32, i32) {
    %c0_i32 = arith.constant 0 : i32
    %c0_i32_0 = arith.constant 0 : i32
    %c0_i32_1 = arith.constant 0 : i32
    return %c0_i32, %c0_i32_0 : i32, i32
  }
  func.func @transform_4(%arg0: i32, %arg1: i32) -> (i32, i32) {
    %c0_i32 = arith.constant 0 : i32
    %c0_i32_0 = arith.constant 0 : i32
    %c0_i32_1 = arith.constant 0 : i32
    return %c0_i32, %c0_i32_0 : i32, i32
  }
  func.func @transform_5(%arg0: i32, %arg1: i32) -> (i32, i32) {
    %c0_i32 = arith.constant 0 : i32
    %c0_i32_0 = arith.constant 0 : i32
    %c0_i32_1 = arith.constant 0 : i32
    return %c0_i32, %c0_i32_0 : i32, i32
  }
  func.func @transform_6(%arg0: i32, %arg1: i32) -> (i32, i32) {
    %c0_i32 = arith.constant 0 : i32
    %c0_i32_0 = arith.constant 0 : i32
    %c0_i32_1 = arith.constant 0 : i32
    return %c0_i32, %c0_i32_0 : i32, i32
  }
  func.func @transform_7(%arg0: i32, %arg1: i32) -> (i32, i32) {
    %c0_i32 = arith.constant 0 : i32
    %c0_i32_0 = arith.constant 0 : i32
    %c0_i32_1 = arith.constant 0 : i32
    return %c0_i32, %c0_i32_0 : i32, i32
  }
  func.func @transform_8(%arg0: i32, %arg1: i32) -> (i32, i32) {
    %c0_i32 = arith.constant 0 : i32
    %c0_i32_0 = arith.constant 0 : i32
    %c0_i32_1 = arith.constant 0 : i32
    return %c0_i32, %c0_i32_0 : i32, i32
  }
  func.func @transform_9(%arg0: i32, %arg1: i32) -> (i32, i32) {
    %c0_i32 = arith.constant 0 : i32
    %c0_i32_0 = arith.constant 0 : i32
    %c0_i32_1 = arith.constant 0 : i32
    return %c0_i32, %c0_i32_0 : i32, i32
  }
  func.func @transform_10(%arg0: i32, %arg1: i32) -> (i32, i32) {
    %c0_i32 = arith.constant 0 : i32
    %c0_i32_0 = arith.constant 0 : i32
    %c0_i32_1 = arith.constant 0 : i32
    return %c0_i32, %c0_i32_0 : i32, i32
  }
  func.func @transform_11(%arg0: i32, %arg1: i32) -> (i32, i32) {
    %c0_i32 = arith.constant 0 : i32
    %c0_i32_0 = arith.constant 0 : i32
    %c0_i32_1 = arith.constant 0 : i32
    return %c0_i32, %c0_i32_0 : i32, i32
  }
  func.func @transform_12(%arg0: i32, %arg1: i32) -> (i32, i32) {
    %c0_i32 = arith.constant 0 : i32
    %c0_i32_0 = arith.constant 0 : i32
    %c0_i32_1 = arith.constant 0 : i32
    return %c0_i32, %c0_i32_0 : i32, i32
  }
  func.func @transform_13(%arg0: i32, %arg1: i32) -> (i32, i32) {
    %c0_i32 = arith.constant 0 : i32
    %c0_i32_0 = arith.constant 0 : i32
    %c0_i32_1 = arith.constant 0 : i32
    return %c0_i32, %c0_i32_0 : i32, i32
  }
  func.func @transform_14(%arg0: i32, %arg1: i32) -> (i32, i32, i32) {
    %c0_i32 = arith.constant 0 : i32
    %c0_i32_0 = arith.constant 0 : i32
    return %arg0, %arg1, %c0_i32 : i32, i32, i32
  }
}

</mosaic_0001>

<llo_original>
// kernel: tpu_custom_call.1
$region0: #{tpu_custom_call.1}
  #allocation0 [shape = 'u32[]', space=smem, size = 0x4, offset = 0x4, fixed_abs, tag = 'smem constant byte address 0x4 - core index']
  #allocation1 [shape = 'u32[144,128]{1,0:T(1,128)}', space=vmem, size = 0x12000, scoped, tag = 'internal scratch']
  #allocation2 [shape = 'f32[152,128]{1,0:T(8,128)}', space=vmem, size = 0x13000, scoped, tag = 'scratch operand']
  #allocation3 [shape = 'bf16[152,128]{1,0:T(8,128)(2,1)}', space=vmem, size = 0x9800, scoped, tag = 'scratch operand']
  %s0 = inlined_call_operand.hbm [shape: f32[2,256,128], index: 0, kind: input, shape index: {}, may-alias: {0,14}]
  %s1 = inlined_call_operand.vmem [shape: f32[2,292,128], index: 1, kind: input, shape index: {}]
  %s2 = inlined_call_operand.vmem [shape: bf16[384,128], index: 2, kind: input, shape index: {}]
  %s3 = inlined_call_operand.vmem [shape: f32[1,128], index: 3, kind: input, shape index: {}]
  %s4 = inlined_call_operand.vmem [shape: bf16[384,128], index: 4, kind: input, shape index: {}]
  %s5 = inlined_call_operand.vmem [shape: f32[1,128], index: 5, kind: input, shape index: {}]
  %s6 = inlined_call_operand.vmem [shape: bf16[384,128], index: 6, kind: input, shape index: {}]
  %s7 = inlined_call_operand.vmem [shape: f32[1,128], index: 7, kind: input, shape index: {}]
  %s8 = inlined_call_operand.vmem [shape: bf16[384,128], index: 8, kind: input, shape index: {}]
  %s9 = inlined_call_operand.vmem [shape: f32[1,128], index: 9, kind: input, shape index: {}]
  %s10 = inlined_call_operand.vmem [shape: bf16[384,128], index: 10, kind: input, shape index: {}]
  %s11 = inlined_call_operand.vmem [shape: f32[1,128], index: 11, kind: input, shape index: {}]
  %s12 = inlined_call_operand.vmem [shape: bf16[384,128], index: 12, kind: input, shape index: {}]
  %s13 = inlined_call_operand.vmem [shape: f32[1,128], index: 13, kind: input, shape index: {}]
  %s14 = inlined_call_operand.hbm [shape: f32[2,256,128], index: 14, kind: output, shape index: {}, may-alias: {0,14}]
  %s15 = sld [smem:[#allocation0]]
  $region93: #{tpu_custom_call.1} parent=0
    _
  %s17 = ssub.s32 1, %s15
  %s18 = scalar_select 0, %s17, %s15
  $region1: #{tpu_custom_call.1} parent=0
    #allocation4 [shape = 'u8[131072]{0}', space=vmem, size = 0x20000, scoped, tag = 'input window, operand 0']
    #allocation5 [shape = 's32[2]{0}', space=sflag, size = 0x8, scoped, tag = 'scoped memory for tpu_custom_call.1']
    #allocation6 [shape = 's32[2]{0}', space=sflag, size = 0x8, scoped, tag = 'scoped memory for tpu_custom_call.1']
    #allocation7 [shape = 'u8[131072]{0}', space=vmem, size = 0x20000, scoped, tag = 'output window, operand 0']
    %19 = vsyncpa [#allocation5], 0
    %s20 = scalar_lea.sflag [#allocation5], 1
    %21 = vsyncpa %s20, 0
    %22 = vsyncpa [#allocation6], 0
    %s23 = scalar_lea.sflag [#allocation6], 1
    %24 = vsyncpa %s23, 0
    loop: start=0, step=1, limit=6
    $region2: #{tpu_custom_call.1} parent=1 // loop_pre_header
      _
    $region3: #{tpu_custom_call.1} parent=1 // loop_header
      %s26 = sphi 0, %s30
      %p27 = scmp.ge.s32.totalorder %s26, 6
      %s33 = sphi 0, %s45
      %s34 = sphi 0, %s41
      %s35 = sphi 0, %s33
      %s36 = sphi 0, %s34
      %s37 = sphi 0, %s35
      %s38 = sphi 0, %s36
      %s50 = sphi 0, %s52
      %s53 = sphi 0, %s50
      %s54 = sphi 0, %s53
      %s70 = sphi 0, %s54
      %s76 = sphi 0, %s78
      %s79 = sphi 0, %s76
      %s80 = sphi 0, %s79
      %s96 = sphi 0, %s80
      %s100 = sphi 0, %s100
      %s102 = sphi 0, %s100
      %s103 = sphi 0, %s102
      %s117 = sphi 0, %s103
      %s121 = sphi 0, %s121
      %s123 = sphi 0, %s121
      %s124 = sphi 0, %s123
      %s138 = sphi 0, %s124
      %s142 = sphi 0, %s142
      %s144 = sphi 0, %s142
      %s145 = sphi 0, %s144
      %s159 = sphi 0, %s145
      %s163 = sphi 0, %s163
      %s165 = sphi 0, %s163
      %s166 = sphi 0, %s165
      %s180 = sphi 0, %s166
      %s184 = sphi 0, %s184
      %s186 = sphi 0, %s184
      %s187 = sphi 0, %s186
      %s201 = sphi 0, %s187
      %s205 = sphi 0, %s205
      %s207 = sphi 0, %s205
      %s208 = sphi 0, %s207
      %s222 = sphi 0, %s208
      %s226 = sphi 0, %s226
      %s228 = sphi 0, %s226
      %s229 = sphi 0, %s228
      %s243 = sphi 0, %s229
      %s247 = sphi 0, %s247
      %s249 = sphi 0, %s247
      %s250 = sphi 0, %s249
      %s264 = sphi 0, %s250
      %s268 = sphi 0, %s268
      %s270 = sphi 0, %s268
      %s271 = sphi 0, %s270
      %s285 = sphi 0, %s271
      %s289 = sphi 0, %s289
      %s291 = sphi 0, %s289
      %s292 = sphi 0, %s291
      %s306 = sphi 0, %s292
      %s310 = sphi 0, %s310
      %s312 = sphi 0, %s310
      %s313 = sphi 0, %s312
      %s327 = sphi 0, %s313
      %s331 = sphi 0, %s331
      %s333 = sphi 0, %s331
      %s334 = sphi 0, %s333
      %s348 = sphi 0, %s334
      %s356 = sphi 0, %s358
      %s359 = sphi 0, %s356
      %s360 = sphi 0, %s359
      %s376 = sphi 0, %s360
    $region4: #{tpu_custom_call.1} parent=1 // loop_header_branch
      %29 = sbr.rel (%p27) target = $region8
    $region5: #{tpu_custom_call.1} parent=1 // loop_body
      %s31 = ssub.s32 %s26, 1
      %s32 = ssub.s32 %s26, 2
      %s39 = sadd.s32 1, %s34
      %p40 = scmp.ge.s32.totalorder %s39, 2
      %s41 = scalar_select %p40, 0, %s39
      %s42 = sadd.s32 1, %s33
      %s43 = scalar_select %p40, %s42, %s33
      %p44 = scmp.ge.s32.totalorder %s43, 2
      %s45 = scalar_select %p44, 0, %s43
      %s46 = ssub.s32 %s33, %s45
      %s47 = ssub.s32 %s34, %s41
      %s48 = sor.u32 %s46, %s47
      %p49 = scmp.eq.s32.totalorder %s48, 0
      %s51 = sadd.s32 %s50, 1
      %s52 = scalar_select %p49, %s50, %s51
      %p55 = pneg %p49
      %p56 = scmp.eq.s32.totalorder %s26, 3
      %p57 = por %p55, %p56
      %p58 = scmp.ne.s32.totalorder %s50, %s53
      %p59 = scmp.eq.s32.totalorder %s26, 0
      %p60 = por %p58, %p59
      %p61 = scmp.ne.s32.totalorder %s50, %s53
      %p62 = scmp.eq.s32.totalorder %s31, 3
      %p63 = por %p61, %p62
      %p64 = scmp.ne.s32.totalorder %s53, %s54
      %p65 = scmp.eq.s32.totalorder %s31, 0
      %p66 = por %p64, %p65
      %p67 = scmp.ne.s32.totalorder %s53, %s54
      %p68 = scmp.eq.s32.totalorder %s32, 3
      %p69 = por %p67, %p68
      %p71 = scmp.ne.s32.totalorder %s54, %s70
      %p72 = scmp.eq.s32.totalorder %s32, 0
      %p73 = por %p71, %p72
      %s74 = ssub.s32 %s33, %s45
      %p75 = scmp.eq.s32.totalorder %s74, 0
      %s77 = sadd.s32 %s76, 1
      %s78 = scalar_select %p75, %s76, %s77
      %p81 = pneg %p75
      %p82 = scmp.eq.s32.totalorder %s26, 3
      %p83 = por %p81, %p82
      %p84 = scmp.ne.s32.totalorder %s76, %s79
      %p85 = scmp.eq.s32.totalorder %s26, 0
      %p86 = por %p84, %p85
      %p87 = scmp.ne.s32.totalorder %s76, %s79
      %p88 = scmp.eq.s32.totalorder %s31, 3
      %p89 = por %p87, %p88
      %p90 = scmp.ne.s32.totalorder %s79, %s80
      %p91 = scmp.eq.s32.totalorder %s31, 0
      %p92 = por %p90, %p91
      %p93 = scmp.ne.s32.totalorder %s79, %s80
      %p94 = scmp.eq.s32.totalorder %s32, 3
      %p95 = por %p93, %p94
      %p97 = scmp.ne.s32.totalorder %s80, %s96
      %p98 = scmp.eq.s32.totalorder %s32, 0
      %p99 = por %p97, %p98
      %s101 = sadd.s32 %s100, 1
      %p104 = scmp.eq.s32.totalorder %s26, 3
      %p105 = scmp.ne.s32.totalorder %s100, %s102
      %p106 = scmp.eq.s32.totalorder %s26, 0
      %p107 = por %p105, %p106
      %p108 = scmp.ne.s32.totalorder %s100, %s102
      %p109 = scmp.eq.s32.totalorder %s31, 3
      %p110 = por %p108, %p109
      %p111 = scmp.ne.s32.totalorder %s102, %s103
      %p112 = scmp.eq.s32.totalorder %s31, 0
      %p113 = por %p111, %p112
      %p114 = scmp.ne.s32.totalorder %s102, %s103
      %p115 = scmp.eq.s32.totalorder %s32, 3
      %p116 = por %p114, %p115
      %p118 = scmp.ne.s32.totalorder %s103, %s117
      %p119 = scmp.eq.s32.totalorder %s32, 0
      %p120 = por %p118, %p119
      %s122 = sadd.s32 %s121, 1
      %p125 = scmp.eq.s32.totalorder %s26, 3
      %p126 = scmp.ne.s32.totalorder %s121, %s123
      %p127 = scmp.eq.s32.totalorder %s26, 0
      %p128 = por %p126, %p127
      %p129 = scmp.ne.s32.totalorder %s121, %s123
      %p130 = scmp.eq.s32.totalorder %s31, 3
      %p131 = por %p129, %p130
      %p132 = scmp.ne.s32.totalorder %s123, %s124
      %p133 = scmp.eq.s32.totalorder %s31, 0
      %p134 = por %p132, %p133
      %p135 = scmp.ne.s32.totalorder %s123, %s124
      %p136 = scmp.eq.s32.totalorder %s32, 3
      %p137 = por %p135, %p136
      %p139 = scmp.ne.s32.totalorder %s124, %s138
      %p140 = scmp.eq.s32.totalorder %s32, 0
      %p141 = por %p139, %p140
      %s143 = sadd.s32 %s142, 1
      %p146 = scmp.eq.s32.totalorder %s26, 3
      %p147 = scmp.ne.s32.totalorder %s142, %s144
      %p148 = scmp.eq.s32.totalorder %s26, 0
      %p149 = por %p147, %p148
      %p150 = scmp.ne.s32.totalorder %s142, %s144
      %p151 = scmp.eq.s32.totalorder %s31, 3
      %p152 = por %p150, %p151
      %p153 = scmp.ne.s32.totalorder %s144, %s145
      %p154 = scmp.eq.s32.totalorder %s31, 0
      %p155 = por %p153, %p154
      %p156 = scmp.ne.s32.totalorder %s144, %s145
      %p157 = scmp.eq.s32.totalorder %s32, 3
      %p158 = por %p156, %p157
      %p160 = scmp.ne.s32.totalorder %s145, %s159
      %p161 = scmp.eq.s32.totalorder %s32, 0
      %p162 = por %p160, %p161
      %s164 = sadd.s32 %s163, 1
      %p167 = scmp.eq.s32.totalorder %s26, 3
      %p168 = scmp.ne.s32.totalorder %s163, %s165
      %p169 = scmp.eq.s32.totalorder %s26, 0
      %p170 = por %p168, %p169
      %p171 = scmp.ne.s32.totalorder %s163, %s165
      %p172 = scmp.eq.s32.totalorder %s31, 3
      %p173 = por %p171, %p172
      %p174 = scmp.ne.s32.totalorder %s165, %s166
      %p175 = scmp.eq.s32.totalorder %s31, 0
      %p176 = por %p174, %p175
      %p177 = scmp.ne.s32.totalorder %s165, %s166
      %p178 = scmp.eq.s32.totalorder %s32, 3
      %p179 = por %p177, %p178
      %p181 = scmp.ne.s32.totalorder %s166, %s180
      %p182 = scmp.eq.s32.totalorder %s32, 0
      %p183 = por %p181, %p182
      %s185 = sadd.s32 %s184, 1
      %p188 = scmp.eq.s32.totalorder %s26, 3
      %p189 = scmp.ne.s32.totalorder %s184, %s186
      %p190 = scmp.eq.s32.totalorder %s26, 0
      %p191 = por %p189, %p190
      %p192 = scmp.ne.s32.totalorder %s184, %s186
      %p193 = scmp.eq.s32.totalorder %s31, 3
      %p194 = por %p192, %p193
      %p195 = scmp.ne.s32.totalorder %s186, %s187
      %p196 = scmp.eq.s32.totalorder %s31, 0
      %p197 = por %p195, %p196
      %p198 = scmp.ne.s32.totalorder %s186, %s187
      %p199 = scmp.eq.s32.totalorder %s32, 3
      %p200 = por %p198, %p199
      %p202 = scmp.ne.s32.totalorder %s187, %s201
      %p203 = scmp.eq.s32.totalorder %s32, 0
      %p204 = por %p202, %p203
      %s206 = sadd.s32 %s205, 1
      %p209 = scmp.eq.s32.totalorder %s26, 3
      %p210 = scmp.ne.s32.totalorder %s205, %s207
      %p211 = scmp.eq.s32.totalorder %s26, 0
      %p212 = por %p210, %p211
      %p213 = scmp.ne.s32.totalorder %s205, %s207
      %p214 = scmp.eq.s32.totalorder %s31, 3
      %p215 = por %p213, %p214
      %p216 = scmp.ne.s32.totalorder %s207, %s208
      %p217 = scmp.eq.s32.totalorder %s31, 0
      %p218 = por %p216, %p217
      %p219 = scmp.ne.s32.totalorder %s207, %s208
      %p220 = scmp.eq.s32.totalorder %s32, 3
      %p221 = por %p219, %p220
      %p223 = scmp.ne.s32.totalorder %s208, %s222
      %p224 = scmp.eq.s32.totalorder %s32, 0
      %p225 = por %p223, %p224
      %s227 = sadd.s32 %s226, 1
      %p230 = scmp.eq.s32.totalorder %s26, 3
      %p231 = scmp.ne.s32.totalorder %s226, %s228
      %p232 = scmp.eq.s32.totalorder %s26, 0
      %p233 = por %p231, %p232
      %p234 = scmp.ne.s32.totalorder %s226, %s228
      %p235 = scmp.eq.s32.totalorder %s31, 3
      %p236 = por %p234, %p235
      %p237 = scmp.ne.s32.totalorder %s228, %s229
      %p238 = scmp.eq.s32.totalorder %s31, 0
      %p239 = por %p237, %p238
      %p240 = scmp.ne.s32.totalorder %s228, %s229
      %p241 = scmp.eq.s32.totalorder %s32, 3
      %p242 = por %p240, %p241
      %p244 = scmp.ne.s32.totalorder %s229, %s243
      %p245 = scmp.eq.s32.totalorder %s32, 0
      %p246 = por %p244, %p245
      %s248 = sadd.s32 %s247, 1
      %p251 = scmp.eq.s32.totalorder %s26, 3
      %p252 = scmp.ne.s32.totalorder %s247, %s249
      %p253 = scmp.eq.s32.totalorder %s26, 0
      %p254 = por %p252, %p253
      %p255 = scmp.ne.s32.totalorder %s247, %s249
      %p256 = scmp.eq.s32.totalorder %s31, 3
      %p257 = por %p255, %p256
      %p258 = scmp.ne.s32.totalorder %s249, %s250
      %p259 = scmp.eq.s32.totalorder %s31, 0
      %p260 = por %p258, %p259
      %p261 = scmp.ne.s32.totalorder %s249, %s250
      %p262 = scmp.eq.s32.totalorder %s32, 3
      %p263 = por %p261, %p262
      %p265 = scmp.ne.s32.totalorder %s250, %s264
      %p266 = scmp.eq.s32.totalorder %s32, 0
      %p267 = por %p265, %p266
      %s269 = sadd.s32 %s268, 1
      %p272 = scmp.eq.s32.totalorder %s26, 3
      %p273 = scmp.ne.s32.totalorder %s268, %s270
      %p274 = scmp.eq.s32.totalorder %s26, 0
      %p275 = por %p273, %p274
      %p276 = scmp.ne.s32.totalorder %s268, %s270
      %p277 = scmp.eq.s32.totalorder %s31, 3
      %p278 = por %p276, %p277
      %p279 = scmp.ne.s32.totalorder %s270, %s271
      %p280 = scmp.eq.s32.totalorder %s31, 0
      %p281 = por %p279, %p280
      %p282 = scmp.ne.s32.totalorder %s270, %s271
      %p283 = scmp.eq.s32.totalorder %s32, 3
      %p284 = por %p282, %p283
      %p286 = scmp.ne.s32.totalorder %s271, %s285
      %p287 = scmp.eq.s32.totalorder %s32, 0
      %p288 = por %p286, %p287
      %s290 = sadd.s32 %s289, 1
      %p293 = scmp.eq.s32.totalorder %s26, 3
      %p294 = scmp.ne.s32.totalorder %s289, %s291
      %p295 = scmp.eq.s32.totalorder %s26, 0
      %p296 = por %p294, %p295
      %p297 = scmp.ne.s32.totalorder %s289, %s291
      %p298 = scmp.eq.s32.totalorder %s31, 3
      %p299 = por %p297, %p298
      %p300 = scmp.ne.s32.totalorder %s291, %s292
      %p301 = scmp.eq.s32.totalorder %s31, 0
      %p302 = por %p300, %p301
      %p303 = scmp.ne.s32.totalorder %s291, %s292
      %p304 = scmp.eq.s32.totalorder %s32, 3
      %p305 = por %p303, %p304
      %p307 = scmp.ne.s32.totalorder %s292, %s306
      %p308 = scmp.eq.s32.totalorder %s32, 0
      %p309 = por %p307, %p308
      %s311 = sadd.s32 %s310, 1
      %p314 = scmp.eq.s32.totalorder %s26, 3
      %p315 = scmp.ne.s32.totalorder %s310, %s312
      %p316 = scmp.eq.s32.totalorder %s26, 0
      %p317 = por %p315, %p316
      %p318 = scmp.ne.s32.totalorder %s310, %s312
      %p319 = scmp.eq.s32.totalorder %s31, 3
      %p320 = por %p318, %p319
      %p321 = scmp.ne.s32.totalorder %s312, %s313
      %p322 = scmp.eq.s32.totalorder %s31, 0
      %p323 = por %p321, %p322
      %p324 = scmp.ne.s32.totalorder %s312, %s313
      %p325 = scmp.eq.s32.totalorder %s32, 3
      %p326 = por %p324, %p325
      %p328 = scmp.ne.s32.totalorder %s313, %s327
      %p329 = scmp.eq.s32.totalorder %s32, 0
      %p330 = por %p328, %p329
      %s332 = sadd.s32 %s331, 1
      %p335 = scmp.eq.s32.totalorder %s26, 3
      %p336 = scmp.ne.s32.totalorder %s331, %s333
      %p337 = scmp.eq.s32.totalorder %s26, 0
      %p338 = por %p336, %p337
      %p339 = scmp.ne.s32.totalorder %s331, %s333
      %p340 = scmp.eq.s32.totalorder %s31, 3
      %p341 = por %p339, %p340
      %p342 = scmp.ne.s32.totalorder %s333, %s334
      %p343 = scmp.eq.s32.totalorder %s31, 0
      %p344 = por %p342, %p343
      %p345 = scmp.ne.s32.totalorder %s333, %s334
      %p346 = scmp.eq.s32.totalorder %s32, 3
      %p347 = por %p345, %p346
      %p349 = scmp.ne.s32.totalorder %s334, %s348
      %p350 = scmp.eq.s32.totalorder %s32, 0
      %p351 = por %p349, %p350
      %s352 = ssub.s32 %s33, %s45
      %s353 = ssub.s32 %s34, %s41
      %s354 = sor.u32 %s352, %s353
      %p355 = scmp.eq.s32.totalorder %s354, 0
      %s357 = sadd.s32 %s356, 1
      %s358 = scalar_select %p355, %s356, %s357
      %p361 = pneg %p355
      %p362 = scmp.eq.s32.totalorder %s26, 3
      %p363 = por %p361, %p362
      %p364 = scmp.ne.s32.totalorder %s356, %s359
      %p365 = scmp.eq.s32.totalorder %s26, 0
      %p366 = por %p364, %p365
      %p367 = scmp.ne.s32.totalorder %s356, %s359
      %p368 = scmp.eq.s32.totalorder %s31, 3
      %p369 = por %p367, %p368
      %p370 = scmp.ne.s32.totalorder %s359, %s360
      %p371 = scmp.eq.s32.totalorder %s31, 0
      %p372 = por %p370, %p371
      %p373 = scmp.ne.s32.totalorder %s359, %s360
      %p374 = scmp.eq.s32.totalorder %s32, 3
      %p375 = por %p373, %p374
      %p377 = scmp.ne.s32.totalorder %s360, %s376
      %p378 = scmp.eq.s32.totalorder %s32, 0
      %p379 = por %p377, %p378
      %p380 = scmp.le.s32.totalorder 1, %s26
      %p381 = scmp.lt.s32.totalorder %s26, 5
      %p382 = pnand %p380, %p381
      %p383 = pneg %p382
      // Predicated region
      $region9: #{tpu_custom_call.1} parent=5 // pred_check
        _
      $region10: #{tpu_custom_call.1} parent=5 // pred_check_branch
        %385 = sbr.rel (%p382) target = $region12
      $region11: #{tpu_custom_call.1} parent=5 // pred_region
        %s386 = ssub.s32 %s26, 1
        // Predicated region
        $region13: #{tpu_custom_call.1} parent=11 // pred_check
          %p387 = pneg %p113
        $region14: #{tpu_custom_call.1} parent=11 // pred_check_branch
          %389 = sbr.rel (%p387) target = $region16
        $region15: #{tpu_custom_call.1} parent=11 // pred_region
          _
        $region16: #{tpu_custom_call.1} parent=11 // pred_fallthru
          _
        // Predicated region
        $region17: #{tpu_custom_call.1} parent=11 // pred_check
          %p390 = pneg %p134
        $region18: #{tpu_custom_call.1} parent=11 // pred_check_branch
          %392 = sbr.rel (%p390) target = $region20
        $region19: #{tpu_custom_call.1} parent=11 // pred_region
          _
        $region20: #{tpu_custom_call.1} parent=11 // pred_fallthru
          _
        // Predicated region
        $region21: #{tpu_custom_call.1} parent=11 // pred_check
          %p393 = pneg %p155
        $region22: #{tpu_custom_call.1} parent=11 // pred_check_branch
          %395 = sbr.rel (%p393) target = $region24
        $region23: #{tpu_custom_call.1} parent=11 // pred_region
          _
        $region24: #{tpu_custom_call.1} parent=11 // pred_fallthru
          _
        // Predicated region
        $region25: #{tpu_custom_call.1} parent=11 // pred_check
          %p396 = pneg %p176
        $region26: #{tpu_custom_call.1} parent=11 // pred_check_branch
          %398 = sbr.rel (%p396) target = $region28
        $region27: #{tpu_custom_call.1} parent=11 // pred_region
          _
        $region28: #{tpu_custom_call.1} parent=11 // pred_fallthru
          _
        // Predicated region
        $region29: #{tpu_custom_call.1} parent=11 // pred_check
          %p399 = pneg %p197
        $region30: #{tpu_custom_call.1} parent=11 // pred_check_branch
          %401 = sbr.rel (%p399) target = $region32
        $region31: #{tpu_custom_call.1} parent=11 // pred_region
          _
        $region32: #{tpu_custom_call.1} parent=11 // pred_fallthru
          _
        // Predicated region
        $region33: #{tpu_custom_call.1} parent=11 // pred_check
          %p402 = pneg %p218
        $region34: #{tpu_custom_call.1} parent=11 // pred_check_branch
          %404 = sbr.rel (%p402) target = $region36
        $region35: #{tpu_custom_call.1} parent=11 // pred_region
          _
        $region36: #{tpu_custom_call.1} parent=11 // pred_fallthru
          _
        // Predicated region
        $region37: #{tpu_custom_call.1} parent=11 // pred_check
          %p405 = pneg %p239
        $region38: #{tpu_custom_call.1} parent=11 // pred_check_branch
          %407 = sbr.rel (%p405) target = $region40
        $region39: #{tpu_custom_call.1} parent=11 // pred_region
          _
        $region40: #{tpu_custom_call.1} parent=11 // pred_fallthru
          _
        // Predicated region
        $region41: #{tpu_custom_call.1} parent=11 // pred_check
          %p408 = pneg %p260
        $region42: #{tpu_custom_call.1} parent=11 // pred_check_branch
          %410 = sbr.rel (%p408) target = $region44
        $region43: #{tpu_custom_call.1} parent=11 // pred_region
          _
        $region44: #{tpu_custom_call.1} parent=11 // pred_fallthru
          _
        // Predicated region
        $region45: #{tpu_custom_call.1} parent=11 // pred_check
          %p411 = pneg %p281
        $region46: #{tpu_custom_call.1} parent=11 // pred_check_branch
          %413 = sbr.rel (%p411) target = $region48
        $region47: #{tpu_custom_call.1} parent=11 // pred_region
          _
        $region48: #{tpu_custom_call.1} parent=11 // pred_fallthru
          _
        // Predicated region
        $region49: #{tpu_custom_call.1} parent=11 // pred_check
          %p414 = pneg %p302
        $region50: #{tpu_custom_call.1} parent=11 // pred_check_branch
          %416 = sbr.rel (%p414) target = $region52
        $region51: #{tpu_custom_call.1} parent=11 // pred_region
          _
        $region52: #{tpu_custom_call.1} parent=11 // pred_fallthru
          _
        // Predicated region
        $region53: #{tpu_custom_call.1} parent=11 // pred_check
          %p417 = pneg %p323
        $region54: #{tpu_custom_call.1} parent=11 // pred_check_branch
          %419 = sbr.rel (%p417) target = $region56
        $region55: #{tpu_custom_call.1} parent=11 // pred_region
          _
        $region56: #{tpu_custom_call.1} parent=11 // pred_fallthru
          _
        // Predicated region
        $region57: #{tpu_custom_call.1} parent=11 // pred_check
          %p420 = pneg %p344
        $region58: #{tpu_custom_call.1} parent=11 // pred_check_branch
          %422 = sbr.rel (%p420) target = $region60
        $region59: #{tpu_custom_call.1} parent=11 // pred_region
          _
        $region60: #{tpu_custom_call.1} parent=11 // pred_fallthru
          _
      $region12: #{tpu_custom_call.1} parent=5 // pred_fallthru
        _
      %p423 = scmp.lt.s32.totalorder %s26, 4
      // Predicated region
      $region61: #{tpu_custom_call.1} parent=5 // pred_check
        %p424 = pneg %p423
      $region62: #{tpu_custom_call.1} parent=5 // pred_check_branch
        %426 = sbr.rel (%p424) target = $region64
      $region63: #{tpu_custom_call.1} parent=5 // pred_region
        // Predicated region
        $region65: #{tpu_custom_call.1} parent=63 // pred_check
          %p427 = pneg %p60
        $region66: #{tpu_custom_call.1} parent=63 // pred_check_branch
          %429 = sbr.rel (%p427) target = $region68
        $region67: #{tpu_custom_call.1} parent=63 // pred_region
          %s430 = sand.u32 %s50, 1
          %s431 = scalar_lea.sflag [#allocation5], %s430
          %s432 = sand.u32 %s50, 1
          %s433 = smul.addr %s432, 128
          %s434 = scalar_lea.vmem [#allocation4], %s433
          %s435 = smul.u32 16, %s34
          %s437 = ssub.s32 2048, 2048
          %438 = vsyncadd %s431, %s437
          %s439 = smul.addr %s33, 32
          %s440 = sadd.s32 %s435, %s439
          %s441 = smul.addr %s440, 128
          %s442 = scalar_lea.hbm %s0, %s441
          %s443 = sshll.u32 %s434, 4
          %s444 = int_to_ptr.vmem [resolvable:$true] %s443
          %449 = dma.hbm_to_vmem [thread:$0]  %s442, 2048, %s444, %s431, 128, 128, 8
        $region68: #{tpu_custom_call.1} parent=63 // pred_fallthru
          _
        // Predicated region
        $region69: #{tpu_custom_call.1} parent=63 // pred_check
          %p450 = pneg %p86
        $region70: #{tpu_custom_call.1} parent=63 // pred_check_branch
          %452 = sbr.rel (%p450) target = $region72
        $region71: #{tpu_custom_call.1} parent=63 // pred_region
          %p453 = scmp.lt.s32.totalorder %s33, 1
          %s454 = scalar_select %p453, %s33, 1
          %s455 = smul.addr %s454, 37
          %s456 = smul.addr %s455, 8
          %s457 = scalar_lea.vmem %s1, %s456
        $region72: #{tpu_custom_call.1} parent=63 // pred_fallthru
          _
      $region64: #{tpu_custom_call.1} parent=5 // pred_fallthru
        _
      %p458 = scmp.le.s32.totalorder 1, %s26
      %p459 = scmp.lt.s32.totalorder %s26, 5
      %p460 = pnand %p458, %p459
      %p461 = pneg %p460
      // Predicated region
      $region73: #{tpu_custom_call.1} parent=5 // pred_check
        _
      $region74: #{tpu_custom_call.1} parent=5 // pred_check_branch
        %463 = sbr.rel (%p460) target = $region76
      $region75: #{tpu_custom_call.1} parent=5 // pred_region
        %s464 = ssub.s32 %s26, 1
        %s465 = sand.u32 %s53, 1
        %s466 = scalar_lea.sflag [#allocation5], %s465
        %s467 = sand.u32 %s53, 1
        %s468 = smul.addr %s467, 128
        %s469 = scalar_lea.vmem [#allocation4], %s468
        // Predicated region
        $region77: #{tpu_custom_call.1} parent=75 // pred_check
          %p470 = pneg %p66
        $region78: #{tpu_custom_call.1} parent=75 // pred_check_branch
          %472 = sbr.rel (%p470) target = $region80
        $region79: #{tpu_custom_call.1} parent=75 // pred_region
          %473 = dma.done %s466, 2048
        $region80: #{tpu_custom_call.1} parent=75 // pred_fallthru
          _
        %s474 = sand.u32 %s53, 1
        %s475 = scalar_lea.sflag [#allocation5], %s474
        %s476 = sand.u32 %s53, 1
        %s477 = smul.addr %s476, 128
        %s478 = scalar_lea.vmem [#allocation4], %s477
        %p479 = pneg %p66
        %p480 = pneg %p63
        %p481 = scmp.lt.s32.totalorder %s35, 1
        %s482 = scalar_select %p481, %s35, 1
        %s483 = smul.addr %s482, 37
        %s484 = smul.addr %s483, 8
        %s485 = scalar_lea.vmem %s1, %s484
        %p486 = pneg %p92
        %p487 = pneg %p89
        %p488 = pneg %p113
        %p489 = pneg %p110
        %p490 = pneg %p134
        %p491 = pneg %p131
        %p492 = pneg %p155
        %p493 = pneg %p152
        %p494 = pneg %p176
        %p495 = pneg %p173
        %p496 = pneg %p197
        %p497 = pneg %p194
        %p498 = pneg %p218
        %p499 = pneg %p215
        %p500 = pneg %p239
        %p501 = pneg %p236
        %p502 = pneg %p260
        %p503 = pneg %p257
        %p504 = pneg %p281
        %p505 = pneg %p278
        %p506 = pneg %p302
        %p507 = pneg %p299
        %p508 = pneg %p323
        %p509 = pneg %p320
        %p510 = pneg %p344
        %p511 = pneg %p341
        %p512 = pneg %p372
        %p513 = pneg %p369
        %s514 = sand.u32 %s359, 1
        %s515 = scalar_lea.sflag [#allocation6], %s514
        %s516 = sand.u32 %s359, 1
        %s517 = smul.addr %s516, 128
        %s518 = scalar_lea.vmem [#allocation7], %s517
        %s519 = smul.u32 16, %s36
        %p520 = scmp.lt.s32.totalorder %s35, 1
        %s521 = scalar_select %p520, %s35, 1
        %s522 = smul.addr %s521, 37
        %s523 = smul.addr %s522, 8
        %s524 = scalar_lea.vmem %s1, %s523
        %s525 = smul.u32 16, %s36
        %s527 = smul.u32 %s36, 128
        %s528 = sadd.s32 %s527, 6
        %s529 = scalar_lea.vmem %s524, %s528
        %v530 = vld [vmem:[%s529] sm:$0xff]
        %v531 = vld [vmem:[%s529 + $0x8] sm:$0xff]
        %v532 = vld [vmem:[%s529 + $0x10] sm:$0xff]
        %v533 = vld [vmem:[%s529 + $0x18] sm:$0xff]
        %v534 = vld [vmem:[%s529 + $0x20] sm:$0xff]
        %v535 = vld [vmem:[%s529 + $0x28] sm:$0xff]
        %v536 = vld [vmem:[%s529 + $0x30] sm:$0xff]
        %v537 = vld [vmem:[%s529 + $0x38] sm:$0xff]
        %v538 = vld [vmem:[%s529 + $0x40] sm:$0xff]
        %v539 = vld [vmem:[%s529 + $0x48] sm:$0xff]
        %v540 = vld [vmem:[%s529 + $0x50] sm:$0xff]
        %v541 = vld [vmem:[%s529 + $0x58] sm:$0xff]
        %v542 = vld [vmem:[%s529 + $0x60] sm:$0xff]
        %v543 = vld [vmem:[%s529 + $0x68] sm:$0xff]
        %v544 = vld [vmem:[%s529 + $0x70] sm:$0xff]
        %v545 = vld [vmem:[%s529 + $0x78] sm:$0xff]
        %v546 = vld [vmem:[%s529 + $0x80] sm:$0xff]
        %v547 = vld [vmem:[%s529 + $0x88] sm:$0xff]
        %v548 = vld [vmem:[%s529 + $0x90] sm:$0xff]
        %549 = vst [vmem:[#allocation2] sm:$0xff] %v530
        %550 = vst [vmem:[#allocation2 + $0x8] sm:$0xff] %v531
        %551 = vst [vmem:[#allocation2 + $0x10] sm:$0xff] %v532
        %552 = vst [vmem:[#allocation2 + $0x18] sm:$0xff] %v533
        %553 = vst [vmem:[#allocation2 + $0x20] sm:$0xff] %v534
        %554 = vst [vmem:[#allocation2 + $0x28] sm:$0xff] %v535
        %555 = vst [vmem:[#allocation2 + $0x30] sm:$0xff] %v536
        %556 = vst [vmem:[#allocation2 + $0x38] sm:$0xff] %v537
        %557 = vst [vmem:[#allocation2 + $0x40] sm:$0xff] %v538
        %558 = vst [vmem:[#allocation2 + $0x48] sm:$0xff] %v539
        %559 = vst [vmem:[#allocation2 + $0x50] sm:$0xff] %v540
        %560 = vst [vmem:[#allocation2 + $0x58] sm:$0xff] %v541
        %561 = vst [vmem:[#allocation2 + $0x60] sm:$0xff] %v542
        %562 = vst [vmem:[#allocation2 + $0x68] sm:$0xff] %v543
        %563 = vst [vmem:[#allocation2 + $0x70] sm:$0xff] %v544
        %564 = vst [vmem:[#allocation2 + $0x78] sm:$0xff] %v545
        %565 = vst [vmem:[#allocation2 + $0x80] sm:$0xff] %v546
        %566 = vst [vmem:[#allocation2 + $0x88] sm:$0xff] %v547
        %567 = vst [vmem:[#allocation2 + $0x90] sm:$0xff] %v548
        %v568 = vld [vmem:[#allocation2] sm:$0xff]
        %v569 = vld [vmem:[#allocation2 + $0x8] sm:$0xff]
        %v570 = vld [vmem:[#allocation2 + $0x10] sm:$0xff]
        %v571 = vld [vmem:[#allocation2 + $0x18] sm:$0xff]
        %v572 = vld [vmem:[#allocation2 + $0x20] sm:$0xff]
        %v573 = vld [vmem:[#allocation2 + $0x28] sm:$0xff]
        %v574 = vld [vmem:[#allocation2 + $0x30] sm:$0xff]
        %v575 = vld [vmem:[#allocation2 + $0x38] sm:$0xff]
        %v576 = vld [vmem:[#allocation2 + $0x40] sm:$0xff]
        %v577 = vld [vmem:[#allocation2 + $0x48] sm:$0xff]
        %v578 = vld [vmem:[#allocation2 + $0x50] sm:$0xff]
        %v579 = vld [vmem:[#allocation2 + $0x58] sm:$0xff]
        %v580 = vld [vmem:[#allocation2 + $0x60] sm:$0xff]
        %v581 = vld [vmem:[#allocation2 + $0x68] sm:$0xff]
        %v582 = vld [vmem:[#allocation2 + $0x70] sm:$0xff]
        %v583 = vld [vmem:[#allocation2 + $0x78] sm:$0xff]
        %v584 = vld [vmem:[#allocation2 + $0x80] sm:$0xff]
        %v585 = vld [vmem:[#allocation2 + $0x88] sm:$0xff]
        %v586 = vld [vmem:[#allocation2 + $0x90] sm:$0xff]
        %vm587 = vcmp.ge.f32.partialorder %v568, 0.0
        %vm588 = vcmp.ge.f32.partialorder %v569, 0.0
        %vm589 = vcmp.ge.f32.partialorder %v570, 0.0
        %vm590 = vcmp.ge.f32.partialorder %v571, 0.0
        %vm591 = vcmp.ge.f32.partialorder %v572, 0.0
        %vm592 = vcmp.ge.f32.partialorder %v573, 0.0
        %vm593 = vcmp.ge.f32.partialorder %v574, 0.0
        %vm594 = vcmp.ge.f32.partialorder %v575, 0.0
        %vm595 = vcmp.ge.f32.partialorder %v576, 0.0
        %vm596 = vcmp.ge.f32.partialorder %v577, 0.0
        %vm597 = vcmp.ge.f32.partialorder %v578, 0.0
        %vm598 = vcmp.ge.f32.partialorder %v579, 0.0
        %vm599 = vcmp.ge.f32.partialorder %v580, 0.0
        %vm600 = vcmp.ge.f32.partialorder %v581, 0.0
        %vm601 = vcmp.ge.f32.partialorder %v582, 0.0
        %vm602 = vcmp.ge.f32.partialorder %v583, 0.0
        %vm603 = vcmp.ge.f32.partialorder %v584, 0.0
        %vm604 = vcmp.ge.f32.partialorder %v585, 0.0
        %vm605 = vcmp.ge.f32.partialorder %v586, 0.0
        %v606 = vmul.f32 %v568, 0.1
        %v607 = vmul.f32 %v569, 0.1
        %v608 = vmul.f32 %v570, 0.1
        %v609 = vmul.f32 %v571, 0.1
        %v610 = vmul.f32 %v572, 0.1
        %v611 = vmul.f32 %v573, 0.1
        %v612 = vmul.f32 %v574, 0.1
        %v613 = vmul.f32 %v575, 0.1
        %v614 = vmul.f32 %v576, 0.1
        %v615 = vmul.f32 %v577, 0.1
        %v616 = vmul.f32 %v578, 0.1
        %v617 = vmul.f32 %v579, 0.1
        %v618 = vmul.f32 %v580, 0.1
        %v619 = vmul.f32 %v581, 0.1
        %v620 = vmul.f32 %v582, 0.1
        %v621 = vmul.f32 %v583, 0.1
        %v622 = vmul.f32 %v584, 0.1
        %v623 = vmul.f32 %v585, 0.1
        %v624 = vmul.f32 %v586, 0.1
        %v625 = vsel %vm587, %v568, %v606
        %v626 = vsel %vm588, %v569, %v607
        %v627 = vsel %vm589, %v570, %v608
        %v628 = vsel %vm590, %v571, %v609
        %v629 = vsel %vm591, %v572, %v610
        %v630 = vsel %vm592, %v573, %v611
        %v631 = vsel %vm593, %v574, %v612
        %v632 = vsel %vm594, %v575, %v613
        %v633 = vsel %vm595, %v576, %v614
        %v634 = vsel %vm596, %v577, %v615
        %v635 = vsel %vm597, %v578, %v616
        %v636 = vsel %vm598, %v579, %v617
        %v637 = vsel %vm599, %v580, %v618
        %v638 = vsel %vm600, %v581, %v619
        %v639 = vsel %vm601, %v582, %v620
        %v640 = vsel %vm602, %v583, %v621
        %v641 = vsel %vm603, %v584, %v622
        %v642 = vsel %vm604, %v585, %v623
        %v643 = vsel %vm605, %v586, %v624
        %v644 = vpack.c.bf16 %v626, %v625
        %v645 = vpack.c.bf16 %v628, %v627
        %v646 = vpack.c.bf16 %v630, %v629
        %v647 = vpack.c.bf16 %v632, %v631
        %v648 = vpack.c.bf16 %v634, %v633
        %v649 = vpack.c.bf16 %v636, %v635
        %v650 = vpack.c.bf16 %v638, %v637
        %v651 = vpack.c.bf16 %v640, %v639
        %v652 = vpack.c.bf16 %v642, %v641
        %v653 = vpack.c.bf16 %v643, %v643
        %v664 = vunpack.c.l.b16 %v644
        %v665 = vunpack.c.h.b16 %v644
        %v666 = vunpack.c.l.b16 %v645
        %v667 = vunpack.c.h.b16 %v645
        %v668 = vunpack.c.l.b16 %v646
        %v669 = vunpack.c.h.b16 %v646
        %v670 = vunpack.c.l.b16 %v647
        %v671 = vunpack.c.h.b16 %v647
        %v672 = vunpack.c.l.b16 %v648
        %v673 = vunpack.c.h.b16 %v648
        %v674 = vunpack.c.l.b16 %v649
        %v675 = vunpack.c.h.b16 %v649
        %v676 = vunpack.c.l.b16 %v650
        %v677 = vunpack.c.h.b16 %v650
        %v678 = vunpack.c.l.b16 %v651
        %v679 = vunpack.c.h.b16 %v651
        %v680 = vunpack.c.l.b16 %v652
        %v681 = vunpack.c.h.b16 %v652
        %v682 = vunpack.c.l.b16 %v653
        %v683 = vpack.c.b16 %v664, %v664
        %v684 = vpack.c.b16 %v665, %v665
        %v685 = vpack.c.b16 %v666, %v666
        %v686 = vpack.c.b16 %v667, %v667
        %v687 = vpack.c.b16 %v668, %v668
        %v688 = vpack.c.b16 %v669, %v669
        %v689 = vpack.c.b16 %v670, %v670
        %v690 = vpack.c.b16 %v671, %v671
        %v691 = vpack.c.b16 %v672, %v672
        %v692 = vpack.c.b16 %v673, %v673
        %v693 = vpack.c.b16 %v674, %v674
        %v694 = vpack.c.b16 %v675, %v675
        %v695 = vpack.c.b16 %v676, %v676
        %v696 = vpack.c.b16 %v677, %v677
        %v697 = vpack.c.b16 %v678, %v678
        %v698 = vpack.c.b16 %v679, %v679
        %v699 = vpack.c.b16 %v680, %v680
        %v700 = vpack.c.b16 %v681, %v681
        %v701 = vpack.c.b16 %v682, %v682
        %721 = vst [vmem:[#allocation3] sm:$0xf] %v683
        %722 = vst [vmem:[#allocation3 + $0x4] sm:$0xf] %v684
        %723 = vst [vmem:[#allocation3 + $0x8] sm:$0xf] %v685
        %724 = vst [vmem:[#allocation3 + $0xc] sm:$0xf] %v686
        %725 = vst [vmem:[#allocation3 + $0x10] sm:$0xf] %v687
        %726 = vst [vmem:[#allocation3 + $0x14] sm:$0xf] %v688
        %727 = vst [vmem:[#allocation3 + $0x18] sm:$0xf] %v689
        %728 = vst [vmem:[#allocation3 + $0x1c] sm:$0xf] %v690
        %729 = vst [vmem:[#allocation3 + $0x20] sm:$0xf] %v691
        %730 = vst [vmem:[#allocation3 + $0x24] sm:$0xf] %v692
        %731 = vst [vmem:[#allocation3 + $0x28] sm:$0xf] %v693
        %732 = vst [vmem:[#allocation3 + $0x2c] sm:$0xf] %v694
        %733 = vst [vmem:[#allocation3 + $0x30] sm:$0xf] %v695
        %734 = vst [vmem:[#allocation3 + $0x34] sm:$0xf] %v696
        %735 = vst [vmem:[#allocation3 + $0x38] sm:$0xf] %v697
        %736 = vst [vmem:[#allocation3 + $0x3c] sm:$0xf] %v698
        %737 = vst [vmem:[#allocation3 + $0x40] sm:$0xf] %v699
        %738 = vst [vmem:[#allocation3 + $0x44] sm:$0xf] %v700
        %739 = vst [vmem:[#allocation3 + $0x48] sm:$0xf] %v701
        %v740 = vld [vmem:[#allocation3] sm:$0xf]
        %v741 = vld [vmem:[#allocation3 + $0x4] sm:$0xf]
        %v742 = vld [vmem:[#allocation3 + $0x8] sm:$0xf]
        %v743 = vld [vmem:[#allocation3 + $0xc] sm:$0xf]
        %v744 = vld [vmem:[#allocation3 + $0x10] sm:$0xf]
        %v745 = vld [vmem:[#allocation3 + $0x14] sm:$0xf]
        %v746 = vld [vmem:[#allocation3 + $0x18] sm:$0xf]
        %v747 = vld [vmem:[#allocation3 + $0x1c] sm:$0xf]
        %v748 = vld [vmem:[#allocation3 + $0x20] sm:$0xf]
        %v749 = vld [vmem:[#allocation3 + $0x24] sm:$0xf]
        %v750 = vld [vmem:[#allocation3 + $0x28] sm:$0xf]
        %v751 = vld [vmem:[#allocation3 + $0x2c] sm:$0xf]
        %v752 = vld [vmem:[#allocation3 + $0x30] sm:$0xf]
        %v753 = vld [vmem:[#allocation3 + $0x34] sm:$0xf]
        %v754 = vld [vmem:[#allocation3 + $0x38] sm:$0xf]
        %v755 = vld [vmem:[#allocation3 + $0x3c] sm:$0xf]
        %v756 = vld [vmem:[#allocation3 + $0x40] sm:$0xf]
        %v757 = vld [vmem:[#allocation3 + $0x44] sm:$0xf]
        %v758 = vld [vmem:[#allocation3 + $0x48] sm:$0x7]
        %v759 = vld [vmem:[#allocation3 + $0x48] sm:$0xf]
        %v779 = vunpack.c.l.b16 %v740
        %v780 = vunpack.c.l.b16 %v741
        %v781 = vunpack.c.l.b16 %v742
        %v782 = vunpack.c.l.b16 %v743
        %v783 = vunpack.c.l.b16 %v744
        %v784 = vunpack.c.l.b16 %v745
        %v785 = vunpack.c.l.b16 %v746
        %v786 = vunpack.c.l.b16 %v747
        %v787 = vunpack.c.l.b16 %v748
        %v788 = vunpack.c.l.b16 %v749
        %v789 = vunpack.c.l.b16 %v750
        %v790 = vunpack.c.l.b16 %v751
        %v791 = vunpack.c.l.b16 %v752
        %v792 = vunpack.c.l.b16 %v753
        %v793 = vunpack.c.l.b16 %v754
        %v794 = vunpack.c.l.b16 %v755
        %v795 = vunpack.c.l.b16 %v756
        %v796 = vunpack.c.l.b16 %v757
        %v797 = vunpack.c.l.b16 %v758
        %v798 = vpack.c.b16 %v780, %v779
        %v799 = vpack.c.b16 %v782, %v781
        %v800 = vpack.c.b16 %v784, %v783
        %v801 = vpack.c.b16 %v786, %v785
        %v802 = vpack.c.b16 %v788, %v787
        %v803 = vpack.c.b16 %v790, %v789
        %v804 = vpack.c.b16 %v792, %v791
        %v805 = vpack.c.b16 %v794, %v793
        %v806 = vpack.c.b16 %v796, %v795
        %v807 = vpack.c.b16 %v797, %v797
        %v819 = vunpack.c.l.b16 %v759
        %v820 = vpack.c.b16 %v819, %v819
        %vm821 = vsmask.f32 7424
        %v823 = vshrl.u32 %v798, 16
        %v825 = vshll.u32 %v798, 16
        %v827 = vrot.slane %v825, 1
        %v828 = vor.u32 %v823, %v827
        %v830 = vshll.u32 %v799, 16
        %v832 = vrot.slane %v830, 1
        %v833 = vsel %vm821, %v828, %v832
        %v834 = vshrl.u32 %v799, 16
        %v836 = vor.u32 %v834, %v832
        %v838 = vshll.u32 %v800, 16
        %v840 = vrot.slane %v838, 1
        %v841 = vsel %vm821, %v836, %v840
        %v842 = vshrl.u32 %v800, 16
        %v844 = vor.u32 %v842, %v840
        %v846 = vshll.u32 %v801, 16
        %v848 = vrot.slane %v846, 1
        %v849 = vsel %vm821, %v844, %v848
        %v850 = vshrl.u32 %v801, 16
        %v852 = vor.u32 %v850, %v848
        %v854 = vshll.u32 %v802, 16
        %v856 = vrot.slane %v854, 1
        %v857 = vsel %vm821, %v852, %v856
        %v858 = vshrl.u32 %v802, 16
        %v860 = vor.u32 %v858, %v856
        %v862 = vshll.u32 %v803, 16
        %v864 = vrot.slane %v862, 1
        %v865 = vsel %vm821, %v860, %v864
        %v866 = vshrl.u32 %v803, 16
        %v868 = vor.u32 %v866, %v864
        %v870 = vshll.u32 %v804, 16
        %v872 = vrot.slane %v870, 1
        %v873 = vsel %vm821, %v868, %v872
        %v874 = vshrl.u32 %v804, 16
        %v876 = vor.u32 %v874, %v872
        %v878 = vshll.u32 %v805, 16
        %v880 = vrot.slane %v878, 1
        %v881 = vsel %vm821, %v876, %v880
        %v882 = vshrl.u32 %v805, 16
        %v884 = vor.u32 %v882, %v880
        %v886 = vshll.u32 %v806, 16
        %v888 = vrot.slane %v886, 1
        %v889 = vsel %vm821, %v884, %v888
        %v890 = vshrl.u32 %v806, 16
        %v892 = vor.u32 %v890, %v888
        %v894 = vshll.u32 %v820, 16
        %v896 = vrot.slane %v894, 1
        %v897 = vsel %vm821, %v892, %v896
        %v898 = vshrl.u32 %v820, 16
        %v900 = vor.u32 %v898, %v896
        %v911 = vld [vmem:[%s2] sm:$0xf]
        %v912 = vld [vmem:[%s2 + $0x4] sm:$0xf]
        %v913 = vld [vmem:[%s2 + $0x8] sm:$0xf]
        %v914 = vld [vmem:[%s2 + $0xc] sm:$0xf]
        %v915 = vld [vmem:[%s2 + $0x10] sm:$0xf]
        %v916 = vld [vmem:[%s2 + $0x14] sm:$0xf]
        %v917 = vld [vmem:[%s2 + $0x18] sm:$0xf]
        %v918 = vld [vmem:[%s2 + $0x1c] sm:$0xf]
        %v919 = vld [vmem:[%s2 + $0x20] sm:$0xf]
        %v920 = vld [vmem:[%s2 + $0x24] sm:$0xf]
        %v921 = vld [vmem:[%s2 + $0x28] sm:$0xf]
        %v922 = vld [vmem:[%s2 + $0x2c] sm:$0xf]
        %v923 = vld [vmem:[%s2 + $0x30] sm:$0xf]
        %v924 = vld [vmem:[%s2 + $0x34] sm:$0xf]
        %v925 = vld [vmem:[%s2 + $0x38] sm:$0xf]
        %v926 = vld [vmem:[%s2 + $0x3c] sm:$0xf]
        %v927 = vld [vmem:[%s2 + $0x40] sm:$0xf]
        %v928 = vld [vmem:[%s2 + $0x44] sm:$0xf]
        %v929 = vld [vmem:[%s2 + $0x48] sm:$0xf]
        %v930 = vld [vmem:[%s2 + $0x4c] sm:$0xf]
        %v931 = vld [vmem:[%s2 + $0x50] sm:$0xf]
        %v932 = vld [vmem:[%s2 + $0x54] sm:$0xf]
        %v933 = vld [vmem:[%s2 + $0x58] sm:$0xf]
        %v934 = vld [vmem:[%s2 + $0x5c] sm:$0xf]
        %v935 = vld [vmem:[%s2 + $0x60] sm:$0xf]
        %v936 = vld [vmem:[%s2 + $0x64] sm:$0xf]
        %v937 = vld [vmem:[%s2 + $0x68] sm:$0xf]
        %v938 = vld [vmem:[%s2 + $0x6c] sm:$0xf]
        %v939 = vld [vmem:[%s2 + $0x70] sm:$0xf]
        %v940 = vld [vmem:[%s2 + $0x74] sm:$0xf]
        %v941 = vld [vmem:[%s2 + $0x78] sm:$0xf]
        %v942 = vld [vmem:[%s2 + $0x7c] sm:$0xf]
        %v943 = vld [vmem:[#allocation3] sm:$0xe]
        %v944 = vld [vmem:[%s2 + $0x80] sm:$0xf]
        %v945 = vld [vmem:[%s2 + $0x84] sm:$0xf]
        %v946 = vld [vmem:[%s2 + $0x88] sm:$0xf]
        %v947 = vld [vmem:[%s2 + $0x8c] sm:$0xf]
        %v948 = vld [vmem:[%s2 + $0x90] sm:$0xf]
        %v949 = vld [vmem:[%s2 + $0x94] sm:$0xf]
        %v950 = vld [vmem:[%s2 + $0x98] sm:$0xf]
        %v951 = vld [vmem:[%s2 + $0x9c] sm:$0xf]
        %v952 = vld [vmem:[%s2 + $0xa0] sm:$0xf]
        %v953 = vld [vmem:[%s2 + $0xa4] sm:$0xf]
        %v954 = vld [vmem:[%s2 + $0xa8] sm:$0xf]
        %v955 = vld [vmem:[%s2 + $0xac] sm:$0xf]
        %v956 = vld [vmem:[%s2 + $0xb0] sm:$0xf]
        %v957 = vld [vmem:[%s2 + $0xb4] sm:$0xf]
        %v958 = vld [vmem:[%s2 + $0xb8] sm:$0xf]
        %v959 = vld [vmem:[%s2 + $0xbc] sm:$0xf]
        %v961 = vunpack.c.l.b16 %v943
        %v962 = vpack.c.b16 %v780, %v961
        %vm963 = vcmask 1046528
        %v964 = vrot.slane %v962, 1
        %v965 = vrot.slane %v799, 1
        %v966 = vsel %vm963, %v964, %v965
        %v967 = vrot.slane %v800, 1
        %v968 = vsel %vm963, %v965, %v967
        %v969 = vrot.slane %v801, 1
        %v970 = vsel %vm963, %v967, %v969
        %v971 = vrot.slane %v802, 1
        %v972 = vsel %vm963, %v969, %v971
        %v973 = vrot.slane %v803, 1
        %v974 = vsel %vm963, %v971, %v973
        %v975 = vrot.slane %v804, 1
        %v976 = vsel %vm963, %v973, %v975
        %v977 = vrot.slane %v805, 1
        %v978 = vsel %vm963, %v975, %v977
        %v979 = vrot.slane %v806, 1
        %v980 = vsel %vm963, %v977, %v979
        %v981 = vrot.slane %v820, 1
        %v982 = vsel %vm963, %v979, %v981
        %v1009 = vunpack.c.l.b16 %v944
        %v1010 = vunpack.c.l.b16 %v945
        %v1011 = vunpack.c.l.b16 %v946
        %v1012 = vunpack.c.l.b16 %v947
        %v1013 = vunpack.c.l.b16 %v948
        %v1014 = vunpack.c.l.b16 %v949
        %v1015 = vunpack.c.l.b16 %v950
        %v1016 = vunpack.c.l.b16 %v951
        %v1017 = vunpack.c.l.b16 %v952
        %v1018 = vunpack.c.l.b16 %v953
        %v1019 = vunpack.c.l.b16 %v954
        %v1020 = vunpack.c.l.b16 %v955
        %v1021 = vunpack.c.l.b16 %v956
        %v1022 = vunpack.c.l.b16 %v957
        %v1023 = vunpack.c.l.b16 %v958
        %v1024 = vunpack.c.l.b16 %v959
        %v1025 = vpack.c.b16 %v1010, %v1009
        %v1026 = vpack.c.b16 %v1012, %v1011
        %v1027 = vpack.c.b16 %v1014, %v1013
        %v1028 = vpack.c.b16 %v1016, %v1015
        %v1029 = vpack.c.b16 %v1018, %v1017
        %v1030 = vpack.c.b16 %v1020, %v1019
        %v1031 = vpack.c.b16 %v1022, %v1021
        %v1032 = vpack.c.b16 %v1024, %v1023
        %1041 = vmatprep.subr.bf16.mxu0 0
        %1042 = vmatpush1.bf16.msra.mxu0 %v1032
        %1043 = vmatprep.subr.bf16.mxu0 0
        %1044 = vmatpush1.bf16.msra.mxu0 %v1031
        %1045 = vmatprep.subr.bf16.mxu0 0
        %1046 = vmatpush1.bf16.msra.mxu0 %v1030
        %1047 = vmatprep.subr.bf16.mxu0 0
        %1048 = vmatpush1.bf16.msra.mxu0 %v1029
        %1049 = vmatprep.subr.bf16.mxu0 0
        %1050 = vmatpush1.bf16.msra.mxu0 %v1028
        %1051 = vmatprep.subr.bf16.mxu0 0
        %1052 = vmatpush1.bf16.msra.mxu0 %v1027
        %1053 = vmatprep.subr.bf16.mxu0 0
        %1054 = vmatpush1.bf16.msra.mxu0 %v1026
        %1055 = vmatprep.subr.bf16.mxu0 0
        %1056 = vmatpush1.bf16.msra.mxu0 %v1025
        %1057 = vmatprep.subr.bf16.mxu0 0
        %1058 = vmatpush2.bf16.msra.mxu0 0
        %1059 = vmatprep.subr.bf16.mxu0 0
        %1060 = vmatpush2.bf16.msra.mxu0 0
        %1061 = vmatprep.subr.bf16.mxu0 0
        %1062 = vmatpush2.bf16.msra.mxu0 0
        %1063 = vmatprep.subr.bf16.mxu0 0
        %1064 = vmatpush2.bf16.msra.mxu0 0
        %1065 = vmatprep.subr.bf16.mxu0 0
        %1066 = vmatpush2.bf16.msra.mxu0 0
        %1067 = vmatprep.subr.bf16.mxu0 0
        %1068 = vmatpush2.bf16.msra.mxu0 0
        %1069 = vmatprep.subr.bf16.mxu0 0
        %1070 = vmatpush2.bf16.msra.mxu0 0
        %1071 = vmatprep.subr.bf16.mxu0 0
        %1072 = vmatpush2.bf16.msra.mxu0 0
        %1073 = vmatprep.mubr.bf16.mxu0 0
        %1074 = vmatmul.mubr.bf16.gmra.mxu0 %v966
        %v1075 = vpop.f32.mrf.mxu0
        %v1076 = vadd.f32 0.0, %v1075
        %v1077 = vpop.f32.mrf.mxu0
        %v1078 = vpop.f32.mrf.mxu0
        %v1079 = vadd.f32 0.0, %v1078
        %v1080 = vpop.f32.mrf.mxu0
        %1081 = vmatprep.mubr.bf16.mxu0 0
        %1082 = vmatmul.mubr.bf16.gmra.mxu0 %v968
        %v1083 = vpop.f32.mrf.mxu0
        %v1084 = vadd.f32 0.0, %v1083
        %v1085 = vpop.f32.mrf.mxu0
        %v1086 = vpop.f32.mrf.mxu0
        %v1087 = vadd.f32 0.0, %v1086
        %v1088 = vpop.f32.mrf.mxu0
        %1089 = vmatprep.mubr.bf16.mxu0 0
        %1090 = vmatmul.mubr.bf16.gmra.mxu0 %v970
        %v1091 = vpop.f32.mrf.mxu0
        %v1092 = vadd.f32 0.0, %v1091
        %v1093 = vpop.f32.mrf.mxu0
        %v1094 = vpop.f32.mrf.mxu0
        %v1095 = vadd.f32 0.0, %v1094
        %v1096 = vpop.f32.mrf.mxu0
        %1097 = vmatprep.mubr.bf16.mxu0 0
        %1098 = vmatmul.mubr.bf16.gmra.mxu0 %v972
        %v1099 = vpop.f32.mrf.mxu0
        %v1100 = vadd.f32 0.0, %v1099
        %v1101 = vpop.f32.mrf.mxu0
        %v1102 = vpop.f32.mrf.mxu0
        %v1103 = vadd.f32 0.0, %v1102
        %v1104 = vpop.f32.mrf.mxu0
        %1105 = vmatprep.mubr.bf16.mxu0 0
        %1106 = vmatmul.mubr.bf16.gmra.mxu0 %v974
        %v1107 = vpop.f32.mrf.mxu0
        %v1108 = vadd.f32 0.0, %v1107
        %v1109 = vpop.f32.mrf.mxu0
        %v1110 = vpop.f32.mrf.mxu0
        %v1111 = vadd.f32 0.0, %v1110
        %v1112 = vpop.f32.mrf.mxu0
        %1113 = vmatprep.mubr.bf16.mxu0 0
        %1114 = vmatmul.mubr.bf16.gmra.mxu0 %v976
        %v1115 = vpop.f32.mrf.mxu0
        %v1116 = vadd.f32 0.0, %v1115
        %v1117 = vpop.f32.mrf.mxu0
        %v1118 = vpop.f32.mrf.mxu0
        %v1119 = vadd.f32 0.0, %v1118
        %v1120 = vpop.f32.mrf.mxu0
        %1121 = vmatprep.mubr.bf16.mxu0 0
        %1122 = vmatmul.mubr.bf16.gmra.mxu0 %v978
        %v1123 = vpop.f32.mrf.mxu0
        %v1124 = vadd.f32 0.0, %v1123
        %v1125 = vpop.f32.mrf.mxu0
        %v1126 = vpop.f32.mrf.mxu0
        %v1127 = vadd.f32 0.0, %v1126
        %v1128 = vpop.f32.mrf.mxu0
        %1129 = vmatprep.mubr.bf16.mxu0 0
        %1130 = vmatmul.mubr.bf16.gmra.mxu0 %v980
        %v1131 = vpop.f32.mrf.mxu0
        %v1132 = vadd.f32 0.0, %v1131
        %v1133 = vpop.f32.mrf.mxu0
        %v1134 = vpop.f32.mrf.mxu0
        %v1135 = vadd.f32 0.0, %v1134
        %v1136 = vpop.f32.mrf.mxu0
        %1137 = vmatprep.mubr.bf16.mxu0 0
        %1138 = vmatmul.mubr.bf16.gmra.mxu0 %v982
        %v1139 = vpop.f32.mrf.mxu0
        %v1140 = vadd.f32 0.0, %v1139
        %v1141 = vpop.f32.mrf.mxu0
        %v1142 = vpop.f32.mrf.mxu0
        %v1143 = vadd.f32 0.0, %v1142
        %v1144 = vpop.f32.mrf.mxu0
        %1145 = vmatprep.mubr.bf16.mxu0 0
        %1146 = vmatmul.mubr.bf16.gmra.mxu0 %v981
        %v1147 = vpop.f32.mrf.mxu0
        %v1148 = vadd.f32 0.0, %v1147
        %v1149 = vpop.f32.mrf.mxu0
        %v1150 = vpop.f32.mrf.mxu0
        %v1151 = vpop.f32.mrf.mxu0
        %1152 = vdwg.mxu0
        %v1185 = vunpack.c.l.b16 %v911
        %v1186 = vunpack.c.l.b16 %v912
        %v1187 = vunpack.c.l.b16 %v913
        %v1188 = vunpack.c.l.b16 %v914
        %v1189 = vunpack.c.l.b16 %v915
        %v1190 = vunpack.c.l.b16 %v916
        %v1191 = vunpack.c.l.b16 %v917
        %v1192 = vunpack.c.l.b16 %v918
        %v1193 = vunpack.c.l.b16 %v919
        %v1194 = vunpack.c.l.b16 %v920
        %v1195 = vunpack.c.l.b16 %v921
        %v1196 = vunpack.c.l.b16 %v922
        %v1197 = vunpack.c.l.b16 %v923
        %v1198 = vunpack.c.l.b16 %v924
        %v1199 = vunpack.c.l.b16 %v925
        %v1200 = vunpack.c.l.b16 %v926
        %v1201 = vunpack.c.l.b16 %v927
        %v1202 = vunpack.c.l.b16 %v928
        %v1203 = vunpack.c.l.b16 %v929
        %v1204 = vunpack.c.l.b16 %v930
        %v1205 = vunpack.c.l.b16 %v931
        %v1206 = vunpack.c.l.b16 %v932
        %v1207 = vunpack.c.l.b16 %v933
        %v1208 = vunpack.c.l.b16 %v934
        %v1209 = vunpack.c.l.b16 %v935
        %v1210 = vunpack.c.l.b16 %v936
        %v1211 = vunpack.c.l.b16 %v937
        %v1212 = vunpack.c.l.b16 %v938
        %v1213 = vunpack.c.l.b16 %v939
        %v1214 = vunpack.c.l.b16 %v940
        %v1215 = vunpack.c.l.b16 %v941
        %v1216 = vunpack.c.l.b16 %v942
        %v1217 = vpack.c.b16 %v1186, %v1185
        %v1218 = vpack.c.b16 %v1188, %v1187
        %v1219 = vpack.c.b16 %v1190, %v1189
        %v1220 = vpack.c.b16 %v1192, %v1191
        %v1221 = vpack.c.b16 %v1194, %v1193
        %v1222 = vpack.c.b16 %v1196, %v1195
        %v1223 = vpack.c.b16 %v1198, %v1197
        %v1224 = vpack.c.b16 %v1200, %v1199
        %v1225 = vpack.c.b16 %v1202, %v1201
        %v1226 = vpack.c.b16 %v1204, %v1203
        %v1227 = vpack.c.b16 %v1206, %v1205
        %v1228 = vpack.c.b16 %v1208, %v1207
        %v1229 = vpack.c.b16 %v1210, %v1209
        %v1230 = vpack.c.b16 %v1212, %v1211
        %v1231 = vpack.c.b16 %v1214, %v1213
        %v1232 = vpack.c.b16 %v1216, %v1215
        %1249 = vmatprep.subr.bf16.mxu0 0
        %1250 = vmatpush1.bf16.msra.mxu0 %v1224
        %1251 = vmatprep.subr.bf16.mxu0 0
        %1252 = vmatpush1.bf16.msra.mxu0 %v1223
        %1253 = vmatprep.subr.bf16.mxu0 0
        %1254 = vmatpush1.bf16.msra.mxu0 %v1222
        %1255 = vmatprep.subr.bf16.mxu0 0
        %1256 = vmatpush1.bf16.msra.mxu0 %v1221
        %1257 = vmatprep.subr.bf16.mxu0 0
        %1258 = vmatpush1.bf16.msra.mxu0 %v1220
        %1259 = vmatprep.subr.bf16.mxu0 0
        %1260 = vmatpush1.bf16.msra.mxu0 %v1219
        %1261 = vmatprep.subr.bf16.mxu0 0
        %1262 = vmatpush1.bf16.msra.mxu0 %v1218
        %1263 = vmatprep.subr.bf16.mxu0 0
        %1264 = vmatpush1.bf16.msra.mxu0 %v1217
        %1265 = vmatprep.subr.bf16.mxu0 0
        %1266 = vmatpush2.bf16.msra.mxu0 %v1232
        %1267 = vmatprep.subr.bf16.mxu0 0
        %1268 = vmatpush2.bf16.msra.mxu0 %v1231
        %1269 = vmatprep.subr.bf16.mxu0 0
        %1270 = vmatpush2.bf16.msra.mxu0 %v1230
        %1271 = vmatprep.subr.bf16.mxu0 0
        %1272 = vmatpush2.bf16.msra.mxu0 %v1229
        %1273 = vmatprep.subr.bf16.mxu0 0
        %1274 = vmatpush2.bf16.msra.mxu0 %v1228
        %1275 = vmatprep.subr.bf16.mxu0 0
        %1276 = vmatpush2.bf16.msra.mxu0 %v1227
        %1277 = vmatprep.subr.bf16.mxu0 0
        %1278 = vmatpush2.bf16.msra.mxu0 %v1226
        %1279 = vmatprep.subr.bf16.mxu0 0
        %1280 = vmatpush2.bf16.msra.mxu0 %v1225
        %1281 = vmatprep.mubr.bf16.mxu0 %v833
        %1282 = vmatmul.mubr.bf16.gmra.mxu0 %v798
        %v1283 = vpop.f32.mrf.mxu0
        %v1284 = vadd.f32 %v1076, %v1283
        %v1285 = vpop.f32.mrf.mxu0
        %v1286 = vpop.f32.mrf.mxu0
        %v1287 = vadd.f32 %v1079, %v1286
        %v1288 = vpop.f32.mrf.mxu0
        %1289 = vmatprep.mubr.bf16.mxu0 %v841
        %1290 = vmatmul.mubr.bf16.gmra.mxu0 %v799
        %v1291 = vpop.f32.mrf.mxu0
        %v1292 = vadd.f32 %v1084, %v1291
        %v1293 = vpop.f32.mrf.mxu0
        %v1294 = vpop.f32.mrf.mxu0
        %v1295 = vadd.f32 %v1087, %v1294
        %v1296 = vpop.f32.mrf.mxu0
        %1297 = vmatprep.mubr.bf16.mxu0 %v849
        %1298 = vmatmul.mubr.bf16.gmra.mxu0 %v800
        %v1299 = vpop.f32.mrf.mxu0
        %v1300 = vadd.f32 %v1092, %v1299
        %v1301 = vpop.f32.mrf.mxu0
        %v1302 = vpop.f32.mrf.mxu0
        %v1303 = vadd.f32 %v1095, %v1302
        %v1304 = vpop.f32.mrf.mxu0
        %1305 = vmatprep.mubr.bf16.mxu0 %v857
        %1306 = vmatmul.mubr.bf16.gmra.mxu0 %v801
        %v1307 = vpop.f32.mrf.mxu0
        %v1308 = vadd.f32 %v1100, %v1307
        %v1309 = vpop.f32.mrf.mxu0
        %v1310 = vpop.f32.mrf.mxu0
        %v1311 = vadd.f32 %v1103, %v1310
        %v1312 = vpop.f32.mrf.mxu0
        %1313 = vmatprep.mubr.bf16.mxu0 %v865
        %1314 = vmatmul.mubr.bf16.gmra.mxu0 %v802
        %v1315 = vpop.f32.mrf.mxu0
        %v1316 = vadd.f32 %v1108, %v1315
        %v1317 = vpop.f32.mrf.mxu0
        %v1318 = vpop.f32.mrf.mxu0
        %v1319 = vadd.f32 %v1111, %v1318
        %v1320 = vpop.f32.mrf.mxu0
        %1321 = vmatprep.mubr.bf16.mxu0 %v873
        %1322 = vmatmul.mubr.bf16.gmra.mxu0 %v803
        %v1323 = vpop.f32.mrf.mxu0
        %v1324 = vadd.f32 %v1116, %v1323
        %v1325 = vpop.f32.mrf.mxu0
        %v1326 = vpop.f32.mrf.mxu0
        %v1327 = vadd.f32 %v1119, %v1326
        %v1328 = vpop.f32.mrf.mxu0
        %1329 = vmatprep.mubr.bf16.mxu0 %v881
        %1330 = vmatmul.mubr.bf16.gmra.mxu0 %v804
        %v1331 = vpop.f32.mrf.mxu0
        %v1332 = vadd.f32 %v1124, %v1331
        %v1333 = vpop.f32.mrf.mxu0
        %v1334 = vpop.f32.mrf.mxu0
        %v1335 = vadd.f32 %v1127, %v1334
        %v1336 = vpop.f32.mrf.mxu0
        %1337 = vmatprep.mubr.bf16.mxu0 %v889
        %1338 = vmatmul.mubr.bf16.gmra.mxu0 %v805
        %v1339 = vpop.f32.mrf.mxu0
        %v1340 = vadd.f32 %v1132, %v1339
        %v1341 = vpop.f32.mrf.mxu0
        %v1342 = vpop.f32.mrf.mxu0
        %v1343 = vadd.f32 %v1135, %v1342
        %v1344 = vpop.f32.mrf.mxu0
        %1345 = vmatprep.mubr.bf16.mxu0 %v897
        %1346 = vmatmul.mubr.bf16.gmra.mxu0 %v806
        %v1347 = vpop.f32.mrf.mxu0
        %v1348 = vadd.f32 %v1140, %v1347
        %v1349 = vpop.f32.mrf.mxu0
        %v1350 = vpop.f32.mrf.mxu0
        %v1351 = vadd.f32 %v1143, %v1350
        %v1352 = vpop.f32.mrf.mxu0
        %1353 = vmatprep.mubr.bf16.mxu0 %v900
        %1354 = vmatmul.mubr.bf16.gmra.mxu0 %v807
        %v1355 = vpop.f32.mrf.mxu0
        %v1356 = vadd.f32 %v1148, %v1355
        %v1357 = vpop.f32.mrf.mxu0
        %v1358 = vpop.f32.mrf.mxu0
        %v1359 = vpop.f32.mrf.mxu0
        %1360 = vdwg.mxu0
        %v1361 = vld [vmem:[%s3] sm:$0x1]
        %v1363 = vlaneseq
        %v1364 = vshrl.u32 %v1363, 7
        %v1365 = vsub.s32 0, %v1364
        %v1366 = vrot.slane %v1361, %v1365
        %v1368 = vadd.f32 %v1284, %v1366
        %v1369 = vadd.f32 %v1287, %v1366
        %v1370 = vadd.f32 %v1292, %v1366
        %v1371 = vadd.f32 %v1295, %v1366
        %v1372 = vadd.f32 %v1300, %v1366
        %v1373 = vadd.f32 %v1303, %v1366
        %v1374 = vadd.f32 %v1308, %v1366
        %v1375 = vadd.f32 %v1311, %v1366
        %v1376 = vadd.f32 %v1316, %v1366
        %v1377 = vadd.f32 %v1319, %v1366
        %v1378 = vadd.f32 %v1324, %v1366
        %v1379 = vadd.f32 %v1327, %v1366
        %v1380 = vadd.f32 %v1332, %v1366
        %v1381 = vadd.f32 %v1335, %v1366
        %v1382 = vadd.f32 %v1340, %v1366
        %v1383 = vadd.f32 %v1343, %v1366
        %v1384 = vadd.f32 %v1348, %v1366
        %v1385 = vadd.f32 %v1351, %v1366
        %v1386 = vadd.f32 %v1356, %v1366
        %vm1387 = vcmp.ge.f32.partialorder %v1368, 0.0
        %vm1388 = vcmp.ge.f32.partialorder %v1369, 0.0
        %vm1389 = vcmp.ge.f32.partialorder %v1370, 0.0
        %vm1390 = vcmp.ge.f32.partialorder %v1371, 0.0
        %vm1391 = vcmp.ge.f32.partialorder %v1372, 0.0
        %vm1392 = vcmp.ge.f32.partialorder %v1373, 0.0
        %vm1393 = vcmp.ge.f32.partialorder %v1374, 0.0
        %vm1394 = vcmp.ge.f32.partialorder %v1375, 0.0
        %vm1395 = vcmp.ge.f32.partialorder %v1376, 0.0
        %vm1396 = vcmp.ge.f32.partialorder %v1377, 0.0
        %vm1397 = vcmp.ge.f32.partialorder %v1378, 0.0
        %vm1398 = vcmp.ge.f32.partialorder %v1379, 0.0
        %vm1399 = vcmp.ge.f32.partialorder %v1380, 0.0
        %vm1400 = vcmp.ge.f32.partialorder %v1381, 0.0
        %vm1401 = vcmp.ge.f32.partialorder %v1382, 0.0
        %vm1402 = vcmp.ge.f32.partialorder %v1383, 0.0
        %vm1403 = vcmp.ge.f32.partialorder %v1384, 0.0
        %vm1404 = vcmp.ge.f32.partialorder %v1385, 0.0
        %vm1405 = vcmp.ge.f32.partialorder %v1386, 0.0
        %v1406 = vmul.f32 %v1368, 0.1
        %v1407 = vmul.f32 %v1369, 0.1
        %v1408 = vmul.f32 %v1370, 0.1
        %v1409 = vmul.f32 %v1371, 0.1
        %v1410 = vmul.f32 %v1372, 0.1
        %v1411 = vmul.f32 %v1373, 0.1
        %v1412 = vmul.f32 %v1374, 0.1
        %v1413 = vmul.f32 %v1375, 0.1
        %v1414 = vmul.f32 %v1376, 0.1
        %v1415 = vmul.f32 %v1377, 0.1
        %v1416 = vmul.f32 %v1378, 0.1
        %v1417 = vmul.f32 %v1379, 0.1
        %v1418 = vmul.f32 %v1380, 0.1
        %v1419 = vmul.f32 %v1381, 0.1
        %v1420 = vmul.f32 %v1382, 0.1
        %v1421 = vmul.f32 %v1383, 0.1
        %v1422 = vmul.f32 %v1384, 0.1
        %v1423 = vmul.f32 %v1385, 0.1
        %v1424 = vmul.f32 %v1386, 0.1
        %v1425 = vsel %vm1387, %v1368, %v1406
        %v1426 = vsel %vm1388, %v1369, %v1407
        %v1427 = vsel %vm1389, %v1370, %v1408
        %v1428 = vsel %vm1390, %v1371, %v1409
        %v1429 = vsel %vm1391, %v1372, %v1410
        %v1430 = vsel %vm1392, %v1373, %v1411
        %v1431 = vsel %vm1393, %v1374, %v1412
        %v1432 = vsel %vm1394, %v1375, %v1413
        %v1433 = vsel %vm1395, %v1376, %v1414
        %v1434 = vsel %vm1396, %v1377, %v1415
        %v1435 = vsel %vm1397, %v1378, %v1416
        %v1436 = vsel %vm1398, %v1379, %v1417
        %v1437 = vsel %vm1399, %v1380, %v1418
        %v1438 = vsel %vm1400, %v1381, %v1419
        %v1439 = vsel %vm1401, %v1382, %v1420
        %v1440 = vsel %vm1402, %v1383, %v1421
        %v1441 = vsel %vm1403, %v1384, %v1422
        %v1442 = vsel %vm1404, %v1385, %v1423
        %v1443 = vsel %vm1405, %v1386, %v1424
        %s1444 = sadd.s32 %s527, 4294967285
        %v1445 = vlaneseq
        %v1446 = vshrl.u32 %v1445, 7
        %v1447 = vadd.s32 %v1446, 8
        %v1448 = vadd.s32 %v1446, 16
        %v1449 = vadd.s32 %v1446, 24
        %v1450 = vadd.s32 %v1446, 32
        %v1451 = vadd.s32 %v1446, 40
        %v1452 = vadd.s32 %v1446, 48
        %v1453 = vadd.s32 %v1446, 56
        %v1454 = vadd.s32 %v1446, 64
        %v1455 = vadd.s32 %v1446, 72
        %v1456 = vadd.s32 %v1446, 80
        %v1457 = vadd.s32 %v1446, 88
        %v1458 = vadd.s32 %v1446, 96
        %v1459 = vadd.s32 %v1446, 104
        %v1460 = vadd.s32 %v1446, 112
        %v1461 = vadd.s32 %v1446, 120
        %v1462 = vadd.s32 %v1446, 128
        %v1463 = vadd.s32 %v1446, 136
        %v1464 = vadd.s32 %v1446, 144
        %v1465 = vstv %s1444
        %v1466 = vadd.s32 %v1465, %v1446
        %v1467 = vadd.s32 %v1465, %v1447
        %v1468 = vadd.s32 %v1465, %v1448
        %v1469 = vadd.s32 %v1465, %v1449
        %v1470 = vadd.s32 %v1465, %v1450
        %v1471 = vadd.s32 %v1465, %v1451
        %v1472 = vadd.s32 %v1465, %v1452
        %v1473 = vadd.s32 %v1465, %v1453
        %v1474 = vadd.s32 %v1465, %v1454
        %v1475 = vadd.s32 %v1465, %v1455
        %v1476 = vadd.s32 %v1465, %v1456
        %v1477 = vadd.s32 %v1465, %v1457
        %v1478 = vadd.s32 %v1465, %v1458
        %v1479 = vadd.s32 %v1465, %v1459
        %v1480 = vadd.s32 %v1465, %v1460
        %v1481 = vadd.s32 %v1465, %v1461
        %v1482 = vadd.s32 %v1465, %v1462
        %v1483 = vadd.s32 %v1465, %v1463
        %v1484 = vadd.s32 %v1465, %v1464
        %vm1485 = vcmp.ge.s32.totalorder %v1466, 0
        %vm1486 = vcmp.ge.s32.totalorder %v1467, 0
        %vm1487 = vcmp.ge.s32.totalorder %v1468, 0
        %vm1488 = vcmp.ge.s32.totalorder %v1469, 0
        %vm1489 = vcmp.ge.s32.totalorder %v1470, 0
        %vm1490 = vcmp.ge.s32.totalorder %v1471, 0
        %vm1491 = vcmp.ge.s32.totalorder %v1472, 0
        %vm1492 = vcmp.ge.s32.totalorder %v1473, 0
        %vm1493 = vcmp.ge.s32.totalorder %v1474, 0
        %vm1494 = vcmp.ge.s32.totalorder %v1475, 0
        %vm1495 = vcmp.ge.s32.totalorder %v1476, 0
        %vm1496 = vcmp.ge.s32.totalorder %v1477, 0
        %vm1497 = vcmp.ge.s32.totalorder %v1478, 0
        %vm1498 = vcmp.ge.s32.totalorder %v1479, 0
        %vm1499 = vcmp.ge.s32.totalorder %v1480, 0
        %vm1500 = vcmp.ge.s32.totalorder %v1481, 0
        %vm1501 = vcmp.ge.s32.totalorder %v1482, 0
        %vm1502 = vcmp.ge.s32.totalorder %v1483, 0
        %vm1503 = vcmp.ge.s32.totalorder %v1484, 0
        %vm1504 = vcmp.lt.s32.totalorder %v1466, 200
        %vm1505 = vcmp.lt.s32.totalorder %v1467, 200
        %vm1506 = vcmp.lt.s32.totalorder %v1468, 200
        %vm1507 = vcmp.lt.s32.totalorder %v1469, 200
        %vm1508 = vcmp.lt.s32.totalorder %v1470, 200
        %vm1509 = vcmp.lt.s32.totalorder %v1471, 200
        %vm1510 = vcmp.lt.s32.totalorder %v1472, 200
        %vm1511 = vcmp.lt.s32.totalorder %v1473, 200
        %vm1512 = vcmp.lt.s32.totalorder %v1474, 200
        %vm1513 = vcmp.lt.s32.totalorder %v1475, 200
        %vm1514 = vcmp.lt.s32.totalorder %v1476, 200
        %vm1515 = vcmp.lt.s32.totalorder %v1477, 200
        %vm1516 = vcmp.lt.s32.totalorder %v1478, 200
        %vm1517 = vcmp.lt.s32.totalorder %v1479, 200
        %vm1518 = vcmp.lt.s32.totalorder %v1480, 200
        %vm1519 = vcmp.lt.s32.totalorder %v1481, 200
        %vm1520 = vcmp.lt.s32.totalorder %v1482, 200
        %vm1521 = vcmp.lt.s32.totalorder %v1483, 200
        %vm1522 = vcmp.lt.s32.totalorder %v1484, 200
        %vm1523 = vmand %vm1485, %vm1504
        %vm1524 = vmand %vm1486, %vm1505
        %vm1525 = vmand %vm1487, %vm1506
        %vm1526 = vmand %vm1488, %vm1507
        %vm1527 = vmand %vm1489, %vm1508
        %vm1528 = vmand %vm1490, %vm1509
        %vm1529 = vmand %vm1491, %vm1510
        %vm1530 = vmand %vm1492, %vm1511
        %vm1531 = vmand %vm1493, %vm1512
        %vm1532 = vmand %vm1494, %vm1513
        %vm1533 = vmand %vm1495, %vm1514
        %vm1534 = vmand %vm1496, %vm1515
        %vm1535 = vmand %vm1497, %vm1516
        %vm1536 = vmand %vm1498, %vm1517
        %vm1537 = vmand %vm1499, %vm1518
        %vm1538 = vmand %vm1500, %vm1519
        %vm1539 = vmand %vm1501, %vm1520
        %vm1540 = vmand %vm1502, %vm1521
        %vm1541 = vmand %vm1503, %vm1522
        %v1542 = vsel %vm1523, 1, 0
        %v1543 = vsel %vm1524, 1, 0
        %v1544 = vsel %vm1525, 1, 0
        %v1545 = vsel %vm1526, 1, 0
        %v1546 = vsel %vm1527, 1, 0
        %v1547 = vsel %vm1528, 1, 0
        %v1548 = vsel %vm1529, 1, 0
        %v1549 = vsel %vm1530, 1, 0
        %v1550 = vsel %vm1531, 1, 0
        %v1551 = vsel %vm1532, 1, 0
        %v1552 = vsel %vm1533, 1, 0
        %v1553 = vsel %vm1534, 1, 0
        %v1554 = vsel %vm1535, 1, 0
        %v1555 = vsel %vm1536, 1, 0
        %v1556 = vsel %vm1537, 1, 0
        %v1557 = vsel %vm1538, 1, 0
        %v1558 = vsel %vm1539, 1, 0
        %v1559 = vsel %vm1540, 1, 0
        %v1560 = vsel %vm1541, 1, 0
        %vm1561 = vcmp.eq.s32.totalorder %v1542, 1
        %vm1562 = vcmp.eq.s32.totalorder %v1543, 1
        %vm1563 = vcmp.eq.s32.totalorder %v1544, 1
        %vm1564 = vcmp.eq.s32.totalorder %v1545, 1
        %vm1565 = vcmp.eq.s32.totalorder %v1546, 1
        %vm1566 = vcmp.eq.s32.totalorder %v1547, 1
        %vm1567 = vcmp.eq.s32.totalorder %v1548, 1
        %vm1568 = vcmp.eq.s32.totalorder %v1549, 1
        %vm1569 = vcmp.eq.s32.totalorder %v1550, 1
        %vm1570 = vcmp.eq.s32.totalorder %v1551, 1
        %vm1571 = vcmp.eq.s32.totalorder %v1552, 1
        %vm1572 = vcmp.eq.s32.totalorder %v1553, 1
        %vm1573 = vcmp.eq.s32.totalorder %v1554, 1
        %vm1574 = vcmp.eq.s32.totalorder %v1555, 1
        %vm1575 = vcmp.eq.s32.totalorder %v1556, 1
        %vm1576 = vcmp.eq.s32.totalorder %v1557, 1
        %vm1577 = vcmp.eq.s32.totalorder %v1558, 1
        %vm1578 = vcmp.eq.s32.totalorder %v1559, 1
        %vm1579 = vcmp.eq.s32.totalorder %v1560, 1
        %v1580 = vsel %vm1561, %v1425, 0.0
        %v1581 = vsel %vm1562, %v1426, 0.0
        %v1582 = vsel %vm1563, %v1427, 0.0
        %v1583 = vsel %vm1564, %v1428, 0.0
        %v1584 = vsel %vm1565, %v1429, 0.0
        %v1585 = vsel %vm1566, %v1430, 0.0
        %v1586 = vsel %vm1567, %v1431, 0.0
        %v1587 = vsel %vm1568, %v1432, 0.0
        %v1588 = vsel %vm1569, %v1433, 0.0
        %v1589 = vsel %vm1570, %v1434, 0.0
        %v1590 = vsel %vm1571, %v1435, 0.0
        %v1591 = vsel %vm1572, %v1436, 0.0
        %v1592 = vsel %vm1573, %v1437, 0.0
        %v1593 = vsel %vm1574, %v1438, 0.0
        %v1594 = vsel %vm1575, %v1439, 0.0
        %v1595 = vsel %vm1576, %v1440, 0.0
        %v1596 = vsel %vm1577, %v1441, 0.0
        %v1597 = vsel %vm1578, %v1442, 0.0
        %v1598 = vsel %vm1579, %v1443, 0.0
        %v1599 = vpack.c.bf16 %v1581, %v1580
        %v1600 = vpack.c.bf16 %v1583, %v1582
        %v1601 = vpack.c.bf16 %v1585, %v1584
        %v1602 = vpack.c.bf16 %v1587, %v1586
        %v1603 = vpack.c.bf16 %v1589, %v1588
        %v1604 = vpack.c.bf16 %v1591, %v1590
        %v1605 = vpack.c.bf16 %v1593, %v1592
        %v1606 = vpack.c.bf16 %v1595, %v1594
        %v1607 = vpack.c.bf16 %v1597, %v1596
        %v1608 = vpack.c.bf16 %v1598, %v1598
        %v1619 = vunpack.c.l.b16 %v1599
        %v1620 = vunpack.c.h.b16 %v1599
        %v1621 = vunpack.c.l.b16 %v1600
        %v1622 = vunpack.c.h.b16 %v1600
        %v1623 = vunpack.c.l.b16 %v1601
        %v1624 = vunpack.c.h.b16 %v1601
        %v1625 = vunpack.c.l.b16 %v1602
        %v1626 = vunpack.c.h.b16 %v1602
        %v1627 = vunpack.c.l.b16 %v1603
        %v1628 = vunpack.c.h.b16 %v1603
        %v1629 = vunpack.c.l.b16 %v1604
        %v1630 = vunpack.c.h.b16 %v1604
        %v1631 = vunpack.c.l.b16 %v1605
        %v1632 = vunpack.c.h.b16 %v1605
        %v1633 = vunpack.c.l.b16 %v1606
        %v1634 = vunpack.c.h.b16 %v1606
        %v1635 = vunpack.c.l.b16 %v1607
        %v1636 = vunpack.c.h.b16 %v1607
        %v1637 = vunpack.c.l.b16 %v1608
        %v1638 = vpack.c.b16 %v1619, %v1619
        %v1639 = vpack.c.b16 %v1620, %v1620
        %v1640 = vpack.c.b16 %v1621, %v1621
        %v1641 = vpack.c.b16 %v1622, %v1622
        %v1642 = vpack.c.b16 %v1623, %v1623
        %v1643 = vpack.c.b16 %v1624, %v1624
        %v1644 = vpack.c.b16 %v1625, %v1625
        %v1645 = vpack.c.b16 %v1626, %v1626
        %v1646 = vpack.c.b16 %v1627, %v1627
        %v1647 = vpack.c.b16 %v1628, %v1628
        %v1648 = vpack.c.b16 %v1629, %v1629
        %v1649 = vpack.c.b16 %v1630, %v1630
        %v1650 = vpack.c.b16 %v1631, %v1631
        %v1651 = vpack.c.b16 %v1632, %v1632
        %v1652 = vpack.c.b16 %v1633, %v1633
        %v1653 = vpack.c.b16 %v1634, %v1634
        %v1654 = vpack.c.b16 %v1635, %v1635
        %v1655 = vpack.c.b16 %v1636, %v1636
        %v1656 = vpack.c.b16 %v1637, %v1637
        %vm1657 = vsmask.f32 256
        %vm1658 = vsmask.f32 4368
        %vm1659 = vmor %vm1657, %vm1658
        %v1661 = vshrl.u32 %v1638, 16
        %v1663 = vrot.slane %v1661, 7
        %v1664 = vshll.u32 %v1638, 16
        %v1666 = vor.u32 %v1663, %v1664
        %v1667 = vrot.slane %v1663, 4
        %v1669 = vshrl.u32 %v1639, 16
        %v1671 = vrot.slane %v1669, 7
        %v1672 = vshll.u32 %v1639, 16
        %v1674 = vor.u32 %v1671, %v1672
        %v1675 = vsel %vm1659, %v1667, %v1674
        %v1676 = vrot.slane %v1671, 4
        %v1678 = vshrl.u32 %v1640, 16
        %v1680 = vrot.slane %v1678, 7
        %v1681 = vshll.u32 %v1640, 16
        %v1683 = vor.u32 %v1680, %v1681
        %v1684 = vsel %vm1659, %v1676, %v1683
        %v1685 = vrot.slane %v1680, 4
        %v1687 = vshrl.u32 %v1641, 16
        %v1689 = vrot.slane %v1687, 7
        %v1690 = vshll.u32 %v1641, 16
        %v1692 = vor.u32 %v1689, %v1690
        %v1693 = vsel %vm1659, %v1685, %v1692
        %v1694 = vrot.slane %v1689, 4
        %v1696 = vshrl.u32 %v1642, 16
        %v1698 = vrot.slane %v1696, 7
        %v1699 = vshll.u32 %v1642, 16
        %v1701 = vor.u32 %v1698, %v1699
        %v1702 = vsel %vm1659, %v1694, %v1701
        %v1703 = vrot.slane %v1698, 4
        %v1705 = vshrl.u32 %v1643, 16
        %v1707 = vrot.slane %v1705, 7
        %v1708 = vshll.u32 %v1643, 16
        %v1710 = vor.u32 %v1707, %v1708
        %v1711 = vsel %vm1659, %v1703, %v1710
        %v1712 = vrot.slane %v1707, 4
        %v1714 = vshrl.u32 %v1644, 16
        %v1716 = vrot.slane %v1714, 7
        %v1717 = vshll.u32 %v1644, 16
        %v1719 = vor.u32 %v1716, %v1717
        %v1720 = vsel %vm1659, %v1712, %v1719
        %v1721 = vrot.slane %v1716, 4
        %v1723 = vshrl.u32 %v1645, 16
        %v1725 = vrot.slane %v1723, 7
        %v1726 = vshll.u32 %v1645, 16
        %v1728 = vor.u32 %v1725, %v1726
        %v1729 = vsel %vm1659, %v1721, %v1728
        %v1730 = vrot.slane %v1725, 4
        %v1732 = vshrl.u32 %v1646, 16
        %v1734 = vrot.slane %v1732, 7
        %v1735 = vshll.u32 %v1646, 16
        %v1737 = vor.u32 %v1734, %v1735
        %v1738 = vsel %vm1659, %v1730, %v1737
        %v1739 = vrot.slane %v1734, 4
        %v1741 = vshrl.u32 %v1647, 16
        %v1743 = vrot.slane %v1741, 7
        %v1744 = vshll.u32 %v1647, 16
        %v1746 = vor.u32 %v1743, %v1744
        %v1747 = vsel %vm1659, %v1739, %v1746
        %v1748 = vrot.slane %v1743, 4
        %v1750 = vshrl.u32 %v1648, 16
        %v1752 = vrot.slane %v1750, 7
        %v1753 = vshll.u32 %v1648, 16
        %v1755 = vor.u32 %v1752, %v1753
        %v1756 = vsel %vm1659, %v1748, %v1755
        %v1757 = vrot.slane %v1752, 4
        %v1759 = vshrl.u32 %v1649, 16
        %v1761 = vrot.slane %v1759, 7
        %v1762 = vshll.u32 %v1649, 16
        %v1764 = vor.u32 %v1761, %v1762
        %v1765 = vsel %vm1659, %v1757, %v1764
        %v1766 = vrot.slane %v1761, 4
        %v1768 = vshrl.u32 %v1650, 16
        %v1770 = vrot.slane %v1768, 7
        %v1771 = vshll.u32 %v1650, 16
        %v1773 = vor.u32 %v1770, %v1771
        %v1774 = vsel %vm1659, %v1766, %v1773
        %v1775 = vrot.slane %v1770, 4
        %v1777 = vshrl.u32 %v1651, 16
        %v1779 = vrot.slane %v1777, 7
        %v1780 = vshll.u32 %v1651, 16
        %v1782 = vor.u32 %v1779, %v1780
        %v1783 = vsel %vm1659, %v1775, %v1782
        %v1784 = vrot.slane %v1779, 4
        %v1786 = vshrl.u32 %v1652, 16
        %v1788 = vrot.slane %v1786, 7
        %v1789 = vshll.u32 %v1652, 16
        %v1791 = vor.u32 %v1788, %v1789
        %v1792 = vsel %vm1659, %v1784, %v1791
        %v1793 = vrot.slane %v1788, 4
        %v1795 = vshrl.u32 %v1653, 16
        %v1797 = vrot.slane %v1795, 7
        %v1798 = vshll.u32 %v1653, 16
        %v1800 = vor.u32 %v1797, %v1798
        %v1801 = vsel %vm1659, %v1793, %v1800
        %v1802 = vrot.slane %v1797, 4
        %v1804 = vshrl.u32 %v1654, 16
        %v1806 = vrot.slane %v1804, 7
        %v1807 = vshll.u32 %v1654, 16
        %v1809 = vor.u32 %v1806, %v1807
        %v1810 = vsel %vm1659, %v1802, %v1809
        %v1811 = vrot.slane %v1806, 4
        %v1813 = vshrl.u32 %v1655, 16
        %v1815 = vrot.slane %v1813, 7
        %v1816 = vshll.u32 %v1655, 16
        %v1818 = vor.u32 %v1815, %v1816
        %v1819 = vsel %vm1659, %v1811, %v1818
        %v1820 = vrot.slane %v1815, 4
        %v1822 = vshrl.u32 %v1656, 16
        %v1824 = vrot.slane %v1822, 7
        %v1825 = vshll.u32 %v1656, 16
        %v1827 = vor.u32 %v1824, %v1825
        %v1828 = vsel %vm1659, %v1820, %v1827
        %vm1848 = vcmask 1043456
        %vm1849 = vsmask.f32 7938
        %vm1850 = vmand %vm1848, %vm1849
        %v1851 = vsel %vm1850, %v1666, %v740
        %1852 = vst [vmem:[#allocation3] sm:$0xf] %v1851
        %1853 = vst [vmem:[#allocation3 + $0x4] sm:$0xf] %v1675
        %1854 = vst [vmem:[#allocation3 + $0x8] sm:$0xf] %v1684
        %1855 = vst [vmem:[#allocation3 + $0xc] sm:$0xf] %v1693
        %1856 = vst [vmem:[#allocation3 + $0x10] sm:$0xf] %v1702
        %1857 = vst [vmem:[#allocation3 + $0x14] sm:$0xf] %v1711
        %1858 = vst [vmem:[#allocation3 + $0x18] sm:$0xf] %v1720
        %1859 = vst [vmem:[#allocation3 + $0x1c] sm:$0xf] %v1729
        %1860 = vst [vmem:[#allocation3 + $0x20] sm:$0xf] %v1738
        %1861 = vst [vmem:[#allocation3 + $0x24] sm:$0xf] %v1747
        %1862 = vst [vmem:[#allocation3 + $0x28] sm:$0xf] %v1756
        %1863 = vst [vmem:[#allocation3 + $0x2c] sm:$0xf] %v1765
        %1864 = vst [vmem:[#allocation3 + $0x30] sm:$0xf] %v1774
        %1865 = vst [vmem:[#allocation3 + $0x34] sm:$0xf] %v1783
        %1866 = vst [vmem:[#allocation3 + $0x38] sm:$0xf] %v1792
        %1867 = vst [vmem:[#allocation3 + $0x3c] sm:$0xf] %v1801
        %1868 = vst [vmem:[#allocation3 + $0x40] sm:$0xf] %v1810
        %1869 = vst [vmem:[#allocation3 + $0x44] sm:$0xf] %v1819
        %vm1870 = vsmask.f32 3328
        %vm1871 = vmand %vm1848, %vm1870
        %v1872 = vld [vmem:[#allocation3 + $0x48] sm:$0xf]
        %v1873 = vsel %vm1871, %v1828, %v1872
        %1874 = vst [vmem:[#allocation3 + $0x48] sm:$0xf] %v1873
        %v1875 = vld [vmem:[#allocation3] sm:$0xf]
        %v1876 = vld [vmem:[#allocation3 + $0x4] sm:$0xf]
        %v1877 = vld [vmem:[#allocation3 + $0x8] sm:$0xf]
        %v1878 = vld [vmem:[#allocation3 + $0xc] sm:$0xf]
        %v1879 = vld [vmem:[#allocation3 + $0x10] sm:$0xf]
        %v1880 = vld [vmem:[#allocation3 + $0x14] sm:$0xf]
        %v1881 = vld [vmem:[#allocation3 + $0x18] sm:$0xf]
        %v1882 = vld [vmem:[#allocation3 + $0x1c] sm:$0xf]
        %v1883 = vld [vmem:[#allocation3 + $0x20] sm:$0xf]
        %v1884 = vld [vmem:[#allocation3 + $0x24] sm:$0xf]
        %v1885 = vld [vmem:[#allocation3 + $0x28] sm:$0xf]
        %v1886 = vld [vmem:[#allocation3 + $0x2c] sm:$0xf]
        %v1887 = vld [vmem:[#allocation3 + $0x30] sm:$0xf]
        %v1888 = vld [vmem:[#allocation3 + $0x34] sm:$0xf]
        %v1889 = vld [vmem:[#allocation3 + $0x38] sm:$0xf]
        %v1890 = vld [vmem:[#allocation3 + $0x3c] sm:$0xf]
        %v1891 = vld [vmem:[#allocation3 + $0x40] sm:$0xf]
        %v1892 = vld [vmem:[#allocation3 + $0x44] sm:$0xf]
        %v1893 = vld [vmem:[#allocation3 + $0x48] sm:$0x7]
        %v1894 = vld [vmem:[#allocation3] sm:$0xe]
        %v1914 = vunpack.c.l.b16 %v1875
        %v1915 = vunpack.c.l.b16 %v1876
        %v1916 = vunpack.c.l.b16 %v1877
        %v1917 = vunpack.c.l.b16 %v1878
        %v1918 = vunpack.c.l.b16 %v1879
        %v1919 = vunpack.c.l.b16 %v1880
        %v1920 = vunpack.c.l.b16 %v1881
        %v1921 = vunpack.c.l.b16 %v1882
        %v1922 = vunpack.c.l.b16 %v1883
        %v1923 = vunpack.c.l.b16 %v1884
        %v1924 = vunpack.c.l.b16 %v1885
        %v1925 = vunpack.c.l.b16 %v1886
        %v1926 = vunpack.c.l.b16 %v1887
        %v1927 = vunpack.c.l.b16 %v1888
        %v1928 = vunpack.c.l.b16 %v1889
        %v1929 = vunpack.c.l.b16 %v1890
        %v1930 = vunpack.c.l.b16 %v1891
        %v1931 = vunpack.c.l.b16 %v1892
        %v1932 = vunpack.c.l.b16 %v1893
        %v1933 = vpack.c.b16 %v1915, %v1914
        %v1934 = vpack.c.b16 %v1917, %v1916
        %v1935 = vpack.c.b16 %v1919, %v1918
        %v1936 = vpack.c.b16 %v1921, %v1920
        %v1937 = vpack.c.b16 %v1923, %v1922
        %v1938 = vpack.c.b16 %v1925, %v1924
        %v1939 = vpack.c.b16 %v1927, %v1926
        %v1940 = vpack.c.b16 %v1929, %v1928
        %v1941 = vpack.c.b16 %v1931, %v1930
        %v1942 = vpack.c.b16 %v1932, %v1932
        %v1944 = vunpack.c.l.b16 %v1894
        %v1945 = vpack.c.b16 %v1915, %v1944
        %v1947 = vshrl.u32 %v1945, 16
        %v1949 = vshll.u32 %v1945, 16
        %v1951 = vrot.slane %v1949, 1
        %v1952 = vor.u32 %v1947, %v1951
        %v1954 = vshll.u32 %v1934, 16
        %v1956 = vrot.slane %v1954, 1
        %v1957 = vsel %vm821, %v1952, %v1956
        %v1958 = vshrl.u32 %v1934, 16
        %v1960 = vor.u32 %v1958, %v1956
        %v1962 = vshll.u32 %v1935, 16
        %v1964 = vrot.slane %v1962, 1
        %v1965 = vsel %vm821, %v1960, %v1964
        %v1966 = vshrl.u32 %v1935, 16
        %v1968 = vor.u32 %v1966, %v1964
        %v1970 = vshll.u32 %v1936, 16
        %v1972 = vrot.slane %v1970, 1
        %v1973 = vsel %vm821, %v1968, %v1972
        %v1974 = vshrl.u32 %v1936, 16
        %v1976 = vor.u32 %v1974, %v1972
        %v1978 = vshll.u32 %v1937, 16
        %v1980 = vrot.slane %v1978, 1
        %v1981 = vsel %vm821, %v1976, %v1980
        %v1982 = vshrl.u32 %v1937, 16
        %v1984 = vor.u32 %v1982, %v1980
        %v1986 = vshll.u32 %v1938, 16
        %v1988 = vrot.slane %v1986, 1
        %v1989 = vsel %vm821, %v1984, %v1988
        %v1990 = vshrl.u32 %v1938, 16
        %v1992 = vor.u32 %v1990, %v1988
        %v1994 = vshll.u32 %v1939, 16
        %v1996 = vrot.slane %v1994, 1
        %v1997 = vsel %vm821, %v1992, %v1996
        %v1998 = vshrl.u32 %v1939, 16
        %v2000 = vor.u32 %v1998, %v1996
        %v2002 = vshll.u32 %v1940, 16
        %v2004 = vrot.slane %v2002, 1
        %v2005 = vsel %vm821, %v2000, %v2004
        %v2006 = vshrl.u32 %v1940, 16
        %v2008 = vor.u32 %v2006, %v2004
        %v2010 = vshll.u32 %v1941, 16
        %v2012 = vrot.slane %v2010, 1
        %v2013 = vsel %vm821, %v2008, %v2012
        %v2014 = vshrl.u32 %v1941, 16
        %v2016 = vor.u32 %v2014, %v2012
        %v2018 = vshll.u32 %v1942, 16
        %v2020 = vrot.slane %v2018, 1
        %v2021 = vsel %vm821, %v2016, %v2020
        %v2022 = vshrl.u32 %v1942, 16
        %v2024 = vor.u32 %v2022, %v2020
        %v2025 = vld [vmem:[%s4] sm:$0xf]
        %v2026 = vld [vmem:[%s4 + $0x4] sm:$0xf]
        %v2027 = vld [vmem:[%s4 + $0x8] sm:$0xf]
        %v2028 = vld [vmem:[%s4 + $0xc] sm:$0xf]
        %v2029 = vld [vmem:[%s4 + $0x10] sm:$0xf]
        %v2030 = vld [vmem:[%s4 + $0x14] sm:$0xf]
        %v2031 = vld [vmem:[%s4 + $0x18] sm:$0xf]
        %v2032 = vld [vmem:[%s4 + $0x1c] sm:$0xf]
        %v2033 = vld [vmem:[%s4 + $0x20] sm:$0xf]
        %v2034 = vld [vmem:[%s4 + $0x24] sm:$0xf]
        %v2035 = vld [vmem:[%s4 + $0x28] sm:$0xf]
        %v2036 = vld [vmem:[%s4 + $0x2c] sm:$0xf]
        %v2037 = vld [vmem:[%s4 + $0x30] sm:$0xf]
        %v2038 = vld [vmem:[%s4 + $0x34] sm:$0xf]
        %v2039 = vld [vmem:[%s4 + $0x38] sm:$0xf]
        %v2040 = vld [vmem:[%s4 + $0x3c] sm:$0xf]
        %v2041 = vld [vmem:[%s4 + $0x40] sm:$0xf]
        %v2042 = vld [vmem:[%s4 + $0x44] sm:$0xf]
        %v2043 = vld [vmem:[%s4 + $0x48] sm:$0xf]
        %v2044 = vld [vmem:[%s4 + $0x4c] sm:$0xf]
        %v2045 = vld [vmem:[%s4 + $0x50] sm:$0xf]
        %v2046 = vld [vmem:[%s4 + $0x54] sm:$0xf]
        %v2047 = vld [vmem:[%s4 + $0x58] sm:$0xf]
        %v2048 = vld [vmem:[%s4 + $0x5c] sm:$0xf]
        %v2049 = vld [vmem:[%s4 + $0x60] sm:$0xf]
        %v2050 = vld [vmem:[%s4 + $0x64] sm:$0xf]
        %v2051 = vld [vmem:[%s4 + $0x68] sm:$0xf]
        %v2052 = vld [vmem:[%s4 + $0x6c] sm:$0xf]
        %v2053 = vld [vmem:[%s4 + $0x70] sm:$0xf]
        %v2054 = vld [vmem:[%s4 + $0x74] sm:$0xf]
        %v2055 = vld [vmem:[%s4 + $0x78] sm:$0xf]
        %v2056 = vld [vmem:[%s4 + $0x7c] sm:$0xf]
        %v2057 = vld [vmem:[#allocation3 + $0x48] sm:$0xf]
        %v2058 = vld [vmem:[%s4 + $0x80] sm:$0xf]
        %v2059 = vld [vmem:[%s4 + $0x84] sm:$0xf]
        %v2060 = vld [vmem:[%s4 + $0x88] sm:$0xf]
        %v2061 = vld [vmem:[%s4 + $0x8c] sm:$0xf]
        %v2062 = vld [vmem:[%s4 + $0x90] sm:$0xf]
        %v2063 = vld [vmem:[%s4 + $0x94] sm:$0xf]
        %v2064 = vld [vmem:[%s4 + $0x98] sm:$0xf]
        %v2065 = vld [vmem:[%s4 + $0x9c] sm:$0xf]
        %v2066 = vld [vmem:[%s4 + $0xa0] sm:$0xf]
        %v2067 = vld [vmem:[%s4 + $0xa4] sm:$0xf]
        %v2068 = vld [vmem:[%s4 + $0xa8] sm:$0xf]
        %v2069 = vld [vmem:[%s4 + $0xac] sm:$0xf]
        %v2070 = vld [vmem:[%s4 + $0xb0] sm:$0xf]
        %v2071 = vld [vmem:[%s4 + $0xb4] sm:$0xf]
        %v2072 = vld [vmem:[%s4 + $0xb8] sm:$0xf]
        %v2073 = vld [vmem:[%s4 + $0xbc] sm:$0xf]
        %v2075 = vunpack.c.l.b16 %v2057
        %v2076 = vpack.c.b16 %v2075, %v2075
        %vm2077 = vsmask.f32 6400
        %v2078 = vrot.slane %v1947, 1
        %v2079 = vrot.slane %v1949, 2
        %v2080 = vor.u32 %v2078, %v2079
        %v2081 = vrot.slane %v1958, 1
        %v2082 = vrot.slane %v1954, 2
        %v2083 = vor.u32 %v2081, %v2082
        %v2084 = vsel %vm2077, %v2080, %v2083
        %v2085 = vrot.slane %v1966, 1
        %v2086 = vrot.slane %v1962, 2
        %v2087 = vor.u32 %v2085, %v2086
        %v2088 = vsel %vm2077, %v2083, %v2087
        %v2089 = vrot.slane %v1974, 1
        %v2090 = vrot.slane %v1970, 2
        %v2091 = vor.u32 %v2089, %v2090
        %v2092 = vsel %vm2077, %v2087, %v2091
        %v2093 = vrot.slane %v1982, 1
        %v2094 = vrot.slane %v1978, 2
        %v2095 = vor.u32 %v2093, %v2094
        %v2096 = vsel %vm2077, %v2091, %v2095
        %v2097 = vrot.slane %v1990, 1
        %v2098 = vrot.slane %v1986, 2
        %v2099 = vor.u32 %v2097, %v2098
        %v2100 = vsel %vm2077, %v2095, %v2099
        %v2101 = vrot.slane %v1998, 1
        %v2102 = vrot.slane %v1994, 2
        %v2103 = vor.u32 %v2101, %v2102
        %v2104 = vsel %vm2077, %v2099, %v2103
        %v2105 = vrot.slane %v2006, 1
        %v2106 = vrot.slane %v2002, 2
        %v2107 = vor.u32 %v2105, %v2106
        %v2108 = vsel %vm2077, %v2103, %v2107
        %v2109 = vrot.slane %v2014, 1
        %v2110 = vrot.slane %v2010, 2
        %v2111 = vor.u32 %v2109, %v2110
        %v2112 = vsel %vm2077, %v2107, %v2111
        %v2114 = vshrl.u32 %v2076, 16
        %v2116 = vrot.slane %v2114, 1
        %v2117 = vshll.u32 %v2076, 16
        %v2119 = vrot.slane %v2117, 2
        %v2120 = vor.u32 %v2116, %v2119
        %v2121 = vsel %vm2077, %v2111, %v2120
        %v2148 = vunpack.c.l.b16 %v2058
        %v2149 = vunpack.c.l.b16 %v2059
        %v2150 = vunpack.c.l.b16 %v2060
        %v2151 = vunpack.c.l.b16 %v2061
        %v2152 = vunpack.c.l.b16 %v2062
        %v2153 = vunpack.c.l.b16 %v2063
        %v2154 = vunpack.c.l.b16 %v2064
        %v2155 = vunpack.c.l.b16 %v2065
        %v2156 = vunpack.c.l.b16 %v2066
        %v2157 = vunpack.c.l.b16 %v2067
        %v2158 = vunpack.c.l.b16 %v2068
        %v2159 = vunpack.c.l.b16 %v2069
        %v2160 = vunpack.c.l.b16 %v2070
        %v2161 = vunpack.c.l.b16 %v2071
        %v2162 = vunpack.c.l.b16 %v2072
        %v2163 = vunpack.c.l.b16 %v2073
        %v2164 = vpack.c.b16 %v2149, %v2148
        %v2165 = vpack.c.b16 %v2151, %v2150
        %v2166 = vpack.c.b16 %v2153, %v2152
        %v2167 = vpack.c.b16 %v2155, %v2154
        %v2168 = vpack.c.b16 %v2157, %v2156
        %v2169 = vpack.c.b16 %v2159, %v2158
        %v2170 = vpack.c.b16 %v2161, %v2160
        %v2171 = vpack.c.b16 %v2163, %v2162
        %2180 = vmatprep.subr.bf16.mxu0 0
        %2181 = vmatpush1.bf16.msra.mxu0 %v2171
        %2182 = vmatprep.subr.bf16.mxu0 0
        %2183 = vmatpush1.bf16.msra.mxu0 %v2170
        %2184 = vmatprep.subr.bf16.mxu0 0
        %2185 = vmatpush1.bf16.msra.mxu0 %v2169
        %2186 = vmatprep.subr.bf16.mxu0 0
        %2187 = vmatpush1.bf16.msra.mxu0 %v2168
        %2188 = vmatprep.subr.bf16.mxu0 0
        %2189 = vmatpush1.bf16.msra.mxu0 %v2167
        %2190 = vmatprep.subr.bf16.mxu0 0
        %2191 = vmatpush1.bf16.msra.mxu0 %v2166
        %2192 = vmatprep.subr.bf16.mxu0 0
        %2193 = vmatpush1.bf16.msra.mxu0 %v2165
        %2194 = vmatprep.subr.bf16.mxu0 0
        %2195 = vmatpush1.bf16.msra.mxu0 %v2164
        %2196 = vmatprep.subr.bf16.mxu0 0
        %2197 = vmatpush2.bf16.msra.mxu0 0
        %2198 = vmatprep.subr.bf16.mxu0 0
        %2199 = vmatpush2.bf16.msra.mxu0 0
        %2200 = vmatprep.subr.bf16.mxu0 0
        %2201 = vmatpush2.bf16.msra.mxu0 0
        %2202 = vmatprep.subr.bf16.mxu0 0
        %2203 = vmatpush2.bf16.msra.mxu0 0
        %2204 = vmatprep.subr.bf16.mxu0 0
        %2205 = vmatpush2.bf16.msra.mxu0 0
        %2206 = vmatprep.subr.bf16.mxu0 0
        %2207 = vmatpush2.bf16.msra.mxu0 0
        %2208 = vmatprep.subr.bf16.mxu0 0
        %2209 = vmatpush2.bf16.msra.mxu0 0
        %2210 = vmatprep.subr.bf16.mxu0 0
        %2211 = vmatpush2.bf16.msra.mxu0 0
        %2212 = vmatprep.mubr.bf16.mxu0 0
        %2213 = vmatmul.mubr.bf16.gmra.mxu0 %v2084
        %v2214 = vpop.f32.mrf.mxu0
        %v2215 = vadd.f32 0.0, %v2214
        %v2216 = vpop.f32.mrf.mxu0
        %v2217 = vpop.f32.mrf.mxu0
        %v2218 = vadd.f32 0.0, %v2217
        %v2219 = vpop.f32.mrf.mxu0
        %2220 = vmatprep.mubr.bf16.mxu0 0
        %2221 = vmatmul.mubr.bf16.gmra.mxu0 %v2088
        %v2222 = vpop.f32.mrf.mxu0
        %v2223 = vadd.f32 0.0, %v2222
        %v2224 = vpop.f32.mrf.mxu0
        %v2225 = vpop.f32.mrf.mxu0
        %v2226 = vadd.f32 0.0, %v2225
        %v2227 = vpop.f32.mrf.mxu0
        %2228 = vmatprep.mubr.bf16.mxu0 0
        %2229 = vmatmul.mubr.bf16.gmra.mxu0 %v2092
        %v2230 = vpop.f32.mrf.mxu0
        %v2231 = vadd.f32 0.0, %v2230
        %v2232 = vpop.f32.mrf.mxu0
        %v2233 = vpop.f32.mrf.mxu0
        %v2234 = vadd.f32 0.0, %v2233
        %v2235 = vpop.f32.mrf.mxu0
        %2236 = vmatprep.mubr.bf16.mxu0 0
        %2237 = vmatmul.mubr.bf16.gmra.mxu0 %v2096
        %v2238 = vpop.f32.mrf.mxu0
        %v2239 = vadd.f32 0.0, %v2238
        %v2240 = vpop.f32.mrf.mxu0
        %v2241 = vpop.f32.mrf.mxu0
        %v2242 = vadd.f32 0.0, %v2241
        %v2243 = vpop.f32.mrf.mxu0
        %2244 = vmatprep.mubr.bf16.mxu0 0
        %2245 = vmatmul.mubr.bf16.gmra.mxu0 %v2100
        %v2246 = vpop.f32.mrf.mxu0
        %v2247 = vadd.f32 0.0, %v2246
        %v2248 = vpop.f32.mrf.mxu0
        %v2249 = vpop.f32.mrf.mxu0
        %v2250 = vadd.f32 0.0, %v2249
        %v2251 = vpop.f32.mrf.mxu0
        %2252 = vmatprep.mubr.bf16.mxu0 0
        %2253 = vmatmul.mubr.bf16.gmra.mxu0 %v2104
        %v2254 = vpop.f32.mrf.mxu0
        %v2255 = vadd.f32 0.0, %v2254
        %v2256 = vpop.f32.mrf.mxu0
        %v2257 = vpop.f32.mrf.mxu0
        %v2258 = vadd.f32 0.0, %v2257
        %v2259 = vpop.f32.mrf.mxu0
        %2260 = vmatprep.mubr.bf16.mxu0 0
        %2261 = vmatmul.mubr.bf16.gmra.mxu0 %v2108
        %v2262 = vpop.f32.mrf.mxu0
        %v2263 = vadd.f32 0.0, %v2262
        %v2264 = vpop.f32.mrf.mxu0
        %v2265 = vpop.f32.mrf.mxu0
        %v2266 = vadd.f32 0.0, %v2265
        %v2267 = vpop.f32.mrf.mxu0
        %2268 = vmatprep.mubr.bf16.mxu0 0
        %2269 = vmatmul.mubr.bf16.gmra.mxu0 %v2112
        %v2270 = vpop.f32.mrf.mxu0
        %v2271 = vadd.f32 0.0, %v2270
        %v2272 = vpop.f32.mrf.mxu0
        %v2273 = vpop.f32.mrf.mxu0
        %v2274 = vadd.f32 0.0, %v2273
        %v2275 = vpop.f32.mrf.mxu0
        %2276 = vmatprep.mubr.bf16.mxu0 0
        %2277 = vmatmul.mubr.bf16.gmra.mxu0 %v2121
        %v2278 = vpop.f32.mrf.mxu0
        %v2279 = vadd.f32 0.0, %v2278
        %v2280 = vpop.f32.mrf.mxu0
        %v2281 = vpop.f32.mrf.mxu0
        %v2282 = vadd.f32 0.0, %v2281
        %v2283 = vpop.f32.mrf.mxu0
        %2284 = vmatprep.mubr.bf16.mxu0 0
        %2285 = vmatmul.mubr.bf16.gmra.mxu0 %v2120
        %v2286 = vpop.f32.mrf.mxu0
        %v2287 = vadd.f32 0.0, %v2286
        %v2288 = vpop.f32.mrf.mxu0
        %v2289 = vpop.f32.mrf.mxu0
        %v2290 = vpop.f32.mrf.mxu0
        %2291 = vdwg.mxu0
        %v2293 = vshrl.u32 %v1933, 16
        %v2295 = vshll.u32 %v1933, 16
        %v2297 = vrot.slane %v2295, 1
        %v2298 = vor.u32 %v2293, %v2297
        %v2299 = vsel %vm821, %v2298, %v1956
        %v2301 = vshrl.u32 %v1957, 16
        %v2303 = vshll.u32 %v1957, 16
        %v2305 = vrot.slane %v2303, 1
        %v2306 = vor.u32 %v2301, %v2305
        %v2308 = vshll.u32 %v1965, 16
        %v2310 = vrot.slane %v2308, 1
        %v2311 = vsel %vm821, %v2306, %v2310
        %v2312 = vshrl.u32 %v1965, 16
        %v2314 = vor.u32 %v2312, %v2310
        %v2316 = vshll.u32 %v1973, 16
        %v2318 = vrot.slane %v2316, 1
        %v2319 = vsel %vm821, %v2314, %v2318
        %v2320 = vshrl.u32 %v1973, 16
        %v2322 = vor.u32 %v2320, %v2318
        %v2324 = vshll.u32 %v1981, 16
        %v2326 = vrot.slane %v2324, 1
        %v2327 = vsel %vm821, %v2322, %v2326
        %v2328 = vshrl.u32 %v1981, 16
        %v2330 = vor.u32 %v2328, %v2326
        %v2332 = vshll.u32 %v1989, 16
        %v2334 = vrot.slane %v2332, 1
        %v2335 = vsel %vm821, %v2330, %v2334
        %v2336 = vshrl.u32 %v1989, 16
        %v2338 = vor.u32 %v2336, %v2334
        %v2340 = vshll.u32 %v1997, 16
        %v2342 = vrot.slane %v2340, 1
        %v2343 = vsel %vm821, %v2338, %v2342
        %v2344 = vshrl.u32 %v1997, 16
        %v2346 = vor.u32 %v2344, %v2342
        %v2348 = vshll.u32 %v2005, 16
        %v2350 = vrot.slane %v2348, 1
        %v2351 = vsel %vm821, %v2346, %v2350
        %v2352 = vshrl.u32 %v2005, 16
        %v2354 = vor.u32 %v2352, %v2350
        %v2356 = vshll.u32 %v2013, 16
        %v2358 = vrot.slane %v2356, 1
        %v2359 = vsel %vm821, %v2354, %v2358
        %v2360 = vshrl.u32 %v2013, 16
        %v2362 = vor.u32 %v2360, %v2358
        %v2364 = vshll.u32 %v2021, 16
        %v2366 = vrot.slane %v2364, 1
        %v2367 = vsel %vm821, %v2362, %v2366
        %v2368 = vshrl.u32 %v2021, 16
        %v2370 = vor.u32 %v2368, %v2366
        %v2372 = vshll.u32 %v2024, 16
        %v2374 = vrot.slane %v2372, 1
        %v2375 = vsel %vm821, %v2370, %v2374
        %v2376 = vshrl.u32 %v2024, 16
        %v2378 = vor.u32 %v2376, %v2374
        %v2431 = vunpack.c.l.b16 %v2025
        %v2432 = vunpack.c.l.b16 %v2026
        %v2433 = vunpack.c.l.b16 %v2027
        %v2434 = vunpack.c.l.b16 %v2028
        %v2435 = vunpack.c.l.b16 %v2029
        %v2436 = vunpack.c.l.b16 %v2030
        %v2437 = vunpack.c.l.b16 %v2031
        %v2438 = vunpack.c.l.b16 %v2032
        %v2439 = vunpack.c.l.b16 %v2033
        %v2440 = vunpack.c.l.b16 %v2034
        %v2441 = vunpack.c.l.b16 %v2035
        %v2442 = vunpack.c.l.b16 %v2036
        %v2443 = vunpack.c.l.b16 %v2037
        %v2444 = vunpack.c.l.b16 %v2038
        %v2445 = vunpack.c.l.b16 %v2039
        %v2446 = vunpack.c.l.b16 %v2040
        %v2447 = vunpack.c.l.b16 %v2041
        %v2448 = vunpack.c.l.b16 %v2042
        %v2449 = vunpack.c.l.b16 %v2043
        %v2450 = vunpack.c.l.b16 %v2044
        %v2451 = vunpack.c.l.b16 %v2045
        %v2452 = vunpack.c.l.b16 %v2046
        %v2453 = vunpack.c.l.b16 %v2047
        %v2454 = vunpack.c.l.b16 %v2048
        %v2455 = vunpack.c.l.b16 %v2049
        %v2456 = vunpack.c.l.b16 %v2050
        %v2457 = vunpack.c.l.b16 %v2051
        %v2458 = vunpack.c.l.b16 %v2052
        %v2459 = vunpack.c.l.b16 %v2053
        %v2460 = vunpack.c.l.b16 %v2054
        %v2461 = vunpack.c.l.b16 %v2055
        %v2462 = vunpack.c.l.b16 %v2056
        %v2463 = vpack.c.b16 %v2432, %v2431
        %v2464 = vpack.c.b16 %v2434, %v2433
        %v2465 = vpack.c.b16 %v2436, %v2435
        %v2466 = vpack.c.b16 %v2438, %v2437
        %v2467 = vpack.c.b16 %v2440, %v2439
        %v2468 = vpack.c.b16 %v2442, %v2441
        %v2469 = vpack.c.b16 %v2444, %v2443
        %v2470 = vpack.c.b16 %v2446, %v2445
        %v2471 = vpack.c.b16 %v2448, %v2447
        %v2472 = vpack.c.b16 %v2450, %v2449
        %v2473 = vpack.c.b16 %v2452, %v2451
        %v2474 = vpack.c.b16 %v2454, %v2453
        %v2475 = vpack.c.b16 %v2456, %v2455
        %v2476 = vpack.c.b16 %v2458, %v2457
        %v2477 = vpack.c.b16 %v2460, %v2459
        %v2478 = vpack.c.b16 %v2462, %v2461
        %2495 = vmatprep.subr.bf16.mxu0 0
        %2496 = vmatpush1.bf16.msra.mxu0 %v2470
        %2497 = vmatprep.subr.bf16.mxu0 0
        %2498 = vmatpush1.bf16.msra.mxu0 %v2469
        %2499 = vmatprep.subr.bf16.mxu0 0
        %2500 = vmatpush1.bf16.msra.mxu0 %v2468
        %2501 = vmatprep.subr.bf16.mxu0 0
        %2502 = vmatpush1.bf16.msra.mxu0 %v2467
        %2503 = vmatprep.subr.bf16.mxu0 0
        %2504 = vmatpush1.bf16.msra.mxu0 %v2466
        %2505 = vmatprep.subr.bf16.mxu0 0
        %2506 = vmatpush1.bf16.msra.mxu0 %v2465
        %2507 = vmatprep.subr.bf16.mxu0 0
        %2508 = vmatpush1.bf16.msra.mxu0 %v2464
        %2509 = vmatprep.subr.bf16.mxu0 0
        %2510 = vmatpush1.bf16.msra.mxu0 %v2463
        %2511 = vmatprep.subr.bf16.mxu0 0
        %2512 = vmatpush2.bf16.msra.mxu0 %v2478
        %2513 = vmatprep.subr.bf16.mxu0 0
        %2514 = vmatpush2.bf16.msra.mxu0 %v2477
        %2515 = vmatprep.subr.bf16.mxu0 0
        %2516 = vmatpush2.bf16.msra.mxu0 %v2476
        %2517 = vmatprep.subr.bf16.mxu0 0
        %2518 = vmatpush2.bf16.msra.mxu0 %v2475
        %2519 = vmatprep.subr.bf16.mxu0 0
        %2520 = vmatpush2.bf16.msra.mxu0 %v2474
        %2521 = vmatprep.subr.bf16.mxu0 0
        %2522 = vmatpush2.bf16.msra.mxu0 %v2473
        %2523 = vmatprep.subr.bf16.mxu0 0
        %2524 = vmatpush2.bf16.msra.mxu0 %v2472
        %2525 = vmatprep.subr.bf16.mxu0 0
        %2526 = vmatpush2.bf16.msra.mxu0 %v2471
        %2527 = vmatprep.mubr.bf16.mxu0 %v2311
        %2528 = vmatmul.mubr.bf16.gmra.mxu0 %v2299
        %v2529 = vpop.f32.mrf.mxu0
        %v2530 = vadd.f32 %v2215, %v2529
        %v2531 = vpop.f32.mrf.mxu0
        %v2532 = vpop.f32.mrf.mxu0
        %v2533 = vadd.f32 %v2218, %v2532
        %v2534 = vpop.f32.mrf.mxu0
        %2535 = vmatprep.mubr.bf16.mxu0 %v2319
        %2536 = vmatmul.mubr.bf16.gmra.mxu0 %v1965
        %v2537 = vpop.f32.mrf.mxu0
        %v2538 = vadd.f32 %v2223, %v2537
        %v2539 = vpop.f32.mrf.mxu0
        %v2540 = vpop.f32.mrf.mxu0
        %v2541 = vadd.f32 %v2226, %v2540
        %v2542 = vpop.f32.mrf.mxu0
        %2543 = vmatprep.mubr.bf16.mxu0 %v2327
        %2544 = vmatmul.mubr.bf16.gmra.mxu0 %v1973
        %v2545 = vpop.f32.mrf.mxu0
        %v2546 = vadd.f32 %v2231, %v2545
        %v2547 = vpop.f32.mrf.mxu0
        %v2548 = vpop.f32.mrf.mxu0
        %v2549 = vadd.f32 %v2234, %v2548
        %v2550 = vpop.f32.mrf.mxu0
        %2551 = vmatprep.mubr.bf16.mxu0 %v2335
        %2552 = vmatmul.mubr.bf16.gmra.mxu0 %v1981
        %v2553 = vpop.f32.mrf.mxu0
        %v2554 = vadd.f32 %v2239, %v2553
        %v2555 = vpop.f32.mrf.mxu0
        %v2556 = vpop.f32.mrf.mxu0
        %v2557 = vadd.f32 %v2242, %v2556
        %v2558 = vpop.f32.mrf.mxu0
        %2559 = vmatprep.mubr.bf16.mxu0 %v2343
        %2560 = vmatmul.mubr.bf16.gmra.mxu0 %v1989
        %v2561 = vpop.f32.mrf.mxu0
        %v2562 = vadd.f32 %v2247, %v2561
        %v2563 = vpop.f32.mrf.mxu0
        %v2564 = vpop.f32.mrf.mxu0
        %v2565 = vadd.f32 %v2250, %v2564
        %v2566 = vpop.f32.mrf.mxu0
        %2567 = vmatprep.mubr.bf16.mxu0 %v2351
        %2568 = vmatmul.mubr.bf16.gmra.mxu0 %v1997
        %v2569 = vpop.f32.mrf.mxu0
        %v2570 = vadd.f32 %v2255, %v2569
        %v2571 = vpop.f32.mrf.mxu0
        %v2572 = vpop.f32.mrf.mxu0
        %v2573 = vadd.f32 %v2258, %v2572
        %v2574 = vpop.f32.mrf.mxu0
        %2575 = vmatprep.mubr.bf16.mxu0 %v2359
        %2576 = vmatmul.mubr.bf16.gmra.mxu0 %v2005
        %v2577 = vpop.f32.mrf.mxu0
        %v2578 = vadd.f32 %v2263, %v2577
        %v2579 = vpop.f32.mrf.mxu0
        %v2580 = vpop.f32.mrf.mxu0
        %v2581 = vadd.f32 %v2266, %v2580
        %v2582 = vpop.f32.mrf.mxu0
        %2583 = vmatprep.mubr.bf16.mxu0 %v2367
        %2584 = vmatmul.mubr.bf16.gmra.mxu0 %v2013
        %v2585 = vpop.f32.mrf.mxu0
        %v2586 = vadd.f32 %v2271, %v2585
        %v2587 = vpop.f32.mrf.mxu0
        %v2588 = vpop.f32.mrf.mxu0
        %v2589 = vadd.f32 %v2274, %v2588
        %v2590 = vpop.f32.mrf.mxu0
        %2591 = vmatprep.mubr.bf16.mxu0 %v2375
        %2592 = vmatmul.mubr.bf16.gmra.mxu0 %v2021
        %v2593 = vpop.f32.mrf.mxu0
        %v2594 = vadd.f32 %v2279, %v2593
        %v2595 = vpop.f32.mrf.mxu0
        %v2596 = vpop.f32.mrf.mxu0
        %v2597 = vadd.f32 %v2282, %v2596
        %v2598 = vpop.f32.mrf.mxu0
        %2599 = vmatprep.mubr.bf16.mxu0 %v2378
        %2600 = vmatmul.mubr.bf16.gmra.mxu0 %v2024
        %v2601 = vpop.f32.mrf.mxu0
        %v2602 = vadd.f32 %v2287, %v2601
        %v2603 = vpop.f32.mrf.mxu0
        %v2604 = vpop.f32.mrf.mxu0
        %v2605 = vpop.f32.mrf.mxu0
        %2606 = vdwg.mxu0
        %v2607 = vld [vmem:[%s5] sm:$0x1]
        %v2609 = vlaneseq
        %v2610 = vshrl.u32 %v2609, 7
        %v2611 = vsub.s32 0, %v2610
        %v2612 = vrot.slane %v2607, %v2611
        %v2614 = vadd.f32 %v2530, %v2612
        %v2615 = vadd.f32 %v2533, %v2612
        %v2616 = vadd.f32 %v2538, %v2612
        %v2617 = vadd.f32 %v2541, %v2612
        %v2618 = vadd.f32 %v2546, %v2612
        %v2619 = vadd.f32 %v2549, %v2612
        %v2620 = vadd.f32 %v2554, %v2612
        %v2621 = vadd.f32 %v2557, %v2612
        %v2622 = vadd.f32 %v2562, %v2612
        %v2623 = vadd.f32 %v2565, %v2612
        %v2624 = vadd.f32 %v2570, %v2612
        %v2625 = vadd.f32 %v2573, %v2612
        %v2626 = vadd.f32 %v2578, %v2612
        %v2627 = vadd.f32 %v2581, %v2612
        %v2628 = vadd.f32 %v2586, %v2612
        %v2629 = vadd.f32 %v2589, %v2612
        %v2630 = vadd.f32 %v2594, %v2612
        %v2631 = vadd.f32 %v2597, %v2612
        %v2632 = vadd.f32 %v2602, %v2612
        %v2633 = vld [vmem:[#allocation2 + $0x2] sm:$0xff]
        %v2634 = vld [vmem:[#allocation2 + $0xa] sm:$0xff]
        %v2635 = vld [vmem:[#allocation2 + $0x12] sm:$0xff]
        %v2636 = vld [vmem:[#allocation2 + $0x1a] sm:$0xff]
        %v2637 = vld [vmem:[#allocation2 + $0x22] sm:$0xff]
        %v2638 = vld [vmem:[#allocation2 + $0x2a] sm:$0xff]
        %v2639 = vld [vmem:[#allocation2 + $0x32] sm:$0xff]
        %v2640 = vld [vmem:[#allocation2 + $0x3a] sm:$0xff]
        %v2641 = vld [vmem:[#allocation2 + $0x42] sm:$0xff]
        %v2642 = vld [vmem:[#allocation2 + $0x4a] sm:$0xff]
        %v2643 = vld [vmem:[#allocation2 + $0x52] sm:$0xff]
        %v2644 = vld [vmem:[#allocation2 + $0x5a] sm:$0xff]
        %v2645 = vld [vmem:[#allocation2 + $0x62] sm:$0xff]
        %v2646 = vld [vmem:[#allocation2 + $0x6a] sm:$0xff]
        %v2647 = vld [vmem:[#allocation2 + $0x72] sm:$0xff]
        %v2648 = vld [vmem:[#allocation2 + $0x7a] sm:$0xff]
        %v2649 = vld [vmem:[#allocation2 + $0x82] sm:$0xff]
        %v2650 = vld [vmem:[#allocation2 + $0x8a] sm:$0xff]
        %v2651 = vld [vmem:[#allocation2 + $0x92] sm:$0xf]
        %v2652 = vadd.f32 %v2633, %v2614
        %v2653 = vadd.f32 %v2634, %v2615
        %v2654 = vadd.f32 %v2635, %v2616
        %v2655 = vadd.f32 %v2636, %v2617
        %v2656 = vadd.f32 %v2637, %v2618
        %v2657 = vadd.f32 %v2638, %v2619
        %v2658 = vadd.f32 %v2639, %v2620
        %v2659 = vadd.f32 %v2640, %v2621
        %v2660 = vadd.f32 %v2641, %v2622
        %v2661 = vadd.f32 %v2642, %v2623
        %v2662 = vadd.f32 %v2643, %v2624
        %v2663 = vadd.f32 %v2644, %v2625
        %v2664 = vadd.f32 %v2645, %v2626
        %v2665 = vadd.f32 %v2646, %v2627
        %v2666 = vadd.f32 %v2647, %v2628
        %v2667 = vadd.f32 %v2648, %v2629
        %v2668 = vadd.f32 %v2649, %v2630
        %v2669 = vadd.f32 %v2650, %v2631
        %v2670 = vadd.f32 %v2651, %v2632
        %s2671 = sadd.s32 %s527, 4294967286
        %v2672 = vstv %s2671
        %v2673 = vadd.s32 %v2672, %v1446
        %v2674 = vadd.s32 %v2672, %v1447
        %v2675 = vadd.s32 %v2672, %v1448
        %v2676 = vadd.s32 %v2672, %v1449
        %v2677 = vadd.s32 %v2672, %v1450
        %v2678 = vadd.s32 %v2672, %v1451
        %v2679 = vadd.s32 %v2672, %v1452
        %v2680 = vadd.s32 %v2672, %v1453
        %v2681 = vadd.s32 %v2672, %v1454
        %v2682 = vadd.s32 %v2672, %v1455
        %v2683 = vadd.s32 %v2672, %v1456
        %v2684 = vadd.s32 %v2672, %v1457
        %v2685 = vadd.s32 %v2672, %v1458
        %v2686 = vadd.s32 %v2672, %v1459
        %v2687 = vadd.s32 %v2672, %v1460
        %v2688 = vadd.s32 %v2672, %v1461
        %v2689 = vadd.s32 %v2672, %v1462
        %v2690 = vadd.s32 %v2672, %v1463
        %v2691 = vadd.s32 %v2672, %v1464
        %vm2692 = vcmp.ge.s32.totalorder %v2673, 0
        %vm2693 = vcmp.ge.s32.totalorder %v2674, 0
        %vm2694 = vcmp.ge.s32.totalorder %v2675, 0
        %vm2695 = vcmp.ge.s32.totalorder %v2676, 0
        %vm2696 = vcmp.ge.s32.totalorder %v2677, 0
        %vm2697 = vcmp.ge.s32.totalorder %v2678, 0
        %vm2698 = vcmp.ge.s32.totalorder %v2679, 0
        %vm2699 = vcmp.ge.s32.totalorder %v2680, 0
        %vm2700 = vcmp.ge.s32.totalorder %v2681, 0
        %vm2701 = vcmp.ge.s32.totalorder %v2682, 0
        %vm2702 = vcmp.ge.s32.totalorder %v2683, 0
        %vm2703 = vcmp.ge.s32.totalorder %v2684, 0
        %vm2704 = vcmp.ge.s32.totalorder %v2685, 0
        %vm2705 = vcmp.ge.s32.totalorder %v2686, 0
        %vm2706 = vcmp.ge.s32.totalorder %v2687, 0
        %vm2707 = vcmp.ge.s32.totalorder %v2688, 0
        %vm2708 = vcmp.ge.s32.totalorder %v2689, 0
        %vm2709 = vcmp.ge.s32.totalorder %v2690, 0
        %vm2710 = vcmp.ge.s32.totalorder %v2691, 0
        %vm2711 = vcmp.lt.s32.totalorder %v2673, 200
        %vm2712 = vcmp.lt.s32.totalorder %v2674, 200
        %vm2713 = vcmp.lt.s32.totalorder %v2675, 200
        %vm2714 = vcmp.lt.s32.totalorder %v2676, 200
        %vm2715 = vcmp.lt.s32.totalorder %v2677, 200
        %vm2716 = vcmp.lt.s32.totalorder %v2678, 200
        %vm2717 = vcmp.lt.s32.totalorder %v2679, 200
        %vm2718 = vcmp.lt.s32.totalorder %v2680, 200
        %vm2719 = vcmp.lt.s32.totalorder %v2681, 200
        %vm2720 = vcmp.lt.s32.totalorder %v2682, 200
        %vm2721 = vcmp.lt.s32.totalorder %v2683, 200
        %vm2722 = vcmp.lt.s32.totalorder %v2684, 200
        %vm2723 = vcmp.lt.s32.totalorder %v2685, 200
        %vm2724 = vcmp.lt.s32.totalorder %v2686, 200
        %vm2725 = vcmp.lt.s32.totalorder %v2687, 200
        %vm2726 = vcmp.lt.s32.totalorder %v2688, 200
        %vm2727 = vcmp.lt.s32.totalorder %v2689, 200
        %vm2728 = vcmp.lt.s32.totalorder %v2690, 200
        %vm2729 = vcmp.lt.s32.totalorder %v2691, 200
        %vm2730 = vmand %vm2692, %vm2711
        %vm2731 = vmand %vm2693, %vm2712
        %vm2732 = vmand %vm2694, %vm2713
        %vm2733 = vmand %vm2695, %vm2714
        %vm2734 = vmand %vm2696, %vm2715
        %vm2735 = vmand %vm2697, %vm2716
        %vm2736 = vmand %vm2698, %vm2717
        %vm2737 = vmand %vm2699, %vm2718
        %vm2738 = vmand %vm2700, %vm2719
        %vm2739 = vmand %vm2701, %vm2720
        %vm2740 = vmand %vm2702, %vm2721
        %vm2741 = vmand %vm2703, %vm2722
        %vm2742 = vmand %vm2704, %vm2723
        %vm2743 = vmand %vm2705, %vm2724
        %vm2744 = vmand %vm2706, %vm2725
        %vm2745 = vmand %vm2707, %vm2726
        %vm2746 = vmand %vm2708, %vm2727
        %vm2747 = vmand %vm2709, %vm2728
        %vm2748 = vmand %vm2710, %vm2729
        %v2749 = vsel %vm2730, 1, 0
        %v2750 = vsel %vm2731, 1, 0
        %v2751 = vsel %vm2732, 1, 0
        %v2752 = vsel %vm2733, 1, 0
        %v2753 = vsel %vm2734, 1, 0
        %v2754 = vsel %vm2735, 1, 0
        %v2755 = vsel %vm2736, 1, 0
        %v2756 = vsel %vm2737, 1, 0
        %v2757 = vsel %vm2738, 1, 0
        %v2758 = vsel %vm2739, 1, 0
        %v2759 = vsel %vm2740, 1, 0
        %v2760 = vsel %vm2741, 1, 0
        %v2761 = vsel %vm2742, 1, 0
        %v2762 = vsel %vm2743, 1, 0
        %v2763 = vsel %vm2744, 1, 0
        %v2764 = vsel %vm2745, 1, 0
        %v2765 = vsel %vm2746, 1, 0
        %v2766 = vsel %vm2747, 1, 0
        %v2767 = vsel %vm2748, 1, 0
        %vm2768 = vcmp.eq.s32.totalorder %v2749, 1
        %vm2769 = vcmp.eq.s32.totalorder %v2750, 1
        %vm2770 = vcmp.eq.s32.totalorder %v2751, 1
        %vm2771 = vcmp.eq.s32.totalorder %v2752, 1
        %vm2772 = vcmp.eq.s32.totalorder %v2753, 1
        %vm2773 = vcmp.eq.s32.totalorder %v2754, 1
        %vm2774 = vcmp.eq.s32.totalorder %v2755, 1
        %vm2775 = vcmp.eq.s32.totalorder %v2756, 1
        %vm2776 = vcmp.eq.s32.totalorder %v2757, 1
        %vm2777 = vcmp.eq.s32.totalorder %v2758, 1
        %vm2778 = vcmp.eq.s32.totalorder %v2759, 1
        %vm2779 = vcmp.eq.s32.totalorder %v2760, 1
        %vm2780 = vcmp.eq.s32.totalorder %v2761, 1
        %vm2781 = vcmp.eq.s32.totalorder %v2762, 1
        %vm2782 = vcmp.eq.s32.totalorder %v2763, 1
        %vm2783 = vcmp.eq.s32.totalorder %v2764, 1
        %vm2784 = vcmp.eq.s32.totalorder %v2765, 1
        %vm2785 = vcmp.eq.s32.totalorder %v2766, 1
        %vm2786 = vcmp.eq.s32.totalorder %v2767, 1
        %v2787 = vsel %vm2768, %v2652, 0.0
        %v2788 = vsel %vm2769, %v2653, 0.0
        %v2789 = vsel %vm2770, %v2654, 0.0
        %v2790 = vsel %vm2771, %v2655, 0.0
        %v2791 = vsel %vm2772, %v2656, 0.0
        %v2792 = vsel %vm2773, %v2657, 0.0
        %v2793 = vsel %vm2774, %v2658, 0.0
        %v2794 = vsel %vm2775, %v2659, 0.0
        %v2795 = vsel %vm2776, %v2660, 0.0
        %v2796 = vsel %vm2777, %v2661, 0.0
        %v2797 = vsel %vm2778, %v2662, 0.0
        %v2798 = vsel %vm2779, %v2663, 0.0
        %v2799 = vsel %vm2780, %v2664, 0.0
        %v2800 = vsel %vm2781, %v2665, 0.0
        %v2801 = vsel %vm2782, %v2666, 0.0
        %v2802 = vsel %vm2783, %v2667, 0.0
        %v2803 = vsel %vm2784, %v2668, 0.0
        %v2804 = vsel %vm2785, %v2669, 0.0
        %v2805 = vsel %vm2786, %v2670, 0.0
        %2806 = vst [vmem:[#allocation2 + $0x2] sm:$0xff] %v2787
        %2807 = vst [vmem:[#allocation2 + $0xa] sm:$0xff] %v2788
        %2808 = vst [vmem:[#allocation2 + $0x12] sm:$0xff] %v2789
        %2809 = vst [vmem:[#allocation2 + $0x1a] sm:$0xff] %v2790
        %2810 = vst [vmem:[#allocation2 + $0x22] sm:$0xff] %v2791
        %2811 = vst [vmem:[#allocation2 + $0x2a] sm:$0xff] %v2792
        %2812 = vst [vmem:[#allocation2 + $0x32] sm:$0xff] %v2793
        %2813 = vst [vmem:[#allocation2 + $0x3a] sm:$0xff] %v2794
        %2814 = vst [vmem:[#allocation2 + $0x42] sm:$0xff] %v2795
        %2815 = vst [vmem:[#allocation2 + $0x4a] sm:$0xff] %v2796
        %2816 = vst [vmem:[#allocation2 + $0x52] sm:$0xff] %v2797
        %2817 = vst [vmem:[#allocation2 + $0x5a] sm:$0xff] %v2798
        %2818 = vst [vmem:[#allocation2 + $0x62] sm:$0xff] %v2799
        %2819 = vst [vmem:[#allocation2 + $0x6a] sm:$0xff] %v2800
        %2820 = vst [vmem:[#allocation2 + $0x72] sm:$0xff] %v2801
        %2821 = vst [vmem:[#allocation2 + $0x7a] sm:$0xff] %v2802
        %2822 = vst [vmem:[#allocation2 + $0x82] sm:$0xff] %v2803
        %2823 = vst [vmem:[#allocation2 + $0x8a] sm:$0xff] %v2804
        %2824 = vst [vmem:[#allocation2 + $0x92] sm:$0xf] %v2805
        %v2825 = vld [vmem:[#allocation2 + $0x2] sm:$0xff]
        %v2826 = vld [vmem:[#allocation2 + $0xa] sm:$0xff]
        %v2827 = vld [vmem:[#allocation2 + $0x12] sm:$0xff]
        %v2828 = vld [vmem:[#allocation2 + $0x1a] sm:$0xff]
        %v2829 = vld [vmem:[#allocation2 + $0x22] sm:$0xff]
        %v2830 = vld [vmem:[#allocation2 + $0x2a] sm:$0xff]
        %v2831 = vld [vmem:[#allocation2 + $0x32] sm:$0xff]
        %v2832 = vld [vmem:[#allocation2 + $0x3a] sm:$0xff]
        %v2833 = vld [vmem:[#allocation2 + $0x42] sm:$0xff]
        %v2834 = vld [vmem:[#allocation2 + $0x4a] sm:$0xff]
        %v2835 = vld [vmem:[#allocation2 + $0x52] sm:$0xff]
        %v2836 = vld [vmem:[#allocation2 + $0x5a] sm:$0xff]
        %v2837 = vld [vmem:[#allocation2 + $0x62] sm:$0xff]
        %v2838 = vld [vmem:[#allocation2 + $0x6a] sm:$0xff]
        %v2839 = vld [vmem:[#allocation2 + $0x72] sm:$0xff]
        %v2840 = vld [vmem:[#allocation2 + $0x7a] sm:$0xff]
        %v2841 = vld [vmem:[#allocation2 + $0x82] sm:$0xff]
        %v2842 = vld [vmem:[#allocation2 + $0x8a] sm:$0xff]
        %v2843 = vld [vmem:[#allocation2 + $0x92] sm:$0xf]
        %vm2844 = vcmp.ge.f32.partialorder %v2825, 0.0
        %vm2845 = vcmp.ge.f32.partialorder %v2826, 0.0
        %vm2846 = vcmp.ge.f32.partialorder %v2827, 0.0
        %vm2847 = vcmp.ge.f32.partialorder %v2828, 0.0
        %vm2848 = vcmp.ge.f32.partialorder %v2829, 0.0
        %vm2849 = vcmp.ge.f32.partialorder %v2830, 0.0
        %vm2850 = vcmp.ge.f32.partialorder %v2831, 0.0
        %vm2851 = vcmp.ge.f32.partialorder %v2832, 0.0
        %vm2852 = vcmp.ge.f32.partialorder %v2833, 0.0
        %vm2853 = vcmp.ge.f32.partialorder %v2834, 0.0
        %vm2854 = vcmp.ge.f32.partialorder %v2835, 0.0
        %vm2855 = vcmp.ge.f32.partialorder %v2836, 0.0
        %vm2856 = vcmp.ge.f32.partialorder %v2837, 0.0
        %vm2857 = vcmp.ge.f32.partialorder %v2838, 0.0
        %vm2858 = vcmp.ge.f32.partialorder %v2839, 0.0
        %vm2859 = vcmp.ge.f32.partialorder %v2840, 0.0
        %vm2860 = vcmp.ge.f32.partialorder %v2841, 0.0
        %vm2861 = vcmp.ge.f32.partialorder %v2842, 0.0
        %vm2862 = vcmp.ge.f32.partialorder %v2843, 0.0
        %v2863 = vmul.f32 %v2825, 0.1
        %v2864 = vmul.f32 %v2826, 0.1
        %v2865 = vmul.f32 %v2827, 0.1
        %v2866 = vmul.f32 %v2828, 0.1
        %v2867 = vmul.f32 %v2829, 0.1
        %v2868 = vmul.f32 %v2830, 0.1
        %v2869 = vmul.f32 %v2831, 0.1
        %v2870 = vmul.f32 %v2832, 0.1
        %v2871 = vmul.f32 %v2833, 0.1
        %v2872 = vmul.f32 %v2834, 0.1
        %v2873 = vmul.f32 %v2835, 0.1
        %v2874 = vmul.f32 %v2836, 0.1
        %v2875 = vmul.f32 %v2837, 0.1
        %v2876 = vmul.f32 %v2838, 0.1
        %v2877 = vmul.f32 %v2839, 0.1
        %v2878 = vmul.f32 %v2840, 0.1
        %v2879 = vmul.f32 %v2841, 0.1
        %v2880 = vmul.f32 %v2842, 0.1
        %v2881 = vmul.f32 %v2843, 0.1
        %v2882 = vsel %vm2844, %v2825, %v2863
        %v2883 = vsel %vm2845, %v2826, %v2864
        %v2884 = vsel %vm2846, %v2827, %v2865
        %v2885 = vsel %vm2847, %v2828, %v2866
        %v2886 = vsel %vm2848, %v2829, %v2867
        %v2887 = vsel %vm2849, %v2830, %v2868
        %v2888 = vsel %vm2850, %v2831, %v2869
        %v2889 = vsel %vm2851, %v2832, %v2870
        %v2890 = vsel %vm2852, %v2833, %v2871
        %v2891 = vsel %vm2853, %v2834, %v2872
        %v2892 = vsel %vm2854, %v2835, %v2873
        %v2893 = vsel %vm2855, %v2836, %v2874
        %v2894 = vsel %vm2856, %v2837, %v2875
        %v2895 = vsel %vm2857, %v2838, %v2876
        %v2896 = vsel %vm2858, %v2839, %v2877
        %v2897 = vsel %vm2859, %v2840, %v2878
        %v2898 = vsel %vm2860, %v2841, %v2879
        %v2899 = vsel %vm2861, %v2842, %v2880
        %v2900 = vsel %vm2862, %v2843, %v2881
        %v2901 = vpack.c.bf16 %v2883, %v2882
        %v2902 = vpack.c.bf16 %v2885, %v2884
        %v2903 = vpack.c.bf16 %v2887, %v2886
        %v2904 = vpack.c.bf16 %v2889, %v2888
        %v2905 = vpack.c.bf16 %v2891, %v2890
        %v2906 = vpack.c.bf16 %v2893, %v2892
        %v2907 = vpack.c.bf16 %v2895, %v2894
        %v2908 = vpack.c.bf16 %v2897, %v2896
        %v2909 = vpack.c.bf16 %v2899, %v2898
        %v2910 = vpack.c.bf16 %v2900, %v2900
        %v2921 = vunpack.c.l.b16 %v2901
        %v2922 = vunpack.c.h.b16 %v2901
        %v2923 = vunpack.c.l.b16 %v2902
        %v2924 = vunpack.c.h.b16 %v2902
        %v2925 = vunpack.c.l.b16 %v2903
        %v2926 = vunpack.c.h.b16 %v2903
        %v2927 = vunpack.c.l.b16 %v2904
        %v2928 = vunpack.c.h.b16 %v2904
        %v2929 = vunpack.c.l.b16 %v2905
        %v2930 = vunpack.c.h.b16 %v2905
        %v2931 = vunpack.c.l.b16 %v2906
        %v2932 = vunpack.c.h.b16 %v2906
        %v2933 = vunpack.c.l.b16 %v2907
        %v2934 = vunpack.c.h.b16 %v2907
        %v2935 = vunpack.c.l.b16 %v2908
        %v2936 = vunpack.c.h.b16 %v2908
        %v2937 = vunpack.c.l.b16 %v2909
        %v2938 = vunpack.c.h.b16 %v2909
        %v2939 = vunpack.c.l.b16 %v2910
        %v2940 = vpack.c.b16 %v2921, %v2921
        %v2941 = vpack.c.b16 %v2922, %v2922
        %v2942 = vpack.c.b16 %v2923, %v2923
        %v2943 = vpack.c.b16 %v2924, %v2924
        %v2944 = vpack.c.b16 %v2925, %v2925
        %v2945 = vpack.c.b16 %v2926, %v2926
        %v2946 = vpack.c.b16 %v2927, %v2927
        %v2947 = vpack.c.b16 %v2928, %v2928
        %v2948 = vpack.c.b16 %v2929, %v2929
        %v2949 = vpack.c.b16 %v2930, %v2930
        %v2950 = vpack.c.b16 %v2931, %v2931
        %v2951 = vpack.c.b16 %v2932, %v2932
        %v2952 = vpack.c.b16 %v2933, %v2933
        %v2953 = vpack.c.b16 %v2934, %v2934
        %v2954 = vpack.c.b16 %v2935, %v2935
        %v2955 = vpack.c.b16 %v2936, %v2936
        %v2956 = vpack.c.b16 %v2937, %v2937
        %v2957 = vpack.c.b16 %v2938, %v2938
        %v2958 = vpack.c.b16 %v2939, %v2939
        %vm2959 = vcmask 1040384
        %vm2960 = vcmask 1044484
        %vm2961 = vmor %vm2959, %vm2960
        %v2962 = vrot.slane %v2940, 7
        %v2963 = vrot.slane %v2962, 4
        %v2964 = vrot.slane %v2941, 7
        %v2965 = vsel %vm2961, %v2963, %v2964
        %v2966 = vrot.slane %v2964, 4
        %v2967 = vrot.slane %v2942, 7
        %v2968 = vsel %vm2961, %v2966, %v2967
        %v2969 = vrot.slane %v2967, 4
        %v2970 = vrot.slane %v2943, 7
        %v2971 = vsel %vm2961, %v2969, %v2970
        %v2972 = vrot.slane %v2970, 4
        %v2973 = vrot.slane %v2944, 7
        %v2974 = vsel %vm2961, %v2972, %v2973
        %v2975 = vrot.slane %v2973, 4
        %v2976 = vrot.slane %v2945, 7
        %v2977 = vsel %vm2961, %v2975, %v2976
        %v2978 = vrot.slane %v2976, 4
        %v2979 = vrot.slane %v2946, 7
        %v2980 = vsel %vm2961, %v2978, %v2979
        %v2981 = vrot.slane %v2979, 4
        %v2982 = vrot.slane %v2947, 7
        %v2983 = vsel %vm2961, %v2981, %v2982
        %v2984 = vrot.slane %v2982, 4
        %v2985 = vrot.slane %v2948, 7
        %v2986 = vsel %vm2961, %v2984, %v2985
        %v2987 = vrot.slane %v2985, 4
        %v2988 = vrot.slane %v2949, 7
        %v2989 = vsel %vm2961, %v2987, %v2988
        %v2990 = vrot.slane %v2988, 4
        %v2991 = vrot.slane %v2950, 7
        %v2992 = vsel %vm2961, %v2990, %v2991
        %v2993 = vrot.slane %v2991, 4
        %v2994 = vrot.slane %v2951, 7
        %v2995 = vsel %vm2961, %v2993, %v2994
        %v2996 = vrot.slane %v2994, 4
        %v2997 = vrot.slane %v2952, 7
        %v2998 = vsel %vm2961, %v2996, %v2997
        %v2999 = vrot.slane %v2997, 4
        %v3000 = vrot.slane %v2953, 7
        %v3001 = vsel %vm2961, %v2999, %v3000
        %v3002 = vrot.slane %v3000, 4
        %v3003 = vrot.slane %v2954, 7
        %v3004 = vsel %vm2961, %v3002, %v3003
        %v3005 = vrot.slane %v3003, 4
        %v3006 = vrot.slane %v2955, 7
        %v3007 = vsel %vm2961, %v3005, %v3006
        %v3008 = vrot.slane %v3006, 4
        %v3009 = vrot.slane %v2956, 7
        %v3010 = vsel %vm2961, %v3008, %v3009
        %v3011 = vrot.slane %v3009, 4
        %v3012 = vrot.slane %v2957, 7
        %v3013 = vsel %vm2961, %v3011, %v3012
        %v3014 = vrot.slane %v3012, 4
        %v3015 = vrot.slane %v2958, 7
        %v3016 = vsel %vm2961, %v3014, %v3015
        %3036 = vst [vmem:[#allocation3] sm:$0xe] %v2962
        %3037 = vst [vmem:[#allocation3 + $0x4] sm:$0xf] %v2965
        %3038 = vst [vmem:[#allocation3 + $0x8] sm:$0xf] %v2968
        %3039 = vst [vmem:[#allocation3 + $0xc] sm:$0xf] %v2971
        %3040 = vst [vmem:[#allocation3 + $0x10] sm:$0xf] %v2974
        %3041 = vst [vmem:[#allocation3 + $0x14] sm:$0xf] %v2977
        %3042 = vst [vmem:[#allocation3 + $0x18] sm:$0xf] %v2980
        %3043 = vst [vmem:[#allocation3 + $0x1c] sm:$0xf] %v2983
        %3044 = vst [vmem:[#allocation3 + $0x20] sm:$0xf] %v2986
        %3045 = vst [vmem:[#allocation3 + $0x24] sm:$0xf] %v2989
        %3046 = vst [vmem:[#allocation3 + $0x28] sm:$0xf] %v2992
        %3047 = vst [vmem:[#allocation3 + $0x2c] sm:$0xf] %v2995
        %3048 = vst [vmem:[#allocation3 + $0x30] sm:$0xf] %v2998
        %3049 = vst [vmem:[#allocation3 + $0x34] sm:$0xf] %v3001
        %3050 = vst [vmem:[#allocation3 + $0x38] sm:$0xf] %v3004
        %3051 = vst [vmem:[#allocation3 + $0x3c] sm:$0xf] %v3007
        %3052 = vst [vmem:[#allocation3 + $0x40] sm:$0xf] %v3010
        %3053 = vst [vmem:[#allocation3 + $0x44] sm:$0xf] %v3013
        %3054 = vst [vmem:[#allocation3 + $0x48] sm:$0x7] %v3016
        %v3055 = vld [vmem:[#allocation3] sm:$0xe]
        %v3056 = vld [vmem:[#allocation3 + $0x4] sm:$0xf]
        %v3057 = vld [vmem:[#allocation3 + $0x8] sm:$0xf]
        %v3058 = vld [vmem:[#allocation3 + $0xc] sm:$0xf]
        %v3059 = vld [vmem:[#allocation3 + $0x10] sm:$0xf]
        %v3060 = vld [vmem:[#allocation3 + $0x14] sm:$0xf]
        %v3061 = vld [vmem:[#allocation3 + $0x18] sm:$0xf]
        %v3062 = vld [vmem:[#allocation3 + $0x1c] sm:$0xf]
        %v3063 = vld [vmem:[#allocation3 + $0x20] sm:$0xf]
        %v3064 = vld [vmem:[#allocation3 + $0x24] sm:$0xf]
        %v3065 = vld [vmem:[#allocation3 + $0x28] sm:$0xf]
        %v3066 = vld [vmem:[#allocation3 + $0x2c] sm:$0xf]
        %v3067 = vld [vmem:[#allocation3 + $0x30] sm:$0xf]
        %v3068 = vld [vmem:[#allocation3 + $0x34] sm:$0xf]
        %v3069 = vld [vmem:[#allocation3 + $0x38] sm:$0xf]
        %v3070 = vld [vmem:[#allocation3 + $0x3c] sm:$0xf]
        %v3071 = vld [vmem:[#allocation3 + $0x40] sm:$0xf]
        %v3072 = vld [vmem:[#allocation3 + $0x44] sm:$0xf]
        %v3073 = vld [vmem:[#allocation3] sm:$0xc]
        %v3074 = vld [vmem:[#allocation3 + $0x4] sm:$0xf]
        %v3075 = vld [vmem:[#allocation3 + $0x8] sm:$0xf]
        %v3076 = vld [vmem:[#allocation3 + $0xc] sm:$0xf]
        %v3077 = vld [vmem:[#allocation3 + $0x10] sm:$0xf]
        %v3078 = vld [vmem:[#allocation3 + $0x14] sm:$0xf]
        %v3079 = vld [vmem:[#allocation3 + $0x18] sm:$0xf]
        %v3080 = vld [vmem:[#allocation3 + $0x1c] sm:$0xf]
        %v3081 = vld [vmem:[#allocation3 + $0x20] sm:$0xf]
        %v3082 = vld [vmem:[#allocation3 + $0x24] sm:$0xf]
        %v3083 = vld [vmem:[#allocation3 + $0x28] sm:$0xf]
        %v3084 = vld [vmem:[#allocation3 + $0x2c] sm:$0xf]
        %v3085 = vld [vmem:[#allocation3 + $0x30] sm:$0xf]
        %v3086 = vld [vmem:[#allocation3 + $0x34] sm:$0xf]
        %v3087 = vld [vmem:[#allocation3 + $0x38] sm:$0xf]
        %v3088 = vld [vmem:[#allocation3 + $0x3c] sm:$0xf]
        %v3089 = vld [vmem:[#allocation3 + $0x40] sm:$0xf]
        %v3090 = vld [vmem:[#allocation3 + $0x44] sm:$0xf]
        %v3091 = vld [vmem:[#allocation3 + $0x48] sm:$0x3]
        %v3110 = vunpack.c.l.b16 %v3055
        %v3111 = vunpack.c.l.b16 %v3056
        %v3112 = vunpack.c.l.b16 %v3057
        %v3113 = vunpack.c.l.b16 %v3058
        %v3114 = vunpack.c.l.b16 %v3059
        %v3115 = vunpack.c.l.b16 %v3060
        %v3116 = vunpack.c.l.b16 %v3061
        %v3117 = vunpack.c.l.b16 %v3062
        %v3118 = vunpack.c.l.b16 %v3063
        %v3119 = vunpack.c.l.b16 %v3064
        %v3120 = vunpack.c.l.b16 %v3065
        %v3121 = vunpack.c.l.b16 %v3066
        %v3122 = vunpack.c.l.b16 %v3067
        %v3123 = vunpack.c.l.b16 %v3068
        %v3124 = vunpack.c.l.b16 %v3069
        %v3125 = vunpack.c.l.b16 %v3070
        %v3126 = vunpack.c.l.b16 %v3071
        %v3127 = vunpack.c.l.b16 %v3072
        %v3128 = vpack.c.b16 %v3111, %v3110
        %v3129 = vpack.c.b16 %v3113, %v3112
        %v3130 = vpack.c.b16 %v3115, %v3114
        %v3131 = vpack.c.b16 %v3117, %v3116
        %v3132 = vpack.c.b16 %v3119, %v3118
        %v3133 = vpack.c.b16 %v3121, %v3120
        %v3134 = vpack.c.b16 %v3123, %v3122
        %v3135 = vpack.c.b16 %v3125, %v3124
        %v3136 = vpack.c.b16 %v3127, %v3126
        %v3156 = vunpack.c.l.b16 %v3073
        %v3157 = vunpack.c.l.b16 %v3074
        %v3158 = vunpack.c.l.b16 %v3075
        %v3159 = vunpack.c.l.b16 %v3076
        %v3160 = vunpack.c.l.b16 %v3077
        %v3161 = vunpack.c.l.b16 %v3078
        %v3162 = vunpack.c.l.b16 %v3079
        %v3163 = vunpack.c.l.b16 %v3080
        %v3164 = vunpack.c.l.b16 %v3081
        %v3165 = vunpack.c.l.b16 %v3082
        %v3166 = vunpack.c.l.b16 %v3083
        %v3167 = vunpack.c.l.b16 %v3084
        %v3168 = vunpack.c.l.b16 %v3085
        %v3169 = vunpack.c.l.b16 %v3086
        %v3170 = vunpack.c.l.b16 %v3087
        %v3171 = vunpack.c.l.b16 %v3088
        %v3172 = vunpack.c.l.b16 %v3089
        %v3173 = vunpack.c.l.b16 %v3090
        %v3174 = vunpack.c.l.b16 %v3091
        %v3175 = vpack.c.b16 %v3157, %v3156
        %v3176 = vpack.c.b16 %v3159, %v3158
        %v3177 = vpack.c.b16 %v3161, %v3160
        %v3178 = vpack.c.b16 %v3163, %v3162
        %v3179 = vpack.c.b16 %v3165, %v3164
        %v3180 = vpack.c.b16 %v3167, %v3166
        %v3181 = vpack.c.b16 %v3169, %v3168
        %v3182 = vpack.c.b16 %v3171, %v3170
        %v3183 = vpack.c.b16 %v3173, %v3172
        %v3184 = vpack.c.b16 %v3174, %v3174
        %v3186 = vshrl.u32 %v3175, 16
        %v3188 = vrot.slane %v3186, 1
        %v3189 = vshll.u32 %v3175, 16
        %v3191 = vrot.slane %v3189, 2
        %v3192 = vor.u32 %v3188, %v3191
        %v3194 = vshrl.u32 %v3176, 16
        %v3196 = vrot.slane %v3194, 1
        %v3197 = vshll.u32 %v3176, 16
        %v3199 = vrot.slane %v3197, 2
        %v3200 = vor.u32 %v3196, %v3199
        %v3201 = vsel %vm2077, %v3192, %v3200
        %v3203 = vshrl.u32 %v3177, 16
        %v3205 = vrot.slane %v3203, 1
        %v3206 = vshll.u32 %v3177, 16
        %v3208 = vrot.slane %v3206, 2
        %v3209 = vor.u32 %v3205, %v3208
        %v3210 = vsel %vm2077, %v3200, %v3209
        %v3212 = vshrl.u32 %v3178, 16
        %v3214 = vrot.slane %v3212, 1
        %v3215 = vshll.u32 %v3178, 16
        %v3217 = vrot.slane %v3215, 2
        %v3218 = vor.u32 %v3214, %v3217
        %v3219 = vsel %vm2077, %v3209, %v3218
        %v3221 = vshrl.u32 %v3179, 16
        %v3223 = vrot.slane %v3221, 1
        %v3224 = vshll.u32 %v3179, 16
        %v3226 = vrot.slane %v3224, 2
        %v3227 = vor.u32 %v3223, %v3226
        %v3228 = vsel %vm2077, %v3218, %v3227
        %v3230 = vshrl.u32 %v3180, 16
        %v3232 = vrot.slane %v3230, 1
        %v3233 = vshll.u32 %v3180, 16
        %v3235 = vrot.slane %v3233, 2
        %v3236 = vor.u32 %v3232, %v3235
        %v3237 = vsel %vm2077, %v3227, %v3236
        %v3239 = vshrl.u32 %v3181, 16
        %v3241 = vrot.slane %v3239, 1
        %v3242 = vshll.u32 %v3181, 16
        %v3244 = vrot.slane %v3242, 2
        %v3245 = vor.u32 %v3241, %v3244
        %v3246 = vsel %vm2077, %v3236, %v3245
        %v3248 = vshrl.u32 %v3182, 16
        %v3250 = vrot.slane %v3248, 1
        %v3251 = vshll.u32 %v3182, 16
        %v3253 = vrot.slane %v3251, 2
        %v3254 = vor.u32 %v3250, %v3253
        %v3255 = vsel %vm2077, %v3245, %v3254
        %v3257 = vshrl.u32 %v3183, 16
        %v3259 = vrot.slane %v3257, 1
        %v3260 = vshll.u32 %v3183, 16
        %v3262 = vrot.slane %v3260, 2
        %v3263 = vor.u32 %v3259, %v3262
        %v3264 = vsel %vm2077, %v3254, %v3263
        %v3266 = vshrl.u32 %v3184, 16
        %v3268 = vrot.slane %v3266, 1
        %v3269 = vshll.u32 %v3184, 16
        %v3271 = vrot.slane %v3269, 2
        %v3272 = vor.u32 %v3268, %v3271
        %v3273 = vsel %vm2077, %v3263, %v3272
        %v3274 = vld [vmem:[%s6] sm:$0xf]
        %v3275 = vld [vmem:[%s6 + $0x4] sm:$0xf]
        %v3276 = vld [vmem:[%s6 + $0x8] sm:$0xf]
        %v3277 = vld [vmem:[%s6 + $0xc] sm:$0xf]
        %v3278 = vld [vmem:[%s6 + $0x10] sm:$0xf]
        %v3279 = vld [vmem:[%s6 + $0x14] sm:$0xf]
        %v3280 = vld [vmem:[%s6 + $0x18] sm:$0xf]
        %v3281 = vld [vmem:[%s6 + $0x1c] sm:$0xf]
        %v3282 = vld [vmem:[%s6 + $0x20] sm:$0xf]
        %v3283 = vld [vmem:[%s6 + $0x24] sm:$0xf]
        %v3284 = vld [vmem:[%s6 + $0x28] sm:$0xf]
        %v3285 = vld [vmem:[%s6 + $0x2c] sm:$0xf]
        %v3286 = vld [vmem:[%s6 + $0x30] sm:$0xf]
        %v3287 = vld [vmem:[%s6 + $0x34] sm:$0xf]
        %v3288 = vld [vmem:[%s6 + $0x38] sm:$0xf]
        %v3289 = vld [vmem:[%s6 + $0x3c] sm:$0xf]
        %v3290 = vld [vmem:[%s6 + $0x40] sm:$0xf]
        %v3291 = vld [vmem:[%s6 + $0x44] sm:$0xf]
        %v3292 = vld [vmem:[%s6 + $0x48] sm:$0xf]
        %v3293 = vld [vmem:[%s6 + $0x4c] sm:$0xf]
        %v3294 = vld [vmem:[%s6 + $0x50] sm:$0xf]
        %v3295 = vld [vmem:[%s6 + $0x54] sm:$0xf]
        %v3296 = vld [vmem:[%s6 + $0x58] sm:$0xf]
        %v3297 = vld [vmem:[%s6 + $0x5c] sm:$0xf]
        %v3298 = vld [vmem:[%s6 + $0x60] sm:$0xf]
        %v3299 = vld [vmem:[%s6 + $0x64] sm:$0xf]
        %v3300 = vld [vmem:[%s6 + $0x68] sm:$0xf]
        %v3301 = vld [vmem:[%s6 + $0x6c] sm:$0xf]
        %v3302 = vld [vmem:[%s6 + $0x70] sm:$0xf]
        %v3303 = vld [vmem:[%s6 + $0x74] sm:$0xf]
        %v3304 = vld [vmem:[%s6 + $0x78] sm:$0xf]
        %v3305 = vld [vmem:[%s6 + $0x7c] sm:$0xf]
        %v3306 = vld [vmem:[#allocation3 + $0x48] sm:$0x7]
        %v3307 = vld [vmem:[%s6 + $0x80] sm:$0xf]
        %v3308 = vld [vmem:[%s6 + $0x84] sm:$0xf]
        %v3309 = vld [vmem:[%s6 + $0x88] sm:$0xf]
        %v3310 = vld [vmem:[%s6 + $0x8c] sm:$0xf]
        %v3311 = vld [vmem:[%s6 + $0x90] sm:$0xf]
        %v3312 = vld [vmem:[%s6 + $0x94] sm:$0xf]
        %v3313 = vld [vmem:[%s6 + $0x98] sm:$0xf]
        %v3314 = vld [vmem:[%s6 + $0x9c] sm:$0xf]
        %v3315 = vld [vmem:[%s6 + $0xa0] sm:$0xf]
        %v3316 = vld [vmem:[%s6 + $0xa4] sm:$0xf]
        %v3317 = vld [vmem:[%s6 + $0xa8] sm:$0xf]
        %v3318 = vld [vmem:[%s6 + $0xac] sm:$0xf]
        %v3319 = vld [vmem:[%s6 + $0xb0] sm:$0xf]
        %v3320 = vld [vmem:[%s6 + $0xb4] sm:$0xf]
        %v3321 = vld [vmem:[%s6 + $0xb8] sm:$0xf]
        %v3322 = vld [vmem:[%s6 + $0xbc] sm:$0xf]
        %v3324 = vunpack.c.l.b16 %v3306
        %v3325 = vpack.c.b16 %v3158, %v3157
        %v3326 = vpack.c.b16 %v3160, %v3159
        %v3327 = vpack.c.b16 %v3162, %v3161
        %v3328 = vpack.c.b16 %v3164, %v3163
        %v3329 = vpack.c.b16 %v3166, %v3165
        %v3330 = vpack.c.b16 %v3168, %v3167
        %v3331 = vpack.c.b16 %v3170, %v3169
        %v3332 = vpack.c.b16 %v3172, %v3171
        %v3333 = vpack.c.b16 %v3324, %v3173
        %v3359 = vunpack.c.l.b16 %v3307
        %v3360 = vunpack.c.l.b16 %v3308
        %v3361 = vunpack.c.l.b16 %v3309
        %v3362 = vunpack.c.l.b16 %v3310
        %v3363 = vunpack.c.l.b16 %v3311
        %v3364 = vunpack.c.l.b16 %v3312
        %v3365 = vunpack.c.l.b16 %v3313
        %v3366 = vunpack.c.l.b16 %v3314
        %v3367 = vunpack.c.l.b16 %v3315
        %v3368 = vunpack.c.l.b16 %v3316
        %v3369 = vunpack.c.l.b16 %v3317
        %v3370 = vunpack.c.l.b16 %v3318
        %v3371 = vunpack.c.l.b16 %v3319
        %v3372 = vunpack.c.l.b16 %v3320
        %v3373 = vunpack.c.l.b16 %v3321
        %v3374 = vunpack.c.l.b16 %v3322
        %v3375 = vpack.c.b16 %v3360, %v3359
        %v3376 = vpack.c.b16 %v3362, %v3361
        %v3377 = vpack.c.b16 %v3364, %v3363
        %v3378 = vpack.c.b16 %v3366, %v3365
        %v3379 = vpack.c.b16 %v3368, %v3367
        %v3380 = vpack.c.b16 %v3370, %v3369
        %v3381 = vpack.c.b16 %v3372, %v3371
        %v3382 = vpack.c.b16 %v3374, %v3373
        %3391 = vmatprep.subr.bf16.mxu0 0
        %3392 = vmatpush1.bf16.msra.mxu0 %v3382
        %3393 = vmatprep.subr.bf16.mxu0 0
        %3394 = vmatpush1.bf16.msra.mxu0 %v3381
        %3395 = vmatprep.subr.bf16.mxu0 0
        %3396 = vmatpush1.bf16.msra.mxu0 %v3380
        %3397 = vmatprep.subr.bf16.mxu0 0
        %3398 = vmatpush1.bf16.msra.mxu0 %v3379
        %3399 = vmatprep.subr.bf16.mxu0 0
        %3400 = vmatpush1.bf16.msra.mxu0 %v3378
        %3401 = vmatprep.subr.bf16.mxu0 0
        %3402 = vmatpush1.bf16.msra.mxu0 %v3377
        %3403 = vmatprep.subr.bf16.mxu0 0
        %3404 = vmatpush1.bf16.msra.mxu0 %v3376
        %3405 = vmatprep.subr.bf16.mxu0 0
        %3406 = vmatpush1.bf16.msra.mxu0 %v3375
        %3407 = vmatprep.subr.bf16.mxu0 0
        %3408 = vmatpush2.bf16.msra.mxu0 0
        %3409 = vmatprep.subr.bf16.mxu0 0
        %3410 = vmatpush2.bf16.msra.mxu0 0
        %3411 = vmatprep.subr.bf16.mxu0 0
        %3412 = vmatpush2.bf16.msra.mxu0 0
        %3413 = vmatprep.subr.bf16.mxu0 0
        %3414 = vmatpush2.bf16.msra.mxu0 0
        %3415 = vmatprep.subr.bf16.mxu0 0
        %3416 = vmatpush2.bf16.msra.mxu0 0
        %3417 = vmatprep.subr.bf16.mxu0 0
        %3418 = vmatpush2.bf16.msra.mxu0 0
        %3419 = vmatprep.subr.bf16.mxu0 0
        %3420 = vmatpush2.bf16.msra.mxu0 0
        %3421 = vmatprep.subr.bf16.mxu0 0
        %3422 = vmatpush2.bf16.msra.mxu0 0
        %3423 = vmatprep.mubr.bf16.mxu0 0
        %3424 = vmatmul.mubr.bf16.gmra.mxu0 %v3325
        %v3425 = vpop.f32.mrf.mxu0
        %v3426 = vadd.f32 0.0, %v3425
        %v3427 = vpop.f32.mrf.mxu0
        %v3428 = vpop.f32.mrf.mxu0
        %v3429 = vadd.f32 0.0, %v3428
        %v3430 = vpop.f32.mrf.mxu0
        %3431 = vmatprep.mubr.bf16.mxu0 0
        %3432 = vmatmul.mubr.bf16.gmra.mxu0 %v3326
        %v3433 = vpop.f32.mrf.mxu0
        %v3434 = vadd.f32 0.0, %v3433
        %v3435 = vpop.f32.mrf.mxu0
        %v3436 = vpop.f32.mrf.mxu0
        %v3437 = vadd.f32 0.0, %v3436
        %v3438 = vpop.f32.mrf.mxu0
        %3439 = vmatprep.mubr.bf16.mxu0 0
        %3440 = vmatmul.mubr.bf16.gmra.mxu0 %v3327
        %v3441 = vpop.f32.mrf.mxu0
        %v3442 = vadd.f32 0.0, %v3441
        %v3443 = vpop.f32.mrf.mxu0
        %v3444 = vpop.f32.mrf.mxu0
        %v3445 = vadd.f32 0.0, %v3444
        %v3446 = vpop.f32.mrf.mxu0
        %3447 = vmatprep.mubr.bf16.mxu0 0
        %3448 = vmatmul.mubr.bf16.gmra.mxu0 %v3328
        %v3449 = vpop.f32.mrf.mxu0
        %v3450 = vadd.f32 0.0, %v3449
        %v3451 = vpop.f32.mrf.mxu0
        %v3452 = vpop.f32.mrf.mxu0
        %v3453 = vadd.f32 0.0, %v3452
        %v3454 = vpop.f32.mrf.mxu0
        %3455 = vmatprep.mubr.bf16.mxu0 0
        %3456 = vmatmul.mubr.bf16.gmra.mxu0 %v3329
        %v3457 = vpop.f32.mrf.mxu0
        %v3458 = vadd.f32 0.0, %v3457
        %v3459 = vpop.f32.mrf.mxu0
        %v3460 = vpop.f32.mrf.mxu0
        %v3461 = vadd.f32 0.0, %v3460
        %v3462 = vpop.f32.mrf.mxu0
        %3463 = vmatprep.mubr.bf16.mxu0 0
        %3464 = vmatmul.mubr.bf16.gmra.mxu0 %v3330
        %v3465 = vpop.f32.mrf.mxu0
        %v3466 = vadd.f32 0.0, %v3465
        %v3467 = vpop.f32.mrf.mxu0
        %v3468 = vpop.f32.mrf.mxu0
        %v3469 = vadd.f32 0.0, %v3468
        %v3470 = vpop.f32.mrf.mxu0
        %3471 = vmatprep.mubr.bf16.mxu0 0
        %3472 = vmatmul.mubr.bf16.gmra.mxu0 %v3331
        %v3473 = vpop.f32.mrf.mxu0
        %v3474 = vadd.f32 0.0, %v3473
        %v3475 = vpop.f32.mrf.mxu0
        %v3476 = vpop.f32.mrf.mxu0
        %v3477 = vadd.f32 0.0, %v3476
        %v3478 = vpop.f32.mrf.mxu0
        %3479 = vmatprep.mubr.bf16.mxu0 0
        %3480 = vmatmul.mubr.bf16.gmra.mxu0 %v3332
        %v3481 = vpop.f32.mrf.mxu0
        %v3482 = vadd.f32 0.0, %v3481
        %v3483 = vpop.f32.mrf.mxu0
        %v3484 = vpop.f32.mrf.mxu0
        %v3485 = vadd.f32 0.0, %v3484
        %v3486 = vpop.f32.mrf.mxu0
        %3487 = vmatprep.mubr.bf16.mxu0 0
        %3488 = vmatmul.mubr.bf16.gmra.mxu0 %v3333
        %v3489 = vpop.f32.mrf.mxu0
        %v3490 = vadd.f32 0.0, %v3489
        %v3491 = vpop.f32.mrf.mxu0
        %v3492 = vpop.f32.mrf.mxu0
        %v3493 = vadd.f32 0.0, %v3492
        %v3494 = vpop.f32.mrf.mxu0
        %3495 = vdwg.mxu0
        %v3496 = vrot.slane %v3128, 1
        %v3497 = vrot.slane %v3129, 1
        %v3498 = vsel %vm963, %v3496, %v3497
        %v3499 = vrot.slane %v3201, 1
        %v3500 = vrot.slane %v3210, 1
        %v3501 = vsel %vm963, %v3499, %v3500
        %v3502 = vrot.slane %v3130, 1
        %v3503 = vsel %vm963, %v3497, %v3502
        %v3504 = vrot.slane %v3219, 1
        %v3505 = vsel %vm963, %v3500, %v3504
        %v3506 = vrot.slane %v3131, 1
        %v3507 = vsel %vm963, %v3502, %v3506
        %v3508 = vrot.slane %v3228, 1
        %v3509 = vsel %vm963, %v3504, %v3508
        %v3510 = vrot.slane %v3132, 1
        %v3511 = vsel %vm963, %v3506, %v3510
        %v3512 = vrot.slane %v3237, 1
        %v3513 = vsel %vm963, %v3508, %v3512
        %v3514 = vrot.slane %v3133, 1
        %v3515 = vsel %vm963, %v3510, %v3514
        %v3516 = vrot.slane %v3246, 1
        %v3517 = vsel %vm963, %v3512, %v3516
        %v3518 = vrot.slane %v3134, 1
        %v3519 = vsel %vm963, %v3514, %v3518
        %v3520 = vrot.slane %v3255, 1
        %v3521 = vsel %vm963, %v3516, %v3520
        %v3522 = vrot.slane %v3135, 1
        %v3523 = vsel %vm963, %v3518, %v3522
        %v3524 = vrot.slane %v3264, 1
        %v3525 = vsel %vm963, %v3520, %v3524
        %v3526 = vrot.slane %v3136, 1
        %v3527 = vsel %vm963, %v3522, %v3526
        %v3528 = vrot.slane %v3273, 1
        %v3529 = vsel %vm963, %v3524, %v3528
        %v3580 = vunpack.c.l.b16 %v3274
        %v3581 = vunpack.c.l.b16 %v3275
        %v3582 = vunpack.c.l.b16 %v3276
        %v3583 = vunpack.c.l.b16 %v3277
        %v3584 = vunpack.c.l.b16 %v3278
        %v3585 = vunpack.c.l.b16 %v3279
        %v3586 = vunpack.c.l.b16 %v3280
        %v3587 = vunpack.c.l.b16 %v3281
        %v3588 = vunpack.c.l.b16 %v3282
        %v3589 = vunpack.c.l.b16 %v3283
        %v3590 = vunpack.c.l.b16 %v3284
        %v3591 = vunpack.c.l.b16 %v3285
        %v3592 = vunpack.c.l.b16 %v3286
        %v3593 = vunpack.c.l.b16 %v3287
        %v3594 = vunpack.c.l.b16 %v3288
        %v3595 = vunpack.c.l.b16 %v3289
        %v3596 = vunpack.c.l.b16 %v3290
        %v3597 = vunpack.c.l.b16 %v3291
        %v3598 = vunpack.c.l.b16 %v3292
        %v3599 = vunpack.c.l.b16 %v3293
        %v3600 = vunpack.c.l.b16 %v3294
        %v3601 = vunpack.c.l.b16 %v3295
        %v3602 = vunpack.c.l.b16 %v3296
        %v3603 = vunpack.c.l.b16 %v3297
        %v3604 = vunpack.c.l.b16 %v3298
        %v3605 = vunpack.c.l.b16 %v3299
        %v3606 = vunpack.c.l.b16 %v3300
        %v3607 = vunpack.c.l.b16 %v3301
        %v3608 = vunpack.c.l.b16 %v3302
        %v3609 = vunpack.c.l.b16 %v3303
        %v3610 = vunpack.c.l.b16 %v3304
        %v3611 = vunpack.c.l.b16 %v3305
        %v3612 = vpack.c.b16 %v3581, %v3580
        %v3613 = vpack.c.b16 %v3583, %v3582
        %v3614 = vpack.c.b16 %v3585, %v3584
        %v3615 = vpack.c.b16 %v3587, %v3586
        %v3616 = vpack.c.b16 %v3589, %v3588
        %v3617 = vpack.c.b16 %v3591, %v3590
        %v3618 = vpack.c.b16 %v3593, %v3592
        %v3619 = vpack.c.b16 %v3595, %v3594
        %v3620 = vpack.c.b16 %v3597, %v3596
        %v3621 = vpack.c.b16 %v3599, %v3598
        %v3622 = vpack.c.b16 %v3601, %v3600
        %v3623 = vpack.c.b16 %v3603, %v3602
        %v3624 = vpack.c.b16 %v3605, %v3604
        %v3625 = vpack.c.b16 %v3607, %v3606
        %v3626 = vpack.c.b16 %v3609, %v3608
        %v3627 = vpack.c.b16 %v3611, %v3610
        %3644 = vmatprep.subr.bf16.mxu0 0
        %3645 = vmatpush1.bf16.msra.mxu0 %v3619
        %3646 = vmatprep.subr.bf16.mxu0 0
        %3647 = vmatpush1.bf16.msra.mxu0 %v3618
        %3648 = vmatprep.subr.bf16.mxu0 0
        %3649 = vmatpush1.bf16.msra.mxu0 %v3617
        %3650 = vmatprep.subr.bf16.mxu0 0
        %3651 = vmatpush1.bf16.msra.mxu0 %v3616
        %3652 = vmatprep.subr.bf16.mxu0 0
        %3653 = vmatpush1.bf16.msra.mxu0 %v3615
        %3654 = vmatprep.subr.bf16.mxu0 0
        %3655 = vmatpush1.bf16.msra.mxu0 %v3614
        %3656 = vmatprep.subr.bf16.mxu0 0
        %3657 = vmatpush1.bf16.msra.mxu0 %v3613
        %3658 = vmatprep.subr.bf16.mxu0 0
        %3659 = vmatpush1.bf16.msra.mxu0 %v3612
        %3660 = vmatprep.subr.bf16.mxu0 0
        %3661 = vmatpush2.bf16.msra.mxu0 %v3627
        %3662 = vmatprep.subr.bf16.mxu0 0
        %3663 = vmatpush2.bf16.msra.mxu0 %v3626
        %3664 = vmatprep.subr.bf16.mxu0 0
        %3665 = vmatpush2.bf16.msra.mxu0 %v3625
        %3666 = vmatprep.subr.bf16.mxu0 0
        %3667 = vmatpush2.bf16.msra.mxu0 %v3624
        %3668 = vmatprep.subr.bf16.mxu0 0
        %3669 = vmatpush2.bf16.msra.mxu0 %v3623
        %3670 = vmatprep.subr.bf16.mxu0 0
        %3671 = vmatpush2.bf16.msra.mxu0 %v3622
        %3672 = vmatprep.subr.bf16.mxu0 0
        %3673 = vmatpush2.bf16.msra.mxu0 %v3621
        %3674 = vmatprep.subr.bf16.mxu0 0
        %3675 = vmatpush2.bf16.msra.mxu0 %v3620
        %3676 = vmatprep.mubr.bf16.mxu0 %v3501
        %3677 = vmatmul.mubr.bf16.gmra.mxu0 %v3498
        %v3678 = vpop.f32.mrf.mxu0
        %v3679 = vadd.f32 %v3426, %v3678
        %v3680 = vpop.f32.mrf.mxu0
        %v3681 = vpop.f32.mrf.mxu0
        %v3682 = vadd.f32 %v3429, %v3681
        %v3683 = vpop.f32.mrf.mxu0
        %3684 = vmatprep.mubr.bf16.mxu0 %v3505
        %3685 = vmatmul.mubr.bf16.gmra.mxu0 %v3503
        %v3686 = vpop.f32.mrf.mxu0
        %v3687 = vadd.f32 %v3434, %v3686
        %v3688 = vpop.f32.mrf.mxu0
        %v3689 = vpop.f32.mrf.mxu0
        %v3690 = vadd.f32 %v3437, %v3689
        %v3691 = vpop.f32.mrf.mxu0
        %3692 = vmatprep.mubr.bf16.mxu0 %v3509
        %3693 = vmatmul.mubr.bf16.gmra.mxu0 %v3507
        %v3694 = vpop.f32.mrf.mxu0
        %v3695 = vadd.f32 %v3442, %v3694
        %v3696 = vpop.f32.mrf.mxu0
        %v3697 = vpop.f32.mrf.mxu0
        %v3698 = vadd.f32 %v3445, %v3697
        %v3699 = vpop.f32.mrf.mxu0
        %3700 = vmatprep.mubr.bf16.mxu0 %v3513
        %3701 = vmatmul.mubr.bf16.gmra.mxu0 %v3511
        %v3702 = vpop.f32.mrf.mxu0
        %v3703 = vadd.f32 %v3450, %v3702
        %v3704 = vpop.f32.mrf.mxu0
        %v3705 = vpop.f32.mrf.mxu0
        %v3706 = vadd.f32 %v3453, %v3705
        %v3707 = vpop.f32.mrf.mxu0
        %3708 = vmatprep.mubr.bf16.mxu0 %v3517
        %3709 = vmatmul.mubr.bf16.gmra.mxu0 %v3515
        %v3710 = vpop.f32.mrf.mxu0
        %v3711 = vadd.f32 %v3458, %v3710
        %v3712 = vpop.f32.mrf.mxu0
        %v3713 = vpop.f32.mrf.mxu0
        %v3714 = vadd.f32 %v3461, %v3713
        %v3715 = vpop.f32.mrf.mxu0
        %3716 = vmatprep.mubr.bf16.mxu0 %v3521
        %3717 = vmatmul.mubr.bf16.gmra.mxu0 %v3519
        %v3718 = vpop.f32.mrf.mxu0
        %v3719 = vadd.f32 %v3466, %v3718
        %v3720 = vpop.f32.mrf.mxu0
        %v3721 = vpop.f32.mrf.mxu0
        %v3722 = vadd.f32 %v3469, %v3721
        %v3723 = vpop.f32.mrf.mxu0
        %3724 = vmatprep.mubr.bf16.mxu0 %v3525
        %3725 = vmatmul.mubr.bf16.gmra.mxu0 %v3523
        %v3726 = vpop.f32.mrf.mxu0
        %v3727 = vadd.f32 %v3474, %v3726
        %v3728 = vpop.f32.mrf.mxu0
        %v3729 = vpop.f32.mrf.mxu0
        %v3730 = vadd.f32 %v3477, %v3729
        %v3731 = vpop.f32.mrf.mxu0
        %3732 = vmatprep.mubr.bf16.mxu0 %v3529
        %3733 = vmatmul.mubr.bf16.gmra.mxu0 %v3527
        %v3734 = vpop.f32.mrf.mxu0
        %v3735 = vadd.f32 %v3482, %v3734
        %v3736 = vpop.f32.mrf.mxu0
        %v3737 = vpop.f32.mrf.mxu0
        %v3738 = vadd.f32 %v3485, %v3737
        %v3739 = vpop.f32.mrf.mxu0
        %3740 = vmatprep.mubr.bf16.mxu0 %v3528
        %3741 = vmatmul.mubr.bf16.gmra.mxu0 %v3526
        %v3742 = vpop.f32.mrf.mxu0
        %v3743 = vadd.f32 %v3490, %v3742
        %v3744 = vpop.f32.mrf.mxu0
        %v3745 = vpop.f32.mrf.mxu0
        %v3746 = vadd.f32 %v3493, %v3745
        %v3747 = vpop.f32.mrf.mxu0
        %3748 = vdwg.mxu0
        %v3749 = vld [vmem:[%s7] sm:$0x1]
        %v3751 = vlaneseq
        %v3752 = vshrl.u32 %v3751, 7
        %v3753 = vsub.s32 0, %v3752
        %v3754 = vrot.slane %v3749, %v3753
        %v3756 = vadd.f32 %v3679, %v3754
        %v3757 = vadd.f32 %v3682, %v3754
        %v3758 = vadd.f32 %v3687, %v3754
        %v3759 = vadd.f32 %v3690, %v3754
        %v3760 = vadd.f32 %v3695, %v3754
        %v3761 = vadd.f32 %v3698, %v3754
        %v3762 = vadd.f32 %v3703, %v3754
        %v3763 = vadd.f32 %v3706, %v3754
        %v3764 = vadd.f32 %v3711, %v3754
        %v3765 = vadd.f32 %v3714, %v3754
        %v3766 = vadd.f32 %v3719, %v3754
        %v3767 = vadd.f32 %v3722, %v3754
        %v3768 = vadd.f32 %v3727, %v3754
        %v3769 = vadd.f32 %v3730, %v3754
        %v3770 = vadd.f32 %v3735, %v3754
        %v3771 = vadd.f32 %v3738, %v3754
        %v3772 = vadd.f32 %v3743, %v3754
        %v3773 = vadd.f32 %v3746, %v3754
        %vm3774 = vcmp.ge.f32.partialorder %v3756, 0.0
        %vm3775 = vcmp.ge.f32.partialorder %v3757, 0.0
        %vm3776 = vcmp.ge.f32.partialorder %v3758, 0.0
        %vm3777 = vcmp.ge.f32.partialorder %v3759, 0.0
        %vm3778 = vcmp.ge.f32.partialorder %v3760, 0.0
        %vm3779 = vcmp.ge.f32.partialorder %v3761, 0.0
        %vm3780 = vcmp.ge.f32.partialorder %v3762, 0.0
        %vm3781 = vcmp.ge.f32.partialorder %v3763, 0.0
        %vm3782 = vcmp.ge.f32.partialorder %v3764, 0.0
        %vm3783 = vcmp.ge.f32.partialorder %v3765, 0.0
        %vm3784 = vcmp.ge.f32.partialorder %v3766, 0.0
        %vm3785 = vcmp.ge.f32.partialorder %v3767, 0.0
        %vm3786 = vcmp.ge.f32.partialorder %v3768, 0.0
        %vm3787 = vcmp.ge.f32.partialorder %v3769, 0.0
        %vm3788 = vcmp.ge.f32.partialorder %v3770, 0.0
        %vm3789 = vcmp.ge.f32.partialorder %v3771, 0.0
        %vm3790 = vcmp.ge.f32.partialorder %v3772, 0.0
        %vm3791 = vcmp.ge.f32.partialorder %v3773, 0.0
        %v3792 = vmul.f32 %v3756, 0.1
        %v3793 = vmul.f32 %v3757, 0.1
        %v3794 = vmul.f32 %v3758, 0.1
        %v3795 = vmul.f32 %v3759, 0.1
        %v3796 = vmul.f32 %v3760, 0.1
        %v3797 = vmul.f32 %v3761, 0.1
        %v3798 = vmul.f32 %v3762, 0.1
        %v3799 = vmul.f32 %v3763, 0.1
        %v3800 = vmul.f32 %v3764, 0.1
        %v3801 = vmul.f32 %v3765, 0.1
        %v3802 = vmul.f32 %v3766, 0.1
        %v3803 = vmul.f32 %v3767, 0.1
        %v3804 = vmul.f32 %v3768, 0.1
        %v3805 = vmul.f32 %v3769, 0.1
        %v3806 = vmul.f32 %v3770, 0.1
        %v3807 = vmul.f32 %v3771, 0.1
        %v3808 = vmul.f32 %v3772, 0.1
        %v3809 = vmul.f32 %v3773, 0.1
        %v3810 = vsel %vm3774, %v3756, %v3792
        %v3811 = vsel %vm3775, %v3757, %v3793
        %v3812 = vsel %vm3776, %v3758, %v3794
        %v3813 = vsel %vm3777, %v3759, %v3795
        %v3814 = vsel %vm3778, %v3760, %v3796
        %v3815 = vsel %vm3779, %v3761, %v3797
        %v3816 = vsel %vm3780, %v3762, %v3798
        %v3817 = vsel %vm3781, %v3763, %v3799
        %v3818 = vsel %vm3782, %v3764, %v3800
        %v3819 = vsel %vm3783, %v3765, %v3801
        %v3820 = vsel %vm3784, %v3766, %v3802
        %v3821 = vsel %vm3785, %v3767, %v3803
        %v3822 = vsel %vm3786, %v3768, %v3804
        %v3823 = vsel %vm3787, %v3769, %v3805
        %v3824 = vsel %vm3788, %v3770, %v3806
        %v3825 = vsel %vm3789, %v3771, %v3807
        %v3826 = vsel %vm3790, %v3772, %v3808
        %v3827 = vsel %vm3791, %v3773, %v3809
        %s3828 = sadd.s32 %s527, 4294967289
        %v3829 = vstv %s3828
        %v3830 = vadd.s32 %v3829, %v1446
        %v3831 = vadd.s32 %v3829, %v1447
        %v3832 = vadd.s32 %v3829, %v1448
        %v3833 = vadd.s32 %v3829, %v1449
        %v3834 = vadd.s32 %v3829, %v1450
        %v3835 = vadd.s32 %v3829, %v1451
        %v3836 = vadd.s32 %v3829, %v1452
        %v3837 = vadd.s32 %v3829, %v1453
        %v3838 = vadd.s32 %v3829, %v1454
        %v3839 = vadd.s32 %v3829, %v1455
        %v3840 = vadd.s32 %v3829, %v1456
        %v3841 = vadd.s32 %v3829, %v1457
        %v3842 = vadd.s32 %v3829, %v1458
        %v3843 = vadd.s32 %v3829, %v1459
        %v3844 = vadd.s32 %v3829, %v1460
        %v3845 = vadd.s32 %v3829, %v1461
        %v3846 = vadd.s32 %v3829, %v1462
        %v3847 = vadd.s32 %v3829, %v1463
        %vm3848 = vcmp.ge.s32.totalorder %v3830, 0
        %vm3849 = vcmp.ge.s32.totalorder %v3831, 0
        %vm3850 = vcmp.ge.s32.totalorder %v3832, 0
        %vm3851 = vcmp.ge.s32.totalorder %v3833, 0
        %vm3852 = vcmp.ge.s32.totalorder %v3834, 0
        %vm3853 = vcmp.ge.s32.totalorder %v3835, 0
        %vm3854 = vcmp.ge.s32.totalorder %v3836, 0
        %vm3855 = vcmp.ge.s32.totalorder %v3837, 0
        %vm3856 = vcmp.ge.s32.totalorder %v3838, 0
        %vm3857 = vcmp.ge.s32.totalorder %v3839, 0
        %vm3858 = vcmp.ge.s32.totalorder %v3840, 0
        %vm3859 = vcmp.ge.s32.totalorder %v3841, 0
        %vm3860 = vcmp.ge.s32.totalorder %v3842, 0
        %vm3861 = vcmp.ge.s32.totalorder %v3843, 0
        %vm3862 = vcmp.ge.s32.totalorder %v3844, 0
        %vm3863 = vcmp.ge.s32.totalorder %v3845, 0
        %vm3864 = vcmp.ge.s32.totalorder %v3846, 0
        %vm3865 = vcmp.ge.s32.totalorder %v3847, 0
        %vm3866 = vcmp.lt.s32.totalorder %v3830, 200
        %vm3867 = vcmp.lt.s32.totalorder %v3831, 200
        %vm3868 = vcmp.lt.s32.totalorder %v3832, 200
        %vm3869 = vcmp.lt.s32.totalorder %v3833, 200
        %vm3870 = vcmp.lt.s32.totalorder %v3834, 200
        %vm3871 = vcmp.lt.s32.totalorder %v3835, 200
        %vm3872 = vcmp.lt.s32.totalorder %v3836, 200
        %vm3873 = vcmp.lt.s32.totalorder %v3837, 200
        %vm3874 = vcmp.lt.s32.totalorder %v3838, 200
        %vm3875 = vcmp.lt.s32.totalorder %v3839, 200
        %vm3876 = vcmp.lt.s32.totalorder %v3840, 200
        %vm3877 = vcmp.lt.s32.totalorder %v3841, 200
        %vm3878 = vcmp.lt.s32.totalorder %v3842, 200
        %vm3879 = vcmp.lt.s32.totalorder %v3843, 200
        %vm3880 = vcmp.lt.s32.totalorder %v3844, 200
        %vm3881 = vcmp.lt.s32.totalorder %v3845, 200
        %vm3882 = vcmp.lt.s32.totalorder %v3846, 200
        %vm3883 = vcmp.lt.s32.totalorder %v3847, 200
        %vm3884 = vmand %vm3848, %vm3866
        %vm3885 = vmand %vm3849, %vm3867
        %vm3886 = vmand %vm3850, %vm3868
        %vm3887 = vmand %vm3851, %vm3869
        %vm3888 = vmand %vm3852, %vm3870
        %vm3889 = vmand %vm3853, %vm3871
        %vm3890 = vmand %vm3854, %vm3872
        %vm3891 = vmand %vm3855, %vm3873
        %vm3892 = vmand %vm3856, %vm3874
        %vm3893 = vmand %vm3857, %vm3875
        %vm3894 = vmand %vm3858, %vm3876
        %vm3895 = vmand %vm3859, %vm3877
        %vm3896 = vmand %vm3860, %vm3878
        %vm3897 = vmand %vm3861, %vm3879
        %vm3898 = vmand %vm3862, %vm3880
        %vm3899 = vmand %vm3863, %vm3881
        %vm3900 = vmand %vm3864, %vm3882
        %vm3901 = vmand %vm3865, %vm3883
        %v3902 = vsel %vm3884, 1, 0
        %v3903 = vsel %vm3885, 1, 0
        %v3904 = vsel %vm3886, 1, 0
        %v3905 = vsel %vm3887, 1, 0
        %v3906 = vsel %vm3888, 1, 0
        %v3907 = vsel %vm3889, 1, 0
        %v3908 = vsel %vm3890, 1, 0
        %v3909 = vsel %vm3891, 1, 0
        %v3910 = vsel %vm3892, 1, 0
        %v3911 = vsel %vm3893, 1, 0
        %v3912 = vsel %vm3894, 1, 0
        %v3913 = vsel %vm3895, 1, 0
        %v3914 = vsel %vm3896, 1, 0
        %v3915 = vsel %vm3897, 1, 0
        %v3916 = vsel %vm3898, 1, 0
        %v3917 = vsel %vm3899, 1, 0
        %v3918 = vsel %vm3900, 1, 0
        %v3919 = vsel %vm3901, 1, 0
        %vm3920 = vcmp.eq.s32.totalorder %v3902, 1
        %vm3921 = vcmp.eq.s32.totalorder %v3903, 1
        %vm3922 = vcmp.eq.s32.totalorder %v3904, 1
        %vm3923 = vcmp.eq.s32.totalorder %v3905, 1
        %vm3924 = vcmp.eq.s32.totalorder %v3906, 1
        %vm3925 = vcmp.eq.s32.totalorder %v3907, 1
        %vm3926 = vcmp.eq.s32.totalorder %v3908, 1
        %vm3927 = vcmp.eq.s32.totalorder %v3909, 1
        %vm3928 = vcmp.eq.s32.totalorder %v3910, 1
        %vm3929 = vcmp.eq.s32.totalorder %v3911, 1
        %vm3930 = vcmp.eq.s32.totalorder %v3912, 1
        %vm3931 = vcmp.eq.s32.totalorder %v3913, 1
        %vm3932 = vcmp.eq.s32.totalorder %v3914, 1
        %vm3933 = vcmp.eq.s32.totalorder %v3915, 1
        %vm3934 = vcmp.eq.s32.totalorder %v3916, 1
        %vm3935 = vcmp.eq.s32.totalorder %v3917, 1
        %vm3936 = vcmp.eq.s32.totalorder %v3918, 1
        %vm3937 = vcmp.eq.s32.totalorder %v3919, 1
        %v3938 = vsel %vm3920, %v3810, 0.0
        %v3939 = vsel %vm3921, %v3811, 0.0
        %v3940 = vsel %vm3922, %v3812, 0.0
        %v3941 = vsel %vm3923, %v3813, 0.0
        %v3942 = vsel %vm3924, %v3814, 0.0
        %v3943 = vsel %vm3925, %v3815, 0.0
        %v3944 = vsel %vm3926, %v3816, 0.0
        %v3945 = vsel %vm3927, %v3817, 0.0
        %v3946 = vsel %vm3928, %v3818, 0.0
        %v3947 = vsel %vm3929, %v3819, 0.0
        %v3948 = vsel %vm3930, %v3820, 0.0
        %v3949 = vsel %vm3931, %v3821, 0.0
        %v3950 = vsel %vm3932, %v3822, 0.0
        %v3951 = vsel %vm3933, %v3823, 0.0
        %v3952 = vsel %vm3934, %v3824, 0.0
        %v3953 = vsel %vm3935, %v3825, 0.0
        %v3954 = vsel %vm3936, %v3826, 0.0
        %v3955 = vsel %vm3937, %v3827, 0.0
        %v3956 = vpack.c.bf16 %v3939, %v3938
        %v3957 = vpack.c.bf16 %v3941, %v3940
        %v3958 = vpack.c.bf16 %v3943, %v3942
        %v3959 = vpack.c.bf16 %v3945, %v3944
        %v3960 = vpack.c.bf16 %v3947, %v3946
        %v3961 = vpack.c.bf16 %v3949, %v3948
        %v3962 = vpack.c.bf16 %v3951, %v3950
        %v3963 = vpack.c.bf16 %v3953, %v3952
        %v3964 = vpack.c.bf16 %v3955, %v3954
        %v3974 = vunpack.c.l.b16 %v3956
        %v3975 = vunpack.c.h.b16 %v3956
        %v3976 = vunpack.c.l.b16 %v3957
        %v3977 = vunpack.c.h.b16 %v3957
        %v3978 = vunpack.c.l.b16 %v3958
        %v3979 = vunpack.c.h.b16 %v3958
        %v3980 = vunpack.c.l.b16 %v3959
        %v3981 = vunpack.c.h.b16 %v3959
        %v3982 = vunpack.c.l.b16 %v3960
        %v3983 = vunpack.c.h.b16 %v3960
        %v3984 = vunpack.c.l.b16 %v3961
        %v3985 = vunpack.c.h.b16 %v3961
        %v3986 = vunpack.c.l.b16 %v3962
        %v3987 = vunpack.c.h.b16 %v3962
        %v3988 = vunpack.c.l.b16 %v3963
        %v3989 = vunpack.c.h.b16 %v3963
        %v3990 = vunpack.c.l.b16 %v3964
        %v3991 = vunpack.c.h.b16 %v3964
        %v3992 = vpack.c.b16 %v3974, %v3974
        %v3993 = vpack.c.b16 %v3975, %v3975
        %v3994 = vpack.c.b16 %v3976, %v3976
        %v3995 = vpack.c.b16 %v3977, %v3977
        %v3996 = vpack.c.b16 %v3978, %v3978
        %v3997 = vpack.c.b16 %v3979, %v3979
        %v3998 = vpack.c.b16 %v3980, %v3980
        %v3999 = vpack.c.b16 %v3981, %v3981
        %v4000 = vpack.c.b16 %v3982, %v3982
        %v4001 = vpack.c.b16 %v3983, %v3983
        %v4002 = vpack.c.b16 %v3984, %v3984
        %v4003 = vpack.c.b16 %v3985, %v3985
        %v4004 = vpack.c.b16 %v3986, %v3986
        %v4005 = vpack.c.b16 %v3987, %v3987
        %v4006 = vpack.c.b16 %v3988, %v3988
        %v4007 = vpack.c.b16 %v3989, %v3989
        %v4008 = vpack.c.b16 %v3990, %v3990
        %v4009 = vpack.c.b16 %v3991, %v3991
        %vm4010 = vsmask.f32 2304
        %vm4011 = vsmask.f32 6416
        %vm4012 = vmor %vm4010, %vm4011
        %v4014 = vshrl.u32 %v3992, 16
        %v4016 = vrot.slane %v4014, 5
        %v4017 = vshll.u32 %v3992, 16
        %v4019 = vrot.slane %v4017, 6
        %v4020 = vor.u32 %v4016, %v4019
        %v4021 = vrot.slane %v4020, 4
        %v4023 = vshrl.u32 %v3993, 16
        %v4025 = vrot.slane %v4023, 5
        %v4026 = vshll.u32 %v3993, 16
        %v4028 = vrot.slane %v4026, 6
        %v4029 = vor.u32 %v4025, %v4028
        %v4030 = vsel %vm4012, %v4021, %v4029
        %v4031 = vrot.slane %v4029, 4
        %v4033 = vshrl.u32 %v3994, 16
        %v4035 = vrot.slane %v4033, 5
        %v4036 = vshll.u32 %v3994, 16
        %v4038 = vrot.slane %v4036, 6
        %v4039 = vor.u32 %v4035, %v4038
        %v4040 = vsel %vm4012, %v4031, %v4039
        %v4041 = vrot.slane %v4039, 4
        %v4043 = vshrl.u32 %v3995, 16
        %v4045 = vrot.slane %v4043, 5
        %v4046 = vshll.u32 %v3995, 16
        %v4048 = vrot.slane %v4046, 6
        %v4049 = vor.u32 %v4045, %v4048
        %v4050 = vsel %vm4012, %v4041, %v4049
        %v4051 = vrot.slane %v4049, 4
        %v4053 = vshrl.u32 %v3996, 16
        %v4055 = vrot.slane %v4053, 5
        %v4056 = vshll.u32 %v3996, 16
        %v4058 = vrot.slane %v4056, 6
        %v4059 = vor.u32 %v4055, %v4058
        %v4060 = vsel %vm4012, %v4051, %v4059
        %v4061 = vrot.slane %v4059, 4
        %v4063 = vshrl.u32 %v3997, 16
        %v4065 = vrot.slane %v4063, 5
        %v4066 = vshll.u32 %v3997, 16
        %v4068 = vrot.slane %v4066, 6
        %v4069 = vor.u32 %v4065, %v4068
        %v4070 = vsel %vm4012, %v4061, %v4069
        %v4071 = vrot.slane %v4069, 4
        %v4073 = vshrl.u32 %v3998, 16
        %v4075 = vrot.slane %v4073, 5
        %v4076 = vshll.u32 %v3998, 16
        %v4078 = vrot.slane %v4076, 6
        %v4079 = vor.u32 %v4075, %v4078
        %v4080 = vsel %vm4012, %v4071, %v4079
        %v4081 = vrot.slane %v4079, 4
        %v4083 = vshrl.u32 %v3999, 16
        %v4085 = vrot.slane %v4083, 5
        %v4086 = vshll.u32 %v3999, 16
        %v4088 = vrot.slane %v4086, 6
        %v4089 = vor.u32 %v4085, %v4088
        %v4090 = vsel %vm4012, %v4081, %v4089
        %v4091 = vrot.slane %v4089, 4
        %v4093 = vshrl.u32 %v4000, 16
        %v4095 = vrot.slane %v4093, 5
        %v4096 = vshll.u32 %v4000, 16
        %v4098 = vrot.slane %v4096, 6
        %v4099 = vor.u32 %v4095, %v4098
        %v4100 = vsel %vm4012, %v4091, %v4099
        %v4101 = vrot.slane %v4099, 4
        %v4103 = vshrl.u32 %v4001, 16
        %v4105 = vrot.slane %v4103, 5
        %v4106 = vshll.u32 %v4001, 16
        %v4108 = vrot.slane %v4106, 6
        %v4109 = vor.u32 %v4105, %v4108
        %v4110 = vsel %vm4012, %v4101, %v4109
        %v4111 = vrot.slane %v4109, 4
        %v4113 = vshrl.u32 %v4002, 16
        %v4115 = vrot.slane %v4113, 5
        %v4116 = vshll.u32 %v4002, 16
        %v4118 = vrot.slane %v4116, 6
        %v4119 = vor.u32 %v4115, %v4118
        %v4120 = vsel %vm4012, %v4111, %v4119
        %v4121 = vrot.slane %v4119, 4
        %v4123 = vshrl.u32 %v4003, 16
        %v4125 = vrot.slane %v4123, 5
        %v4126 = vshll.u32 %v4003, 16
        %v4128 = vrot.slane %v4126, 6
        %v4129 = vor.u32 %v4125, %v4128
        %v4130 = vsel %vm4012, %v4121, %v4129
        %v4131 = vrot.slane %v4129, 4
        %v4133 = vshrl.u32 %v4004, 16
        %v4135 = vrot.slane %v4133, 5
        %v4136 = vshll.u32 %v4004, 16
        %v4138 = vrot.slane %v4136, 6
        %v4139 = vor.u32 %v4135, %v4138
        %v4140 = vsel %vm4012, %v4131, %v4139
        %v4141 = vrot.slane %v4139, 4
        %v4143 = vshrl.u32 %v4005, 16
        %v4145 = vrot.slane %v4143, 5
        %v4146 = vshll.u32 %v4005, 16
        %v4148 = vrot.slane %v4146, 6
        %v4149 = vor.u32 %v4145, %v4148
        %v4150 = vsel %vm4012, %v4141, %v4149
        %v4151 = vrot.slane %v4149, 4
        %v4153 = vshrl.u32 %v4006, 16
        %v4155 = vrot.slane %v4153, 5
        %v4156 = vshll.u32 %v4006, 16
        %v4158 = vrot.slane %v4156, 6
        %v4159 = vor.u32 %v4155, %v4158
        %v4160 = vsel %vm4012, %v4151, %v4159
        %v4161 = vrot.slane %v4159, 4
        %v4163 = vshrl.u32 %v4007, 16
        %v4165 = vrot.slane %v4163, 5
        %v4166 = vshll.u32 %v4007, 16
        %v4168 = vrot.slane %v4166, 6
        %v4169 = vor.u32 %v4165, %v4168
        %v4170 = vsel %vm4012, %v4161, %v4169
        %v4171 = vrot.slane %v4169, 4
        %v4173 = vshrl.u32 %v4008, 16
        %v4175 = vrot.slane %v4173, 5
        %v4176 = vshll.u32 %v4008, 16
        %v4178 = vrot.slane %v4176, 6
        %v4179 = vor.u32 %v4175, %v4178
        %v4180 = vsel %vm4012, %v4171, %v4179
        %v4181 = vrot.slane %v4179, 4
        %v4183 = vshrl.u32 %v4009, 16
        %v4185 = vrot.slane %v4183, 5
        %v4186 = vshll.u32 %v4009, 16
        %v4188 = vrot.slane %v4186, 6
        %v4189 = vor.u32 %v4185, %v4188
        %v4190 = vsel %vm4012, %v4181, %v4189
        %v4191 = vrot.slane %v4189, 4
        %vm4211 = vcmask 1043458
        %vm4212 = vsmask.f32 7946
        %vm4213 = vmand %vm4211, %vm4212
        %v4214 = vsel %vm4213, %v4020, %v3073
        %4215 = vst [vmem:[#allocation3] sm:$0xc] %v4214
        %4216 = vst [vmem:[#allocation3 + $0x4] sm:$0xf] %v4030
        %4217 = vst [vmem:[#allocation3 + $0x8] sm:$0xf] %v4040
        %4218 = vst [vmem:[#allocation3 + $0xc] sm:$0xf] %v4050
        %4219 = vst [vmem:[#allocation3 + $0x10] sm:$0xf] %v4060
        %4220 = vst [vmem:[#allocation3 + $0x14] sm:$0xf] %v4070
        %4221 = vst [vmem:[#allocation3 + $0x18] sm:$0xf] %v4080
        %4222 = vst [vmem:[#allocation3 + $0x1c] sm:$0xf] %v4090
        %4223 = vst [vmem:[#allocation3 + $0x20] sm:$0xf] %v4100
        %4224 = vst [vmem:[#allocation3 + $0x24] sm:$0xf] %v4110
        %4225 = vst [vmem:[#allocation3 + $0x28] sm:$0xf] %v4120
        %4226 = vst [vmem:[#allocation3 + $0x2c] sm:$0xf] %v4130
        %4227 = vst [vmem:[#allocation3 + $0x30] sm:$0xf] %v4140
        %4228 = vst [vmem:[#allocation3 + $0x34] sm:$0xf] %v4150
        %4229 = vst [vmem:[#allocation3 + $0x38] sm:$0xf] %v4160
        %4230 = vst [vmem:[#allocation3 + $0x3c] sm:$0xf] %v4170
        %4231 = vst [vmem:[#allocation3 + $0x40] sm:$0xf] %v4180
        %4232 = vst [vmem:[#allocation3 + $0x44] sm:$0xf] %v4190
        %vm4233 = vcmask 1041408
        %vm4234 = vsmask.f32 1280
        %vm4235 = vmand %vm4233, %vm4234
        %v4236 = vld [vmem:[#allocation3 + $0x48] sm:$0x3]
        %v4237 = vsel %vm4235, %v4191, %v4236
        %4238 = vst [vmem:[#allocation3 + $0x48] sm:$0x3] %v4237
        %v4239 = vld [vmem:[#allocation3] sm:$0xc]
        %v4240 = vld [vmem:[#allocation3 + $0x4] sm:$0xf]
        %v4241 = vld [vmem:[#allocation3 + $0x8] sm:$0xf]
        %v4242 = vld [vmem:[#allocation3 + $0xc] sm:$0xf]
        %v4243 = vld [vmem:[#allocation3 + $0x10] sm:$0xf]
        %v4244 = vld [vmem:[#allocation3 + $0x14] sm:$0xf]
        %v4245 = vld [vmem:[#allocation3 + $0x18] sm:$0xf]
        %v4246 = vld [vmem:[#allocation3 + $0x1c] sm:$0xf]
        %v4247 = vld [vmem:[#allocation3 + $0x20] sm:$0xf]
        %v4248 = vld [vmem:[#allocation3 + $0x24] sm:$0xf]
        %v4249 = vld [vmem:[#allocation3 + $0x28] sm:$0xf]
        %v4250 = vld [vmem:[#allocation3 + $0x2c] sm:$0xf]
        %v4251 = vld [vmem:[#allocation3 + $0x30] sm:$0xf]
        %v4252 = vld [vmem:[#allocation3 + $0x34] sm:$0xf]
        %v4253 = vld [vmem:[#allocation3 + $0x38] sm:$0xf]
        %v4254 = vld [vmem:[#allocation3 + $0x3c] sm:$0xf]
        %v4255 = vld [vmem:[#allocation3 + $0x40] sm:$0xf]
        %v4256 = vld [vmem:[#allocation3 + $0x44] sm:$0xf]
        %v4257 = vld [vmem:[#allocation3 + $0x48] sm:$0x1]
        %v4258 = vld [vmem:[#allocation3] sm:$0x8]
        %v4278 = vunpack.c.l.b16 %v4239
        %v4279 = vunpack.c.l.b16 %v4240
        %v4280 = vunpack.c.l.b16 %v4241
        %v4281 = vunpack.c.l.b16 %v4242
        %v4282 = vunpack.c.l.b16 %v4243
        %v4283 = vunpack.c.l.b16 %v4244
        %v4284 = vunpack.c.l.b16 %v4245
        %v4285 = vunpack.c.l.b16 %v4246
        %v4286 = vunpack.c.l.b16 %v4247
        %v4287 = vunpack.c.l.b16 %v4248
        %v4288 = vunpack.c.l.b16 %v4249
        %v4289 = vunpack.c.l.b16 %v4250
        %v4290 = vunpack.c.l.b16 %v4251
        %v4291 = vunpack.c.l.b16 %v4252
        %v4292 = vunpack.c.l.b16 %v4253
        %v4293 = vunpack.c.l.b16 %v4254
        %v4294 = vunpack.c.l.b16 %v4255
        %v4295 = vunpack.c.l.b16 %v4256
        %v4296 = vunpack.c.l.b16 %v4257
        %v4297 = vpack.c.b16 %v4279, %v4278
        %v4298 = vpack.c.b16 %v4281, %v4280
        %v4299 = vpack.c.b16 %v4283, %v4282
        %v4300 = vpack.c.b16 %v4285, %v4284
        %v4301 = vpack.c.b16 %v4287, %v4286
        %v4302 = vpack.c.b16 %v4289, %v4288
        %v4303 = vpack.c.b16 %v4291, %v4290
        %v4304 = vpack.c.b16 %v4293, %v4292
        %v4305 = vpack.c.b16 %v4295, %v4294
        %v4306 = vpack.c.b16 %v4296, %v4296
        %v4308 = vunpack.c.l.b16 %v4258
        %v4309 = vpack.c.b16 %v4279, %v4308
        %v4311 = vshrl.u32 %v4309, 16
        %v4313 = vshll.u32 %v4309, 16
        %v4315 = vrot.slane %v4313, 1
        %v4316 = vor.u32 %v4311, %v4315
        %v4318 = vshll.u32 %v4298, 16
        %v4320 = vrot.slane %v4318, 1
        %v4321 = vsel %vm821, %v4316, %v4320
        %v4322 = vshrl.u32 %v4298, 16
        %v4324 = vor.u32 %v4322, %v4320
        %v4326 = vshll.u32 %v4299, 16
        %v4328 = vrot.slane %v4326, 1
        %v4329 = vsel %vm821, %v4324, %v4328
        %v4330 = vshrl.u32 %v4299, 16
        %v4332 = vor.u32 %v4330, %v4328
        %v4334 = vshll.u32 %v4300, 16
        %v4336 = vrot.slane %v4334, 1
        %v4337 = vsel %vm821, %v4332, %v4336
        %v4338 = vshrl.u32 %v4300, 16
        %v4340 = vor.u32 %v4338, %v4336
        %v4342 = vshll.u32 %v4301, 16
        %v4344 = vrot.slane %v4342, 1
        %v4345 = vsel %vm821, %v4340, %v4344
        %v4346 = vshrl.u32 %v4301, 16
        %v4348 = vor.u32 %v4346, %v4344
        %v4350 = vshll.u32 %v4302, 16
        %v4352 = vrot.slane %v4350, 1
        %v4353 = vsel %vm821, %v4348, %v4352
        %v4354 = vshrl.u32 %v4302, 16
        %v4356 = vor.u32 %v4354, %v4352
        %v4358 = vshll.u32 %v4303, 16
        %v4360 = vrot.slane %v4358, 1
        %v4361 = vsel %vm821, %v4356, %v4360
        %v4362 = vshrl.u32 %v4303, 16
        %v4364 = vor.u32 %v4362, %v4360
        %v4366 = vshll.u32 %v4304, 16
        %v4368 = vrot.slane %v4366, 1
        %v4369 = vsel %vm821, %v4364, %v4368
        %v4370 = vshrl.u32 %v4304, 16
        %v4372 = vor.u32 %v4370, %v4368
        %v4374 = vshll.u32 %v4305, 16
        %v4376 = vrot.slane %v4374, 1
        %v4377 = vsel %vm821, %v4372, %v4376
        %v4378 = vshrl.u32 %v4305, 16
        %v4380 = vor.u32 %v4378, %v4376
        %v4382 = vshll.u32 %v4306, 16
        %v4384 = vrot.slane %v4382, 1
        %v4385 = vsel %vm821, %v4380, %v4384
        %v4386 = vshrl.u32 %v4306, 16
        %v4388 = vld [vmem:[%s8] sm:$0xf]
        %v4389 = vld [vmem:[%s8 + $0x4] sm:$0xf]
        %v4390 = vld [vmem:[%s8 + $0x8] sm:$0xf]
        %v4391 = vld [vmem:[%s8 + $0xc] sm:$0xf]
        %v4392 = vld [vmem:[%s8 + $0x10] sm:$0xf]
        %v4393 = vld [vmem:[%s8 + $0x14] sm:$0xf]
        %v4394 = vld [vmem:[%s8 + $0x18] sm:$0xf]
        %v4395 = vld [vmem:[%s8 + $0x1c] sm:$0xf]
        %v4396 = vld [vmem:[%s8 + $0x20] sm:$0xf]
        %v4397 = vld [vmem:[%s8 + $0x24] sm:$0xf]
        %v4398 = vld [vmem:[%s8 + $0x28] sm:$0xf]
        %v4399 = vld [vmem:[%s8 + $0x2c] sm:$0xf]
        %v4400 = vld [vmem:[%s8 + $0x30] sm:$0xf]
        %v4401 = vld [vmem:[%s8 + $0x34] sm:$0xf]
        %v4402 = vld [vmem:[%s8 + $0x38] sm:$0xf]
        %v4403 = vld [vmem:[%s8 + $0x3c] sm:$0xf]
        %v4404 = vld [vmem:[%s8 + $0x40] sm:$0xf]
        %v4405 = vld [vmem:[%s8 + $0x44] sm:$0xf]
        %v4406 = vld [vmem:[%s8 + $0x48] sm:$0xf]
        %v4407 = vld [vmem:[%s8 + $0x4c] sm:$0xf]
        %v4408 = vld [vmem:[%s8 + $0x50] sm:$0xf]
        %v4409 = vld [vmem:[%s8 + $0x54] sm:$0xf]
        %v4410 = vld [vmem:[%s8 + $0x58] sm:$0xf]
        %v4411 = vld [vmem:[%s8 + $0x5c] sm:$0xf]
        %v4412 = vld [vmem:[%s8 + $0x60] sm:$0xf]
        %v4413 = vld [vmem:[%s8 + $0x64] sm:$0xf]
        %v4414 = vld [vmem:[%s8 + $0x68] sm:$0xf]
        %v4415 = vld [vmem:[%s8 + $0x6c] sm:$0xf]
        %v4416 = vld [vmem:[%s8 + $0x70] sm:$0xf]
        %v4417 = vld [vmem:[%s8 + $0x74] sm:$0xf]
        %v4418 = vld [vmem:[%s8 + $0x78] sm:$0xf]
        %v4419 = vld [vmem:[%s8 + $0x7c] sm:$0xf]
        %v4420 = vld [vmem:[#allocation3 + $0x48] sm:$0x3]
        %v4421 = vld [vmem:[%s8 + $0x80] sm:$0xf]
        %v4422 = vld [vmem:[%s8 + $0x84] sm:$0xf]
        %v4423 = vld [vmem:[%s8 + $0x88] sm:$0xf]
        %v4424 = vld [vmem:[%s8 + $0x8c] sm:$0xf]
        %v4425 = vld [vmem:[%s8 + $0x90] sm:$0xf]
        %v4426 = vld [vmem:[%s8 + $0x94] sm:$0xf]
        %v4427 = vld [vmem:[%s8 + $0x98] sm:$0xf]
        %v4428 = vld [vmem:[%s8 + $0x9c] sm:$0xf]
        %v4429 = vld [vmem:[%s8 + $0xa0] sm:$0xf]
        %v4430 = vld [vmem:[%s8 + $0xa4] sm:$0xf]
        %v4431 = vld [vmem:[%s8 + $0xa8] sm:$0xf]
        %v4432 = vld [vmem:[%s8 + $0xac] sm:$0xf]
        %v4433 = vld [vmem:[%s8 + $0xb0] sm:$0xf]
        %v4434 = vld [vmem:[%s8 + $0xb4] sm:$0xf]
        %v4435 = vld [vmem:[%s8 + $0xb8] sm:$0xf]
        %v4436 = vld [vmem:[%s8 + $0xbc] sm:$0xf]
        %v4438 = vunpack.c.l.b16 %v4420
        %v4439 = vpack.c.b16 %v4438, %v4438
        %vm4440 = vsmask.f32 4352
        %v4441 = vrot.slane %v4311, 3
        %v4442 = vrot.slane %v4313, 4
        %v4443 = vor.u32 %v4441, %v4442
        %v4444 = vrot.slane %v4322, 3
        %v4445 = vrot.slane %v4318, 4
        %v4446 = vor.u32 %v4444, %v4445
        %v4447 = vsel %vm4440, %v4443, %v4446
        %v4448 = vrot.slane %v4330, 3
        %v4449 = vrot.slane %v4326, 4
        %v4450 = vor.u32 %v4448, %v4449
        %v4451 = vsel %vm4440, %v4446, %v4450
        %v4452 = vrot.slane %v4338, 3
        %v4453 = vrot.slane %v4334, 4
        %v4454 = vor.u32 %v4452, %v4453
        %v4455 = vsel %vm4440, %v4450, %v4454
        %v4456 = vrot.slane %v4346, 3
        %v4457 = vrot.slane %v4342, 4
        %v4458 = vor.u32 %v4456, %v4457
        %v4459 = vsel %vm4440, %v4454, %v4458
        %v4460 = vrot.slane %v4354, 3
        %v4461 = vrot.slane %v4350, 4
        %v4462 = vor.u32 %v4460, %v4461
        %v4463 = vsel %vm4440, %v4458, %v4462
        %v4464 = vrot.slane %v4362, 3
        %v4465 = vrot.slane %v4358, 4
        %v4466 = vor.u32 %v4464, %v4465
        %v4467 = vsel %vm4440, %v4462, %v4466
        %v4468 = vrot.slane %v4370, 3
        %v4469 = vrot.slane %v4366, 4
        %v4470 = vor.u32 %v4468, %v4469
        %v4471 = vsel %vm4440, %v4466, %v4470
        %v4472 = vrot.slane %v4378, 3
        %v4473 = vrot.slane %v4374, 4
        %v4474 = vor.u32 %v4472, %v4473
        %v4475 = vsel %vm4440, %v4470, %v4474
        %v4477 = vshrl.u32 %v4439, 16
        %v4479 = vrot.slane %v4477, 3
        %v4480 = vshll.u32 %v4439, 16
        %v4482 = vrot.slane %v4480, 4
        %v4483 = vor.u32 %v4479, %v4482
        %v4484 = vsel %vm4440, %v4474, %v4483
        %v4510 = vunpack.c.l.b16 %v4421
        %v4511 = vunpack.c.l.b16 %v4422
        %v4512 = vunpack.c.l.b16 %v4423
        %v4513 = vunpack.c.l.b16 %v4424
        %v4514 = vunpack.c.l.b16 %v4425
        %v4515 = vunpack.c.l.b16 %v4426
        %v4516 = vunpack.c.l.b16 %v4427
        %v4517 = vunpack.c.l.b16 %v4428
        %v4518 = vunpack.c.l.b16 %v4429
        %v4519 = vunpack.c.l.b16 %v4430
        %v4520 = vunpack.c.l.b16 %v4431
        %v4521 = vunpack.c.l.b16 %v4432
        %v4522 = vunpack.c.l.b16 %v4433
        %v4523 = vunpack.c.l.b16 %v4434
        %v4524 = vunpack.c.l.b16 %v4435
        %v4525 = vunpack.c.l.b16 %v4436
        %v4526 = vpack.c.b16 %v4511, %v4510
        %v4527 = vpack.c.b16 %v4513, %v4512
        %v4528 = vpack.c.b16 %v4515, %v4514
        %v4529 = vpack.c.b16 %v4517, %v4516
        %v4530 = vpack.c.b16 %v4519, %v4518
        %v4531 = vpack.c.b16 %v4521, %v4520
        %v4532 = vpack.c.b16 %v4523, %v4522
        %v4533 = vpack.c.b16 %v4525, %v4524
        %4542 = vmatprep.subr.bf16.mxu0 0
        %4543 = vmatpush1.bf16.msra.mxu0 %v4533
        %4544 = vmatprep.subr.bf16.mxu0 0
        %4545 = vmatpush1.bf16.msra.mxu0 %v4532
        %4546 = vmatprep.subr.bf16.mxu0 0
        %4547 = vmatpush1.bf16.msra.mxu0 %v4531
        %4548 = vmatprep.subr.bf16.mxu0 0
        %4549 = vmatpush1.bf16.msra.mxu0 %v4530
        %4550 = vmatprep.subr.bf16.mxu0 0
        %4551 = vmatpush1.bf16.msra.mxu0 %v4529
        %4552 = vmatprep.subr.bf16.mxu0 0
        %4553 = vmatpush1.bf16.msra.mxu0 %v4528
        %4554 = vmatprep.subr.bf16.mxu0 0
        %4555 = vmatpush1.bf16.msra.mxu0 %v4527
        %4556 = vmatprep.subr.bf16.mxu0 0
        %4557 = vmatpush1.bf16.msra.mxu0 %v4526
        %4558 = vmatprep.subr.bf16.mxu0 0
        %4559 = vmatpush2.bf16.msra.mxu0 0
        %4560 = vmatprep.subr.bf16.mxu0 0
        %4561 = vmatpush2.bf16.msra.mxu0 0
        %4562 = vmatprep.subr.bf16.mxu0 0
        %4563 = vmatpush2.bf16.msra.mxu0 0
        %4564 = vmatprep.subr.bf16.mxu0 0
        %4565 = vmatpush2.bf16.msra.mxu0 0
        %4566 = vmatprep.subr.bf16.mxu0 0
        %4567 = vmatpush2.bf16.msra.mxu0 0
        %4568 = vmatprep.subr.bf16.mxu0 0
        %4569 = vmatpush2.bf16.msra.mxu0 0
        %4570 = vmatprep.subr.bf16.mxu0 0
        %4571 = vmatpush2.bf16.msra.mxu0 0
        %4572 = vmatprep.subr.bf16.mxu0 0
        %4573 = vmatpush2.bf16.msra.mxu0 0
        %4574 = vmatprep.mubr.bf16.mxu0 0
        %4575 = vmatmul.mubr.bf16.gmra.mxu0 %v4447
        %v4576 = vpop.f32.mrf.mxu0
        %v4577 = vadd.f32 0.0, %v4576
        %v4578 = vpop.f32.mrf.mxu0
        %v4579 = vpop.f32.mrf.mxu0
        %v4580 = vadd.f32 0.0, %v4579
        %v4581 = vpop.f32.mrf.mxu0
        %4582 = vmatprep.mubr.bf16.mxu0 0
        %4583 = vmatmul.mubr.bf16.gmra.mxu0 %v4451
        %v4584 = vpop.f32.mrf.mxu0
        %v4585 = vadd.f32 0.0, %v4584
        %v4586 = vpop.f32.mrf.mxu0
        %v4587 = vpop.f32.mrf.mxu0
        %v4588 = vadd.f32 0.0, %v4587
        %v4589 = vpop.f32.mrf.mxu0
        %4590 = vmatprep.mubr.bf16.mxu0 0
        %4591 = vmatmul.mubr.bf16.gmra.mxu0 %v4455
        %v4592 = vpop.f32.mrf.mxu0
        %v4593 = vadd.f32 0.0, %v4592
        %v4594 = vpop.f32.mrf.mxu0
        %v4595 = vpop.f32.mrf.mxu0
        %v4596 = vadd.f32 0.0, %v4595
        %v4597 = vpop.f32.mrf.mxu0
        %4598 = vmatprep.mubr.bf16.mxu0 0
        %4599 = vmatmul.mubr.bf16.gmra.mxu0 %v4459
        %v4600 = vpop.f32.mrf.mxu0
        %v4601 = vadd.f32 0.0, %v4600
        %v4602 = vpop.f32.mrf.mxu0
        %v4603 = vpop.f32.mrf.mxu0
        %v4604 = vadd.f32 0.0, %v4603
        %v4605 = vpop.f32.mrf.mxu0
        %4606 = vmatprep.mubr.bf16.mxu0 0
        %4607 = vmatmul.mubr.bf16.gmra.mxu0 %v4463
        %v4608 = vpop.f32.mrf.mxu0
        %v4609 = vadd.f32 0.0, %v4608
        %v4610 = vpop.f32.mrf.mxu0
        %v4611 = vpop.f32.mrf.mxu0
        %v4612 = vadd.f32 0.0, %v4611
        %v4613 = vpop.f32.mrf.mxu0
        %4614 = vmatprep.mubr.bf16.mxu0 0
        %4615 = vmatmul.mubr.bf16.gmra.mxu0 %v4467
        %v4616 = vpop.f32.mrf.mxu0
        %v4617 = vadd.f32 0.0, %v4616
        %v4618 = vpop.f32.mrf.mxu0
        %v4619 = vpop.f32.mrf.mxu0
        %v4620 = vadd.f32 0.0, %v4619
        %v4621 = vpop.f32.mrf.mxu0
        %4622 = vmatprep.mubr.bf16.mxu0 0
        %4623 = vmatmul.mubr.bf16.gmra.mxu0 %v4471
        %v4624 = vpop.f32.mrf.mxu0
        %v4625 = vadd.f32 0.0, %v4624
        %v4626 = vpop.f32.mrf.mxu0
        %v4627 = vpop.f32.mrf.mxu0
        %v4628 = vadd.f32 0.0, %v4627
        %v4629 = vpop.f32.mrf.mxu0
        %4630 = vmatprep.mubr.bf16.mxu0 0
        %4631 = vmatmul.mubr.bf16.gmra.mxu0 %v4475
        %v4632 = vpop.f32.mrf.mxu0
        %v4633 = vadd.f32 0.0, %v4632
        %v4634 = vpop.f32.mrf.mxu0
        %v4635 = vpop.f32.mrf.mxu0
        %v4636 = vadd.f32 0.0, %v4635
        %v4637 = vpop.f32.mrf.mxu0
        %4638 = vmatprep.mubr.bf16.mxu0 0
        %4639 = vmatmul.mubr.bf16.gmra.mxu0 %v4484
        %v4640 = vpop.f32.mrf.mxu0
        %v4641 = vadd.f32 0.0, %v4640
        %v4642 = vpop.f32.mrf.mxu0
        %v4643 = vpop.f32.mrf.mxu0
        %v4644 = vadd.f32 0.0, %v4643
        %v4645 = vpop.f32.mrf.mxu0
        %4646 = vdwg.mxu0
        %vm4647 = vsmask.f32 5376
        %v4649 = vshrl.u32 %v4297, 16
        %v4651 = vrot.slane %v4649, 2
        %v4652 = vshll.u32 %v4297, 16
        %v4654 = vrot.slane %v4652, 3
        %v4655 = vor.u32 %v4651, %v4654
        %v4656 = vrot.slane %v4322, 2
        %v4657 = vrot.slane %v4318, 3
        %v4658 = vor.u32 %v4656, %v4657
        %v4659 = vsel %vm4647, %v4655, %v4658
        %v4661 = vshrl.u32 %v4321, 16
        %v4663 = vrot.slane %v4661, 2
        %v4664 = vshll.u32 %v4321, 16
        %v4666 = vrot.slane %v4664, 3
        %v4667 = vor.u32 %v4663, %v4666
        %v4669 = vshrl.u32 %v4329, 16
        %v4671 = vrot.slane %v4669, 2
        %v4672 = vshll.u32 %v4329, 16
        %v4674 = vrot.slane %v4672, 3
        %v4675 = vor.u32 %v4671, %v4674
        %v4676 = vsel %vm4647, %v4667, %v4675
        %v4677 = vrot.slane %v4330, 2
        %v4678 = vrot.slane %v4326, 3
        %v4679 = vor.u32 %v4677, %v4678
        %v4680 = vsel %vm4647, %v4658, %v4679
        %v4682 = vshrl.u32 %v4337, 16
        %v4684 = vrot.slane %v4682, 2
        %v4685 = vshll.u32 %v4337, 16
        %v4687 = vrot.slane %v4685, 3
        %v4688 = vor.u32 %v4684, %v4687
        %v4689 = vsel %vm4647, %v4675, %v4688
        %v4690 = vrot.slane %v4338, 2
        %v4691 = vrot.slane %v4334, 3
        %v4692 = vor.u32 %v4690, %v4691
        %v4693 = vsel %vm4647, %v4679, %v4692
        %v4695 = vshrl.u32 %v4345, 16
        %v4697 = vrot.slane %v4695, 2
        %v4698 = vshll.u32 %v4345, 16
        %v4700 = vrot.slane %v4698, 3
        %v4701 = vor.u32 %v4697, %v4700
        %v4702 = vsel %vm4647, %v4688, %v4701
        %v4703 = vrot.slane %v4346, 2
        %v4704 = vrot.slane %v4342, 3
        %v4705 = vor.u32 %v4703, %v4704
        %v4706 = vsel %vm4647, %v4692, %v4705
        %v4708 = vshrl.u32 %v4353, 16
        %v4710 = vrot.slane %v4708, 2
        %v4711 = vshll.u32 %v4353, 16
        %v4713 = vrot.slane %v4711, 3
        %v4714 = vor.u32 %v4710, %v4713
        %v4715 = vsel %vm4647, %v4701, %v4714
        %v4716 = vrot.slane %v4354, 2
        %v4717 = vrot.slane %v4350, 3
        %v4718 = vor.u32 %v4716, %v4717
        %v4719 = vsel %vm4647, %v4705, %v4718
        %v4721 = vshrl.u32 %v4361, 16
        %v4723 = vrot.slane %v4721, 2
        %v4724 = vshll.u32 %v4361, 16
        %v4726 = vrot.slane %v4724, 3
        %v4727 = vor.u32 %v4723, %v4726
        %v4728 = vsel %vm4647, %v4714, %v4727
        %v4729 = vrot.slane %v4362, 2
        %v4730 = vrot.slane %v4358, 3
        %v4731 = vor.u32 %v4729, %v4730
        %v4732 = vsel %vm4647, %v4718, %v4731
        %v4734 = vshrl.u32 %v4369, 16
        %v4736 = vrot.slane %v4734, 2
        %v4737 = vshll.u32 %v4369, 16
        %v4739 = vrot.slane %v4737, 3
        %v4740 = vor.u32 %v4736, %v4739
        %v4741 = vsel %vm4647, %v4727, %v4740
        %v4742 = vrot.slane %v4370, 2
        %v4743 = vrot.slane %v4366, 3
        %v4744 = vor.u32 %v4742, %v4743
        %v4745 = vsel %vm4647, %v4731, %v4744
        %v4747 = vshrl.u32 %v4377, 16
        %v4749 = vrot.slane %v4747, 2
        %v4750 = vshll.u32 %v4377, 16
        %v4752 = vrot.slane %v4750, 3
        %v4753 = vor.u32 %v4749, %v4752
        %v4754 = vsel %vm4647, %v4740, %v4753
        %v4755 = vrot.slane %v4378, 2
        %v4756 = vrot.slane %v4374, 3
        %v4757 = vor.u32 %v4755, %v4756
        %v4758 = vsel %vm4647, %v4744, %v4757
        %v4760 = vshrl.u32 %v4385, 16
        %v4762 = vrot.slane %v4760, 2
        %v4763 = vshll.u32 %v4385, 16
        %v4765 = vrot.slane %v4763, 3
        %v4766 = vor.u32 %v4762, %v4765
        %v4767 = vsel %vm4647, %v4753, %v4766
        %v4768 = vrot.slane %v4382, 3
        %v4769 = vsel %vm4647, %v4757, %v4768
        %v4771 = vshll.u32 %v4386, 16
        %v4773 = vrot.slane %v4771, 3
        %v4774 = vsel %vm4647, %v4766, %v4773
        %v4825 = vunpack.c.l.b16 %v4388
        %v4826 = vunpack.c.l.b16 %v4389
        %v4827 = vunpack.c.l.b16 %v4390
        %v4828 = vunpack.c.l.b16 %v4391
        %v4829 = vunpack.c.l.b16 %v4392
        %v4830 = vunpack.c.l.b16 %v4393
        %v4831 = vunpack.c.l.b16 %v4394
        %v4832 = vunpack.c.l.b16 %v4395
        %v4833 = vunpack.c.l.b16 %v4396
        %v4834 = vunpack.c.l.b16 %v4397
        %v4835 = vunpack.c.l.b16 %v4398
        %v4836 = vunpack.c.l.b16 %v4399
        %v4837 = vunpack.c.l.b16 %v4400
        %v4838 = vunpack.c.l.b16 %v4401
        %v4839 = vunpack.c.l.b16 %v4402
        %v4840 = vunpack.c.l.b16 %v4403
        %v4841 = vunpack.c.l.b16 %v4404
        %v4842 = vunpack.c.l.b16 %v4405
        %v4843 = vunpack.c.l.b16 %v4406
        %v4844 = vunpack.c.l.b16 %v4407
        %v4845 = vunpack.c.l.b16 %v4408
        %v4846 = vunpack.c.l.b16 %v4409
        %v4847 = vunpack.c.l.b16 %v4410
        %v4848 = vunpack.c.l.b16 %v4411
        %v4849 = vunpack.c.l.b16 %v4412
        %v4850 = vunpack.c.l.b16 %v4413
        %v4851 = vunpack.c.l.b16 %v4414
        %v4852 = vunpack.c.l.b16 %v4415
        %v4853 = vunpack.c.l.b16 %v4416
        %v4854 = vunpack.c.l.b16 %v4417
        %v4855 = vunpack.c.l.b16 %v4418
        %v4856 = vunpack.c.l.b16 %v4419
        %v4857 = vpack.c.b16 %v4826, %v4825
        %v4858 = vpack.c.b16 %v4828, %v4827
        %v4859 = vpack.c.b16 %v4830, %v4829
        %v4860 = vpack.c.b16 %v4832, %v4831
        %v4861 = vpack.c.b16 %v4834, %v4833
        %v4862 = vpack.c.b16 %v4836, %v4835
        %v4863 = vpack.c.b16 %v4838, %v4837
        %v4864 = vpack.c.b16 %v4840, %v4839
        %v4865 = vpack.c.b16 %v4842, %v4841
        %v4866 = vpack.c.b16 %v4844, %v4843
        %v4867 = vpack.c.b16 %v4846, %v4845
        %v4868 = vpack.c.b16 %v4848, %v4847
        %v4869 = vpack.c.b16 %v4850, %v4849
        %v4870 = vpack.c.b16 %v4852, %v4851
        %v4871 = vpack.c.b16 %v4854, %v4853
        %v4872 = vpack.c.b16 %v4856, %v4855
        %4889 = vmatprep.subr.bf16.mxu0 0
        %4890 = vmatpush1.bf16.msra.mxu0 %v4864
        %4891 = vmatprep.subr.bf16.mxu0 0
        %4892 = vmatpush1.bf16.msra.mxu0 %v4863
        %4893 = vmatprep.subr.bf16.mxu0 0
        %4894 = vmatpush1.bf16.msra.mxu0 %v4862
        %4895 = vmatprep.subr.bf16.mxu0 0
        %4896 = vmatpush1.bf16.msra.mxu0 %v4861
        %4897 = vmatprep.subr.bf16.mxu0 0
        %4898 = vmatpush1.bf16.msra.mxu0 %v4860
        %4899 = vmatprep.subr.bf16.mxu0 0
        %4900 = vmatpush1.bf16.msra.mxu0 %v4859
        %4901 = vmatprep.subr.bf16.mxu0 0
        %4902 = vmatpush1.bf16.msra.mxu0 %v4858
        %4903 = vmatprep.subr.bf16.mxu0 0
        %4904 = vmatpush1.bf16.msra.mxu0 %v4857
        %4905 = vmatprep.subr.bf16.mxu0 0
        %4906 = vmatpush2.bf16.msra.mxu0 %v4872
        %4907 = vmatprep.subr.bf16.mxu0 0
        %4908 = vmatpush2.bf16.msra.mxu0 %v4871
        %4909 = vmatprep.subr.bf16.mxu0 0
        %4910 = vmatpush2.bf16.msra.mxu0 %v4870
        %4911 = vmatprep.subr.bf16.mxu0 0
        %4912 = vmatpush2.bf16.msra.mxu0 %v4869
        %4913 = vmatprep.subr.bf16.mxu0 0
        %4914 = vmatpush2.bf16.msra.mxu0 %v4868
        %4915 = vmatprep.subr.bf16.mxu0 0
        %4916 = vmatpush2.bf16.msra.mxu0 %v4867
        %4917 = vmatprep.subr.bf16.mxu0 0
        %4918 = vmatpush2.bf16.msra.mxu0 %v4866
        %4919 = vmatprep.subr.bf16.mxu0 0
        %4920 = vmatpush2.bf16.msra.mxu0 %v4865
        %4921 = vmatprep.mubr.bf16.mxu0 %v4676
        %4922 = vmatmul.mubr.bf16.gmra.mxu0 %v4659
        %v4923 = vpop.f32.mrf.mxu0
        %v4924 = vadd.f32 %v4577, %v4923
        %v4925 = vpop.f32.mrf.mxu0
        %v4926 = vpop.f32.mrf.mxu0
        %v4927 = vadd.f32 %v4580, %v4926
        %v4928 = vpop.f32.mrf.mxu0
        %4929 = vmatprep.mubr.bf16.mxu0 %v4689
        %4930 = vmatmul.mubr.bf16.gmra.mxu0 %v4680
        %v4931 = vpop.f32.mrf.mxu0
        %v4932 = vadd.f32 %v4585, %v4931
        %v4933 = vpop.f32.mrf.mxu0
        %v4934 = vpop.f32.mrf.mxu0
        %v4935 = vadd.f32 %v4588, %v4934
        %v4936 = vpop.f32.mrf.mxu0
        %4937 = vmatprep.mubr.bf16.mxu0 %v4702
        %4938 = vmatmul.mubr.bf16.gmra.mxu0 %v4693
        %v4939 = vpop.f32.mrf.mxu0
        %v4940 = vadd.f32 %v4593, %v4939
        %v4941 = vpop.f32.mrf.mxu0
        %v4942 = vpop.f32.mrf.mxu0
        %v4943 = vadd.f32 %v4596, %v4942
        %v4944 = vpop.f32.mrf.mxu0
        %4945 = vmatprep.mubr.bf16.mxu0 %v4715
        %4946 = vmatmul.mubr.bf16.gmra.mxu0 %v4706
        %v4947 = vpop.f32.mrf.mxu0
        %v4948 = vadd.f32 %v4601, %v4947
        %v4949 = vpop.f32.mrf.mxu0
        %v4950 = vpop.f32.mrf.mxu0
        %v4951 = vadd.f32 %v4604, %v4950
        %v4952 = vpop.f32.mrf.mxu0
        %4953 = vmatprep.mubr.bf16.mxu0 %v4728
        %4954 = vmatmul.mubr.bf16.gmra.mxu0 %v4719
        %v4955 = vpop.f32.mrf.mxu0
        %v4956 = vadd.f32 %v4609, %v4955
        %v4957 = vpop.f32.mrf.mxu0
        %v4958 = vpop.f32.mrf.mxu0
        %v4959 = vadd.f32 %v4612, %v4958
        %v4960 = vpop.f32.mrf.mxu0
        %4961 = vmatprep.mubr.bf16.mxu0 %v4741
        %4962 = vmatmul.mubr.bf16.gmra.mxu0 %v4732
        %v4963 = vpop.f32.mrf.mxu0
        %v4964 = vadd.f32 %v4617, %v4963
        %v4965 = vpop.f32.mrf.mxu0
        %v4966 = vpop.f32.mrf.mxu0
        %v4967 = vadd.f32 %v4620, %v4966
        %v4968 = vpop.f32.mrf.mxu0
        %4969 = vmatprep.mubr.bf16.mxu0 %v4754
        %4970 = vmatmul.mubr.bf16.gmra.mxu0 %v4745
        %v4971 = vpop.f32.mrf.mxu0
        %v4972 = vadd.f32 %v4625, %v4971
        %v4973 = vpop.f32.mrf.mxu0
        %v4974 = vpop.f32.mrf.mxu0
        %v4975 = vadd.f32 %v4628, %v4974
        %v4976 = vpop.f32.mrf.mxu0
        %4977 = vmatprep.mubr.bf16.mxu0 %v4767
        %4978 = vmatmul.mubr.bf16.gmra.mxu0 %v4758
        %v4979 = vpop.f32.mrf.mxu0
        %v4980 = vadd.f32 %v4633, %v4979
        %v4981 = vpop.f32.mrf.mxu0
        %v4982 = vpop.f32.mrf.mxu0
        %v4983 = vadd.f32 %v4636, %v4982
        %v4984 = vpop.f32.mrf.mxu0
        %4985 = vmatprep.mubr.bf16.mxu0 %v4774
        %4986 = vmatmul.mubr.bf16.gmra.mxu0 %v4769
        %v4987 = vpop.f32.mrf.mxu0
        %v4988 = vadd.f32 %v4641, %v4987
        %v4989 = vpop.f32.mrf.mxu0
        %v4990 = vpop.f32.mrf.mxu0
        %v4991 = vadd.f32 %v4644, %v4990
        %v4992 = vpop.f32.mrf.mxu0
        %4993 = vdwg.mxu0
        %v4994 = vld [vmem:[%s9] sm:$0x1]
        %v4996 = vlaneseq
        %v4997 = vshrl.u32 %v4996, 7
        %v4998 = vsub.s32 0, %v4997
        %v4999 = vrot.slane %v4994, %v4998
        %v5001 = vadd.f32 %v4924, %v4999
        %v5002 = vadd.f32 %v4927, %v4999
        %v5003 = vadd.f32 %v4932, %v4999
        %v5004 = vadd.f32 %v4935, %v4999
        %v5005 = vadd.f32 %v4940, %v4999
        %v5006 = vadd.f32 %v4943, %v4999
        %v5007 = vadd.f32 %v4948, %v4999
        %v5008 = vadd.f32 %v4951, %v4999
        %v5009 = vadd.f32 %v4956, %v4999
        %v5010 = vadd.f32 %v4959, %v4999
        %v5011 = vadd.f32 %v4964, %v4999
        %v5012 = vadd.f32 %v4967, %v4999
        %v5013 = vadd.f32 %v4972, %v4999
        %v5014 = vadd.f32 %v4975, %v4999
        %v5015 = vadd.f32 %v4980, %v4999
        %v5016 = vadd.f32 %v4983, %v4999
        %v5017 = vadd.f32 %v4988, %v4999
        %v5018 = vadd.f32 %v4991, %v4999
        %v5019 = vld [vmem:[#allocation2 + $0x6] sm:$0xff]
        %v5020 = vld [vmem:[#allocation2 + $0xe] sm:$0xff]
        %v5021 = vld [vmem:[#allocation2 + $0x16] sm:$0xff]
        %v5022 = vld [vmem:[#allocation2 + $0x1e] sm:$0xff]
        %v5023 = vld [vmem:[#allocation2 + $0x26] sm:$0xff]
        %v5024 = vld [vmem:[#allocation2 + $0x2e] sm:$0xff]
        %v5025 = vld [vmem:[#allocation2 + $0x36] sm:$0xff]
        %v5026 = vld [vmem:[#allocation2 + $0x3e] sm:$0xff]
        %v5027 = vld [vmem:[#allocation2 + $0x46] sm:$0xff]
        %v5028 = vld [vmem:[#allocation2 + $0x4e] sm:$0xff]
        %v5029 = vld [vmem:[#allocation2 + $0x56] sm:$0xff]
        %v5030 = vld [vmem:[#allocation2 + $0x5e] sm:$0xff]
        %v5031 = vld [vmem:[#allocation2 + $0x66] sm:$0xff]
        %v5032 = vld [vmem:[#allocation2 + $0x6e] sm:$0xff]
        %v5033 = vld [vmem:[#allocation2 + $0x76] sm:$0xff]
        %v5034 = vld [vmem:[#allocation2 + $0x7e] sm:$0xff]
        %v5035 = vld [vmem:[#allocation2 + $0x86] sm:$0xff]
        %v5036 = vld [vmem:[#allocation2 + $0x8e] sm:$0xf]
        %v5037 = vadd.f32 %v5019, %v5001
        %v5038 = vadd.f32 %v5020, %v5002
        %v5039 = vadd.f32 %v5021, %v5003
        %v5040 = vadd.f32 %v5022, %v5004
        %v5041 = vadd.f32 %v5023, %v5005
        %v5042 = vadd.f32 %v5024, %v5006
        %v5043 = vadd.f32 %v5025, %v5007
        %v5044 = vadd.f32 %v5026, %v5008
        %v5045 = vadd.f32 %v5027, %v5009
        %v5046 = vadd.f32 %v5028, %v5010
        %v5047 = vadd.f32 %v5029, %v5011
        %v5048 = vadd.f32 %v5030, %v5012
        %v5049 = vadd.f32 %v5031, %v5013
        %v5050 = vadd.f32 %v5032, %v5014
        %v5051 = vadd.f32 %v5033, %v5015
        %v5052 = vadd.f32 %v5034, %v5016
        %v5053 = vadd.f32 %v5035, %v5017
        %v5054 = vadd.f32 %v5036, %v5018
        %s5055 = sadd.s32 %s527, 4294967290
        %v5056 = vstv %s5055
        %v5057 = vadd.s32 %v5056, %v1446
        %v5058 = vadd.s32 %v5056, %v1447
        %v5059 = vadd.s32 %v5056, %v1448
        %v5060 = vadd.s32 %v5056, %v1449
        %v5061 = vadd.s32 %v5056, %v1450
        %v5062 = vadd.s32 %v5056, %v1451
        %v5063 = vadd.s32 %v5056, %v1452
        %v5064 = vadd.s32 %v5056, %v1453
        %v5065 = vadd.s32 %v5056, %v1454
        %v5066 = vadd.s32 %v5056, %v1455
        %v5067 = vadd.s32 %v5056, %v1456
        %v5068 = vadd.s32 %v5056, %v1457
        %v5069 = vadd.s32 %v5056, %v1458
        %v5070 = vadd.s32 %v5056, %v1459
        %v5071 = vadd.s32 %v5056, %v1460
        %v5072 = vadd.s32 %v5056, %v1461
        %v5073 = vadd.s32 %v5056, %v1462
        %v5074 = vadd.s32 %v5056, %v1463
        %vm5075 = vcmp.ge.s32.totalorder %v5057, 0
        %vm5076 = vcmp.ge.s32.totalorder %v5058, 0
        %vm5077 = vcmp.ge.s32.totalorder %v5059, 0
        %vm5078 = vcmp.ge.s32.totalorder %v5060, 0
        %vm5079 = vcmp.ge.s32.totalorder %v5061, 0
        %vm5080 = vcmp.ge.s32.totalorder %v5062, 0
        %vm5081 = vcmp.ge.s32.totalorder %v5063, 0
        %vm5082 = vcmp.ge.s32.totalorder %v5064, 0
        %vm5083 = vcmp.ge.s32.totalorder %v5065, 0
        %vm5084 = vcmp.ge.s32.totalorder %v5066, 0
        %vm5085 = vcmp.ge.s32.totalorder %v5067, 0
        %vm5086 = vcmp.ge.s32.totalorder %v5068, 0
        %vm5087 = vcmp.ge.s32.totalorder %v5069, 0
        %vm5088 = vcmp.ge.s32.totalorder %v5070, 0
        %vm5089 = vcmp.ge.s32.totalorder %v5071, 0
        %vm5090 = vcmp.ge.s32.totalorder %v5072, 0
        %vm5091 = vcmp.ge.s32.totalorder %v5073, 0
        %vm5092 = vcmp.ge.s32.totalorder %v5074, 0
        %vm5093 = vcmp.lt.s32.totalorder %v5057, 200
        %vm5094 = vcmp.lt.s32.totalorder %v5058, 200
        %vm5095 = vcmp.lt.s32.totalorder %v5059, 200
        %vm5096 = vcmp.lt.s32.totalorder %v5060, 200
        %vm5097 = vcmp.lt.s32.totalorder %v5061, 200
        %vm5098 = vcmp.lt.s32.totalorder %v5062, 200
        %vm5099 = vcmp.lt.s32.totalorder %v5063, 200
        %vm5100 = vcmp.lt.s32.totalorder %v5064, 200
        %vm5101 = vcmp.lt.s32.totalorder %v5065, 200
        %vm5102 = vcmp.lt.s32.totalorder %v5066, 200
        %vm5103 = vcmp.lt.s32.totalorder %v5067, 200
        %vm5104 = vcmp.lt.s32.totalorder %v5068, 200
        %vm5105 = vcmp.lt.s32.totalorder %v5069, 200
        %vm5106 = vcmp.lt.s32.totalorder %v5070, 200
        %vm5107 = vcmp.lt.s32.totalorder %v5071, 200
        %vm5108 = vcmp.lt.s32.totalorder %v5072, 200
        %vm5109 = vcmp.lt.s32.totalorder %v5073, 200
        %vm5110 = vcmp.lt.s32.totalorder %v5074, 200
        %vm5111 = vmand %vm5075, %vm5093
        %vm5112 = vmand %vm5076, %vm5094
        %vm5113 = vmand %vm5077, %vm5095
        %vm5114 = vmand %vm5078, %vm5096
        %vm5115 = vmand %vm5079, %vm5097
        %vm5116 = vmand %vm5080, %vm5098
        %vm5117 = vmand %vm5081, %vm5099
        %vm5118 = vmand %vm5082, %vm5100
        %vm5119 = vmand %vm5083, %vm5101
        %vm5120 = vmand %vm5084, %vm5102
        %vm5121 = vmand %vm5085, %vm5103
        %vm5122 = vmand %vm5086, %vm5104
        %vm5123 = vmand %vm5087, %vm5105
        %vm5124 = vmand %vm5088, %vm5106
        %vm5125 = vmand %vm5089, %vm5107
        %vm5126 = vmand %vm5090, %vm5108
        %vm5127 = vmand %vm5091, %vm5109
        %vm5128 = vmand %vm5092, %vm5110
        %v5129 = vsel %vm5111, 1, 0
        %v5130 = vsel %vm5112, 1, 0
        %v5131 = vsel %vm5113, 1, 0
        %v5132 = vsel %vm5114, 1, 0
        %v5133 = vsel %vm5115, 1, 0
        %v5134 = vsel %vm5116, 1, 0
        %v5135 = vsel %vm5117, 1, 0
        %v5136 = vsel %vm5118, 1, 0
        %v5137 = vsel %vm5119, 1, 0
        %v5138 = vsel %vm5120, 1, 0
        %v5139 = vsel %vm5121, 1, 0
        %v5140 = vsel %vm5122, 1, 0
        %v5141 = vsel %vm5123, 1, 0
        %v5142 = vsel %vm5124, 1, 0
        %v5143 = vsel %vm5125, 1, 0
        %v5144 = vsel %vm5126, 1, 0
        %v5145 = vsel %vm5127, 1, 0
        %v5146 = vsel %vm5128, 1, 0
        %vm5147 = vcmp.eq.s32.totalorder %v5129, 1
        %vm5148 = vcmp.eq.s32.totalorder %v5130, 1
        %vm5149 = vcmp.eq.s32.totalorder %v5131, 1
        %vm5150 = vcmp.eq.s32.totalorder %v5132, 1
        %vm5151 = vcmp.eq.s32.totalorder %v5133, 1
        %vm5152 = vcmp.eq.s32.totalorder %v5134, 1
        %vm5153 = vcmp.eq.s32.totalorder %v5135, 1
        %vm5154 = vcmp.eq.s32.totalorder %v5136, 1
        %vm5155 = vcmp.eq.s32.totalorder %v5137, 1
        %vm5156 = vcmp.eq.s32.totalorder %v5138, 1
        %vm5157 = vcmp.eq.s32.totalorder %v5139, 1
        %vm5158 = vcmp.eq.s32.totalorder %v5140, 1
        %vm5159 = vcmp.eq.s32.totalorder %v5141, 1
        %vm5160 = vcmp.eq.s32.totalorder %v5142, 1
        %vm5161 = vcmp.eq.s32.totalorder %v5143, 1
        %vm5162 = vcmp.eq.s32.totalorder %v5144, 1
        %vm5163 = vcmp.eq.s32.totalorder %v5145, 1
        %vm5164 = vcmp.eq.s32.totalorder %v5146, 1
        %v5165 = vsel %vm5147, %v5037, 0.0
        %v5166 = vsel %vm5148, %v5038, 0.0
        %v5167 = vsel %vm5149, %v5039, 0.0
        %v5168 = vsel %vm5150, %v5040, 0.0
        %v5169 = vsel %vm5151, %v5041, 0.0
        %v5170 = vsel %vm5152, %v5042, 0.0
        %v5171 = vsel %vm5153, %v5043, 0.0
        %v5172 = vsel %vm5154, %v5044, 0.0
        %v5173 = vsel %vm5155, %v5045, 0.0
        %v5174 = vsel %vm5156, %v5046, 0.0
        %v5175 = vsel %vm5157, %v5047, 0.0
        %v5176 = vsel %vm5158, %v5048, 0.0
        %v5177 = vsel %vm5159, %v5049, 0.0
        %v5178 = vsel %vm5160, %v5050, 0.0
        %v5179 = vsel %vm5161, %v5051, 0.0
        %v5180 = vsel %vm5162, %v5052, 0.0
        %v5181 = vsel %vm5163, %v5053, 0.0
        %v5182 = vsel %vm5164, %v5054, 0.0
        %5183 = vst [vmem:[#allocation2 + $0x6] sm:$0xff] %v5165
        %5184 = vst [vmem:[#allocation2 + $0xe] sm:$0xff] %v5166
        %5185 = vst [vmem:[#allocation2 + $0x16] sm:$0xff] %v5167
        %5186 = vst [vmem:[#allocation2 + $0x1e] sm:$0xff] %v5168
        %5187 = vst [vmem:[#allocation2 + $0x26] sm:$0xff] %v5169
        %5188 = vst [vmem:[#allocation2 + $0x2e] sm:$0xff] %v5170
        %5189 = vst [vmem:[#allocation2 + $0x36] sm:$0xff] %v5171
        %5190 = vst [vmem:[#allocation2 + $0x3e] sm:$0xff] %v5172
        %5191 = vst [vmem:[#allocation2 + $0x46] sm:$0xff] %v5173
        %5192 = vst [vmem:[#allocation2 + $0x4e] sm:$0xff] %v5174
        %5193 = vst [vmem:[#allocation2 + $0x56] sm:$0xff] %v5175
        %5194 = vst [vmem:[#allocation2 + $0x5e] sm:$0xff] %v5176
        %5195 = vst [vmem:[#allocation2 + $0x66] sm:$0xff] %v5177
        %5196 = vst [vmem:[#allocation2 + $0x6e] sm:$0xff] %v5178
        %5197 = vst [vmem:[#allocation2 + $0x76] sm:$0xff] %v5179
        %5198 = vst [vmem:[#allocation2 + $0x7e] sm:$0xff] %v5180
        %5199 = vst [vmem:[#allocation2 + $0x86] sm:$0xff] %v5181
        %5200 = vst [vmem:[#allocation2 + $0x8e] sm:$0xf] %v5182
        %v5201 = vld [vmem:[#allocation2 + $0x6] sm:$0xff]
        %v5202 = vld [vmem:[#allocation2 + $0xe] sm:$0xff]
        %v5203 = vld [vmem:[#allocation2 + $0x16] sm:$0xff]
        %v5204 = vld [vmem:[#allocation2 + $0x1e] sm:$0xff]
        %v5205 = vld [vmem:[#allocation2 + $0x26] sm:$0xff]
        %v5206 = vld [vmem:[#allocation2 + $0x2e] sm:$0xff]
        %v5207 = vld [vmem:[#allocation2 + $0x36] sm:$0xff]
        %v5208 = vld [vmem:[#allocation2 + $0x3e] sm:$0xff]
        %v5209 = vld [vmem:[#allocation2 + $0x46] sm:$0xff]
        %v5210 = vld [vmem:[#allocation2 + $0x4e] sm:$0xff]
        %v5211 = vld [vmem:[#allocation2 + $0x56] sm:$0xff]
        %v5212 = vld [vmem:[#allocation2 + $0x5e] sm:$0xff]
        %v5213 = vld [vmem:[#allocation2 + $0x66] sm:$0xff]
        %v5214 = vld [vmem:[#allocation2 + $0x6e] sm:$0xff]
        %v5215 = vld [vmem:[#allocation2 + $0x76] sm:$0xff]
        %v5216 = vld [vmem:[#allocation2 + $0x7e] sm:$0xff]
        %v5217 = vld [vmem:[#allocation2 + $0x86] sm:$0xff]
        %v5218 = vld [vmem:[#allocation2 + $0x8e] sm:$0xf]
        %vm5219 = vcmp.ge.f32.partialorder %v5201, 0.0
        %vm5220 = vcmp.ge.f32.partialorder %v5202, 0.0
        %vm5221 = vcmp.ge.f32.partialorder %v5203, 0.0
        %vm5222 = vcmp.ge.f32.partialorder %v5204, 0.0
        %vm5223 = vcmp.ge.f32.partialorder %v5205, 0.0
        %vm5224 = vcmp.ge.f32.partialorder %v5206, 0.0
        %vm5225 = vcmp.ge.f32.partialorder %v5207, 0.0
        %vm5226 = vcmp.ge.f32.partialorder %v5208, 0.0
        %vm5227 = vcmp.ge.f32.partialorder %v5209, 0.0
        %vm5228 = vcmp.ge.f32.partialorder %v5210, 0.0
        %vm5229 = vcmp.ge.f32.partialorder %v5211, 0.0
        %vm5230 = vcmp.ge.f32.partialorder %v5212, 0.0
        %vm5231 = vcmp.ge.f32.partialorder %v5213, 0.0
        %vm5232 = vcmp.ge.f32.partialorder %v5214, 0.0
        %vm5233 = vcmp.ge.f32.partialorder %v5215, 0.0
        %vm5234 = vcmp.ge.f32.partialorder %v5216, 0.0
        %vm5235 = vcmp.ge.f32.partialorder %v5217, 0.0
        %vm5236 = vcmp.ge.f32.partialorder %v5218, 0.0
        %v5237 = vmul.f32 %v5201, 0.1
        %v5238 = vmul.f32 %v5202, 0.1
        %v5239 = vmul.f32 %v5203, 0.1
        %v5240 = vmul.f32 %v5204, 0.1
        %v5241 = vmul.f32 %v5205, 0.1
        %v5242 = vmul.f32 %v5206, 0.1
        %v5243 = vmul.f32 %v5207, 0.1
        %v5244 = vmul.f32 %v5208, 0.1
        %v5245 = vmul.f32 %v5209, 0.1
        %v5246 = vmul.f32 %v5210, 0.1
        %v5247 = vmul.f32 %v5211, 0.1
        %v5248 = vmul.f32 %v5212, 0.1
        %v5249 = vmul.f32 %v5213, 0.1
        %v5250 = vmul.f32 %v5214, 0.1
        %v5251 = vmul.f32 %v5215, 0.1
        %v5252 = vmul.f32 %v5216, 0.1
        %v5253 = vmul.f32 %v5217, 0.1
        %v5254 = vmul.f32 %v5218, 0.1
        %v5255 = vsel %vm5219, %v5201, %v5237
        %v5256 = vsel %vm5220, %v5202, %v5238
        %v5257 = vsel %vm5221, %v5203, %v5239
        %v5258 = vsel %vm5222, %v5204, %v5240
        %v5259 = vsel %vm5223, %v5205, %v5241
        %v5260 = vsel %vm5224, %v5206, %v5242
        %v5261 = vsel %vm5225, %v5207, %v5243
        %v5262 = vsel %vm5226, %v5208, %v5244
        %v5263 = vsel %vm5227, %v5209, %v5245
        %v5264 = vsel %vm5228, %v5210, %v5246
        %v5265 = vsel %vm5229, %v5211, %v5247
        %v5266 = vsel %vm5230, %v5212, %v5248
        %v5267 = vsel %vm5231, %v5213, %v5249
        %v5268 = vsel %vm5232, %v5214, %v5250
        %v5269 = vsel %vm5233, %v5215, %v5251
        %v5270 = vsel %vm5234, %v5216, %v5252
        %v5271 = vsel %vm5235, %v5217, %v5253
        %v5272 = vsel %vm5236, %v5218, %v5254
        %v5273 = vpack.c.bf16 %v5256, %v5255
        %v5274 = vpack.c.bf16 %v5258, %v5257
        %v5275 = vpack.c.bf16 %v5260, %v5259
        %v5276 = vpack.c.bf16 %v5262, %v5261
        %v5277 = vpack.c.bf16 %v5264, %v5263
        %v5278 = vpack.c.bf16 %v5266, %v5265
        %v5279 = vpack.c.bf16 %v5268, %v5267
        %v5280 = vpack.c.bf16 %v5270, %v5269
        %v5281 = vpack.c.bf16 %v5272, %v5271
        %v5291 = vunpack.c.l.b16 %v5273
        %v5292 = vunpack.c.h.b16 %v5273
        %v5293 = vunpack.c.l.b16 %v5274
        %v5294 = vunpack.c.h.b16 %v5274
        %v5295 = vunpack.c.l.b16 %v5275
        %v5296 = vunpack.c.h.b16 %v5275
        %v5297 = vunpack.c.l.b16 %v5276
        %v5298 = vunpack.c.h.b16 %v5276
        %v5299 = vunpack.c.l.b16 %v5277
        %v5300 = vunpack.c.h.b16 %v5277
        %v5301 = vunpack.c.l.b16 %v5278
        %v5302 = vunpack.c.h.b16 %v5278
        %v5303 = vunpack.c.l.b16 %v5279
        %v5304 = vunpack.c.h.b16 %v5279
        %v5305 = vunpack.c.l.b16 %v5280
        %v5306 = vunpack.c.h.b16 %v5280
        %v5307 = vunpack.c.l.b16 %v5281
        %v5308 = vunpack.c.h.b16 %v5281
        %v5309 = vpack.c.b16 %v5291, %v5291
        %v5310 = vpack.c.b16 %v5292, %v5292
        %v5311 = vpack.c.b16 %v5293, %v5293
        %v5312 = vpack.c.b16 %v5294, %v5294
        %v5313 = vpack.c.b16 %v5295, %v5295
        %v5314 = vpack.c.b16 %v5296, %v5296
        %v5315 = vpack.c.b16 %v5297, %v5297
        %v5316 = vpack.c.b16 %v5298, %v5298
        %v5317 = vpack.c.b16 %v5299, %v5299
        %v5318 = vpack.c.b16 %v5300, %v5300
        %v5319 = vpack.c.b16 %v5301, %v5301
        %v5320 = vpack.c.b16 %v5302, %v5302
        %v5321 = vpack.c.b16 %v5303, %v5303
        %v5322 = vpack.c.b16 %v5304, %v5304
        %v5323 = vpack.c.b16 %v5305, %v5305
        %v5324 = vpack.c.b16 %v5306, %v5306
        %v5325 = vpack.c.b16 %v5307, %v5307
        %v5326 = vpack.c.b16 %v5308, %v5308
        %vm5327 = vcmask 1042432
        %vm5328 = vcmask 1046532
        %vm5329 = vmor %vm5327, %vm5328
        %v5330 = vrot.slane %v5309, 5
        %v5331 = vrot.slane %v5330, 4
        %v5332 = vrot.slane %v5310, 5
        %v5333 = vsel %vm5329, %v5331, %v5332
        %v5334 = vrot.slane %v5332, 4
        %v5335 = vrot.slane %v5311, 5
        %v5336 = vsel %vm5329, %v5334, %v5335
        %v5337 = vrot.slane %v5335, 4
        %v5338 = vrot.slane %v5312, 5
        %v5339 = vsel %vm5329, %v5337, %v5338
        %v5340 = vrot.slane %v5338, 4
        %v5341 = vrot.slane %v5313, 5
        %v5342 = vsel %vm5329, %v5340, %v5341
        %v5343 = vrot.slane %v5341, 4
        %v5344 = vrot.slane %v5314, 5
        %v5345 = vsel %vm5329, %v5343, %v5344
        %v5346 = vrot.slane %v5344, 4
        %v5347 = vrot.slane %v5315, 5
        %v5348 = vsel %vm5329, %v5346, %v5347
        %v5349 = vrot.slane %v5347, 4
        %v5350 = vrot.slane %v5316, 5
        %v5351 = vsel %vm5329, %v5349, %v5350
        %v5352 = vrot.slane %v5350, 4
        %v5353 = vrot.slane %v5317, 5
        %v5354 = vsel %vm5329, %v5352, %v5353
        %v5355 = vrot.slane %v5353, 4
        %v5356 = vrot.slane %v5318, 5
        %v5357 = vsel %vm5329, %v5355, %v5356
        %v5358 = vrot.slane %v5356, 4
        %v5359 = vrot.slane %v5319, 5
        %v5360 = vsel %vm5329, %v5358, %v5359
        %v5361 = vrot.slane %v5359, 4
        %v5362 = vrot.slane %v5320, 5
        %v5363 = vsel %vm5329, %v5361, %v5362
        %v5364 = vrot.slane %v5362, 4
        %v5365 = vrot.slane %v5321, 5
        %v5366 = vsel %vm5329, %v5364, %v5365
        %v5367 = vrot.slane %v5365, 4
        %v5368 = vrot.slane %v5322, 5
        %v5369 = vsel %vm5329, %v5367, %v5368
        %v5370 = vrot.slane %v5368, 4
        %v5371 = vrot.slane %v5323, 5
        %v5372 = vsel %vm5329, %v5370, %v5371
        %v5373 = vrot.slane %v5371, 4
        %v5374 = vrot.slane %v5324, 5
        %v5375 = vsel %vm5329, %v5373, %v5374
        %v5376 = vrot.slane %v5374, 4
        %v5377 = vrot.slane %v5325, 5
        %v5378 = vsel %vm5329, %v5376, %v5377
        %v5379 = vrot.slane %v5377, 4
        %v5380 = vrot.slane %v5326, 5
        %v5381 = vsel %vm5329, %v5379, %v5380
        %v5382 = vrot.slane %v5380, 4
        %5402 = vst [vmem:[#allocation3] sm:$0x8] %v5330
        %5403 = vst [vmem:[#allocation3 + $0x4] sm:$0xf] %v5333
        %5404 = vst [vmem:[#allocation3 + $0x8] sm:$0xf] %v5336
        %5405 = vst [vmem:[#allocation3 + $0xc] sm:$0xf] %v5339
        %5406 = vst [vmem:[#allocation3 + $0x10] sm:$0xf] %v5342
        %5407 = vst [vmem:[#allocation3 + $0x14] sm:$0xf] %v5345
        %5408 = vst [vmem:[#allocation3 + $0x18] sm:$0xf] %v5348
        %5409 = vst [vmem:[#allocation3 + $0x1c] sm:$0xf] %v5351
        %5410 = vst [vmem:[#allocation3 + $0x20] sm:$0xf] %v5354
        %5411 = vst [vmem:[#allocation3 + $0x24] sm:$0xf] %v5357
        %5412 = vst [vmem:[#allocation3 + $0x28] sm:$0xf] %v5360
        %5413 = vst [vmem:[#allocation3 + $0x2c] sm:$0xf] %v5363
        %5414 = vst [vmem:[#allocation3 + $0x30] sm:$0xf] %v5366
        %5415 = vst [vmem:[#allocation3 + $0x34] sm:$0xf] %v5369
        %5416 = vst [vmem:[#allocation3 + $0x38] sm:$0xf] %v5372
        %5417 = vst [vmem:[#allocation3 + $0x3c] sm:$0xf] %v5375
        %5418 = vst [vmem:[#allocation3 + $0x40] sm:$0xf] %v5378
        %5419 = vst [vmem:[#allocation3 + $0x44] sm:$0xf] %v5381
        %5420 = vst [vmem:[#allocation3 + $0x48] sm:$0x1] %v5382
        %v5421 = vld [vmem:[#allocation3] sm:$0x8]
        %v5422 = vld [vmem:[#allocation3 + $0x4] sm:$0xf]
        %v5423 = vld [vmem:[#allocation3 + $0x8] sm:$0xf]
        %v5424 = vld [vmem:[#allocation3 + $0xc] sm:$0xf]
        %v5425 = vld [vmem:[#allocation3 + $0x10] sm:$0xf]
        %v5426 = vld [vmem:[#allocation3 + $0x14] sm:$0xf]
        %v5427 = vld [vmem:[#allocation3 + $0x18] sm:$0xf]
        %v5428 = vld [vmem:[#allocation3 + $0x1c] sm:$0xf]
        %v5429 = vld [vmem:[#allocation3 + $0x20] sm:$0xf]
        %v5430 = vld [vmem:[#allocation3 + $0x24] sm:$0xf]
        %v5431 = vld [vmem:[#allocation3 + $0x28] sm:$0xf]
        %v5432 = vld [vmem:[#allocation3 + $0x2c] sm:$0xf]
        %v5433 = vld [vmem:[#allocation3 + $0x30] sm:$0xf]
        %v5434 = vld [vmem:[#allocation3 + $0x34] sm:$0xf]
        %v5435 = vld [vmem:[#allocation3 + $0x38] sm:$0xf]
        %v5436 = vld [vmem:[#allocation3 + $0x3c] sm:$0xf]
        %v5437 = vld [vmem:[#allocation3 + $0x40] sm:$0xf]
        %v5438 = vld [vmem:[#allocation3 + $0x4] sm:$0xe]
        %v5439 = vld [vmem:[#allocation3 + $0x44] sm:$0x7]
        %v5457 = vunpack.c.l.b16 %v5421
        %v5458 = vunpack.c.l.b16 %v5422
        %v5459 = vunpack.c.l.b16 %v5423
        %v5460 = vunpack.c.l.b16 %v5424
        %v5461 = vunpack.c.l.b16 %v5425
        %v5462 = vunpack.c.l.b16 %v5426
        %v5463 = vunpack.c.l.b16 %v5427
        %v5464 = vunpack.c.l.b16 %v5428
        %v5465 = vunpack.c.l.b16 %v5429
        %v5466 = vunpack.c.l.b16 %v5430
        %v5467 = vunpack.c.l.b16 %v5431
        %v5468 = vunpack.c.l.b16 %v5432
        %v5469 = vunpack.c.l.b16 %v5433
        %v5470 = vunpack.c.l.b16 %v5434
        %v5471 = vunpack.c.l.b16 %v5435
        %v5472 = vunpack.c.l.b16 %v5436
        %v5473 = vunpack.c.l.b16 %v5437
        %v5474 = vpack.c.b16 %v5458, %v5457
        %v5475 = vpack.c.b16 %v5460, %v5459
        %v5476 = vpack.c.b16 %v5462, %v5461
        %v5477 = vpack.c.b16 %v5464, %v5463
        %v5478 = vpack.c.b16 %v5466, %v5465
        %v5479 = vpack.c.b16 %v5468, %v5467
        %v5480 = vpack.c.b16 %v5470, %v5469
        %v5481 = vpack.c.b16 %v5472, %v5471
        %v5482 = vpack.c.b16 %v5473, %v5473
        %v5485 = vunpack.c.l.b16 %v5438
        %v5486 = vunpack.c.l.b16 %v5439
        %v5487 = vpack.c.b16 %v5459, %v5485
        %v5488 = vpack.c.b16 %v5461, %v5460
        %v5489 = vpack.c.b16 %v5463, %v5462
        %v5490 = vpack.c.b16 %v5465, %v5464
        %v5491 = vpack.c.b16 %v5467, %v5466
        %v5492 = vpack.c.b16 %v5469, %v5468
        %v5493 = vpack.c.b16 %v5471, %v5470
        %v5494 = vpack.c.b16 %v5473, %v5472
        %v5495 = vpack.c.b16 %v5486, %v5486
        %v5497 = vshrl.u32 %v5487, 16
        %v5499 = vrot.slane %v5497, 6
        %v5500 = vshll.u32 %v5487, 16
        %v5502 = vrot.slane %v5500, 7
        %v5503 = vor.u32 %v5499, %v5502
        %v5505 = vshrl.u32 %v5488, 16
        %v5507 = vrot.slane %v5505, 6
        %v5508 = vshll.u32 %v5488, 16
        %v5510 = vrot.slane %v5508, 7
        %v5511 = vor.u32 %v5507, %v5510
        %v5512 = vsel %vm4234, %v5503, %v5511
        %v5514 = vshrl.u32 %v5489, 16
        %v5516 = vrot.slane %v5514, 6
        %v5517 = vshll.u32 %v5489, 16
        %v5519 = vrot.slane %v5517, 7
        %v5520 = vor.u32 %v5516, %v5519
        %v5521 = vsel %vm4234, %v5511, %v5520
        %v5523 = vshrl.u32 %v5490, 16
        %v5525 = vrot.slane %v5523, 6
        %v5526 = vshll.u32 %v5490, 16
        %v5528 = vrot.slane %v5526, 7
        %v5529 = vor.u32 %v5525, %v5528
        %v5530 = vsel %vm4234, %v5520, %v5529
        %v5532 = vshrl.u32 %v5491, 16
        %v5534 = vrot.slane %v5532, 6
        %v5535 = vshll.u32 %v5491, 16
        %v5537 = vrot.slane %v5535, 7
        %v5538 = vor.u32 %v5534, %v5537
        %v5539 = vsel %vm4234, %v5529, %v5538
        %v5541 = vshrl.u32 %v5492, 16
        %v5543 = vrot.slane %v5541, 6
        %v5544 = vshll.u32 %v5492, 16
        %v5546 = vrot.slane %v5544, 7
        %v5547 = vor.u32 %v5543, %v5546
        %v5548 = vsel %vm4234, %v5538, %v5547
        %v5550 = vshrl.u32 %v5493, 16
        %v5552 = vrot.slane %v5550, 6
        %v5553 = vshll.u32 %v5493, 16
        %v5555 = vrot.slane %v5553, 7
        %v5556 = vor.u32 %v5552, %v5555
        %v5557 = vsel %vm4234, %v5547, %v5556
        %v5559 = vshrl.u32 %v5494, 16
        %v5561 = vrot.slane %v5559, 6
        %v5562 = vshll.u32 %v5494, 16
        %v5564 = vrot.slane %v5562, 7
        %v5565 = vor.u32 %v5561, %v5564
        %v5566 = vsel %vm4234, %v5556, %v5565
        %v5568 = vshrl.u32 %v5495, 16
        %v5570 = vrot.slane %v5568, 6
        %v5571 = vshll.u32 %v5495, 16
        %v5573 = vrot.slane %v5571, 7
        %v5574 = vor.u32 %v5570, %v5573
        %v5575 = vsel %vm4234, %v5565, %v5574
        %v5576 = vld [vmem:[%s10] sm:$0xf]
        %v5577 = vld [vmem:[%s10 + $0x4] sm:$0xf]
        %v5578 = vld [vmem:[%s10 + $0x8] sm:$0xf]
        %v5579 = vld [vmem:[%s10 + $0xc] sm:$0xf]
        %v5580 = vld [vmem:[%s10 + $0x10] sm:$0xf]
        %v5581 = vld [vmem:[%s10 + $0x14] sm:$0xf]
        %v5582 = vld [vmem:[%s10 + $0x18] sm:$0xf]
        %v5583 = vld [vmem:[%s10 + $0x1c] sm:$0xf]
        %v5584 = vld [vmem:[%s10 + $0x20] sm:$0xf]
        %v5585 = vld [vmem:[%s10 + $0x24] sm:$0xf]
        %v5586 = vld [vmem:[%s10 + $0x28] sm:$0xf]
        %v5587 = vld [vmem:[%s10 + $0x2c] sm:$0xf]
        %v5588 = vld [vmem:[%s10 + $0x30] sm:$0xf]
        %v5589 = vld [vmem:[%s10 + $0x34] sm:$0xf]
        %v5590 = vld [vmem:[%s10 + $0x38] sm:$0xf]
        %v5591 = vld [vmem:[%s10 + $0x3c] sm:$0xf]
        %v5592 = vld [vmem:[%s10 + $0x40] sm:$0xf]
        %v5593 = vld [vmem:[%s10 + $0x44] sm:$0xf]
        %v5594 = vld [vmem:[%s10 + $0x48] sm:$0xf]
        %v5595 = vld [vmem:[%s10 + $0x4c] sm:$0xf]
        %v5596 = vld [vmem:[%s10 + $0x50] sm:$0xf]
        %v5597 = vld [vmem:[%s10 + $0x54] sm:$0xf]
        %v5598 = vld [vmem:[%s10 + $0x58] sm:$0xf]
        %v5599 = vld [vmem:[%s10 + $0x5c] sm:$0xf]
        %v5600 = vld [vmem:[%s10 + $0x60] sm:$0xf]
        %v5601 = vld [vmem:[%s10 + $0x64] sm:$0xf]
        %v5602 = vld [vmem:[%s10 + $0x68] sm:$0xf]
        %v5603 = vld [vmem:[%s10 + $0x6c] sm:$0xf]
        %v5604 = vld [vmem:[%s10 + $0x70] sm:$0xf]
        %v5605 = vld [vmem:[%s10 + $0x74] sm:$0xf]
        %v5606 = vld [vmem:[%s10 + $0x78] sm:$0xf]
        %v5607 = vld [vmem:[%s10 + $0x7c] sm:$0xf]
        %v5608 = vld [vmem:[#allocation3 + $0x8] sm:$0xf]
        %v5609 = vld [vmem:[#allocation3 + $0xc] sm:$0xf]
        %v5610 = vld [vmem:[#allocation3 + $0x10] sm:$0xf]
        %v5611 = vld [vmem:[#allocation3 + $0x14] sm:$0xf]
        %v5612 = vld [vmem:[#allocation3 + $0x18] sm:$0xf]
        %v5613 = vld [vmem:[#allocation3 + $0x1c] sm:$0xf]
        %v5614 = vld [vmem:[#allocation3 + $0x20] sm:$0xf]
        %v5615 = vld [vmem:[#allocation3 + $0x24] sm:$0xf]
        %v5616 = vld [vmem:[#allocation3 + $0x28] sm:$0xf]
        %v5617 = vld [vmem:[#allocation3 + $0x2c] sm:$0xf]
        %v5618 = vld [vmem:[#allocation3 + $0x30] sm:$0xf]
        %v5619 = vld [vmem:[#allocation3 + $0x34] sm:$0xf]
        %v5620 = vld [vmem:[#allocation3 + $0x38] sm:$0xf]
        %v5621 = vld [vmem:[#allocation3 + $0x3c] sm:$0xf]
        %v5622 = vld [vmem:[#allocation3 + $0x40] sm:$0xf]
        %v5623 = vld [vmem:[#allocation3 + $0x44] sm:$0xf]
        %v5624 = vld [vmem:[#allocation3 + $0x48] sm:$0x1]
        %v5625 = vld [vmem:[%s10 + $0x80] sm:$0xf]
        %v5626 = vld [vmem:[%s10 + $0x84] sm:$0xf]
        %v5627 = vld [vmem:[%s10 + $0x88] sm:$0xf]
        %v5628 = vld [vmem:[%s10 + $0x8c] sm:$0xf]
        %v5629 = vld [vmem:[%s10 + $0x90] sm:$0xf]
        %v5630 = vld [vmem:[%s10 + $0x94] sm:$0xf]
        %v5631 = vld [vmem:[%s10 + $0x98] sm:$0xf]
        %v5632 = vld [vmem:[%s10 + $0x9c] sm:$0xf]
        %v5633 = vld [vmem:[%s10 + $0xa0] sm:$0xf]
        %v5634 = vld [vmem:[%s10 + $0xa4] sm:$0xf]
        %v5635 = vld [vmem:[%s10 + $0xa8] sm:$0xf]
        %v5636 = vld [vmem:[%s10 + $0xac] sm:$0xf]
        %v5637 = vld [vmem:[%s10 + $0xb0] sm:$0xf]
        %v5638 = vld [vmem:[%s10 + $0xb4] sm:$0xf]
        %v5639 = vld [vmem:[%s10 + $0xb8] sm:$0xf]
        %v5640 = vld [vmem:[%s10 + $0xbc] sm:$0xf]
        %v5658 = vunpack.c.l.b16 %v5608
        %v5659 = vunpack.c.l.b16 %v5609
        %v5660 = vunpack.c.l.b16 %v5610
        %v5661 = vunpack.c.l.b16 %v5611
        %v5662 = vunpack.c.l.b16 %v5612
        %v5663 = vunpack.c.l.b16 %v5613
        %v5664 = vunpack.c.l.b16 %v5614
        %v5665 = vunpack.c.l.b16 %v5615
        %v5666 = vunpack.c.l.b16 %v5616
        %v5667 = vunpack.c.l.b16 %v5617
        %v5668 = vunpack.c.l.b16 %v5618
        %v5669 = vunpack.c.l.b16 %v5619
        %v5670 = vunpack.c.l.b16 %v5620
        %v5671 = vunpack.c.l.b16 %v5621
        %v5672 = vunpack.c.l.b16 %v5622
        %v5673 = vunpack.c.l.b16 %v5623
        %v5674 = vunpack.c.l.b16 %v5624
        %v5675 = vpack.c.b16 %v5659, %v5658
        %v5676 = vpack.c.b16 %v5661, %v5660
        %v5677 = vpack.c.b16 %v5663, %v5662
        %v5678 = vpack.c.b16 %v5665, %v5664
        %v5679 = vpack.c.b16 %v5667, %v5666
        %v5680 = vpack.c.b16 %v5669, %v5668
        %v5681 = vpack.c.b16 %v5671, %v5670
        %v5682 = vpack.c.b16 %v5673, %v5672
        %v5683 = vpack.c.b16 %v5674, %v5674
        %v5709 = vunpack.c.l.b16 %v5625
        %v5710 = vunpack.c.l.b16 %v5626
        %v5711 = vunpack.c.l.b16 %v5627
        %v5712 = vunpack.c.l.b16 %v5628
        %v5713 = vunpack.c.l.b16 %v5629
        %v5714 = vunpack.c.l.b16 %v5630
        %v5715 = vunpack.c.l.b16 %v5631
        %v5716 = vunpack.c.l.b16 %v5632
        %v5717 = vunpack.c.l.b16 %v5633
        %v5718 = vunpack.c.l.b16 %v5634
        %v5719 = vunpack.c.l.b16 %v5635
        %v5720 = vunpack.c.l.b16 %v5636
        %v5721 = vunpack.c.l.b16 %v5637
        %v5722 = vunpack.c.l.b16 %v5638
        %v5723 = vunpack.c.l.b16 %v5639
        %v5724 = vunpack.c.l.b16 %v5640
        %v5725 = vpack.c.b16 %v5710, %v5709
        %v5726 = vpack.c.b16 %v5712, %v5711
        %v5727 = vpack.c.b16 %v5714, %v5713
        %v5728 = vpack.c.b16 %v5716, %v5715
        %v5729 = vpack.c.b16 %v5718, %v5717
        %v5730 = vpack.c.b16 %v5720, %v5719
        %v5731 = vpack.c.b16 %v5722, %v5721
        %v5732 = vpack.c.b16 %v5724, %v5723
        %5741 = vmatprep.subr.bf16.mxu0 0
        %5742 = vmatpush1.bf16.msra.mxu0 %v5732
        %5743 = vmatprep.subr.bf16.mxu0 0
        %5744 = vmatpush1.bf16.msra.mxu0 %v5731
        %5745 = vmatprep.subr.bf16.mxu0 0
        %5746 = vmatpush1.bf16.msra.mxu0 %v5730
        %5747 = vmatprep.subr.bf16.mxu0 0
        %5748 = vmatpush1.bf16.msra.mxu0 %v5729
        %5749 = vmatprep.subr.bf16.mxu0 0
        %5750 = vmatpush1.bf16.msra.mxu0 %v5728
        %5751 = vmatprep.subr.bf16.mxu0 0
        %5752 = vmatpush1.bf16.msra.mxu0 %v5727
        %5753 = vmatprep.subr.bf16.mxu0 0
        %5754 = vmatpush1.bf16.msra.mxu0 %v5726
        %5755 = vmatprep.subr.bf16.mxu0 0
        %5756 = vmatpush1.bf16.msra.mxu0 %v5725
        %5757 = vmatprep.subr.bf16.mxu0 0
        %5758 = vmatpush2.bf16.msra.mxu0 0
        %5759 = vmatprep.subr.bf16.mxu0 0
        %5760 = vmatpush2.bf16.msra.mxu0 0
        %5761 = vmatprep.subr.bf16.mxu0 0
        %5762 = vmatpush2.bf16.msra.mxu0 0
        %5763 = vmatprep.subr.bf16.mxu0 0
        %5764 = vmatpush2.bf16.msra.mxu0 0
        %5765 = vmatprep.subr.bf16.mxu0 0
        %5766 = vmatpush2.bf16.msra.mxu0 0
        %5767 = vmatprep.subr.bf16.mxu0 0
        %5768 = vmatpush2.bf16.msra.mxu0 0
        %5769 = vmatprep.subr.bf16.mxu0 0
        %5770 = vmatpush2.bf16.msra.mxu0 0
        %5771 = vmatprep.subr.bf16.mxu0 0
        %5772 = vmatpush2.bf16.msra.mxu0 0
        %5773 = vmatprep.mubr.bf16.mxu0 0
        %5774 = vmatmul.mubr.bf16.gmra.mxu0 %v5675
        %v5775 = vpop.f32.mrf.mxu0
        %v5776 = vadd.f32 0.0, %v5775
        %v5777 = vpop.f32.mrf.mxu0
        %v5778 = vpop.f32.mrf.mxu0
        %v5779 = vadd.f32 0.0, %v5778
        %v5780 = vpop.f32.mrf.mxu0
        %5781 = vmatprep.mubr.bf16.mxu0 0
        %5782 = vmatmul.mubr.bf16.gmra.mxu0 %v5676
        %v5783 = vpop.f32.mrf.mxu0
        %v5784 = vadd.f32 0.0, %v5783
        %v5785 = vpop.f32.mrf.mxu0
        %v5786 = vpop.f32.mrf.mxu0
        %v5787 = vadd.f32 0.0, %v5786
        %v5788 = vpop.f32.mrf.mxu0
        %5789 = vmatprep.mubr.bf16.mxu0 0
        %5790 = vmatmul.mubr.bf16.gmra.mxu0 %v5677
        %v5791 = vpop.f32.mrf.mxu0
        %v5792 = vadd.f32 0.0, %v5791
        %v5793 = vpop.f32.mrf.mxu0
        %v5794 = vpop.f32.mrf.mxu0
        %v5795 = vadd.f32 0.0, %v5794
        %v5796 = vpop.f32.mrf.mxu0
        %5797 = vmatprep.mubr.bf16.mxu0 0
        %5798 = vmatmul.mubr.bf16.gmra.mxu0 %v5678
        %v5799 = vpop.f32.mrf.mxu0
        %v5800 = vadd.f32 0.0, %v5799
        %v5801 = vpop.f32.mrf.mxu0
        %v5802 = vpop.f32.mrf.mxu0
        %v5803 = vadd.f32 0.0, %v5802
        %v5804 = vpop.f32.mrf.mxu0
        %5805 = vmatprep.mubr.bf16.mxu0 0
        %5806 = vmatmul.mubr.bf16.gmra.mxu0 %v5679
        %v5807 = vpop.f32.mrf.mxu0
        %v5808 = vadd.f32 0.0, %v5807
        %v5809 = vpop.f32.mrf.mxu0
        %v5810 = vpop.f32.mrf.mxu0
        %v5811 = vadd.f32 0.0, %v5810
        %v5812 = vpop.f32.mrf.mxu0
        %5813 = vmatprep.mubr.bf16.mxu0 0
        %5814 = vmatmul.mubr.bf16.gmra.mxu0 %v5680
        %v5815 = vpop.f32.mrf.mxu0
        %v5816 = vadd.f32 0.0, %v5815
        %v5817 = vpop.f32.mrf.mxu0
        %v5818 = vpop.f32.mrf.mxu0
        %v5819 = vadd.f32 0.0, %v5818
        %v5820 = vpop.f32.mrf.mxu0
        %5821 = vmatprep.mubr.bf16.mxu0 0
        %5822 = vmatmul.mubr.bf16.gmra.mxu0 %v5681
        %v5823 = vpop.f32.mrf.mxu0
        %v5824 = vadd.f32 0.0, %v5823
        %v5825 = vpop.f32.mrf.mxu0
        %v5826 = vpop.f32.mrf.mxu0
        %v5827 = vadd.f32 0.0, %v5826
        %v5828 = vpop.f32.mrf.mxu0
        %5829 = vmatprep.mubr.bf16.mxu0 0
        %5830 = vmatmul.mubr.bf16.gmra.mxu0 %v5682
        %v5831 = vpop.f32.mrf.mxu0
        %v5832 = vadd.f32 0.0, %v5831
        %v5833 = vpop.f32.mrf.mxu0
        %v5834 = vpop.f32.mrf.mxu0
        %v5835 = vadd.f32 0.0, %v5834
        %v5836 = vpop.f32.mrf.mxu0
        %5837 = vmatprep.mubr.bf16.mxu0 0
        %5838 = vmatmul.mubr.bf16.gmra.mxu0 %v5683
        %v5839 = vpop.f32.mrf.mxu0
        %v5840 = vadd.f32 0.0, %v5839
        %v5841 = vpop.f32.mrf.mxu0
        %v5842 = vpop.f32.mrf.mxu0
        %v5843 = vpop.f32.mrf.mxu0
        %5844 = vdwg.mxu0
        %vm5845 = vcmask 1044480
        %v5846 = vrot.slane %v5474, 3
        %v5847 = vrot.slane %v5475, 3
        %v5848 = vsel %vm5845, %v5846, %v5847
        %v5849 = vrot.slane %v5503, 3
        %v5850 = vrot.slane %v5512, 3
        %v5851 = vsel %vm5845, %v5849, %v5850
        %v5852 = vrot.slane %v5476, 3
        %v5853 = vsel %vm5845, %v5847, %v5852
        %v5854 = vrot.slane %v5521, 3
        %v5855 = vsel %vm5845, %v5850, %v5854
        %v5856 = vrot.slane %v5477, 3
        %v5857 = vsel %vm5845, %v5852, %v5856
        %v5858 = vrot.slane %v5530, 3
        %v5859 = vsel %vm5845, %v5854, %v5858
        %v5860 = vrot.slane %v5478, 3
        %v5861 = vsel %vm5845, %v5856, %v5860
        %v5862 = vrot.slane %v5539, 3
        %v5863 = vsel %vm5845, %v5858, %v5862
        %v5864 = vrot.slane %v5479, 3
        %v5865 = vsel %vm5845, %v5860, %v5864
        %v5866 = vrot.slane %v5548, 3
        %v5867 = vsel %vm5845, %v5862, %v5866
        %v5868 = vrot.slane %v5480, 3
        %v5869 = vsel %vm5845, %v5864, %v5868
        %v5870 = vrot.slane %v5557, 3
        %v5871 = vsel %vm5845, %v5866, %v5870
        %v5872 = vrot.slane %v5481, 3
        %v5873 = vsel %vm5845, %v5868, %v5872
        %v5874 = vrot.slane %v5566, 3
        %v5875 = vsel %vm5845, %v5870, %v5874
        %v5876 = vrot.slane %v5482, 3
        %v5877 = vsel %vm5845, %v5872, %v5876
        %v5878 = vrot.slane %v5575, 3
        %v5879 = vsel %vm5845, %v5874, %v5878
        %v5930 = vunpack.c.l.b16 %v5576
        %v5931 = vunpack.c.l.b16 %v5577
        %v5932 = vunpack.c.l.b16 %v5578
        %v5933 = vunpack.c.l.b16 %v5579
        %v5934 = vunpack.c.l.b16 %v5580
        %v5935 = vunpack.c.l.b16 %v5581
        %v5936 = vunpack.c.l.b16 %v5582
        %v5937 = vunpack.c.l.b16 %v5583
        %v5938 = vunpack.c.l.b16 %v5584
        %v5939 = vunpack.c.l.b16 %v5585
        %v5940 = vunpack.c.l.b16 %v5586
        %v5941 = vunpack.c.l.b16 %v5587
        %v5942 = vunpack.c.l.b16 %v5588
        %v5943 = vunpack.c.l.b16 %v5589
        %v5944 = vunpack.c.l.b16 %v5590
        %v5945 = vunpack.c.l.b16 %v5591
        %v5946 = vunpack.c.l.b16 %v5592
        %v5947 = vunpack.c.l.b16 %v5593
        %v5948 = vunpack.c.l.b16 %v5594
        %v5949 = vunpack.c.l.b16 %v5595
        %v5950 = vunpack.c.l.b16 %v5596
        %v5951 = vunpack.c.l.b16 %v5597
        %v5952 = vunpack.c.l.b16 %v5598
        %v5953 = vunpack.c.l.b16 %v5599
        %v5954 = vunpack.c.l.b16 %v5600
        %v5955 = vunpack.c.l.b16 %v5601
        %v5956 = vunpack.c.l.b16 %v5602
        %v5957 = vunpack.c.l.b16 %v5603
        %v5958 = vunpack.c.l.b16 %v5604
        %v5959 = vunpack.c.l.b16 %v5605
        %v5960 = vunpack.c.l.b16 %v5606
        %v5961 = vunpack.c.l.b16 %v5607
        %v5962 = vpack.c.b16 %v5931, %v5930
        %v5963 = vpack.c.b16 %v5933, %v5932
        %v5964 = vpack.c.b16 %v5935, %v5934
        %v5965 = vpack.c.b16 %v5937, %v5936
        %v5966 = vpack.c.b16 %v5939, %v5938
        %v5967 = vpack.c.b16 %v5941, %v5940
        %v5968 = vpack.c.b16 %v5943, %v5942
        %v5969 = vpack.c.b16 %v5945, %v5944
        %v5970 = vpack.c.b16 %v5947, %v5946
        %v5971 = vpack.c.b16 %v5949, %v5948
        %v5972 = vpack.c.b16 %v5951, %v5950
        %v5973 = vpack.c.b16 %v5953, %v5952
        %v5974 = vpack.c.b16 %v5955, %v5954
        %v5975 = vpack.c.b16 %v5957, %v5956
        %v5976 = vpack.c.b16 %v5959, %v5958
        %v5977 = vpack.c.b16 %v5961, %v5960
        %5994 = vmatprep.subr.bf16.mxu0 0
        %5995 = vmatpush1.bf16.msra.mxu0 %v5969
        %5996 = vmatprep.subr.bf16.mxu0 0
        %5997 = vmatpush1.bf16.msra.mxu0 %v5968
        %5998 = vmatprep.subr.bf16.mxu0 0
        %5999 = vmatpush1.bf16.msra.mxu0 %v5967
        %6000 = vmatprep.subr.bf16.mxu0 0
        %6001 = vmatpush1.bf16.msra.mxu0 %v5966
        %6002 = vmatprep.subr.bf16.mxu0 0
        %6003 = vmatpush1.bf16.msra.mxu0 %v5965
        %6004 = vmatprep.subr.bf16.mxu0 0
        %6005 = vmatpush1.bf16.msra.mxu0 %v5964
        %6006 = vmatprep.subr.bf16.mxu0 0
        %6007 = vmatpush1.bf16.msra.mxu0 %v5963
        %6008 = vmatprep.subr.bf16.mxu0 0
        %6009 = vmatpush1.bf16.msra.mxu0 %v5962
        %6010 = vmatprep.subr.bf16.mxu0 0
        %6011 = vmatpush2.bf16.msra.mxu0 %v5977
        %6012 = vmatprep.subr.bf16.mxu0 0
        %6013 = vmatpush2.bf16.msra.mxu0 %v5976
        %6014 = vmatprep.subr.bf16.mxu0 0
        %6015 = vmatpush2.bf16.msra.mxu0 %v5975
        %6016 = vmatprep.subr.bf16.mxu0 0
        %6017 = vmatpush2.bf16.msra.mxu0 %v5974
        %6018 = vmatprep.subr.bf16.mxu0 0
        %6019 = vmatpush2.bf16.msra.mxu0 %v5973
        %6020 = vmatprep.subr.bf16.mxu0 0
        %6021 = vmatpush2.bf16.msra.mxu0 %v5972
        %6022 = vmatprep.subr.bf16.mxu0 0
        %6023 = vmatpush2.bf16.msra.mxu0 %v5971
        %6024 = vmatprep.subr.bf16.mxu0 0
        %6025 = vmatpush2.bf16.msra.mxu0 %v5970
        %6026 = vmatprep.mubr.bf16.mxu0 %v5851
        %6027 = vmatmul.mubr.bf16.gmra.mxu0 %v5848
        %v6028 = vpop.f32.mrf.mxu0
        %v6029 = vadd.f32 %v5776, %v6028
        %v6030 = vpop.f32.mrf.mxu0
        %v6031 = vpop.f32.mrf.mxu0
        %v6032 = vadd.f32 %v5779, %v6031
        %v6033 = vpop.f32.mrf.mxu0
        %6034 = vmatprep.mubr.bf16.mxu0 %v5855
        %6035 = vmatmul.mubr.bf16.gmra.mxu0 %v5853
        %v6036 = vpop.f32.mrf.mxu0
        %v6037 = vadd.f32 %v5784, %v6036
        %v6038 = vpop.f32.mrf.mxu0
        %v6039 = vpop.f32.mrf.mxu0
        %v6040 = vadd.f32 %v5787, %v6039
        %v6041 = vpop.f32.mrf.mxu0
        %6042 = vmatprep.mubr.bf16.mxu0 %v5859
        %6043 = vmatmul.mubr.bf16.gmra.mxu0 %v5857
        %v6044 = vpop.f32.mrf.mxu0
        %v6045 = vadd.f32 %v5792, %v6044
        %v6046 = vpop.f32.mrf.mxu0
        %v6047 = vpop.f32.mrf.mxu0
        %v6048 = vadd.f32 %v5795, %v6047
        %v6049 = vpop.f32.mrf.mxu0
        %6050 = vmatprep.mubr.bf16.mxu0 %v5863
        %6051 = vmatmul.mubr.bf16.gmra.mxu0 %v5861
        %v6052 = vpop.f32.mrf.mxu0
        %v6053 = vadd.f32 %v5800, %v6052
        %v6054 = vpop.f32.mrf.mxu0
        %v6055 = vpop.f32.mrf.mxu0
        %v6056 = vadd.f32 %v5803, %v6055
        %v6057 = vpop.f32.mrf.mxu0
        %6058 = vmatprep.mubr.bf16.mxu0 %v5867
        %6059 = vmatmul.mubr.bf16.gmra.mxu0 %v5865
        %v6060 = vpop.f32.mrf.mxu0
        %v6061 = vadd.f32 %v5808, %v6060
        %v6062 = vpop.f32.mrf.mxu0
        %v6063 = vpop.f32.mrf.mxu0
        %v6064 = vadd.f32 %v5811, %v6063
        %v6065 = vpop.f32.mrf.mxu0
        %6066 = vmatprep.mubr.bf16.mxu0 %v5871
        %6067 = vmatmul.mubr.bf16.gmra.mxu0 %v5869
        %v6068 = vpop.f32.mrf.mxu0
        %v6069 = vadd.f32 %v5816, %v6068
        %v6070 = vpop.f32.mrf.mxu0
        %v6071 = vpop.f32.mrf.mxu0
        %v6072 = vadd.f32 %v5819, %v6071
        %v6073 = vpop.f32.mrf.mxu0
        %6074 = vmatprep.mubr.bf16.mxu0 %v5875
        %6075 = vmatmul.mubr.bf16.gmra.mxu0 %v5873
        %v6076 = vpop.f32.mrf.mxu0
        %v6077 = vadd.f32 %v5824, %v6076
        %v6078 = vpop.f32.mrf.mxu0
        %v6079 = vpop.f32.mrf.mxu0
        %v6080 = vadd.f32 %v5827, %v6079
        %v6081 = vpop.f32.mrf.mxu0
        %6082 = vmatprep.mubr.bf16.mxu0 %v5879
        %6083 = vmatmul.mubr.bf16.gmra.mxu0 %v5877
        %v6084 = vpop.f32.mrf.mxu0
        %v6085 = vadd.f32 %v5832, %v6084
        %v6086 = vpop.f32.mrf.mxu0
        %v6087 = vpop.f32.mrf.mxu0
        %v6088 = vadd.f32 %v5835, %v6087
        %v6089 = vpop.f32.mrf.mxu0
        %6090 = vmatprep.mubr.bf16.mxu0 %v5878
        %6091 = vmatmul.mubr.bf16.gmra.mxu0 %v5876
        %v6092 = vpop.f32.mrf.mxu0
        %v6093 = vadd.f32 %v5840, %v6092
        %v6094 = vpop.f32.mrf.mxu0
        %v6095 = vpop.f32.mrf.mxu0
        %v6096 = vpop.f32.mrf.mxu0
        %6097 = vdwg.mxu0
        %v6098 = vld [vmem:[%s11] sm:$0x1]
        %v6100 = vlaneseq
        %v6101 = vshrl.u32 %v6100, 7
        %v6102 = vsub.s32 0, %v6101
        %v6103 = vrot.slane %v6098, %v6102
        %v6105 = vadd.f32 %v6029, %v6103
        %v6106 = vadd.f32 %v6032, %v6103
        %v6107 = vadd.f32 %v6037, %v6103
        %v6108 = vadd.f32 %v6040, %v6103
        %v6109 = vadd.f32 %v6045, %v6103
        %v6110 = vadd.f32 %v6048, %v6103
        %v6111 = vadd.f32 %v6053, %v6103
        %v6112 = vadd.f32 %v6056, %v6103
        %v6113 = vadd.f32 %v6061, %v6103
        %v6114 = vadd.f32 %v6064, %v6103
        %v6115 = vadd.f32 %v6069, %v6103
        %v6116 = vadd.f32 %v6072, %v6103
        %v6117 = vadd.f32 %v6077, %v6103
        %v6118 = vadd.f32 %v6080, %v6103
        %v6119 = vadd.f32 %v6085, %v6103
        %v6120 = vadd.f32 %v6088, %v6103
        %v6121 = vadd.f32 %v6093, %v6103
        %vm6122 = vcmp.ge.f32.partialorder %v6105, 0.0
        %vm6123 = vcmp.ge.f32.partialorder %v6106, 0.0
        %vm6124 = vcmp.ge.f32.partialorder %v6107, 0.0
        %vm6125 = vcmp.ge.f32.partialorder %v6108, 0.0
        %vm6126 = vcmp.ge.f32.partialorder %v6109, 0.0
        %vm6127 = vcmp.ge.f32.partialorder %v6110, 0.0
        %vm6128 = vcmp.ge.f32.partialorder %v6111, 0.0
        %vm6129 = vcmp.ge.f32.partialorder %v6112, 0.0
        %vm6130 = vcmp.ge.f32.partialorder %v6113, 0.0
        %vm6131 = vcmp.ge.f32.partialorder %v6114, 0.0
        %vm6132 = vcmp.ge.f32.partialorder %v6115, 0.0
        %vm6133 = vcmp.ge.f32.partialorder %v6116, 0.0
        %vm6134 = vcmp.ge.f32.partialorder %v6117, 0.0
        %vm6135 = vcmp.ge.f32.partialorder %v6118, 0.0
        %vm6136 = vcmp.ge.f32.partialorder %v6119, 0.0
        %vm6137 = vcmp.ge.f32.partialorder %v6120, 0.0
        %vm6138 = vcmp.ge.f32.partialorder %v6121, 0.0
        %v6139 = vmul.f32 %v6105, 0.1
        %v6140 = vmul.f32 %v6106, 0.1
        %v6141 = vmul.f32 %v6107, 0.1
        %v6142 = vmul.f32 %v6108, 0.1
        %v6143 = vmul.f32 %v6109, 0.1
        %v6144 = vmul.f32 %v6110, 0.1
        %v6145 = vmul.f32 %v6111, 0.1
        %v6146 = vmul.f32 %v6112, 0.1
        %v6147 = vmul.f32 %v6113, 0.1
        %v6148 = vmul.f32 %v6114, 0.1
        %v6149 = vmul.f32 %v6115, 0.1
        %v6150 = vmul.f32 %v6116, 0.1
        %v6151 = vmul.f32 %v6117, 0.1
        %v6152 = vmul.f32 %v6118, 0.1
        %v6153 = vmul.f32 %v6119, 0.1
        %v6154 = vmul.f32 %v6120, 0.1
        %v6155 = vmul.f32 %v6121, 0.1
        %v6156 = vsel %vm6122, %v6105, %v6139
        %v6157 = vsel %vm6123, %v6106, %v6140
        %v6158 = vsel %vm6124, %v6107, %v6141
        %v6159 = vsel %vm6125, %v6108, %v6142
        %v6160 = vsel %vm6126, %v6109, %v6143
        %v6161 = vsel %vm6127, %v6110, %v6144
        %v6162 = vsel %vm6128, %v6111, %v6145
        %v6163 = vsel %vm6129, %v6112, %v6146
        %v6164 = vsel %vm6130, %v6113, %v6147
        %v6165 = vsel %vm6131, %v6114, %v6148
        %v6166 = vsel %vm6132, %v6115, %v6149
        %v6167 = vsel %vm6133, %v6116, %v6150
        %v6168 = vsel %vm6134, %v6117, %v6151
        %v6169 = vsel %vm6135, %v6118, %v6152
        %v6170 = vsel %vm6136, %v6119, %v6153
        %v6171 = vsel %vm6137, %v6120, %v6154
        %v6172 = vsel %vm6138, %v6121, %v6155
        %s6173 = sadd.s32 %s527, 4294967295
        %v6174 = vstv %s6173
        %v6175 = vadd.s32 %v6174, %v1446
        %v6176 = vadd.s32 %v6174, %v1447
        %v6177 = vadd.s32 %v6174, %v1448
        %v6178 = vadd.s32 %v6174, %v1449
        %v6179 = vadd.s32 %v6174, %v1450
        %v6180 = vadd.s32 %v6174, %v1451
        %v6181 = vadd.s32 %v6174, %v1452
        %v6182 = vadd.s32 %v6174, %v1453
        %v6183 = vadd.s32 %v6174, %v1454
        %v6184 = vadd.s32 %v6174, %v1455
        %v6185 = vadd.s32 %v6174, %v1456
        %v6186 = vadd.s32 %v6174, %v1457
        %v6187 = vadd.s32 %v6174, %v1458
        %v6188 = vadd.s32 %v6174, %v1459
        %v6189 = vadd.s32 %v6174, %v1460
        %v6190 = vadd.s32 %v6174, %v1461
        %v6191 = vadd.s32 %v6174, %v1462
        %vm6192 = vcmp.ge.s32.totalorder %v6175, 0
        %vm6193 = vcmp.ge.s32.totalorder %v6176, 0
        %vm6194 = vcmp.ge.s32.totalorder %v6177, 0
        %vm6195 = vcmp.ge.s32.totalorder %v6178, 0
        %vm6196 = vcmp.ge.s32.totalorder %v6179, 0
        %vm6197 = vcmp.ge.s32.totalorder %v6180, 0
        %vm6198 = vcmp.ge.s32.totalorder %v6181, 0
        %vm6199 = vcmp.ge.s32.totalorder %v6182, 0
        %vm6200 = vcmp.ge.s32.totalorder %v6183, 0
        %vm6201 = vcmp.ge.s32.totalorder %v6184, 0
        %vm6202 = vcmp.ge.s32.totalorder %v6185, 0
        %vm6203 = vcmp.ge.s32.totalorder %v6186, 0
        %vm6204 = vcmp.ge.s32.totalorder %v6187, 0
        %vm6205 = vcmp.ge.s32.totalorder %v6188, 0
        %vm6206 = vcmp.ge.s32.totalorder %v6189, 0
        %vm6207 = vcmp.ge.s32.totalorder %v6190, 0
        %vm6208 = vcmp.ge.s32.totalorder %v6191, 0
        %vm6209 = vcmp.lt.s32.totalorder %v6175, 200
        %vm6210 = vcmp.lt.s32.totalorder %v6176, 200
        %vm6211 = vcmp.lt.s32.totalorder %v6177, 200
        %vm6212 = vcmp.lt.s32.totalorder %v6178, 200
        %vm6213 = vcmp.lt.s32.totalorder %v6179, 200
        %vm6214 = vcmp.lt.s32.totalorder %v6180, 200
        %vm6215 = vcmp.lt.s32.totalorder %v6181, 200
        %vm6216 = vcmp.lt.s32.totalorder %v6182, 200
        %vm6217 = vcmp.lt.s32.totalorder %v6183, 200
        %vm6218 = vcmp.lt.s32.totalorder %v6184, 200
        %vm6219 = vcmp.lt.s32.totalorder %v6185, 200
        %vm6220 = vcmp.lt.s32.totalorder %v6186, 200
        %vm6221 = vcmp.lt.s32.totalorder %v6187, 200
        %vm6222 = vcmp.lt.s32.totalorder %v6188, 200
        %vm6223 = vcmp.lt.s32.totalorder %v6189, 200
        %vm6224 = vcmp.lt.s32.totalorder %v6190, 200
        %vm6225 = vcmp.lt.s32.totalorder %v6191, 200
        %vm6226 = vmand %vm6192, %vm6209
        %vm6227 = vmand %vm6193, %vm6210
        %vm6228 = vmand %vm6194, %vm6211
        %vm6229 = vmand %vm6195, %vm6212
        %vm6230 = vmand %vm6196, %vm6213
        %vm6231 = vmand %vm6197, %vm6214
        %vm6232 = vmand %vm6198, %vm6215
        %vm6233 = vmand %vm6199, %vm6216
        %vm6234 = vmand %vm6200, %vm6217
        %vm6235 = vmand %vm6201, %vm6218
        %vm6236 = vmand %vm6202, %vm6219
        %vm6237 = vmand %vm6203, %vm6220
        %vm6238 = vmand %vm6204, %vm6221
        %vm6239 = vmand %vm6205, %vm6222
        %vm6240 = vmand %vm6206, %vm6223
        %vm6241 = vmand %vm6207, %vm6224
        %vm6242 = vmand %vm6208, %vm6225
        %v6243 = vsel %vm6226, 1, 0
        %v6244 = vsel %vm6227, 1, 0
        %v6245 = vsel %vm6228, 1, 0
        %v6246 = vsel %vm6229, 1, 0
        %v6247 = vsel %vm6230, 1, 0
        %v6248 = vsel %vm6231, 1, 0
        %v6249 = vsel %vm6232, 1, 0
        %v6250 = vsel %vm6233, 1, 0
        %v6251 = vsel %vm6234, 1, 0
        %v6252 = vsel %vm6235, 1, 0
        %v6253 = vsel %vm6236, 1, 0
        %v6254 = vsel %vm6237, 1, 0
        %v6255 = vsel %vm6238, 1, 0
        %v6256 = vsel %vm6239, 1, 0
        %v6257 = vsel %vm6240, 1, 0
        %v6258 = vsel %vm6241, 1, 0
        %v6259 = vsel %vm6242, 1, 0
        %vm6260 = vcmp.eq.s32.totalorder %v6243, 1
        %vm6261 = vcmp.eq.s32.totalorder %v6244, 1
        %vm6262 = vcmp.eq.s32.totalorder %v6245, 1
        %vm6263 = vcmp.eq.s32.totalorder %v6246, 1
        %vm6264 = vcmp.eq.s32.totalorder %v6247, 1
        %vm6265 = vcmp.eq.s32.totalorder %v6248, 1
        %vm6266 = vcmp.eq.s32.totalorder %v6249, 1
        %vm6267 = vcmp.eq.s32.totalorder %v6250, 1
        %vm6268 = vcmp.eq.s32.totalorder %v6251, 1
        %vm6269 = vcmp.eq.s32.totalorder %v6252, 1
        %vm6270 = vcmp.eq.s32.totalorder %v6253, 1
        %vm6271 = vcmp.eq.s32.totalorder %v6254, 1
        %vm6272 = vcmp.eq.s32.totalorder %v6255, 1
        %vm6273 = vcmp.eq.s32.totalorder %v6256, 1
        %vm6274 = vcmp.eq.s32.totalorder %v6257, 1
        %vm6275 = vcmp.eq.s32.totalorder %v6258, 1
        %vm6276 = vcmp.eq.s32.totalorder %v6259, 1
        %v6277 = vsel %vm6260, %v6156, 0.0
        %v6278 = vsel %vm6261, %v6157, 0.0
        %v6279 = vsel %vm6262, %v6158, 0.0
        %v6280 = vsel %vm6263, %v6159, 0.0
        %v6281 = vsel %vm6264, %v6160, 0.0
        %v6282 = vsel %vm6265, %v6161, 0.0
        %v6283 = vsel %vm6266, %v6162, 0.0
        %v6284 = vsel %vm6267, %v6163, 0.0
        %v6285 = vsel %vm6268, %v6164, 0.0
        %v6286 = vsel %vm6269, %v6165, 0.0
        %v6287 = vsel %vm6270, %v6166, 0.0
        %v6288 = vsel %vm6271, %v6167, 0.0
        %v6289 = vsel %vm6272, %v6168, 0.0
        %v6290 = vsel %vm6273, %v6169, 0.0
        %v6291 = vsel %vm6274, %v6170, 0.0
        %v6292 = vsel %vm6275, %v6171, 0.0
        %v6293 = vsel %vm6276, %v6172, 0.0
        %v6294 = vpack.c.bf16 %v6278, %v6277
        %v6295 = vpack.c.bf16 %v6280, %v6279
        %v6296 = vpack.c.bf16 %v6282, %v6281
        %v6297 = vpack.c.bf16 %v6284, %v6283
        %v6298 = vpack.c.bf16 %v6286, %v6285
        %v6299 = vpack.c.bf16 %v6288, %v6287
        %v6300 = vpack.c.bf16 %v6290, %v6289
        %v6301 = vpack.c.bf16 %v6292, %v6291
        %v6302 = vpack.c.bf16 %v6293, %v6293
        %v6312 = vunpack.c.l.b16 %v6294
        %v6313 = vunpack.c.h.b16 %v6294
        %v6314 = vunpack.c.l.b16 %v6295
        %v6315 = vunpack.c.h.b16 %v6295
        %v6316 = vunpack.c.l.b16 %v6296
        %v6317 = vunpack.c.h.b16 %v6296
        %v6318 = vunpack.c.l.b16 %v6297
        %v6319 = vunpack.c.h.b16 %v6297
        %v6320 = vunpack.c.l.b16 %v6298
        %v6321 = vunpack.c.h.b16 %v6298
        %v6322 = vunpack.c.l.b16 %v6299
        %v6323 = vunpack.c.h.b16 %v6299
        %v6324 = vunpack.c.l.b16 %v6300
        %v6325 = vunpack.c.h.b16 %v6300
        %v6326 = vunpack.c.l.b16 %v6301
        %v6327 = vunpack.c.h.b16 %v6301
        %v6328 = vunpack.c.l.b16 %v6302
        %v6329 = vpack.c.b16 %v6312, %v6312
        %v6330 = vpack.c.b16 %v6313, %v6313
        %v6331 = vpack.c.b16 %v6314, %v6314
        %v6332 = vpack.c.b16 %v6315, %v6315
        %v6333 = vpack.c.b16 %v6316, %v6316
        %v6334 = vpack.c.b16 %v6317, %v6317
        %v6335 = vpack.c.b16 %v6318, %v6318
        %v6336 = vpack.c.b16 %v6319, %v6319
        %v6337 = vpack.c.b16 %v6320, %v6320
        %v6338 = vpack.c.b16 %v6321, %v6321
        %v6339 = vpack.c.b16 %v6322, %v6322
        %v6340 = vpack.c.b16 %v6323, %v6323
        %v6341 = vpack.c.b16 %v6324, %v6324
        %v6342 = vpack.c.b16 %v6325, %v6325
        %v6343 = vpack.c.b16 %v6326, %v6326
        %v6344 = vpack.c.b16 %v6327, %v6327
        %v6345 = vpack.c.b16 %v6328, %v6328
        %vm6346 = vsmask.f32 5392
        %vm6347 = vmor %vm4234, %vm6346
        %v6349 = vshrl.u32 %v6329, 16
        %v6351 = vrot.slane %v6349, 6
        %v6352 = vshll.u32 %v6329, 16
        %v6354 = vrot.slane %v6352, 7
        %v6355 = vor.u32 %v6351, %v6354
        %v6356 = vrot.slane %v6355, 4
        %v6358 = vshrl.u32 %v6330, 16
        %v6360 = vrot.slane %v6358, 6
        %v6361 = vshll.u32 %v6330, 16
        %v6363 = vrot.slane %v6361, 7
        %v6364 = vor.u32 %v6360, %v6363
        %v6365 = vsel %vm6347, %v6356, %v6364
        %v6366 = vrot.slane %v6364, 4
        %v6368 = vshrl.u32 %v6331, 16
        %v6370 = vrot.slane %v6368, 6
        %v6371 = vshll.u32 %v6331, 16
        %v6373 = vrot.slane %v6371, 7
        %v6374 = vor.u32 %v6370, %v6373
        %v6375 = vsel %vm6347, %v6366, %v6374
        %v6376 = vrot.slane %v6374, 4
        %v6378 = vshrl.u32 %v6332, 16
        %v6380 = vrot.slane %v6378, 6
        %v6381 = vshll.u32 %v6332, 16
        %v6383 = vrot.slane %v6381, 7
        %v6384 = vor.u32 %v6380, %v6383
        %v6385 = vsel %vm6347, %v6376, %v6384
        %v6386 = vrot.slane %v6384, 4
        %v6388 = vshrl.u32 %v6333, 16
        %v6390 = vrot.slane %v6388, 6
        %v6391 = vshll.u32 %v6333, 16
        %v6393 = vrot.slane %v6391, 7
        %v6394 = vor.u32 %v6390, %v6393
        %v6395 = vsel %vm6347, %v6386, %v6394
        %v6396 = vrot.slane %v6394, 4
        %v6398 = vshrl.u32 %v6334, 16
        %v6400 = vrot.slane %v6398, 6
        %v6401 = vshll.u32 %v6334, 16
        %v6403 = vrot.slane %v6401, 7
        %v6404 = vor.u32 %v6400, %v6403
        %v6405 = vsel %vm6347, %v6396, %v6404
        %v6406 = vrot.slane %v6404, 4
        %v6408 = vshrl.u32 %v6335, 16
        %v6410 = vrot.slane %v6408, 6
        %v6411 = vshll.u32 %v6335, 16
        %v6413 = vrot.slane %v6411, 7
        %v6414 = vor.u32 %v6410, %v6413
        %v6415 = vsel %vm6347, %v6406, %v6414
        %v6416 = vrot.slane %v6414, 4
        %v6418 = vshrl.u32 %v6336, 16
        %v6420 = vrot.slane %v6418, 6
        %v6421 = vshll.u32 %v6336, 16
        %v6423 = vrot.slane %v6421, 7
        %v6424 = vor.u32 %v6420, %v6423
        %v6425 = vsel %vm6347, %v6416, %v6424
        %v6426 = vrot.slane %v6424, 4
        %v6428 = vshrl.u32 %v6337, 16
        %v6430 = vrot.slane %v6428, 6
        %v6431 = vshll.u32 %v6337, 16
        %v6433 = vrot.slane %v6431, 7
        %v6434 = vor.u32 %v6430, %v6433
        %v6435 = vsel %vm6347, %v6426, %v6434
        %v6436 = vrot.slane %v6434, 4
        %v6438 = vshrl.u32 %v6338, 16
        %v6440 = vrot.slane %v6438, 6
        %v6441 = vshll.u32 %v6338, 16
        %v6443 = vrot.slane %v6441, 7
        %v6444 = vor.u32 %v6440, %v6443
        %v6445 = vsel %vm6347, %v6436, %v6444
        %v6446 = vrot.slane %v6444, 4
        %v6448 = vshrl.u32 %v6339, 16
        %v6450 = vrot.slane %v6448, 6
        %v6451 = vshll.u32 %v6339, 16
        %v6453 = vrot.slane %v6451, 7
        %v6454 = vor.u32 %v6450, %v6453
        %v6455 = vsel %vm6347, %v6446, %v6454
        %v6456 = vrot.slane %v6454, 4
        %v6458 = vshrl.u32 %v6340, 16
        %v6460 = vrot.slane %v6458, 6
        %v6461 = vshll.u32 %v6340, 16
        %v6463 = vrot.slane %v6461, 7
        %v6464 = vor.u32 %v6460, %v6463
        %v6465 = vsel %vm6347, %v6456, %v6464
        %v6466 = vrot.slane %v6464, 4
        %v6468 = vshrl.u32 %v6341, 16
        %v6470 = vrot.slane %v6468, 6
        %v6471 = vshll.u32 %v6341, 16
        %v6473 = vrot.slane %v6471, 7
        %v6474 = vor.u32 %v6470, %v6473
        %v6475 = vsel %vm6347, %v6466, %v6474
        %v6476 = vrot.slane %v6474, 4
        %v6478 = vshrl.u32 %v6342, 16
        %v6480 = vrot.slane %v6478, 6
        %v6481 = vshll.u32 %v6342, 16
        %v6483 = vrot.slane %v6481, 7
        %v6484 = vor.u32 %v6480, %v6483
        %v6485 = vsel %vm6347, %v6476, %v6484
        %v6486 = vrot.slane %v6484, 4
        %v6488 = vshrl.u32 %v6343, 16
        %v6490 = vrot.slane %v6488, 6
        %v6491 = vshll.u32 %v6343, 16
        %v6493 = vrot.slane %v6491, 7
        %v6494 = vor.u32 %v6490, %v6493
        %v6495 = vsel %vm6347, %v6486, %v6494
        %v6496 = vrot.slane %v6494, 4
        %v6498 = vshrl.u32 %v6344, 16
        %v6500 = vrot.slane %v6498, 6
        %v6501 = vshll.u32 %v6344, 16
        %v6503 = vrot.slane %v6501, 7
        %v6504 = vor.u32 %v6500, %v6503
        %v6505 = vsel %vm6347, %v6496, %v6504
        %v6506 = vrot.slane %v6504, 4
        %v6508 = vshrl.u32 %v6345, 16
        %v6510 = vrot.slane %v6508, 6
        %v6511 = vshll.u32 %v6345, 16
        %v6513 = vrot.slane %v6511, 7
        %v6514 = vor.u32 %v6510, %v6513
        %v6515 = vsel %vm6347, %v6506, %v6514
        %vm6533 = vcmask 1043457
        %vm6534 = vsmask.f32 7942
        %vm6535 = vmand %vm6533, %vm6534
        %v6536 = vsel %vm6535, %v6355, %v5438
        %6537 = vst [vmem:[#allocation3 + $0x4] sm:$0xe] %v6536
        %6538 = vst [vmem:[#allocation3 + $0x8] sm:$0xf] %v6365
        %6539 = vst [vmem:[#allocation3 + $0xc] sm:$0xf] %v6375
        %6540 = vst [vmem:[#allocation3 + $0x10] sm:$0xf] %v6385
        %6541 = vst [vmem:[#allocation3 + $0x14] sm:$0xf] %v6395
        %6542 = vst [vmem:[#allocation3 + $0x18] sm:$0xf] %v6405
        %6543 = vst [vmem:[#allocation3 + $0x1c] sm:$0xf] %v6415
        %6544 = vst [vmem:[#allocation3 + $0x20] sm:$0xf] %v6425
        %6545 = vst [vmem:[#allocation3 + $0x24] sm:$0xf] %v6435
        %6546 = vst [vmem:[#allocation3 + $0x28] sm:$0xf] %v6445
        %6547 = vst [vmem:[#allocation3 + $0x2c] sm:$0xf] %v6455
        %6548 = vst [vmem:[#allocation3 + $0x30] sm:$0xf] %v6465
        %6549 = vst [vmem:[#allocation3 + $0x34] sm:$0xf] %v6475
        %6550 = vst [vmem:[#allocation3 + $0x38] sm:$0xf] %v6485
        %6551 = vst [vmem:[#allocation3 + $0x3c] sm:$0xf] %v6495
        %6552 = vst [vmem:[#allocation3 + $0x40] sm:$0xf] %v6505
        %vm6553 = vmand %vm5327, %vm4010
        %v6554 = vld [vmem:[#allocation3 + $0x44] sm:$0x7]
        %v6555 = vsel %vm6553, %v6515, %v6554
        %6556 = vst [vmem:[#allocation3 + $0x44] sm:$0x7] %v6555
        %v6557 = vld [vmem:[#allocation3 + $0x4] sm:$0xe]
        %v6558 = vld [vmem:[#allocation3 + $0x8] sm:$0xf]
        %v6559 = vld [vmem:[#allocation3 + $0xc] sm:$0xf]
        %v6560 = vld [vmem:[#allocation3 + $0x10] sm:$0xf]
        %v6561 = vld [vmem:[#allocation3 + $0x14] sm:$0xf]
        %v6562 = vld [vmem:[#allocation3 + $0x18] sm:$0xf]
        %v6563 = vld [vmem:[#allocation3 + $0x1c] sm:$0xf]
        %v6564 = vld [vmem:[#allocation3 + $0x20] sm:$0xf]
        %v6565 = vld [vmem:[#allocation3 + $0x24] sm:$0xf]
        %v6566 = vld [vmem:[#allocation3 + $0x28] sm:$0xf]
        %v6567 = vld [vmem:[#allocation3 + $0x2c] sm:$0xf]
        %v6568 = vld [vmem:[#allocation3 + $0x30] sm:$0xf]
        %v6569 = vld [vmem:[#allocation3 + $0x34] sm:$0xf]
        %v6570 = vld [vmem:[#allocation3 + $0x38] sm:$0xf]
        %v6571 = vld [vmem:[#allocation3 + $0x3c] sm:$0xf]
        %v6572 = vld [vmem:[#allocation3 + $0x40] sm:$0xf]
        %v6573 = vld [vmem:[#allocation3 + $0x44] sm:$0x3]
        %v6574 = vld [vmem:[#allocation3 + $0x4] sm:$0xc]
        %v6592 = vunpack.c.l.b16 %v6557
        %v6593 = vunpack.c.l.b16 %v6558
        %v6594 = vunpack.c.l.b16 %v6559
        %v6595 = vunpack.c.l.b16 %v6560
        %v6596 = vunpack.c.l.b16 %v6561
        %v6597 = vunpack.c.l.b16 %v6562
        %v6598 = vunpack.c.l.b16 %v6563
        %v6599 = vunpack.c.l.b16 %v6564
        %v6600 = vunpack.c.l.b16 %v6565
        %v6601 = vunpack.c.l.b16 %v6566
        %v6602 = vunpack.c.l.b16 %v6567
        %v6603 = vunpack.c.l.b16 %v6568
        %v6604 = vunpack.c.l.b16 %v6569
        %v6605 = vunpack.c.l.b16 %v6570
        %v6606 = vunpack.c.l.b16 %v6571
        %v6607 = vunpack.c.l.b16 %v6572
        %v6608 = vunpack.c.l.b16 %v6573
        %v6609 = vpack.c.b16 %v6593, %v6592
        %v6610 = vpack.c.b16 %v6595, %v6594
        %v6611 = vpack.c.b16 %v6597, %v6596
        %v6612 = vpack.c.b16 %v6599, %v6598
        %v6613 = vpack.c.b16 %v6601, %v6600
        %v6614 = vpack.c.b16 %v6603, %v6602
        %v6615 = vpack.c.b16 %v6605, %v6604
        %v6616 = vpack.c.b16 %v6607, %v6606
        %v6617 = vpack.c.b16 %v6608, %v6608
        %v6619 = vunpack.c.l.b16 %v6574
        %v6620 = vpack.c.b16 %v6593, %v6619
        %v6622 = vshrl.u32 %v6620, 16
        %v6624 = vshll.u32 %v6620, 16
        %v6626 = vrot.slane %v6624, 1
        %v6627 = vor.u32 %v6622, %v6626
        %v6629 = vshll.u32 %v6610, 16
        %v6631 = vrot.slane %v6629, 1
        %v6632 = vsel %vm821, %v6627, %v6631
        %v6633 = vshrl.u32 %v6610, 16
        %v6635 = vor.u32 %v6633, %v6631
        %v6637 = vshll.u32 %v6611, 16
        %v6639 = vrot.slane %v6637, 1
        %v6640 = vsel %vm821, %v6635, %v6639
        %v6641 = vshrl.u32 %v6611, 16
        %v6643 = vor.u32 %v6641, %v6639
        %v6645 = vshll.u32 %v6612, 16
        %v6647 = vrot.slane %v6645, 1
        %v6648 = vsel %vm821, %v6643, %v6647
        %v6649 = vshrl.u32 %v6612, 16
        %v6651 = vor.u32 %v6649, %v6647
        %v6653 = vshll.u32 %v6613, 16
        %v6655 = vrot.slane %v6653, 1
        %v6656 = vsel %vm821, %v6651, %v6655
        %v6657 = vshrl.u32 %v6613, 16
        %v6659 = vor.u32 %v6657, %v6655
        %v6661 = vshll.u32 %v6614, 16
        %v6663 = vrot.slane %v6661, 1
        %v6664 = vsel %vm821, %v6659, %v6663
        %v6665 = vshrl.u32 %v6614, 16
        %v6667 = vor.u32 %v6665, %v6663
        %v6669 = vshll.u32 %v6615, 16
        %v6671 = vrot.slane %v6669, 1
        %v6672 = vsel %vm821, %v6667, %v6671
        %v6673 = vshrl.u32 %v6615, 16
        %v6675 = vor.u32 %v6673, %v6671
        %v6677 = vshll.u32 %v6616, 16
        %v6679 = vrot.slane %v6677, 1
        %v6680 = vsel %vm821, %v6675, %v6679
        %v6681 = vshrl.u32 %v6616, 16
        %v6683 = vor.u32 %v6681, %v6679
        %v6685 = vshll.u32 %v6617, 16
        %v6687 = vrot.slane %v6685, 1
        %v6688 = vsel %vm821, %v6683, %v6687
        %v6689 = vshrl.u32 %v6617, 16
        %v6691 = vor.u32 %v6689, %v6687
        %v6692 = vld [vmem:[%s12] sm:$0xf]
        %v6693 = vld [vmem:[%s12 + $0x4] sm:$0xf]
        %v6694 = vld [vmem:[%s12 + $0x8] sm:$0xf]
        %v6695 = vld [vmem:[%s12 + $0xc] sm:$0xf]
        %v6696 = vld [vmem:[%s12 + $0x10] sm:$0xf]
        %v6697 = vld [vmem:[%s12 + $0x14] sm:$0xf]
        %v6698 = vld [vmem:[%s12 + $0x18] sm:$0xf]
        %v6699 = vld [vmem:[%s12 + $0x1c] sm:$0xf]
        %v6700 = vld [vmem:[%s12 + $0x20] sm:$0xf]
        %v6701 = vld [vmem:[%s12 + $0x24] sm:$0xf]
        %v6702 = vld [vmem:[%s12 + $0x28] sm:$0xf]
        %v6703 = vld [vmem:[%s12 + $0x2c] sm:$0xf]
        %v6704 = vld [vmem:[%s12 + $0x30] sm:$0xf]
        %v6705 = vld [vmem:[%s12 + $0x34] sm:$0xf]
        %v6706 = vld [vmem:[%s12 + $0x38] sm:$0xf]
        %v6707 = vld [vmem:[%s12 + $0x3c] sm:$0xf]
        %v6708 = vld [vmem:[%s12 + $0x40] sm:$0xf]
        %v6709 = vld [vmem:[%s12 + $0x44] sm:$0xf]
        %v6710 = vld [vmem:[%s12 + $0x48] sm:$0xf]
        %v6711 = vld [vmem:[%s12 + $0x4c] sm:$0xf]
        %v6712 = vld [vmem:[%s12 + $0x50] sm:$0xf]
        %v6713 = vld [vmem:[%s12 + $0x54] sm:$0xf]
        %v6714 = vld [vmem:[%s12 + $0x58] sm:$0xf]
        %v6715 = vld [vmem:[%s12 + $0x5c] sm:$0xf]
        %v6716 = vld [vmem:[%s12 + $0x60] sm:$0xf]
        %v6717 = vld [vmem:[%s12 + $0x64] sm:$0xf]
        %v6718 = vld [vmem:[%s12 + $0x68] sm:$0xf]
        %v6719 = vld [vmem:[%s12 + $0x6c] sm:$0xf]
        %v6720 = vld [vmem:[%s12 + $0x70] sm:$0xf]
        %v6721 = vld [vmem:[%s12 + $0x74] sm:$0xf]
        %v6722 = vld [vmem:[%s12 + $0x78] sm:$0xf]
        %v6723 = vld [vmem:[%s12 + $0x7c] sm:$0xf]
        %v6724 = vld [vmem:[#allocation3 + $0x44] sm:$0x7]
        %v6725 = vld [vmem:[%s12 + $0x80] sm:$0xf]
        %v6726 = vld [vmem:[%s12 + $0x84] sm:$0xf]
        %v6727 = vld [vmem:[%s12 + $0x88] sm:$0xf]
        %v6728 = vld [vmem:[%s12 + $0x8c] sm:$0xf]
        %v6729 = vld [vmem:[%s12 + $0x90] sm:$0xf]
        %v6730 = vld [vmem:[%s12 + $0x94] sm:$0xf]
        %v6731 = vld [vmem:[%s12 + $0x98] sm:$0xf]
        %v6732 = vld [vmem:[%s12 + $0x9c] sm:$0xf]
        %v6733 = vld [vmem:[%s12 + $0xa0] sm:$0xf]
        %v6734 = vld [vmem:[%s12 + $0xa4] sm:$0xf]
        %v6735 = vld [vmem:[%s12 + $0xa8] sm:$0xf]
        %v6736 = vld [vmem:[%s12 + $0xac] sm:$0xf]
        %v6737 = vld [vmem:[%s12 + $0xb0] sm:$0xf]
        %v6738 = vld [vmem:[%s12 + $0xb4] sm:$0xf]
        %v6739 = vld [vmem:[%s12 + $0xb8] sm:$0xf]
        %v6740 = vld [vmem:[%s12 + $0xbc] sm:$0xf]
        %v6742 = vunpack.c.l.b16 %v6724
        %v6743 = vpack.c.b16 %v6742, %v6742
        %v6744 = vrot.slane %v6622, 2
        %v6745 = vrot.slane %v6624, 3
        %v6746 = vor.u32 %v6744, %v6745
        %v6747 = vrot.slane %v6633, 2
        %v6748 = vrot.slane %v6629, 3
        %v6749 = vor.u32 %v6747, %v6748
        %v6750 = vsel %vm4647, %v6746, %v6749
        %v6751 = vrot.slane %v6641, 2
        %v6752 = vrot.slane %v6637, 3
        %v6753 = vor.u32 %v6751, %v6752
        %v6754 = vsel %vm4647, %v6749, %v6753
        %v6755 = vrot.slane %v6649, 2
        %v6756 = vrot.slane %v6645, 3
        %v6757 = vor.u32 %v6755, %v6756
        %v6758 = vsel %vm4647, %v6753, %v6757
        %v6759 = vrot.slane %v6657, 2
        %v6760 = vrot.slane %v6653, 3
        %v6761 = vor.u32 %v6759, %v6760
        %v6762 = vsel %vm4647, %v6757, %v6761
        %v6763 = vrot.slane %v6665, 2
        %v6764 = vrot.slane %v6661, 3
        %v6765 = vor.u32 %v6763, %v6764
        %v6766 = vsel %vm4647, %v6761, %v6765
        %v6767 = vrot.slane %v6673, 2
        %v6768 = vrot.slane %v6669, 3
        %v6769 = vor.u32 %v6767, %v6768
        %v6770 = vsel %vm4647, %v6765, %v6769
        %v6771 = vrot.slane %v6681, 2
        %v6772 = vrot.slane %v6677, 3
        %v6773 = vor.u32 %v6771, %v6772
        %v6774 = vsel %vm4647, %v6769, %v6773
        %v6776 = vshrl.u32 %v6743, 16
        %v6778 = vrot.slane %v6776, 2
        %v6779 = vshll.u32 %v6743, 16
        %v6781 = vrot.slane %v6779, 3
        %v6782 = vor.u32 %v6778, %v6781
        %v6783 = vsel %vm4647, %v6773, %v6782
        %v6808 = vunpack.c.l.b16 %v6725
        %v6809 = vunpack.c.l.b16 %v6726
        %v6810 = vunpack.c.l.b16 %v6727
        %v6811 = vunpack.c.l.b16 %v6728
        %v6812 = vunpack.c.l.b16 %v6729
        %v6813 = vunpack.c.l.b16 %v6730
        %v6814 = vunpack.c.l.b16 %v6731
        %v6815 = vunpack.c.l.b16 %v6732
        %v6816 = vunpack.c.l.b16 %v6733
        %v6817 = vunpack.c.l.b16 %v6734
        %v6818 = vunpack.c.l.b16 %v6735
        %v6819 = vunpack.c.l.b16 %v6736
        %v6820 = vunpack.c.l.b16 %v6737
        %v6821 = vunpack.c.l.b16 %v6738
        %v6822 = vunpack.c.l.b16 %v6739
        %v6823 = vunpack.c.l.b16 %v6740
        %v6824 = vpack.c.b16 %v6809, %v6808
        %v6825 = vpack.c.b16 %v6811, %v6810
        %v6826 = vpack.c.b16 %v6813, %v6812
        %v6827 = vpack.c.b16 %v6815, %v6814
        %v6828 = vpack.c.b16 %v6817, %v6816
        %v6829 = vpack.c.b16 %v6819, %v6818
        %v6830 = vpack.c.b16 %v6821, %v6820
        %v6831 = vpack.c.b16 %v6823, %v6822
        %6840 = vmatprep.subr.bf16.mxu0 0
        %6841 = vmatpush1.bf16.msra.mxu0 %v6831
        %6842 = vmatprep.subr.bf16.mxu0 0
        %6843 = vmatpush1.bf16.msra.mxu0 %v6830
        %6844 = vmatprep.subr.bf16.mxu0 0
        %6845 = vmatpush1.bf16.msra.mxu0 %v6829
        %6846 = vmatprep.subr.bf16.mxu0 0
        %6847 = vmatpush1.bf16.msra.mxu0 %v6828
        %6848 = vmatprep.subr.bf16.mxu0 0
        %6849 = vmatpush1.bf16.msra.mxu0 %v6827
        %6850 = vmatprep.subr.bf16.mxu0 0
        %6851 = vmatpush1.bf16.msra.mxu0 %v6826
        %6852 = vmatprep.subr.bf16.mxu0 0
        %6853 = vmatpush1.bf16.msra.mxu0 %v6825
        %6854 = vmatprep.subr.bf16.mxu0 0
        %6855 = vmatpush1.bf16.msra.mxu0 %v6824
        %6856 = vmatprep.subr.bf16.mxu0 0
        %6857 = vmatpush2.bf16.msra.mxu0 0
        %6858 = vmatprep.subr.bf16.mxu0 0
        %6859 = vmatpush2.bf16.msra.mxu0 0
        %6860 = vmatprep.subr.bf16.mxu0 0
        %6861 = vmatpush2.bf16.msra.mxu0 0
        %6862 = vmatprep.subr.bf16.mxu0 0
        %6863 = vmatpush2.bf16.msra.mxu0 0
        %6864 = vmatprep.subr.bf16.mxu0 0
        %6865 = vmatpush2.bf16.msra.mxu0 0
        %6866 = vmatprep.subr.bf16.mxu0 0
        %6867 = vmatpush2.bf16.msra.mxu0 0
        %6868 = vmatprep.subr.bf16.mxu0 0
        %6869 = vmatpush2.bf16.msra.mxu0 0
        %6870 = vmatprep.subr.bf16.mxu0 0
        %6871 = vmatpush2.bf16.msra.mxu0 0
        %6872 = vmatprep.mubr.bf16.mxu0 0
        %6873 = vmatmul.mubr.bf16.gmra.mxu0 %v6750
        %v6874 = vpop.f32.mrf.mxu0
        %v6875 = vadd.f32 0.0, %v6874
        %v6876 = vpop.f32.mrf.mxu0
        %v6877 = vpop.f32.mrf.mxu0
        %v6878 = vadd.f32 0.0, %v6877
        %v6879 = vpop.f32.mrf.mxu0
        %6880 = vmatprep.mubr.bf16.mxu0 0
        %6881 = vmatmul.mubr.bf16.gmra.mxu0 %v6754
        %v6882 = vpop.f32.mrf.mxu0
        %v6883 = vadd.f32 0.0, %v6882
        %v6884 = vpop.f32.mrf.mxu0
        %v6885 = vpop.f32.mrf.mxu0
        %v6886 = vadd.f32 0.0, %v6885
        %v6887 = vpop.f32.mrf.mxu0
        %6888 = vmatprep.mubr.bf16.mxu0 0
        %6889 = vmatmul.mubr.bf16.gmra.mxu0 %v6758
        %v6890 = vpop.f32.mrf.mxu0
        %v6891 = vadd.f32 0.0, %v6890
        %v6892 = vpop.f32.mrf.mxu0
        %v6893 = vpop.f32.mrf.mxu0
        %v6894 = vadd.f32 0.0, %v6893
        %v6895 = vpop.f32.mrf.mxu0
        %6896 = vmatprep.mubr.bf16.mxu0 0
        %6897 = vmatmul.mubr.bf16.gmra.mxu0 %v6762
        %v6898 = vpop.f32.mrf.mxu0
        %v6899 = vadd.f32 0.0, %v6898
        %v6900 = vpop.f32.mrf.mxu0
        %v6901 = vpop.f32.mrf.mxu0
        %v6902 = vadd.f32 0.0, %v6901
        %v6903 = vpop.f32.mrf.mxu0
        %6904 = vmatprep.mubr.bf16.mxu0 0
        %6905 = vmatmul.mubr.bf16.gmra.mxu0 %v6766
        %v6906 = vpop.f32.mrf.mxu0
        %v6907 = vadd.f32 0.0, %v6906
        %v6908 = vpop.f32.mrf.mxu0
        %v6909 = vpop.f32.mrf.mxu0
        %v6910 = vadd.f32 0.0, %v6909
        %v6911 = vpop.f32.mrf.mxu0
        %6912 = vmatprep.mubr.bf16.mxu0 0
        %6913 = vmatmul.mubr.bf16.gmra.mxu0 %v6770
        %v6914 = vpop.f32.mrf.mxu0
        %v6915 = vadd.f32 0.0, %v6914
        %v6916 = vpop.f32.mrf.mxu0
        %v6917 = vpop.f32.mrf.mxu0
        %v6918 = vadd.f32 0.0, %v6917
        %v6919 = vpop.f32.mrf.mxu0
        %6920 = vmatprep.mubr.bf16.mxu0 0
        %6921 = vmatmul.mubr.bf16.gmra.mxu0 %v6774
        %v6922 = vpop.f32.mrf.mxu0
        %v6923 = vadd.f32 0.0, %v6922
        %v6924 = vpop.f32.mrf.mxu0
        %v6925 = vpop.f32.mrf.mxu0
        %v6926 = vadd.f32 0.0, %v6925
        %v6927 = vpop.f32.mrf.mxu0
        %6928 = vmatprep.mubr.bf16.mxu0 0
        %6929 = vmatmul.mubr.bf16.gmra.mxu0 %v6783
        %v6930 = vpop.f32.mrf.mxu0
        %v6931 = vadd.f32 0.0, %v6930
        %v6932 = vpop.f32.mrf.mxu0
        %v6933 = vpop.f32.mrf.mxu0
        %v6934 = vadd.f32 0.0, %v6933
        %v6935 = vpop.f32.mrf.mxu0
        %6936 = vdwg.mxu0
        %v6938 = vshrl.u32 %v6609, 16
        %v6940 = vrot.slane %v6938, 1
        %v6941 = vshll.u32 %v6609, 16
        %v6943 = vrot.slane %v6941, 2
        %v6944 = vor.u32 %v6940, %v6943
        %v6945 = vrot.slane %v6633, 1
        %v6946 = vrot.slane %v6629, 2
        %v6947 = vor.u32 %v6945, %v6946
        %v6948 = vsel %vm2077, %v6944, %v6947
        %v6950 = vshrl.u32 %v6632, 16
        %v6952 = vrot.slane %v6950, 1
        %v6953 = vshll.u32 %v6632, 16
        %v6955 = vrot.slane %v6953, 2
        %v6956 = vor.u32 %v6952, %v6955
        %v6958 = vshrl.u32 %v6640, 16
        %v6960 = vrot.slane %v6958, 1
        %v6961 = vshll.u32 %v6640, 16
        %v6963 = vrot.slane %v6961, 2
        %v6964 = vor.u32 %v6960, %v6963
        %v6965 = vsel %vm2077, %v6956, %v6964
        %v6966 = vrot.slane %v6641, 1
        %v6967 = vrot.slane %v6637, 2
        %v6968 = vor.u32 %v6966, %v6967
        %v6969 = vsel %vm2077, %v6947, %v6968
        %v6971 = vshrl.u32 %v6648, 16
        %v6973 = vrot.slane %v6971, 1
        %v6974 = vshll.u32 %v6648, 16
        %v6976 = vrot.slane %v6974, 2
        %v6977 = vor.u32 %v6973, %v6976
        %v6978 = vsel %vm2077, %v6964, %v6977
        %v6979 = vrot.slane %v6649, 1
        %v6980 = vrot.slane %v6645, 2
        %v6981 = vor.u32 %v6979, %v6980
        %v6982 = vsel %vm2077, %v6968, %v6981
        %v6984 = vshrl.u32 %v6656, 16
        %v6986 = vrot.slane %v6984, 1
        %v6987 = vshll.u32 %v6656, 16
        %v6989 = vrot.slane %v6987, 2
        %v6990 = vor.u32 %v6986, %v6989
        %v6991 = vsel %vm2077, %v6977, %v6990
        %v6992 = vrot.slane %v6657, 1
        %v6993 = vrot.slane %v6653, 2
        %v6994 = vor.u32 %v6992, %v6993
        %v6995 = vsel %vm2077, %v6981, %v6994
        %v6997 = vshrl.u32 %v6664, 16
        %v6999 = vrot.slane %v6997, 1
        %v7000 = vshll.u32 %v6664, 16
        %v7002 = vrot.slane %v7000, 2
        %v7003 = vor.u32 %v6999, %v7002
        %v7004 = vsel %vm2077, %v6990, %v7003
        %v7005 = vrot.slane %v6665, 1
        %v7006 = vrot.slane %v6661, 2
        %v7007 = vor.u32 %v7005, %v7006
        %v7008 = vsel %vm2077, %v6994, %v7007
        %v7010 = vshrl.u32 %v6672, 16
        %v7012 = vrot.slane %v7010, 1
        %v7013 = vshll.u32 %v6672, 16
        %v7015 = vrot.slane %v7013, 2
        %v7016 = vor.u32 %v7012, %v7015
        %v7017 = vsel %vm2077, %v7003, %v7016
        %v7018 = vrot.slane %v6673, 1
        %v7019 = vrot.slane %v6669, 2
        %v7020 = vor.u32 %v7018, %v7019
        %v7021 = vsel %vm2077, %v7007, %v7020
        %v7023 = vshrl.u32 %v6680, 16
        %v7025 = vrot.slane %v7023, 1
        %v7026 = vshll.u32 %v6680, 16
        %v7028 = vrot.slane %v7026, 2
        %v7029 = vor.u32 %v7025, %v7028
        %v7030 = vsel %vm2077, %v7016, %v7029
        %v7031 = vrot.slane %v6681, 1
        %v7032 = vrot.slane %v6677, 2
        %v7033 = vor.u32 %v7031, %v7032
        %v7034 = vsel %vm2077, %v7020, %v7033
        %v7036 = vshrl.u32 %v6688, 16
        %v7038 = vrot.slane %v7036, 1
        %v7039 = vshll.u32 %v6688, 16
        %v7041 = vrot.slane %v7039, 2
        %v7042 = vor.u32 %v7038, %v7041
        %v7043 = vsel %vm2077, %v7029, %v7042
        %v7044 = vrot.slane %v6689, 1
        %v7045 = vrot.slane %v6685, 2
        %v7046 = vor.u32 %v7044, %v7045
        %v7047 = vsel %vm2077, %v7033, %v7046
        %v7049 = vshrl.u32 %v6691, 16
        %v7051 = vrot.slane %v7049, 1
        %v7052 = vshll.u32 %v6691, 16
        %v7054 = vrot.slane %v7052, 2
        %v7055 = vor.u32 %v7051, %v7054
        %v7056 = vsel %vm2077, %v7042, %v7055
        %v7105 = vunpack.c.l.b16 %v6692
        %v7106 = vunpack.c.l.b16 %v6693
        %v7107 = vunpack.c.l.b16 %v6694
        %v7108 = vunpack.c.l.b16 %v6695
        %v7109 = vunpack.c.l.b16 %v6696
        %v7110 = vunpack.c.l.b16 %v6697
        %v7111 = vunpack.c.l.b16 %v6698
        %v7112 = vunpack.c.l.b16 %v6699
        %v7113 = vunpack.c.l.b16 %v6700
        %v7114 = vunpack.c.l.b16 %v6701
        %v7115 = vunpack.c.l.b16 %v6702
        %v7116 = vunpack.c.l.b16 %v6703
        %v7117 = vunpack.c.l.b16 %v6704
        %v7118 = vunpack.c.l.b16 %v6705
        %v7119 = vunpack.c.l.b16 %v6706
        %v7120 = vunpack.c.l.b16 %v6707
        %v7121 = vunpack.c.l.b16 %v6708
        %v7122 = vunpack.c.l.b16 %v6709
        %v7123 = vunpack.c.l.b16 %v6710
        %v7124 = vunpack.c.l.b16 %v6711
        %v7125 = vunpack.c.l.b16 %v6712
        %v7126 = vunpack.c.l.b16 %v6713
        %v7127 = vunpack.c.l.b16 %v6714
        %v7128 = vunpack.c.l.b16 %v6715
        %v7129 = vunpack.c.l.b16 %v6716
        %v7130 = vunpack.c.l.b16 %v6717
        %v7131 = vunpack.c.l.b16 %v6718
        %v7132 = vunpack.c.l.b16 %v6719
        %v7133 = vunpack.c.l.b16 %v6720
        %v7134 = vunpack.c.l.b16 %v6721
        %v7135 = vunpack.c.l.b16 %v6722
        %v7136 = vunpack.c.l.b16 %v6723
        %v7137 = vpack.c.b16 %v7106, %v7105
        %v7138 = vpack.c.b16 %v7108, %v7107
        %v7139 = vpack.c.b16 %v7110, %v7109
        %v7140 = vpack.c.b16 %v7112, %v7111
        %v7141 = vpack.c.b16 %v7114, %v7113
        %v7142 = vpack.c.b16 %v7116, %v7115
        %v7143 = vpack.c.b16 %v7118, %v7117
        %v7144 = vpack.c.b16 %v7120, %v7119
        %v7145 = vpack.c.b16 %v7122, %v7121
        %v7146 = vpack.c.b16 %v7124, %v7123
        %v7147 = vpack.c.b16 %v7126, %v7125
        %v7148 = vpack.c.b16 %v7128, %v7127
        %v7149 = vpack.c.b16 %v7130, %v7129
        %v7150 = vpack.c.b16 %v7132, %v7131
        %v7151 = vpack.c.b16 %v7134, %v7133
        %v7152 = vpack.c.b16 %v7136, %v7135
        %7169 = vmatprep.subr.bf16.mxu0 0
        %7170 = vmatpush1.bf16.msra.mxu0 %v7144
        %7171 = vmatprep.subr.bf16.mxu0 0
        %7172 = vmatpush1.bf16.msra.mxu0 %v7143
        %7173 = vmatprep.subr.bf16.mxu0 0
        %7174 = vmatpush1.bf16.msra.mxu0 %v7142
        %7175 = vmatprep.subr.bf16.mxu0 0
        %7176 = vmatpush1.bf16.msra.mxu0 %v7141
        %7177 = vmatprep.subr.bf16.mxu0 0
        %7178 = vmatpush1.bf16.msra.mxu0 %v7140
        %7179 = vmatprep.subr.bf16.mxu0 0
        %7180 = vmatpush1.bf16.msra.mxu0 %v7139
        %7181 = vmatprep.subr.bf16.mxu0 0
        %7182 = vmatpush1.bf16.msra.mxu0 %v7138
        %7183 = vmatprep.subr.bf16.mxu0 0
        %7184 = vmatpush1.bf16.msra.mxu0 %v7137
        %7185 = vmatprep.subr.bf16.mxu0 0
        %7186 = vmatpush2.bf16.msra.mxu0 %v7152
        %7187 = vmatprep.subr.bf16.mxu0 0
        %7188 = vmatpush2.bf16.msra.mxu0 %v7151
        %7189 = vmatprep.subr.bf16.mxu0 0
        %7190 = vmatpush2.bf16.msra.mxu0 %v7150
        %7191 = vmatprep.subr.bf16.mxu0 0
        %7192 = vmatpush2.bf16.msra.mxu0 %v7149
        %7193 = vmatprep.subr.bf16.mxu0 0
        %7194 = vmatpush2.bf16.msra.mxu0 %v7148
        %7195 = vmatprep.subr.bf16.mxu0 0
        %7196 = vmatpush2.bf16.msra.mxu0 %v7147
        %7197 = vmatprep.subr.bf16.mxu0 0
        %7198 = vmatpush2.bf16.msra.mxu0 %v7146
        %7199 = vmatprep.subr.bf16.mxu0 0
        %7200 = vmatpush2.bf16.msra.mxu0 %v7145
        %7201 = vmatprep.mubr.bf16.mxu0 %v6965
        %7202 = vmatmul.mubr.bf16.gmra.mxu0 %v6948
        %v7203 = vpop.f32.mrf.mxu0
        %v7204 = vadd.f32 %v6875, %v7203
        %v7205 = vpop.f32.mrf.mxu0
        %v7206 = vpop.f32.mrf.mxu0
        %v7207 = vadd.f32 %v6878, %v7206
        %v7208 = vpop.f32.mrf.mxu0
        %7209 = vmatprep.mubr.bf16.mxu0 %v6978
        %7210 = vmatmul.mubr.bf16.gmra.mxu0 %v6969
        %v7211 = vpop.f32.mrf.mxu0
        %v7212 = vadd.f32 %v6883, %v7211
        %v7213 = vpop.f32.mrf.mxu0
        %v7214 = vpop.f32.mrf.mxu0
        %v7215 = vadd.f32 %v6886, %v7214
        %v7216 = vpop.f32.mrf.mxu0
        %7217 = vmatprep.mubr.bf16.mxu0 %v6991
        %7218 = vmatmul.mubr.bf16.gmra.mxu0 %v6982
        %v7219 = vpop.f32.mrf.mxu0
        %v7220 = vadd.f32 %v6891, %v7219
        %v7221 = vpop.f32.mrf.mxu0
        %v7222 = vpop.f32.mrf.mxu0
        %v7223 = vadd.f32 %v6894, %v7222
        %v7224 = vpop.f32.mrf.mxu0
        %7225 = vmatprep.mubr.bf16.mxu0 %v7004
        %7226 = vmatmul.mubr.bf16.gmra.mxu0 %v6995
        %v7227 = vpop.f32.mrf.mxu0
        %v7228 = vadd.f32 %v6899, %v7227
        %v7229 = vpop.f32.mrf.mxu0
        %v7230 = vpop.f32.mrf.mxu0
        %v7231 = vadd.f32 %v6902, %v7230
        %v7232 = vpop.f32.mrf.mxu0
        %7233 = vmatprep.mubr.bf16.mxu0 %v7017
        %7234 = vmatmul.mubr.bf16.gmra.mxu0 %v7008
        %v7235 = vpop.f32.mrf.mxu0
        %v7236 = vadd.f32 %v6907, %v7235
        %v7237 = vpop.f32.mrf.mxu0
        %v7238 = vpop.f32.mrf.mxu0
        %v7239 = vadd.f32 %v6910, %v7238
        %v7240 = vpop.f32.mrf.mxu0
        %7241 = vmatprep.mubr.bf16.mxu0 %v7030
        %7242 = vmatmul.mubr.bf16.gmra.mxu0 %v7021
        %v7243 = vpop.f32.mrf.mxu0
        %v7244 = vadd.f32 %v6915, %v7243
        %v7245 = vpop.f32.mrf.mxu0
        %v7246 = vpop.f32.mrf.mxu0
        %v7247 = vadd.f32 %v6918, %v7246
        %v7248 = vpop.f32.mrf.mxu0
        %7249 = vmatprep.mubr.bf16.mxu0 %v7043
        %7250 = vmatmul.mubr.bf16.gmra.mxu0 %v7034
        %v7251 = vpop.f32.mrf.mxu0
        %v7252 = vadd.f32 %v6923, %v7251
        %v7253 = vpop.f32.mrf.mxu0
        %v7254 = vpop.f32.mrf.mxu0
        %v7255 = vadd.f32 %v6926, %v7254
        %v7256 = vpop.f32.mrf.mxu0
        %7257 = vmatprep.mubr.bf16.mxu0 %v7056
        %7258 = vmatmul.mubr.bf16.gmra.mxu0 %v7047
        %v7259 = vpop.f32.mrf.mxu0
        %v7260 = vadd.f32 %v6931, %v7259
        %v7261 = vpop.f32.mrf.mxu0
        %v7262 = vpop.f32.mrf.mxu0
        %v7263 = vadd.f32 %v6934, %v7262
        %v7264 = vpop.f32.mrf.mxu0
        %7265 = vdwg.mxu0
        %v7266 = vld [vmem:[%s13] sm:$0x1]
        %v7268 = vlaneseq
        %v7269 = vshrl.u32 %v7268, 7
        %v7270 = vsub.s32 0, %v7269
        %v7271 = vrot.slane %v7266, %v7270
        %v7273 = vadd.f32 %v7204, %v7271
        %v7274 = vadd.f32 %v7207, %v7271
        %v7275 = vadd.f32 %v7212, %v7271
        %v7276 = vadd.f32 %v7215, %v7271
        %v7277 = vadd.f32 %v7220, %v7271
        %v7278 = vadd.f32 %v7223, %v7271
        %v7279 = vadd.f32 %v7228, %v7271
        %v7280 = vadd.f32 %v7231, %v7271
        %v7281 = vadd.f32 %v7236, %v7271
        %v7282 = vadd.f32 %v7239, %v7271
        %v7283 = vadd.f32 %v7244, %v7271
        %v7284 = vadd.f32 %v7247, %v7271
        %v7285 = vadd.f32 %v7252, %v7271
        %v7286 = vadd.f32 %v7255, %v7271
        %v7287 = vadd.f32 %v7260, %v7271
        %v7288 = vadd.f32 %v7263, %v7271
        %v7289 = vld [vmem:[#allocation2 + $0xc] sm:$0xff]
        %v7290 = vld [vmem:[#allocation2 + $0x14] sm:$0xff]
        %v7291 = vld [vmem:[#allocation2 + $0x1c] sm:$0xff]
        %v7292 = vld [vmem:[#allocation2 + $0x24] sm:$0xff]
        %v7293 = vld [vmem:[#allocation2 + $0x2c] sm:$0xff]
        %v7294 = vld [vmem:[#allocation2 + $0x34] sm:$0xff]
        %v7295 = vld [vmem:[#allocation2 + $0x3c] sm:$0xff]
        %v7296 = vld [vmem:[#allocation2 + $0x44] sm:$0xff]
        %v7297 = vld [vmem:[#allocation2 + $0x4c] sm:$0xff]
        %v7298 = vld [vmem:[#allocation2 + $0x54] sm:$0xff]
        %v7299 = vld [vmem:[#allocation2 + $0x5c] sm:$0xff]
        %v7300 = vld [vmem:[#allocation2 + $0x64] sm:$0xff]
        %v7301 = vld [vmem:[#allocation2 + $0x6c] sm:$0xff]
        %v7302 = vld [vmem:[#allocation2 + $0x74] sm:$0xff]
        %v7303 = vld [vmem:[#allocation2 + $0x7c] sm:$0xff]
        %v7304 = vld [vmem:[#allocation2 + $0x84] sm:$0xff]
        %v7305 = vadd.f32 %v7289, %v7273
        %v7306 = vadd.f32 %v7290, %v7274
        %v7307 = vadd.f32 %v7291, %v7275
        %v7308 = vadd.f32 %v7292, %v7276
        %v7309 = vadd.f32 %v7293, %v7277
        %v7310 = vadd.f32 %v7294, %v7278
        %v7311 = vadd.f32 %v7295, %v7279
        %v7312 = vadd.f32 %v7296, %v7280
        %v7313 = vadd.f32 %v7297, %v7281
        %v7314 = vadd.f32 %v7298, %v7282
        %v7315 = vadd.f32 %v7299, %v7283
        %v7316 = vadd.f32 %v7300, %v7284
        %v7317 = vadd.f32 %v7301, %v7285
        %v7318 = vadd.f32 %v7302, %v7286
        %v7319 = vadd.f32 %v7303, %v7287
        %v7320 = vadd.f32 %v7304, %v7288
        %v7321 = vstv %s527
        %v7322 = vadd.s32 %v7321, %v1446
        %v7323 = vadd.s32 %v7321, %v1447
        %v7324 = vadd.s32 %v7321, %v1448
        %v7325 = vadd.s32 %v7321, %v1449
        %v7326 = vadd.s32 %v7321, %v1450
        %v7327 = vadd.s32 %v7321, %v1451
        %v7328 = vadd.s32 %v7321, %v1452
        %v7329 = vadd.s32 %v7321, %v1453
        %v7330 = vadd.s32 %v7321, %v1454
        %v7331 = vadd.s32 %v7321, %v1455
        %v7332 = vadd.s32 %v7321, %v1456
        %v7333 = vadd.s32 %v7321, %v1457
        %v7334 = vadd.s32 %v7321, %v1458
        %v7335 = vadd.s32 %v7321, %v1459
        %v7336 = vadd.s32 %v7321, %v1460
        %v7337 = vadd.s32 %v7321, %v1461
        %vm7338 = vcmp.ge.s32.totalorder %v7322, 0
        %vm7339 = vcmp.ge.s32.totalorder %v7323, 0
        %vm7340 = vcmp.ge.s32.totalorder %v7324, 0
        %vm7341 = vcmp.ge.s32.totalorder %v7325, 0
        %vm7342 = vcmp.ge.s32.totalorder %v7326, 0
        %vm7343 = vcmp.ge.s32.totalorder %v7327, 0
        %vm7344 = vcmp.ge.s32.totalorder %v7328, 0
        %vm7345 = vcmp.ge.s32.totalorder %v7329, 0
        %vm7346 = vcmp.ge.s32.totalorder %v7330, 0
        %vm7347 = vcmp.ge.s32.totalorder %v7331, 0
        %vm7348 = vcmp.ge.s32.totalorder %v7332, 0
        %vm7349 = vcmp.ge.s32.totalorder %v7333, 0
        %vm7350 = vcmp.ge.s32.totalorder %v7334, 0
        %vm7351 = vcmp.ge.s32.totalorder %v7335, 0
        %vm7352 = vcmp.ge.s32.totalorder %v7336, 0
        %vm7353 = vcmp.ge.s32.totalorder %v7337, 0
        %vm7354 = vcmp.lt.s32.totalorder %v7322, 200
        %vm7355 = vcmp.lt.s32.totalorder %v7323, 200
        %vm7356 = vcmp.lt.s32.totalorder %v7324, 200
        %vm7357 = vcmp.lt.s32.totalorder %v7325, 200
        %vm7358 = vcmp.lt.s32.totalorder %v7326, 200
        %vm7359 = vcmp.lt.s32.totalorder %v7327, 200
        %vm7360 = vcmp.lt.s32.totalorder %v7328, 200
        %vm7361 = vcmp.lt.s32.totalorder %v7329, 200
        %vm7362 = vcmp.lt.s32.totalorder %v7330, 200
        %vm7363 = vcmp.lt.s32.totalorder %v7331, 200
        %vm7364 = vcmp.lt.s32.totalorder %v7332, 200
        %vm7365 = vcmp.lt.s32.totalorder %v7333, 200
        %vm7366 = vcmp.lt.s32.totalorder %v7334, 200
        %vm7367 = vcmp.lt.s32.totalorder %v7335, 200
        %vm7368 = vcmp.lt.s32.totalorder %v7336, 200
        %vm7369 = vcmp.lt.s32.totalorder %v7337, 200
        %vm7370 = vmand %vm7338, %vm7354
        %vm7371 = vmand %vm7339, %vm7355
        %vm7372 = vmand %vm7340, %vm7356
        %vm7373 = vmand %vm7341, %vm7357
        %vm7374 = vmand %vm7342, %vm7358
        %vm7375 = vmand %vm7343, %vm7359
        %vm7376 = vmand %vm7344, %vm7360
        %vm7377 = vmand %vm7345, %vm7361
        %vm7378 = vmand %vm7346, %vm7362
        %vm7379 = vmand %vm7347, %vm7363
        %vm7380 = vmand %vm7348, %vm7364
        %vm7381 = vmand %vm7349, %vm7365
        %vm7382 = vmand %vm7350, %vm7366
        %vm7383 = vmand %vm7351, %vm7367
        %vm7384 = vmand %vm7352, %vm7368
        %vm7385 = vmand %vm7353, %vm7369
        %v7386 = vsel %vm7370, 1, 0
        %v7387 = vsel %vm7371, 1, 0
        %v7388 = vsel %vm7372, 1, 0
        %v7389 = vsel %vm7373, 1, 0
        %v7390 = vsel %vm7374, 1, 0
        %v7391 = vsel %vm7375, 1, 0
        %v7392 = vsel %vm7376, 1, 0
        %v7393 = vsel %vm7377, 1, 0
        %v7394 = vsel %vm7378, 1, 0
        %v7395 = vsel %vm7379, 1, 0
        %v7396 = vsel %vm7380, 1, 0
        %v7397 = vsel %vm7381, 1, 0
        %v7398 = vsel %vm7382, 1, 0
        %v7399 = vsel %vm7383, 1, 0
        %v7400 = vsel %vm7384, 1, 0
        %v7401 = vsel %vm7385, 1, 0
        %vm7402 = vcmp.eq.s32.totalorder %v7386, 1
        %vm7403 = vcmp.eq.s32.totalorder %v7387, 1
        %vm7404 = vcmp.eq.s32.totalorder %v7388, 1
        %vm7405 = vcmp.eq.s32.totalorder %v7389, 1
        %vm7406 = vcmp.eq.s32.totalorder %v7390, 1
        %vm7407 = vcmp.eq.s32.totalorder %v7391, 1
        %vm7408 = vcmp.eq.s32.totalorder %v7392, 1
        %vm7409 = vcmp.eq.s32.totalorder %v7393, 1
        %vm7410 = vcmp.eq.s32.totalorder %v7394, 1
        %vm7411 = vcmp.eq.s32.totalorder %v7395, 1
        %vm7412 = vcmp.eq.s32.totalorder %v7396, 1
        %vm7413 = vcmp.eq.s32.totalorder %v7397, 1
        %vm7414 = vcmp.eq.s32.totalorder %v7398, 1
        %vm7415 = vcmp.eq.s32.totalorder %v7399, 1
        %vm7416 = vcmp.eq.s32.totalorder %v7400, 1
        %vm7417 = vcmp.eq.s32.totalorder %v7401, 1
        %v7418 = vsel %vm7402, %v7305, 0.0
        %v7419 = vsel %vm7403, %v7306, 0.0
        %v7420 = vsel %vm7404, %v7307, 0.0
        %v7421 = vsel %vm7405, %v7308, 0.0
        %v7422 = vsel %vm7406, %v7309, 0.0
        %v7423 = vsel %vm7407, %v7310, 0.0
        %v7424 = vsel %vm7408, %v7311, 0.0
        %v7425 = vsel %vm7409, %v7312, 0.0
        %v7426 = vsel %vm7410, %v7313, 0.0
        %v7427 = vsel %vm7411, %v7314, 0.0
        %v7428 = vsel %vm7412, %v7315, 0.0
        %v7429 = vsel %vm7413, %v7316, 0.0
        %v7430 = vsel %vm7414, %v7317, 0.0
        %v7431 = vsel %vm7415, %v7318, 0.0
        %v7432 = vsel %vm7416, %v7319, 0.0
        %v7433 = vsel %vm7417, %v7320, 0.0
        %7434 = vst [vmem:[#allocation2 + $0xc] sm:$0xff] %v7418
        %7435 = vst [vmem:[#allocation2 + $0x14] sm:$0xff] %v7419
        %7436 = vst [vmem:[#allocation2 + $0x1c] sm:$0xff] %v7420
        %7437 = vst [vmem:[#allocation2 + $0x24] sm:$0xff] %v7421
        %7438 = vst [vmem:[#allocation2 + $0x2c] sm:$0xff] %v7422
        %7439 = vst [vmem:[#allocation2 + $0x34] sm:$0xff] %v7423
        %7440 = vst [vmem:[#allocation2 + $0x3c] sm:$0xff] %v7424
        %7441 = vst [vmem:[#allocation2 + $0x44] sm:$0xff] %v7425
        %7442 = vst [vmem:[#allocation2 + $0x4c] sm:$0xff] %v7426
        %7443 = vst [vmem:[#allocation2 + $0x54] sm:$0xff] %v7427
        %7444 = vst [vmem:[#allocation2 + $0x5c] sm:$0xff] %v7428
        %7445 = vst [vmem:[#allocation2 + $0x64] sm:$0xff] %v7429
        %7446 = vst [vmem:[#allocation2 + $0x6c] sm:$0xff] %v7430
        %7447 = vst [vmem:[#allocation2 + $0x74] sm:$0xff] %v7431
        %7448 = vst [vmem:[#allocation2 + $0x7c] sm:$0xff] %v7432
        %7449 = vst [vmem:[#allocation2 + $0x84] sm:$0xff] %v7433
        %v7450 = vld [vmem:[%s469] sm:$0xff]
        %v7451 = vld [vmem:[%s469 + $0x8] sm:$0xff]
        %v7452 = vld [vmem:[%s469 + $0x10] sm:$0xff]
        %v7453 = vld [vmem:[%s469 + $0x18] sm:$0xff]
        %v7454 = vld [vmem:[%s469 + $0x20] sm:$0xff]
        %v7455 = vld [vmem:[%s469 + $0x28] sm:$0xff]
        %v7456 = vld [vmem:[%s469 + $0x30] sm:$0xff]
        %v7457 = vld [vmem:[%s469 + $0x38] sm:$0xff]
        %v7458 = vld [vmem:[%s469 + $0x40] sm:$0xff]
        %v7459 = vld [vmem:[%s469 + $0x48] sm:$0xff]
        %v7460 = vld [vmem:[%s469 + $0x50] sm:$0xff]
        %v7461 = vld [vmem:[%s469 + $0x58] sm:$0xff]
        %v7462 = vld [vmem:[%s469 + $0x60] sm:$0xff]
        %v7463 = vld [vmem:[%s469 + $0x68] sm:$0xff]
        %v7464 = vld [vmem:[%s469 + $0x70] sm:$0xff]
        %v7465 = vld [vmem:[%s469 + $0x78] sm:$0xff]
        %v7466 = vld [vmem:[#allocation2 + $0xc] sm:$0xff]
        %v7467 = vld [vmem:[#allocation2 + $0x14] sm:$0xff]
        %v7468 = vld [vmem:[#allocation2 + $0x1c] sm:$0xff]
        %v7469 = vld [vmem:[#allocation2 + $0x24] sm:$0xff]
        %v7470 = vld [vmem:[#allocation2 + $0x2c] sm:$0xff]
        %v7471 = vld [vmem:[#allocation2 + $0x34] sm:$0xff]
        %v7472 = vld [vmem:[#allocation2 + $0x3c] sm:$0xff]
        %v7473 = vld [vmem:[#allocation2 + $0x44] sm:$0xff]
        %v7474 = vld [vmem:[#allocation2 + $0x4c] sm:$0xff]
        %v7475 = vld [vmem:[#allocation2 + $0x54] sm:$0xff]
        %v7476 = vld [vmem:[#allocation2 + $0x5c] sm:$0xff]
        %v7477 = vld [vmem:[#allocation2 + $0x64] sm:$0xff]
        %v7478 = vld [vmem:[#allocation2 + $0x6c] sm:$0xff]
        %v7479 = vld [vmem:[#allocation2 + $0x74] sm:$0xff]
        %v7480 = vld [vmem:[#allocation2 + $0x7c] sm:$0xff]
        %v7481 = vld [vmem:[#allocation2 + $0x84] sm:$0xff]
        %v7482 = vadd.f32 %v7450, %v7466
        %v7483 = vadd.f32 %v7451, %v7467
        %v7484 = vadd.f32 %v7452, %v7468
        %v7485 = vadd.f32 %v7453, %v7469
        %v7486 = vadd.f32 %v7454, %v7470
        %v7487 = vadd.f32 %v7455, %v7471
        %v7488 = vadd.f32 %v7456, %v7472
        %v7489 = vadd.f32 %v7457, %v7473
        %v7490 = vadd.f32 %v7458, %v7474
        %v7491 = vadd.f32 %v7459, %v7475
        %v7492 = vadd.f32 %v7460, %v7476
        %v7493 = vadd.f32 %v7461, %v7477
        %v7494 = vadd.f32 %v7462, %v7478
        %v7495 = vadd.f32 %v7463, %v7479
        %v7496 = vadd.f32 %v7464, %v7480
        %v7497 = vadd.f32 %v7465, %v7481
        %7498 = vst [vmem:[%s518] sm:$0xff] %v7482
        %7499 = vst [vmem:[%s518 + $0x8] sm:$0xff] %v7483
        %7500 = vst [vmem:[%s518 + $0x10] sm:$0xff] %v7484
        %7501 = vst [vmem:[%s518 + $0x18] sm:$0xff] %v7485
        %7502 = vst [vmem:[%s518 + $0x20] sm:$0xff] %v7486
        %7503 = vst [vmem:[%s518 + $0x28] sm:$0xff] %v7487
        %7504 = vst [vmem:[%s518 + $0x30] sm:$0xff] %v7488
        %7505 = vst [vmem:[%s518 + $0x38] sm:$0xff] %v7489
        %7506 = vst [vmem:[%s518 + $0x40] sm:$0xff] %v7490
        %7507 = vst [vmem:[%s518 + $0x48] sm:$0xff] %v7491
        %7508 = vst [vmem:[%s518 + $0x50] sm:$0xff] %v7492
        %7509 = vst [vmem:[%s518 + $0x58] sm:$0xff] %v7493
        %7510 = vst [vmem:[%s518 + $0x60] sm:$0xff] %v7494
        %7511 = vst [vmem:[%s518 + $0x68] sm:$0xff] %v7495
        %7512 = vst [vmem:[%s518 + $0x70] sm:$0xff] %v7496
        %7513 = vst [vmem:[%s518 + $0x78] sm:$0xff] %v7497
        %s7514 = sand.u32 %s359, 1
        %s7515 = scalar_lea.sflag [#allocation6], %s7514
        %s7516 = sand.u32 %s359, 1
        %s7517 = smul.addr %s7516, 128
        %s7518 = scalar_lea.vmem [#allocation7], %s7517
        // Predicated region
        $region81: #{tpu_custom_call.1} parent=75 // pred_check
          %p7519 = pneg %p369
        $region82: #{tpu_custom_call.1} parent=75 // pred_check_branch
          %7521 = sbr.rel (%p7519) target = $region84
        $region83: #{tpu_custom_call.1} parent=75 // pred_region
          %s7522 = smul.u32 16, %s36
          %s7524 = ssub.s32 2048, 2048
          %7525 = vsyncadd %s7515, %s7524
          %s7526 = smul.addr %s35, 32
          %s7527 = sadd.s32 %s7522, %s7526
          %s7528 = smul.addr %s7527, 128
          %s7529 = scalar_lea.hbm %s14, %s7528
          %s7530 = sshll.u32 %s7518, 4
          %s7531 = int_to_ptr.vmem [resolvable:$true] %s7530
          %7536 = dma.vmem_to_hbm [thread:$0]  %s7531, 2048, %s7529, %s7515, 128, 128, 8
        $region84: #{tpu_custom_call.1} parent=75 // pred_fallthru
          _
      $region76: #{tpu_custom_call.1} parent=5 // pred_fallthru
        _
      %p7537 = scmp.le.s32.totalorder 2, %s26
      // Predicated region
      $region85: #{tpu_custom_call.1} parent=5 // pred_check
        %p7538 = pneg %p7537
      $region86: #{tpu_custom_call.1} parent=5 // pred_check_branch
        %7540 = sbr.rel (%p7538) target = $region88
      $region87: #{tpu_custom_call.1} parent=5 // pred_region
        %s7541 = ssub.s32 %s26, 2
        // Predicated region
        $region89: #{tpu_custom_call.1} parent=87 // pred_check
          %p7542 = pneg %p375
        $region90: #{tpu_custom_call.1} parent=87 // pred_check_branch
          %7544 = sbr.rel (%p7542) target = $region92
        $region91: #{tpu_custom_call.1} parent=87 // pred_region
          %s7545 = sand.u32 %s360, 1
          %s7546 = scalar_lea.sflag [#allocation6], %s7545
          %s7547 = sand.u32 %s360, 1
          %s7548 = smul.addr %s7547, 128
          %s7549 = scalar_lea.vmem [#allocation7], %s7548
          %7550 = dma.done %s7546, 2048
        $region92: #{tpu_custom_call.1} parent=87 // pred_fallthru
          _
      $region88: #{tpu_custom_call.1} parent=5 // pred_fallthru
        _
    $region6: #{tpu_custom_call.1} parent=1 // loop_footer
      %s30 = sadd.s32 1, %s26
    $region7: #{tpu_custom_call.1} parent=1 // loop_footer_branch
      %25 = sbr.rel target = $region3
    $region8: #{tpu_custom_call.1} parent=1 // loop_exit
      _
    %7551 = vsyncpa [#allocation5], 1
    %s7552 = scalar_lea.sflag [#allocation5], 1
    %7553 = vsyncpa %s7552, 1
    %7554 = vsyncpa [#allocation6], 1
    %s7555 = scalar_lea.sflag [#allocation6], 1
    %7556 = vsyncpa %s7555, 1

</llo_original>
